<compile_context>
chip_gen: v7x
topology: tpu7x:2x2x1
jax: 0.10.0
libtpu: 0.0.40
codegen_flags: <defaults>
</compile_context>

<pallas_src>
import numpy as np
import jax
import jax.numpy as jnp
from jax.experimental import pallas as pl
from jax.experimental.pallas import tpu as pltpu

TILE_B = 4  # images processed per grid step


# ------------------------------ fused kernel -------------------------------

def _mnist_fused_kernel(x_ref, t1_ref, b1_ref, s1e_ref, s1o_ref, e1_ref, o1_ref,
                        t2_ref, b2_ref, s2e_ref, s2o_ref, e2_ref, o2_ref,
                        wf1_ref, bf1_ref, wf2_ref, bf2_ref, wf3_ref, bf3_ref,
                        out_ref):
    dot = lambda a, b: jnp.dot(a, b, preferred_element_type=jnp.float32)

    # Hoist all weight loads out of the per-image loop (VMEM-resident values).
    t1 = [t1_ref[k] for k in range(5)]        # each (28, 144)
    t2 = [t2_ref[k] for k in range(5)]        # each (72, 96)
    wf1 = [wf1_ref[h] for h in range(4)]      # each (48, 120)
    b1, b2 = b1_ref[...], b2_ref[...]         # (1, 144), (1, 96)
    s1e, s1o = s1e_ref[...], s1o_ref[...]     # (12, 24)
    e1, o1 = e1_ref[...], o1_ref[...]         # (144, 72)
    s2e, s2o = s2e_ref[...], s2o_ref[...]     # (4, 8)
    e2, o2 = e2_ref[...], o2_ref[...]         # (96, 48)
    bf1, wf2, bf2 = bf1_ref[...], wf2_ref[...], bf2_ref[...]
    wf3, bf3 = wf3_ref[...], bf3_ref[...]

    tb = x_ref.shape[0]
    for b in range(tb):                       # small static unroll over the tile
        img = x_ref[b]                                   # (28, 28)

        # conv1 (1->6, k=5) + bias + ReLU; lanes = co*24 + wo
        y1 = dot(img[0:24, :], t1[0])
        for kh in range(1, 5):
            y1 = y1 + dot(img[kh:kh + 24, :], t1[kh])    # (24, 144)
        y1 = jnp.maximum(y1 + b1, 0.0)

        # maxpool 2x2 (rows then lane pairs) -> (12, 72); lanes = ci*12 + w
        ph = jnp.maximum(dot(s1e, y1), dot(s1o, y1))     # (12, 144)
        p1 = jnp.maximum(dot(ph, e1), dot(ph, o1))       # (12, 72)

        # conv2 (6->12, k=5) + bias + ReLU; lanes = co*8 + wo
        y2 = dot(p1[0:8, :], t2[0])
        for kh in range(1, 5):
            y2 = y2 + dot(p1[kh:kh + 8, :], t2[kh])      # (8, 96)
        y2 = jnp.maximum(y2 + b2, 0.0)

        # maxpool 2x2 -> (4, 48); lanes = co*4 + w
        qh = jnp.maximum(dot(s2e, y2), dot(s2o, y2))     # (4, 96)
        p2 = jnp.maximum(dot(qh, e2), dot(qh, o2))       # (4, 48)

        # fc1 + ReLU: contract the 4 pooled rows against per-row weight slabs
        h1 = dot(p2[0:1, :], wf1[0])
        for hh in range(1, 4):
            h1 = h1 + dot(p2[hh:hh + 1, :], wf1[hh])     # (1, 120)
        h1 = jnp.maximum(h1 + bf1, 0.0)

        # fc2 + ReLU, fc3 (output lane-padded to 128 for a dense store)
        h2 = jnp.maximum(dot(h1, wf2) + bf2, 0.0)        # (1, 60)
        out_ref[b] = dot(h2, wf3) + bf3                  # (1, 128)


# --------------------------- weight preparation -----------------------------

def _conv_band_mats(w, w_in):
    """Conv weight (Cout, Cin, K, K) -> (K, Cin*Win, Cout*Wout) banded matrices:
    T[kh][ci*Win + win, co*Wout + wo] = w[co, ci, kh, win - wo], 0 <= win-wo < K."""
    c_out, c_in, k, _ = w.shape
    w_out = w_in - k + 1
    sel = np.zeros((w_in, w_out, k), np.float32)
    for wo in range(w_out):
        for kw in range(k):
            sel[wo + kw, wo, kw] = 1.0
    t = jnp.einsum('vok,cihk->hivco', jnp.asarray(sel), w.astype(jnp.float32))
    return t.reshape(k, c_in * w_in, c_out * w_out)


def _pool_mats(h_in, w_in, c):
    """Even/odd selection matrices implementing a 2x2 stride-2 max-pool."""
    h_out, w_out = h_in // 2, w_in // 2
    se = np.zeros((h_out, h_in), np.float32)
    so = np.zeros((h_out, h_in), np.float32)
    for i in range(h_out):
        se[i, 2 * i] = 1.0
        so[i, 2 * i + 1] = 1.0
    ee = np.zeros((c * w_in, c * w_out), np.float32)
    eo = np.zeros((c * w_in, c * w_out), np.float32)
    for ch in range(c):
        for j in range(w_out):
            ee[ch * w_in + 2 * j, ch * w_out + j] = 1.0
            eo[ch * w_in + 2 * j + 1, ch * w_out + j] = 1.0
    return (jnp.asarray(se), jnp.asarray(so), jnp.asarray(ee), jnp.asarray(eo))


def _prep_params(params):
    f32 = jnp.float32
    t1 = _conv_band_mats(params['conv1_w'], 28)                         # (5, 28, 144)
    b1 = jnp.repeat(params['conv1_b'].astype(f32), 24).reshape(1, 144)
    s1e, s1o, e1, o1 = _pool_mats(24, 24, 6)
    t2 = _conv_band_mats(params['conv2_w'], 12)                         # (5, 72, 96)
    b2 = jnp.repeat(params['conv2_b'].astype(f32), 8).reshape(1, 96)
    s2e, s2o, e2, o2 = _pool_mats(8, 8, 12)
    # fc1 columns re-ordered to the kernel's (h, c, w) flatten order.
    wf1 = (params['fc1_w'].astype(f32).reshape(120, 12, 4, 4)
           .transpose(2, 1, 3, 0).reshape(4, 48, 120))
    bf1 = params['fc1_b'].astype(f32).reshape(1, 120)
    wf2 = params['fc2_w'].astype(f32).T                                 # (120, 60)
    bf2 = params['fc2_b'].astype(f32).reshape(1, 60)
    wf3 = jnp.zeros((60, 128), f32).at[:, :10].set(params['fc3_w'].astype(f32).T)
    bf3 = jnp.zeros((1, 128), f32).at[:, :10].set(params['fc3_b'].astype(f32).reshape(1, 10))
    return (t1, b1, s1e, s1o, e1, o1, t2, b2, s2e, s2o, e2, o2,
            wf1, bf1, wf2, bf2, wf3, bf3)


# ------------------------------ public forward ------------------------------

def mnist_classifier_forward(x, params, *, tile_b=TILE_B):
    """x: (B, 1, 28, 28) or (B, 28, 28) float32 -> logits (B, 10)."""
    if x.ndim == 4:
        x = x[:, 0]
    x = x.astype(jnp.float32)
    b = x.shape[0]
    bp = ((b + tile_b - 1) // tile_b) * tile_b
    if bp != b:
        x = jnp.concatenate([x, jnp.zeros((bp - b, 28, 28), jnp.float32)], axis=0)

    prepped = _prep_params(params)

    def const_spec(arr):
        nd = arr.ndim
        return pl.BlockSpec(arr.shape, lambda i: (0,) * nd)   # resident in VMEM

    in_specs = [pl.BlockSpec((tile_b, 28, 28), lambda i: (i, 0, 0))]
    in_specs += [const_spec(p) for p in prepped]

    out = pl.pallas_call(
        _mnist_fused_kernel,
        out_shape=jax.ShapeDtypeStruct((bp, 1, 128), jnp.float32),
        grid=(bp // tile_b,),
        in_specs=in_specs,
        out_specs=pl.BlockSpec((tile_b, 1, 128), lambda i: (i, 0, 0)),
        compiler_params=pltpu.CompilerParams(dimension_semantics=("parallel",)),
    )(x, *prepped)
    return out[:b, 0, :10]


# ------------------------------ test scaffolding ----------------------------

def init_params(key):
    ks = jax.random.split(key, 10)
    s = 0.05
    return {
        "conv1_w": s * jax.random.normal(ks[0], (6, 1, 5, 5), jnp.float32),
        "conv1_b": s * jax.random.normal(ks[1], (6,), jnp.float32),
        "conv2_w": s * jax.random.normal(ks[2], (12, 6, 5, 5), jnp.float32),
        "conv2_b": s * jax.random.normal(ks[3], (12,), jnp.float32),
        "fc1_w": s * jax.random.normal(ks[4], (120, 192), jnp.float32),  # (out, in) like torch
        "fc1_b": s * jax.random.normal(ks[5], (120,), jnp.float32),
        "fc2_w": s * jax.random.normal(ks[6], (60, 120), jnp.float32),
        "fc2_b": s * jax.random.normal(ks[7], (60,), jnp.float32),
        "fc3_w": s * jax.random.normal(ks[8], (10, 60), jnp.float32),
        "fc3_b": s * jax.random.normal(ks[9], (10,), jnp.float32),
    }


def _reference_forward(x, params):
    """Plain-JAX reference with PyTorch semantics (self-check only)."""
    def conv2d(inp, w, bias):
        bsz, cin, h, wdt = inp.shape
        cout, _, k, _ = w.shape
        ho, wo = h - k + 1, wdt - k + 1
        cols = []
        for c in range(cin):
            for i in range(k):
                for j in range(k):
                    cols.append(inp[:, c, i:i + ho, j:j + wo])
        p = jnp.stack(cols, axis=-1).reshape(bsz * ho * wo, cin * k * k)
        y = p @ w.reshape(cout, -1).T + bias
        return y.reshape(bsz, ho, wo, cout).transpose(0, 3, 1, 2)

    def pool(inp):
        return jnp.maximum(
            jnp.maximum(inp[:, :, 0::2, 0::2], inp[:, :, 0::2, 1::2]),
            jnp.maximum(inp[:, :, 1::2, 0::2], inp[:, :, 1::2, 1::2]))

    y = pool(jax.nn.relu(conv2d(x, params['conv1_w'], params['conv1_b'])))
    y = pool(jax.nn.relu(conv2d(y, params['conv2_w'], params['conv2_b'])))
    flat = y.reshape(y.shape[0], -1)
    h = jax.nn.relu(flat @ params['fc1_w'].T + params['fc1_b'])
    h = jax.nn.relu(h @ params['fc2_w'].T + params['fc2_b'])
    return h @ params['fc3_w'].T + params['fc3_b']


if __name__ == "__main__":
    key = jax.random.PRNGKey(0)
    k_x, k_p = jax.random.split(key)
    # 28x28 spatial is required by the module (flatten dim 12*4*4); B=8 -> 2 parallel grid steps.
    x = jax.random.normal(k_x, (8, 1, 28, 28), jnp.float32)
    params = init_params(k_p)

    fwd = jax.jit(mnist_classifier_forward)
    logits = fwd(x, params)
    jax.block_until_ready(logits)
    assert logits.shape == (8, 10), logits.shape

    ref = _reference_forward(x, params)
    err = float(jnp.max(jnp.abs(logits - ref)))
    assert err < 2e-3, f"max abs error vs reference: {err}"
    print("KERNEL_OK")
</pallas_src>

<mosaic_0001>
module attributes {stable_mosaic.version = 11 : i64} {
  func.func @_mnist_fused_kernel(%arg0: i32, %arg1: memref<4x28x28xf32, #tpu.memory_space<vmem>>, %arg2: memref<5x28x144xf32, #tpu.memory_space<vmem>>, %arg3: memref<1x144xf32, #tpu.memory_space<vmem>>, %arg4: memref<12x24xf32, #tpu.memory_space<vmem>>, %arg5: memref<12x24xf32, #tpu.memory_space<vmem>>, %arg6: memref<144x72xf32, #tpu.memory_space<vmem>>, %arg7: memref<144x72xf32, #tpu.memory_space<vmem>>, %arg8: memref<5x72x96xf32, #tpu.memory_space<vmem>>, %arg9: memref<1x96xf32, #tpu.memory_space<vmem>>, %arg10: memref<4x8xf32, #tpu.memory_space<vmem>>, %arg11: memref<4x8xf32, #tpu.memory_space<vmem>>, %arg12: memref<96x48xf32, #tpu.memory_space<vmem>>, %arg13: memref<96x48xf32, #tpu.memory_space<vmem>>, %arg14: memref<4x48x120xf32, #tpu.memory_space<vmem>>, %arg15: memref<1x120xf32, #tpu.memory_space<vmem>>, %arg16: memref<120x60xf32, #tpu.memory_space<vmem>>, %arg17: memref<1x60xf32, #tpu.memory_space<vmem>>, %arg18: memref<60x128xf32, #tpu.memory_space<vmem>>, %arg19: memref<1x128xf32, #tpu.memory_space<vmem>>, %arg20: memref<4x1x128xf32, #tpu.memory_space<vmem>>) attributes {dimension_semantics = [#tpu.dimension_semantics<parallel>], iteration_bounds = array<i64: 2>, scalar_prefetch = 0 : i64, scratch_operands = 0 : i64, tpu.core_type = #tpu.core_type<tc>, window_params = [{transform_indices = @transform_0, window_bounds = array<i64: 4, 28, 28>}, {pipeline_mode = #tpu.pipeline_mode<synchronous>, transform_indices = @transform_1, window_bounds = array<i64: 5, 28, 144>}, {pipeline_mode = #tpu.pipeline_mode<synchronous>, transform_indices = @transform_2, window_bounds = array<i64: 1, 144>}, {pipeline_mode = #tpu.pipeline_mode<synchronous>, transform_indices = @transform_3, window_bounds = array<i64: 12, 24>}, {pipeline_mode = #tpu.pipeline_mode<synchronous>, transform_indices = @transform_4, window_bounds = array<i64: 12, 24>}, {pipeline_mode = #tpu.pipeline_mode<synchronous>, transform_indices = @transform_5, window_bounds = array<i64: 144, 72>}, {pipeline_mode = #tpu.pipeline_mode<synchronous>, transform_indices = @transform_6, window_bounds = array<i64: 144, 72>}, {pipeline_mode = #tpu.pipeline_mode<synchronous>, transform_indices = @transform_7, window_bounds = array<i64: 5, 72, 96>}, {pipeline_mode = #tpu.pipeline_mode<synchronous>, transform_indices = @transform_8, window_bounds = array<i64: 1, 96>}, {pipeline_mode = #tpu.pipeline_mode<synchronous>, transform_indices = @transform_9, window_bounds = array<i64: 4, 8>}, {pipeline_mode = #tpu.pipeline_mode<synchronous>, transform_indices = @transform_10, window_bounds = array<i64: 4, 8>}, {pipeline_mode = #tpu.pipeline_mode<synchronous>, transform_indices = @transform_11, window_bounds = array<i64: 96, 48>}, {pipeline_mode = #tpu.pipeline_mode<synchronous>, transform_indices = @transform_12, window_bounds = array<i64: 96, 48>}, {pipeline_mode = #tpu.pipeline_mode<synchronous>, transform_indices = @transform_13, window_bounds = array<i64: 4, 48, 120>}, {pipeline_mode = #tpu.pipeline_mode<synchronous>, transform_indices = @transform_14, window_bounds = array<i64: 1, 120>}, {pipeline_mode = #tpu.pipeline_mode<synchronous>, transform_indices = @transform_15, window_bounds = array<i64: 120, 60>}, {pipeline_mode = #tpu.pipeline_mode<synchronous>, transform_indices = @transform_16, window_bounds = array<i64: 1, 60>}, {pipeline_mode = #tpu.pipeline_mode<synchronous>, transform_indices = @transform_17, window_bounds = array<i64: 60, 128>}, {pipeline_mode = #tpu.pipeline_mode<synchronous>, transform_indices = @transform_18, window_bounds = array<i64: 1, 128>}, {transform_indices = @transform_19, window_bounds = array<i64: 4, 1, 128>}]} {
    %c0 = arith.constant 0 : index
    %c0_0 = arith.constant 0 : index
    %c0_1 = arith.constant 0 : index
    %0 = vector.load %arg2[%c0, %c0_0, %c0_1] : memref<5x28x144xf32, #tpu.memory_space<vmem>>, vector<1x28x144xf32>
    %1 = vector.shape_cast %0 : vector<1x28x144xf32> to vector<28x144xf32>
    %c1 = arith.constant 1 : index
    %c0_2 = arith.constant 0 : index
    %c0_3 = arith.constant 0 : index
    %2 = vector.load %arg2[%c1, %c0_2, %c0_3] : memref<5x28x144xf32, #tpu.memory_space<vmem>>, vector<1x28x144xf32>
    %3 = vector.shape_cast %2 : vector<1x28x144xf32> to vector<28x144xf32>
    %c2 = arith.constant 2 : index
    %c0_4 = arith.constant 0 : index
    %c0_5 = arith.constant 0 : index
    %4 = vector.load %arg2[%c2, %c0_4, %c0_5] : memref<5x28x144xf32, #tpu.memory_space<vmem>>, vector<1x28x144xf32>
    %5 = vector.shape_cast %4 : vector<1x28x144xf32> to vector<28x144xf32>
    %c3 = arith.constant 3 : index
    %c0_6 = arith.constant 0 : index
    %c0_7 = arith.constant 0 : index
    %6 = vector.load %arg2[%c3, %c0_6, %c0_7] : memref<5x28x144xf32, #tpu.memory_space<vmem>>, vector<1x28x144xf32>
    %7 = vector.shape_cast %6 : vector<1x28x144xf32> to vector<28x144xf32>
    %c4 = arith.constant 4 : index
    %c0_8 = arith.constant 0 : index
    %c0_9 = arith.constant 0 : index
    %8 = vector.load %arg2[%c4, %c0_8, %c0_9] : memref<5x28x144xf32, #tpu.memory_space<vmem>>, vector<1x28x144xf32>
    %9 = vector.shape_cast %8 : vector<1x28x144xf32> to vector<28x144xf32>
    %c0_10 = arith.constant 0 : index
    %c0_11 = arith.constant 0 : index
    %c0_12 = arith.constant 0 : index
    %10 = vector.load %arg8[%c0_10, %c0_11, %c0_12] : memref<5x72x96xf32, #tpu.memory_space<vmem>>, vector<1x72x96xf32>
    %11 = vector.shape_cast %10 : vector<1x72x96xf32> to vector<72x96xf32>
    %c1_13 = arith.constant 1 : index
    %c0_14 = arith.constant 0 : index
    %c0_15 = arith.constant 0 : index
    %12 = vector.load %arg8[%c1_13, %c0_14, %c0_15] : memref<5x72x96xf32, #tpu.memory_space<vmem>>, vector<1x72x96xf32>
    %13 = vector.shape_cast %12 : vector<1x72x96xf32> to vector<72x96xf32>
    %c2_16 = arith.constant 2 : index
    %c0_17 = arith.constant 0 : index
    %c0_18 = arith.constant 0 : index
    %14 = vector.load %arg8[%c2_16, %c0_17, %c0_18] : memref<5x72x96xf32, #tpu.memory_space<vmem>>, vector<1x72x96xf32>
    %15 = vector.shape_cast %14 : vector<1x72x96xf32> to vector<72x96xf32>
    %c3_19 = arith.constant 3 : index
    %c0_20 = arith.constant 0 : index
    %c0_21 = arith.constant 0 : index
    %16 = vector.load %arg8[%c3_19, %c0_20, %c0_21] : memref<5x72x96xf32, #tpu.memory_space<vmem>>, vector<1x72x96xf32>
    %17 = vector.shape_cast %16 : vector<1x72x96xf32> to vector<72x96xf32>
    %c4_22 = arith.constant 4 : index
    %c0_23 = arith.constant 0 : index
    %c0_24 = arith.constant 0 : index
    %18 = vector.load %arg8[%c4_22, %c0_23, %c0_24] : memref<5x72x96xf32, #tpu.memory_space<vmem>>, vector<1x72x96xf32>
    %19 = vector.shape_cast %18 : vector<1x72x96xf32> to vector<72x96xf32>
    %c0_25 = arith.constant 0 : index
    %c0_26 = arith.constant 0 : index
    %c0_27 = arith.constant 0 : index
    %20 = vector.load %arg14[%c0_25, %c0_26, %c0_27] : memref<4x48x120xf32, #tpu.memory_space<vmem>>, vector<1x48x120xf32>
    %21 = vector.shape_cast %20 : vector<1x48x120xf32> to vector<48x120xf32>
    %c1_28 = arith.constant 1 : index
    %c0_29 = arith.constant 0 : index
    %c0_30 = arith.constant 0 : index
    %22 = vector.load %arg14[%c1_28, %c0_29, %c0_30] : memref<4x48x120xf32, #tpu.memory_space<vmem>>, vector<1x48x120xf32>
    %23 = vector.shape_cast %22 : vector<1x48x120xf32> to vector<48x120xf32>
    %c2_31 = arith.constant 2 : index
    %c0_32 = arith.constant 0 : index
    %c0_33 = arith.constant 0 : index
    %24 = vector.load %arg14[%c2_31, %c0_32, %c0_33] : memref<4x48x120xf32, #tpu.memory_space<vmem>>, vector<1x48x120xf32>
    %25 = vector.shape_cast %24 : vector<1x48x120xf32> to vector<48x120xf32>
    %c3_34 = arith.constant 3 : index
    %c0_35 = arith.constant 0 : index
    %c0_36 = arith.constant 0 : index
    %26 = vector.load %arg14[%c3_34, %c0_35, %c0_36] : memref<4x48x120xf32, #tpu.memory_space<vmem>>, vector<1x48x120xf32>
    %27 = vector.shape_cast %26 : vector<1x48x120xf32> to vector<48x120xf32>
    %c0_37 = arith.constant 0 : index
    %c0_38 = arith.constant 0 : index
    %28 = vector.load %arg3[%c0_37, %c0_38] : memref<1x144xf32, #tpu.memory_space<vmem>>, vector<1x144xf32>
    %c0_39 = arith.constant 0 : index
    %c0_40 = arith.constant 0 : index
    %29 = vector.load %arg9[%c0_39, %c0_40] : memref<1x96xf32, #tpu.memory_space<vmem>>, vector<1x96xf32>
    %c0_41 = arith.constant 0 : index
    %c0_42 = arith.constant 0 : index
    %30 = vector.load %arg4[%c0_41, %c0_42] : memref<12x24xf32, #tpu.memory_space<vmem>>, vector<12x24xf32>
    %c0_43 = arith.constant 0 : index
    %c0_44 = arith.constant 0 : index
    %31 = vector.load %arg5[%c0_43, %c0_44] : memref<12x24xf32, #tpu.memory_space<vmem>>, vector<12x24xf32>
    %c0_45 = arith.constant 0 : index
    %c0_46 = arith.constant 0 : index
    %32 = vector.load %arg6[%c0_45, %c0_46] : memref<144x72xf32, #tpu.memory_space<vmem>>, vector<144x72xf32>
    %c0_47 = arith.constant 0 : index
    %c0_48 = arith.constant 0 : index
    %33 = vector.load %arg7[%c0_47, %c0_48] : memref<144x72xf32, #tpu.memory_space<vmem>>, vector<144x72xf32>
    %c0_49 = arith.constant 0 : index
    %c0_50 = arith.constant 0 : index
    %34 = vector.load %arg10[%c0_49, %c0_50] : memref<4x8xf32, #tpu.memory_space<vmem>>, vector<4x8xf32>
    %c0_51 = arith.constant 0 : index
    %c0_52 = arith.constant 0 : index
    %35 = vector.load %arg11[%c0_51, %c0_52] : memref<4x8xf32, #tpu.memory_space<vmem>>, vector<4x8xf32>
    %c0_53 = arith.constant 0 : index
    %c0_54 = arith.constant 0 : index
    %36 = vector.load %arg12[%c0_53, %c0_54] : memref<96x48xf32, #tpu.memory_space<vmem>>, vector<96x48xf32>
    %c0_55 = arith.constant 0 : index
    %c0_56 = arith.constant 0 : index
    %37 = vector.load %arg13[%c0_55, %c0_56] : memref<96x48xf32, #tpu.memory_space<vmem>>, vector<96x48xf32>
    %c0_57 = arith.constant 0 : index
    %c0_58 = arith.constant 0 : index
    %38 = vector.load %arg15[%c0_57, %c0_58] : memref<1x120xf32, #tpu.memory_space<vmem>>, vector<1x120xf32>
    %c0_59 = arith.constant 0 : index
    %c0_60 = arith.constant 0 : index
    %39 = vector.load %arg16[%c0_59, %c0_60] : memref<120x60xf32, #tpu.memory_space<vmem>>, vector<120x60xf32>
    %c0_61 = arith.constant 0 : index
    %c0_62 = arith.constant 0 : index
    %40 = vector.load %arg17[%c0_61, %c0_62] : memref<1x60xf32, #tpu.memory_space<vmem>>, vector<1x60xf32>
    %c0_63 = arith.constant 0 : index
    %c0_64 = arith.constant 0 : index
    %41 = vector.load %arg18[%c0_63, %c0_64] : memref<60x128xf32, #tpu.memory_space<vmem>>, vector<60x128xf32>
    %c0_65 = arith.constant 0 : index
    %c0_66 = arith.constant 0 : index
    %42 = vector.load %arg19[%c0_65, %c0_66] : memref<1x128xf32, #tpu.memory_space<vmem>>, vector<1x128xf32>
    %c0_67 = arith.constant 0 : index
    %c0_68 = arith.constant 0 : index
    %c0_69 = arith.constant 0 : index
    %43 = vector.load %arg1[%c0_67, %c0_68, %c0_69] : memref<4x28x28xf32, #tpu.memory_space<vmem>>, vector<1x28x28xf32>
    %44 = vector.shape_cast %43 : vector<1x28x28xf32> to vector<28x28xf32>
    %45 = vector.extract_strided_slice %44 {offsets = [0, 0], sizes = [24, 28], strides = [1, 1]} : vector<28x28xf32> to vector<24x28xf32>
    %cst = arith.constant dense<0.000000e+00> : vector<24x144xf32>
    %46 = tpu.matmul %45, %1, %cst {dimension_numbers = #tpu.dot_dimension_numbers<[1], [0], [0], [1], [0, 0, 1, 1], [], []>} : vector<24x28xf32>, vector<28x144xf32>, vector<24x144xf32> -> vector<24x144xf32>
    %47 = vector.extract_strided_slice %44 {offsets = [1, 0], sizes = [24, 28], strides = [1, 1]} : vector<28x28xf32> to vector<24x28xf32>
    %cst_70 = arith.constant dense<0.000000e+00> : vector<24x144xf32>
    %48 = tpu.matmul %47, %3, %cst_70 {dimension_numbers = #tpu.dot_dimension_numbers<[1], [0], [0], [1], [0, 0, 1, 1], [], []>} : vector<24x28xf32>, vector<28x144xf32>, vector<24x144xf32> -> vector<24x144xf32>
    %49 = arith.addf %46, %48 : vector<24x144xf32>
    %50 = vector.extract_strided_slice %44 {offsets = [2, 0], sizes = [24, 28], strides = [1, 1]} : vector<28x28xf32> to vector<24x28xf32>
    %cst_71 = arith.constant dense<0.000000e+00> : vector<24x144xf32>
    %51 = tpu.matmul %50, %5, %cst_71 {dimension_numbers = #tpu.dot_dimension_numbers<[1], [0], [0], [1], [0, 0, 1, 1], [], []>} : vector<24x28xf32>, vector<28x144xf32>, vector<24x144xf32> -> vector<24x144xf32>
    %52 = arith.addf %49, %51 : vector<24x144xf32>
    %53 = vector.extract_strided_slice %44 {offsets = [3, 0], sizes = [24, 28], strides = [1, 1]} : vector<28x28xf32> to vector<24x28xf32>
    %cst_72 = arith.constant dense<0.000000e+00> : vector<24x144xf32>
    %54 = tpu.matmul %53, %7, %cst_72 {dimension_numbers = #tpu.dot_dimension_numbers<[1], [0], [0], [1], [0, 0, 1, 1], [], []>} : vector<24x28xf32>, vector<28x144xf32>, vector<24x144xf32> -> vector<24x144xf32>
    %55 = arith.addf %52, %54 : vector<24x144xf32>
    %56 = vector.extract_strided_slice %44 {offsets = [4, 0], sizes = [24, 28], strides = [1, 1]} : vector<28x28xf32> to vector<24x28xf32>
    %cst_73 = arith.constant dense<0.000000e+00> : vector<24x144xf32>
    %57 = tpu.matmul %56, %9, %cst_73 {dimension_numbers = #tpu.dot_dimension_numbers<[1], [0], [0], [1], [0, 0, 1, 1], [], []>} : vector<24x28xf32>, vector<28x144xf32>, vector<24x144xf32> -> vector<24x144xf32>
    %58 = arith.addf %55, %57 : vector<24x144xf32>
    %59 = vector.broadcast %28 : vector<1x144xf32> to vector<24x144xf32>
    %60 = arith.addf %58, %59 : vector<24x144xf32>
    %cst_74 = arith.constant 0.000000e+00 : f32
    %61 = vector.broadcast %cst_74 : f32 to vector<24x144xf32>
    %62 = arith.maximumf %60, %61 : vector<24x144xf32>
    %cst_75 = arith.constant dense<0.000000e+00> : vector<12x144xf32>
    %63 = tpu.matmul %30, %62, %cst_75 {dimension_numbers = #tpu.dot_dimension_numbers<[1], [0], [0], [1], [0, 0, 1, 1], [], []>} : vector<12x24xf32>, vector<24x144xf32>, vector<12x144xf32> -> vector<12x144xf32>
    %cst_76 = arith.constant dense<0.000000e+00> : vector<12x144xf32>
    %64 = tpu.matmul %31, %62, %cst_76 {dimension_numbers = #tpu.dot_dimension_numbers<[1], [0], [0], [1], [0, 0, 1, 1], [], []>} : vector<12x24xf32>, vector<24x144xf32>, vector<12x144xf32> -> vector<12x144xf32>
    %65 = arith.maximumf %63, %64 : vector<12x144xf32>
    %cst_77 = arith.constant dense<0.000000e+00> : vector<12x72xf32>
    %66 = tpu.matmul %65, %32, %cst_77 {dimension_numbers = #tpu.dot_dimension_numbers<[1], [0], [0], [1], [0, 0, 1, 1], [], []>} : vector<12x144xf32>, vector<144x72xf32>, vector<12x72xf32> -> vector<12x72xf32>
    %cst_78 = arith.constant dense<0.000000e+00> : vector<12x72xf32>
    %67 = tpu.matmul %65, %33, %cst_78 {dimension_numbers = #tpu.dot_dimension_numbers<[1], [0], [0], [1], [0, 0, 1, 1], [], []>} : vector<12x144xf32>, vector<144x72xf32>, vector<12x72xf32> -> vector<12x72xf32>
    %68 = arith.maximumf %66, %67 : vector<12x72xf32>
    %69 = vector.extract_strided_slice %68 {offsets = [0, 0], sizes = [8, 72], strides = [1, 1]} : vector<12x72xf32> to vector<8x72xf32>
    %cst_79 = arith.constant dense<0.000000e+00> : vector<8x96xf32>
    %70 = tpu.matmul %69, %11, %cst_79 {dimension_numbers = #tpu.dot_dimension_numbers<[1], [0], [0], [1], [0, 0, 1, 1], [], []>} : vector<8x72xf32>, vector<72x96xf32>, vector<8x96xf32> -> vector<8x96xf32>
    %71 = vector.extract_strided_slice %68 {offsets = [1, 0], sizes = [8, 72], strides = [1, 1]} : vector<12x72xf32> to vector<8x72xf32>
    %cst_80 = arith.constant dense<0.000000e+00> : vector<8x96xf32>
    %72 = tpu.matmul %71, %13, %cst_80 {dimension_numbers = #tpu.dot_dimension_numbers<[1], [0], [0], [1], [0, 0, 1, 1], [], []>} : vector<8x72xf32>, vector<72x96xf32>, vector<8x96xf32> -> vector<8x96xf32>
    %73 = arith.addf %70, %72 : vector<8x96xf32>
    %74 = vector.extract_strided_slice %68 {offsets = [2, 0], sizes = [8, 72], strides = [1, 1]} : vector<12x72xf32> to vector<8x72xf32>
    %cst_81 = arith.constant dense<0.000000e+00> : vector<8x96xf32>
    %75 = tpu.matmul %74, %15, %cst_81 {dimension_numbers = #tpu.dot_dimension_numbers<[1], [0], [0], [1], [0, 0, 1, 1], [], []>} : vector<8x72xf32>, vector<72x96xf32>, vector<8x96xf32> -> vector<8x96xf32>
    %76 = arith.addf %73, %75 : vector<8x96xf32>
    %77 = vector.extract_strided_slice %68 {offsets = [3, 0], sizes = [8, 72], strides = [1, 1]} : vector<12x72xf32> to vector<8x72xf32>
    %cst_82 = arith.constant dense<0.000000e+00> : vector<8x96xf32>
    %78 = tpu.matmul %77, %17, %cst_82 {dimension_numbers = #tpu.dot_dimension_numbers<[1], [0], [0], [1], [0, 0, 1, 1], [], []>} : vector<8x72xf32>, vector<72x96xf32>, vector<8x96xf32> -> vector<8x96xf32>
    %79 = arith.addf %76, %78 : vector<8x96xf32>
    %80 = vector.extract_strided_slice %68 {offsets = [4, 0], sizes = [8, 72], strides = [1, 1]} : vector<12x72xf32> to vector<8x72xf32>
    %cst_83 = arith.constant dense<0.000000e+00> : vector<8x96xf32>
    %81 = tpu.matmul %80, %19, %cst_83 {dimension_numbers = #tpu.dot_dimension_numbers<[1], [0], [0], [1], [0, 0, 1, 1], [], []>} : vector<8x72xf32>, vector<72x96xf32>, vector<8x96xf32> -> vector<8x96xf32>
    %82 = arith.addf %79, %81 : vector<8x96xf32>
    %83 = vector.broadcast %29 : vector<1x96xf32> to vector<8x96xf32>
    %84 = arith.addf %82, %83 : vector<8x96xf32>
    %cst_84 = arith.constant 0.000000e+00 : f32
    %85 = vector.broadcast %cst_84 : f32 to vector<8x96xf32>
    %86 = arith.maximumf %84, %85 : vector<8x96xf32>
    %cst_85 = arith.constant dense<0.000000e+00> : vector<4x96xf32>
    %87 = tpu.matmul %34, %86, %cst_85 {dimension_numbers = #tpu.dot_dimension_numbers<[1], [0], [0], [1], [0, 0, 1, 1], [], []>} : vector<4x8xf32>, vector<8x96xf32>, vector<4x96xf32> -> vector<4x96xf32>
    %cst_86 = arith.constant dense<0.000000e+00> : vector<4x96xf32>
    %88 = tpu.matmul %35, %86, %cst_86 {dimension_numbers = #tpu.dot_dimension_numbers<[1], [0], [0], [1], [0, 0, 1, 1], [], []>} : vector<4x8xf32>, vector<8x96xf32>, vector<4x96xf32> -> vector<4x96xf32>
    %89 = arith.maximumf %87, %88 : vector<4x96xf32>
    %cst_87 = arith.constant dense<0.000000e+00> : vector<4x48xf32>
    %90 = tpu.matmul %89, %36, %cst_87 {dimension_numbers = #tpu.dot_dimension_numbers<[1], [0], [0], [1], [0, 0, 1, 1], [], []>} : vector<4x96xf32>, vector<96x48xf32>, vector<4x48xf32> -> vector<4x48xf32>
    %cst_88 = arith.constant dense<0.000000e+00> : vector<4x48xf32>
    %91 = tpu.matmul %89, %37, %cst_88 {dimension_numbers = #tpu.dot_dimension_numbers<[1], [0], [0], [1], [0, 0, 1, 1], [], []>} : vector<4x96xf32>, vector<96x48xf32>, vector<4x48xf32> -> vector<4x48xf32>
    %92 = arith.maximumf %90, %91 : vector<4x48xf32>
    %93 = vector.extract_strided_slice %92 {offsets = [0, 0], sizes = [1, 48], strides = [1, 1]} : vector<4x48xf32> to vector<1x48xf32>
    %cst_89 = arith.constant dense<0.000000e+00> : vector<1x120xf32>
    %94 = tpu.matmul %93, %21, %cst_89 {dimension_numbers = #tpu.dot_dimension_numbers<[1], [0], [0], [1], [0, 0, 1, 1], [], []>} : vector<1x48xf32>, vector<48x120xf32>, vector<1x120xf32> -> vector<1x120xf32>
    %95 = vector.extract_strided_slice %92 {offsets = [1, 0], sizes = [1, 48], strides = [1, 1]} : vector<4x48xf32> to vector<1x48xf32>
    %cst_90 = arith.constant dense<0.000000e+00> : vector<1x120xf32>
    %96 = tpu.matmul %95, %23, %cst_90 {dimension_numbers = #tpu.dot_dimension_numbers<[1], [0], [0], [1], [0, 0, 1, 1], [], []>} : vector<1x48xf32>, vector<48x120xf32>, vector<1x120xf32> -> vector<1x120xf32>
    %97 = arith.addf %94, %96 : vector<1x120xf32>
    %98 = vector.extract_strided_slice %92 {offsets = [2, 0], sizes = [1, 48], strides = [1, 1]} : vector<4x48xf32> to vector<1x48xf32>
    %cst_91 = arith.constant dense<0.000000e+00> : vector<1x120xf32>
    %99 = tpu.matmul %98, %25, %cst_91 {dimension_numbers = #tpu.dot_dimension_numbers<[1], [0], [0], [1], [0, 0, 1, 1], [], []>} : vector<1x48xf32>, vector<48x120xf32>, vector<1x120xf32> -> vector<1x120xf32>
    %100 = arith.addf %97, %99 : vector<1x120xf32>
    %101 = vector.extract_strided_slice %92 {offsets = [3, 0], sizes = [1, 48], strides = [1, 1]} : vector<4x48xf32> to vector<1x48xf32>
    %cst_92 = arith.constant dense<0.000000e+00> : vector<1x120xf32>
    %102 = tpu.matmul %101, %27, %cst_92 {dimension_numbers = #tpu.dot_dimension_numbers<[1], [0], [0], [1], [0, 0, 1, 1], [], []>} : vector<1x48xf32>, vector<48x120xf32>, vector<1x120xf32> -> vector<1x120xf32>
    %103 = arith.addf %100, %102 : vector<1x120xf32>
    %104 = arith.addf %103, %38 : vector<1x120xf32>
    %cst_93 = arith.constant 0.000000e+00 : f32
    %105 = vector.broadcast %cst_93 : f32 to vector<1x120xf32>
    %106 = arith.maximumf %104, %105 : vector<1x120xf32>
    %cst_94 = arith.constant dense<0.000000e+00> : vector<1x60xf32>
    %107 = tpu.matmul %106, %39, %cst_94 {dimension_numbers = #tpu.dot_dimension_numbers<[1], [0], [0], [1], [0, 0, 1, 1], [], []>} : vector<1x120xf32>, vector<120x60xf32>, vector<1x60xf32> -> vector<1x60xf32>
    %108 = arith.addf %107, %40 : vector<1x60xf32>
    %cst_95 = arith.constant 0.000000e+00 : f32
    %109 = vector.broadcast %cst_95 : f32 to vector<1x60xf32>
    %110 = arith.maximumf %108, %109 : vector<1x60xf32>
    %cst_96 = arith.constant dense<0.000000e+00> : vector<1x128xf32>
    %111 = tpu.matmul %110, %41, %cst_96 {dimension_numbers = #tpu.dot_dimension_numbers<[1], [0], [0], [1], [0, 0, 1, 1], [], []>} : vector<1x60xf32>, vector<60x128xf32>, vector<1x128xf32> -> vector<1x128xf32>
    %112 = arith.addf %111, %42 : vector<1x128xf32>
    %c0_97 = arith.constant 0 : index
    %c0_98 = arith.constant 0 : index
    %c0_99 = arith.constant 0 : index
    %113 = vector.load %arg20[%c0_97, %c0_98, %c0_99] : memref<4x1x128xf32, #tpu.memory_space<vmem>>, vector<1x1x128xf32>
    %114 = vector.shape_cast %113 : vector<1x1x128xf32> to vector<1x128xf32>
    %115 = vector.shape_cast %112 : vector<1x128xf32> to vector<1x1x128xf32>
    tpu.vector_store %arg20[%c0_97, %c0_98, %c0_99], %115 {strides = array<i32>} : memref<4x1x128xf32, #tpu.memory_space<vmem>>, vector<1x1x128xf32>,
    %c1_100 = arith.constant 1 : index
    %c0_101 = arith.constant 0 : index
    %c0_102 = arith.constant 0 : index
    %116 = vector.load %arg1[%c1_100, %c0_101, %c0_102] : memref<4x28x28xf32, #tpu.memory_space<vmem>>, vector<1x28x28xf32>
    %117 = vector.shape_cast %116 : vector<1x28x28xf32> to vector<28x28xf32>
    %118 = vector.extract_strided_slice %117 {offsets = [0, 0], sizes = [24, 28], strides = [1, 1]} : vector<28x28xf32> to vector<24x28xf32>
    %cst_103 = arith.constant dense<0.000000e+00> : vector<24x144xf32>
    %119 = tpu.matmul %118, %1, %cst_103 {dimension_numbers = #tpu.dot_dimension_numbers<[1], [0], [0], [1], [0, 0, 1, 1], [], []>} : vector<24x28xf32>, vector<28x144xf32>, vector<24x144xf32> -> vector<24x144xf32>
    %120 = vector.extract_strided_slice %117 {offsets = [1, 0], sizes = [24, 28], strides = [1, 1]} : vector<28x28xf32> to vector<24x28xf32>
    %cst_104 = arith.constant dense<0.000000e+00> : vector<24x144xf32>
    %121 = tpu.matmul %120, %3, %cst_104 {dimension_numbers = #tpu.dot_dimension_numbers<[1], [0], [0], [1], [0, 0, 1, 1], [], []>} : vector<24x28xf32>, vector<28x144xf32>, vector<24x144xf32> -> vector<24x144xf32>
    %122 = arith.addf %119, %121 : vector<24x144xf32>
    %123 = vector.extract_strided_slice %117 {offsets = [2, 0], sizes = [24, 28], strides = [1, 1]} : vector<28x28xf32> to vector<24x28xf32>
    %cst_105 = arith.constant dense<0.000000e+00> : vector<24x144xf32>
    %124 = tpu.matmul %123, %5, %cst_105 {dimension_numbers = #tpu.dot_dimension_numbers<[1], [0], [0], [1], [0, 0, 1, 1], [], []>} : vector<24x28xf32>, vector<28x144xf32>, vector<24x144xf32> -> vector<24x144xf32>
    %125 = arith.addf %122, %124 : vector<24x144xf32>
    %126 = vector.extract_strided_slice %117 {offsets = [3, 0], sizes = [24, 28], strides = [1, 1]} : vector<28x28xf32> to vector<24x28xf32>
    %cst_106 = arith.constant dense<0.000000e+00> : vector<24x144xf32>
    %127 = tpu.matmul %126, %7, %cst_106 {dimension_numbers = #tpu.dot_dimension_numbers<[1], [0], [0], [1], [0, 0, 1, 1], [], []>} : vector<24x28xf32>, vector<28x144xf32>, vector<24x144xf32> -> vector<24x144xf32>
    %128 = arith.addf %125, %127 : vector<24x144xf32>
    %129 = vector.extract_strided_slice %117 {offsets = [4, 0], sizes = [24, 28], strides = [1, 1]} : vector<28x28xf32> to vector<24x28xf32>
    %cst_107 = arith.constant dense<0.000000e+00> : vector<24x144xf32>
    %130 = tpu.matmul %129, %9, %cst_107 {dimension_numbers = #tpu.dot_dimension_numbers<[1], [0], [0], [1], [0, 0, 1, 1], [], []>} : vector<24x28xf32>, vector<28x144xf32>, vector<24x144xf32> -> vector<24x144xf32>
    %131 = arith.addf %128, %130 : vector<24x144xf32>
    %132 = vector.broadcast %28 : vector<1x144xf32> to vector<24x144xf32>
    %133 = arith.addf %131, %132 : vector<24x144xf32>
    %cst_108 = arith.constant 0.000000e+00 : f32
    %134 = vector.broadcast %cst_108 : f32 to vector<24x144xf32>
    %135 = arith.maximumf %133, %134 : vector<24x144xf32>
    %cst_109 = arith.constant dense<0.000000e+00> : vector<12x144xf32>
    %136 = tpu.matmul %30, %135, %cst_109 {dimension_numbers = #tpu.dot_dimension_numbers<[1], [0], [0], [1], [0, 0, 1, 1], [], []>} : vector<12x24xf32>, vector<24x144xf32>, vector<12x144xf32> -> vector<12x144xf32>
    %cst_110 = arith.constant dense<0.000000e+00> : vector<12x144xf32>
    %137 = tpu.matmul %31, %135, %cst_110 {dimension_numbers = #tpu.dot_dimension_numbers<[1], [0], [0], [1], [0, 0, 1, 1], [], []>} : vector<12x24xf32>, vector<24x144xf32>, vector<12x144xf32> -> vector<12x144xf32>
    %138 = arith.maximumf %136, %137 : vector<12x144xf32>
    %cst_111 = arith.constant dense<0.000000e+00> : vector<12x72xf32>
    %139 = tpu.matmul %138, %32, %cst_111 {dimension_numbers = #tpu.dot_dimension_numbers<[1], [0], [0], [1], [0, 0, 1, 1], [], []>} : vector<12x144xf32>, vector<144x72xf32>, vector<12x72xf32> -> vector<12x72xf32>
    %cst_112 = arith.constant dense<0.000000e+00> : vector<12x72xf32>
    %140 = tpu.matmul %138, %33, %cst_112 {dimension_numbers = #tpu.dot_dimension_numbers<[1], [0], [0], [1], [0, 0, 1, 1], [], []>} : vector<12x144xf32>, vector<144x72xf32>, vector<12x72xf32> -> vector<12x72xf32>
    %141 = arith.maximumf %139, %140 : vector<12x72xf32>
    %142 = vector.extract_strided_slice %141 {offsets = [0, 0], sizes = [8, 72], strides = [1, 1]} : vector<12x72xf32> to vector<8x72xf32>
    %cst_113 = arith.constant dense<0.000000e+00> : vector<8x96xf32>
    %143 = tpu.matmul %142, %11, %cst_113 {dimension_numbers = #tpu.dot_dimension_numbers<[1], [0], [0], [1], [0, 0, 1, 1], [], []>} : vector<8x72xf32>, vector<72x96xf32>, vector<8x96xf32> -> vector<8x96xf32>
    %144 = vector.extract_strided_slice %141 {offsets = [1, 0], sizes = [8, 72], strides = [1, 1]} : vector<12x72xf32> to vector<8x72xf32>
    %cst_114 = arith.constant dense<0.000000e+00> : vector<8x96xf32>
    %145 = tpu.matmul %144, %13, %cst_114 {dimension_numbers = #tpu.dot_dimension_numbers<[1], [0], [0], [1], [0, 0, 1, 1], [], []>} : vector<8x72xf32>, vector<72x96xf32>, vector<8x96xf32> -> vector<8x96xf32>
    %146 = arith.addf %143, %145 : vector<8x96xf32>
    %147 = vector.extract_strided_slice %141 {offsets = [2, 0], sizes = [8, 72], strides = [1, 1]} : vector<12x72xf32> to vector<8x72xf32>
    %cst_115 = arith.constant dense<0.000000e+00> : vector<8x96xf32>
    %148 = tpu.matmul %147, %15, %cst_115 {dimension_numbers = #tpu.dot_dimension_numbers<[1], [0], [0], [1], [0, 0, 1, 1], [], []>} : vector<8x72xf32>, vector<72x96xf32>, vector<8x96xf32> -> vector<8x96xf32>
    %149 = arith.addf %146, %148 : vector<8x96xf32>
    %150 = vector.extract_strided_slice %141 {offsets = [3, 0], sizes = [8, 72], strides = [1, 1]} : vector<12x72xf32> to vector<8x72xf32>
    %cst_116 = arith.constant dense<0.000000e+00> : vector<8x96xf32>
    %151 = tpu.matmul %150, %17, %cst_116 {dimension_numbers = #tpu.dot_dimension_numbers<[1], [0], [0], [1], [0, 0, 1, 1], [], []>} : vector<8x72xf32>, vector<72x96xf32>, vector<8x96xf32> -> vector<8x96xf32>
    %152 = arith.addf %149, %151 : vector<8x96xf32>
    %153 = vector.extract_strided_slice %141 {offsets = [4, 0], sizes = [8, 72], strides = [1, 1]} : vector<12x72xf32> to vector<8x72xf32>
    %cst_117 = arith.constant dense<0.000000e+00> : vector<8x96xf32>
    %154 = tpu.matmul %153, %19, %cst_117 {dimension_numbers = #tpu.dot_dimension_numbers<[1], [0], [0], [1], [0, 0, 1, 1], [], []>} : vector<8x72xf32>, vector<72x96xf32>, vector<8x96xf32> -> vector<8x96xf32>
    %155 = arith.addf %152, %154 : vector<8x96xf32>
    %156 = vector.broadcast %29 : vector<1x96xf32> to vector<8x96xf32>
    %157 = arith.addf %155, %156 : vector<8x96xf32>
    %cst_118 = arith.constant 0.000000e+00 : f32
    %158 = vector.broadcast %cst_118 : f32 to vector<8x96xf32>
    %159 = arith.maximumf %157, %158 : vector<8x96xf32>
    %cst_119 = arith.constant dense<0.000000e+00> : vector<4x96xf32>
    %160 = tpu.matmul %34, %159, %cst_119 {dimension_numbers = #tpu.dot_dimension_numbers<[1], [0], [0], [1], [0, 0, 1, 1], [], []>} : vector<4x8xf32>, vector<8x96xf32>, vector<4x96xf32> -> vector<4x96xf32>
    %cst_120 = arith.constant dense<0.000000e+00> : vector<4x96xf32>
    %161 = tpu.matmul %35, %159, %cst_120 {dimension_numbers = #tpu.dot_dimension_numbers<[1], [0], [0], [1], [0, 0, 1, 1], [], []>} : vector<4x8xf32>, vector<8x96xf32>, vector<4x96xf32> -> vector<4x96xf32>
    %162 = arith.maximumf %160, %161 : vector<4x96xf32>
    %cst_121 = arith.constant dense<0.000000e+00> : vector<4x48xf32>
    %163 = tpu.matmul %162, %36, %cst_121 {dimension_numbers = #tpu.dot_dimension_numbers<[1], [0], [0], [1], [0, 0, 1, 1], [], []>} : vector<4x96xf32>, vector<96x48xf32>, vector<4x48xf32> -> vector<4x48xf32>
    %cst_122 = arith.constant dense<0.000000e+00> : vector<4x48xf32>
    %164 = tpu.matmul %162, %37, %cst_122 {dimension_numbers = #tpu.dot_dimension_numbers<[1], [0], [0], [1], [0, 0, 1, 1], [], []>} : vector<4x96xf32>, vector<96x48xf32>, vector<4x48xf32> -> vector<4x48xf32>
    %165 = arith.maximumf %163, %164 : vector<4x48xf32>
    %166 = vector.extract_strided_slice %165 {offsets = [0, 0], sizes = [1, 48], strides = [1, 1]} : vector<4x48xf32> to vector<1x48xf32>
    %cst_123 = arith.constant dense<0.000000e+00> : vector<1x120xf32>
    %167 = tpu.matmul %166, %21, %cst_123 {dimension_numbers = #tpu.dot_dimension_numbers<[1], [0], [0], [1], [0, 0, 1, 1], [], []>} : vector<1x48xf32>, vector<48x120xf32>, vector<1x120xf32> -> vector<1x120xf32>
    %168 = vector.extract_strided_slice %165 {offsets = [1, 0], sizes = [1, 48], strides = [1, 1]} : vector<4x48xf32> to vector<1x48xf32>
    %cst_124 = arith.constant dense<0.000000e+00> : vector<1x120xf32>
    %169 = tpu.matmul %168, %23, %cst_124 {dimension_numbers = #tpu.dot_dimension_numbers<[1], [0], [0], [1], [0, 0, 1, 1], [], []>} : vector<1x48xf32>, vector<48x120xf32>, vector<1x120xf32> -> vector<1x120xf32>
    %170 = arith.addf %167, %169 : vector<1x120xf32>
    %171 = vector.extract_strided_slice %165 {offsets = [2, 0], sizes = [1, 48], strides = [1, 1]} : vector<4x48xf32> to vector<1x48xf32>
    %cst_125 = arith.constant dense<0.000000e+00> : vector<1x120xf32>
    %172 = tpu.matmul %171, %25, %cst_125 {dimension_numbers = #tpu.dot_dimension_numbers<[1], [0], [0], [1], [0, 0, 1, 1], [], []>} : vector<1x48xf32>, vector<48x120xf32>, vector<1x120xf32> -> vector<1x120xf32>
    %173 = arith.addf %170, %172 : vector<1x120xf32>
    %174 = vector.extract_strided_slice %165 {offsets = [3, 0], sizes = [1, 48], strides = [1, 1]} : vector<4x48xf32> to vector<1x48xf32>
    %cst_126 = arith.constant dense<0.000000e+00> : vector<1x120xf32>
    %175 = tpu.matmul %174, %27, %cst_126 {dimension_numbers = #tpu.dot_dimension_numbers<[1], [0], [0], [1], [0, 0, 1, 1], [], []>} : vector<1x48xf32>, vector<48x120xf32>, vector<1x120xf32> -> vector<1x120xf32>
    %176 = arith.addf %173, %175 : vector<1x120xf32>
    %177 = arith.addf %176, %38 : vector<1x120xf32>
    %cst_127 = arith.constant 0.000000e+00 : f32
    %178 = vector.broadcast %cst_127 : f32 to vector<1x120xf32>
    %179 = arith.maximumf %177, %178 : vector<1x120xf32>
    %cst_128 = arith.constant dense<0.000000e+00> : vector<1x60xf32>
    %180 = tpu.matmul %179, %39, %cst_128 {dimension_numbers = #tpu.dot_dimension_numbers<[1], [0], [0], [1], [0, 0, 1, 1], [], []>} : vector<1x120xf32>, vector<120x60xf32>, vector<1x60xf32> -> vector<1x60xf32>
    %181 = arith.addf %180, %40 : vector<1x60xf32>
    %cst_129 = arith.constant 0.000000e+00 : f32
    %182 = vector.broadcast %cst_129 : f32 to vector<1x60xf32>
    %183 = arith.maximumf %181, %182 : vector<1x60xf32>
    %cst_130 = arith.constant dense<0.000000e+00> : vector<1x128xf32>
    %184 = tpu.matmul %183, %41, %cst_130 {dimension_numbers = #tpu.dot_dimension_numbers<[1], [0], [0], [1], [0, 0, 1, 1], [], []>} : vector<1x60xf32>, vector<60x128xf32>, vector<1x128xf32> -> vector<1x128xf32>
    %185 = arith.addf %184, %42 : vector<1x128xf32>
    %c1_131 = arith.constant 1 : index
    %c0_132 = arith.constant 0 : index
    %c0_133 = arith.constant 0 : index
    %186 = vector.load %arg20[%c1_131, %c0_132, %c0_133] : memref<4x1x128xf32, #tpu.memory_space<vmem>>, vector<1x1x128xf32>
    %187 = vector.shape_cast %186 : vector<1x1x128xf32> to vector<1x128xf32>
    %188 = vector.shape_cast %185 : vector<1x128xf32> to vector<1x1x128xf32>
    tpu.vector_store %arg20[%c1_131, %c0_132, %c0_133], %188 {strides = array<i32>} : memref<4x1x128xf32, #tpu.memory_space<vmem>>, vector<1x1x128xf32>,
    %c2_134 = arith.constant 2 : index
    %c0_135 = arith.constant 0 : index
    %c0_136 = arith.constant 0 : index
    %189 = vector.load %arg1[%c2_134, %c0_135, %c0_136] : memref<4x28x28xf32, #tpu.memory_space<vmem>>, vector<1x28x28xf32>
    %190 = vector.shape_cast %189 : vector<1x28x28xf32> to vector<28x28xf32>
    %191 = vector.extract_strided_slice %190 {offsets = [0, 0], sizes = [24, 28], strides = [1, 1]} : vector<28x28xf32> to vector<24x28xf32>
    %cst_137 = arith.constant dense<0.000000e+00> : vector<24x144xf32>
    %192 = tpu.matmul %191, %1, %cst_137 {dimension_numbers = #tpu.dot_dimension_numbers<[1], [0], [0], [1], [0, 0, 1, 1], [], []>} : vector<24x28xf32>, vector<28x144xf32>, vector<24x144xf32> -> vector<24x144xf32>
    %193 = vector.extract_strided_slice %190 {offsets = [1, 0], sizes = [24, 28], strides = [1, 1]} : vector<28x28xf32> to vector<24x28xf32>
    %cst_138 = arith.constant dense<0.000000e+00> : vector<24x144xf32>
    %194 = tpu.matmul %193, %3, %cst_138 {dimension_numbers = #tpu.dot_dimension_numbers<[1], [0], [0], [1], [0, 0, 1, 1], [], []>} : vector<24x28xf32>, vector<28x144xf32>, vector<24x144xf32> -> vector<24x144xf32>
    %195 = arith.addf %192, %194 : vector<24x144xf32>
    %196 = vector.extract_strided_slice %190 {offsets = [2, 0], sizes = [24, 28], strides = [1, 1]} : vector<28x28xf32> to vector<24x28xf32>
    %cst_139 = arith.constant dense<0.000000e+00> : vector<24x144xf32>
    %197 = tpu.matmul %196, %5, %cst_139 {dimension_numbers = #tpu.dot_dimension_numbers<[1], [0], [0], [1], [0, 0, 1, 1], [], []>} : vector<24x28xf32>, vector<28x144xf32>, vector<24x144xf32> -> vector<24x144xf32>
    %198 = arith.addf %195, %197 : vector<24x144xf32>
    %199 = vector.extract_strided_slice %190 {offsets = [3, 0], sizes = [24, 28], strides = [1, 1]} : vector<28x28xf32> to vector<24x28xf32>
    %cst_140 = arith.constant dense<0.000000e+00> : vector<24x144xf32>
    %200 = tpu.matmul %199, %7, %cst_140 {dimension_numbers = #tpu.dot_dimension_numbers<[1], [0], [0], [1], [0, 0, 1, 1], [], []>} : vector<24x28xf32>, vector<28x144xf32>, vector<24x144xf32> -> vector<24x144xf32>
    %201 = arith.addf %198, %200 : vector<24x144xf32>
    %202 = vector.extract_strided_slice %190 {offsets = [4, 0], sizes = [24, 28], strides = [1, 1]} : vector<28x28xf32> to vector<24x28xf32>
    %cst_141 = arith.constant dense<0.000000e+00> : vector<24x144xf32>
    %203 = tpu.matmul %202, %9, %cst_141 {dimension_numbers = #tpu.dot_dimension_numbers<[1], [0], [0], [1], [0, 0, 1, 1], [], []>} : vector<24x28xf32>, vector<28x144xf32>, vector<24x144xf32> -> vector<24x144xf32>
    %204 = arith.addf %201, %203 : vector<24x144xf32>
    %205 = vector.broadcast %28 : vector<1x144xf32> to vector<24x144xf32>
    %206 = arith.addf %204, %205 : vector<24x144xf32>
    %cst_142 = arith.constant 0.000000e+00 : f32
    %207 = vector.broadcast %cst_142 : f32 to vector<24x144xf32>
    %208 = arith.maximumf %206, %207 : vector<24x144xf32>
    %cst_143 = arith.constant dense<0.000000e+00> : vector<12x144xf32>
    %209 = tpu.matmul %30, %208, %cst_143 {dimension_numbers = #tpu.dot_dimension_numbers<[1], [0], [0], [1], [0, 0, 1, 1], [], []>} : vector<12x24xf32>, vector<24x144xf32>, vector<12x144xf32> -> vector<12x144xf32>
    %cst_144 = arith.constant dense<0.000000e+00> : vector<12x144xf32>
    %210 = tpu.matmul %31, %208, %cst_144 {dimension_numbers = #tpu.dot_dimension_numbers<[1], [0], [0], [1], [0, 0, 1, 1], [], []>} : vector<12x24xf32>, vector<24x144xf32>, vector<12x144xf32> -> vector<12x144xf32>
    %211 = arith.maximumf %209, %210 : vector<12x144xf32>
    %cst_145 = arith.constant dense<0.000000e+00> : vector<12x72xf32>
    %212 = tpu.matmul %211, %32, %cst_145 {dimension_numbers = #tpu.dot_dimension_numbers<[1], [0], [0], [1], [0, 0, 1, 1], [], []>} : vector<12x144xf32>, vector<144x72xf32>, vector<12x72xf32> -> vector<12x72xf32>
    %cst_146 = arith.constant dense<0.000000e+00> : vector<12x72xf32>
    %213 = tpu.matmul %211, %33, %cst_146 {dimension_numbers = #tpu.dot_dimension_numbers<[1], [0], [0], [1], [0, 0, 1, 1], [], []>} : vector<12x144xf32>, vector<144x72xf32>, vector<12x72xf32> -> vector<12x72xf32>
    %214 = arith.maximumf %212, %213 : vector<12x72xf32>
    %215 = vector.extract_strided_slice %214 {offsets = [0, 0], sizes = [8, 72], strides = [1, 1]} : vector<12x72xf32> to vector<8x72xf32>
    %cst_147 = arith.constant dense<0.000000e+00> : vector<8x96xf32>
    %216 = tpu.matmul %215, %11, %cst_147 {dimension_numbers = #tpu.dot_dimension_numbers<[1], [0], [0], [1], [0, 0, 1, 1], [], []>} : vector<8x72xf32>, vector<72x96xf32>, vector<8x96xf32> -> vector<8x96xf32>
    %217 = vector.extract_strided_slice %214 {offsets = [1, 0], sizes = [8, 72], strides = [1, 1]} : vector<12x72xf32> to vector<8x72xf32>
    %cst_148 = arith.constant dense<0.000000e+00> : vector<8x96xf32>
    %218 = tpu.matmul %217, %13, %cst_148 {dimension_numbers = #tpu.dot_dimension_numbers<[1], [0], [0], [1], [0, 0, 1, 1], [], []>} : vector<8x72xf32>, vector<72x96xf32>, vector<8x96xf32> -> vector<8x96xf32>
    %219 = arith.addf %216, %218 : vector<8x96xf32>
    %220 = vector.extract_strided_slice %214 {offsets = [2, 0], sizes = [8, 72], strides = [1, 1]} : vector<12x72xf32> to vector<8x72xf32>
    %cst_149 = arith.constant dense<0.000000e+00> : vector<8x96xf32>
    %221 = tpu.matmul %220, %15, %cst_149 {dimension_numbers = #tpu.dot_dimension_numbers<[1], [0], [0], [1], [0, 0, 1, 1], [], []>} : vector<8x72xf32>, vector<72x96xf32>, vector<8x96xf32> -> vector<8x96xf32>
    %222 = arith.addf %219, %221 : vector<8x96xf32>
    %223 = vector.extract_strided_slice %214 {offsets = [3, 0], sizes = [8, 72], strides = [1, 1]} : vector<12x72xf32> to vector<8x72xf32>
    %cst_150 = arith.constant dense<0.000000e+00> : vector<8x96xf32>
    %224 = tpu.matmul %223, %17, %cst_150 {dimension_numbers = #tpu.dot_dimension_numbers<[1], [0], [0], [1], [0, 0, 1, 1], [], []>} : vector<8x72xf32>, vector<72x96xf32>, vector<8x96xf32> -> vector<8x96xf32>
    %225 = arith.addf %222, %224 : vector<8x96xf32>
    %226 = vector.extract_strided_slice %214 {offsets = [4, 0], sizes = [8, 72], strides = [1, 1]} : vector<12x72xf32> to vector<8x72xf32>
    %cst_151 = arith.constant dense<0.000000e+00> : vector<8x96xf32>
    %227 = tpu.matmul %226, %19, %cst_151 {dimension_numbers = #tpu.dot_dimension_numbers<[1], [0], [0], [1], [0, 0, 1, 1], [], []>} : vector<8x72xf32>, vector<72x96xf32>, vector<8x96xf32> -> vector<8x96xf32>
    %228 = arith.addf %225, %227 : vector<8x96xf32>
    %229 = vector.broadcast %29 : vector<1x96xf32> to vector<8x96xf32>
    %230 = arith.addf %228, %229 : vector<8x96xf32>
    %cst_152 = arith.constant 0.000000e+00 : f32
    %231 = vector.broadcast %cst_152 : f32 to vector<8x96xf32>
    %232 = arith.maximumf %230, %231 : vector<8x96xf32>
    %cst_153 = arith.constant dense<0.000000e+00> : vector<4x96xf32>
    %233 = tpu.matmul %34, %232, %cst_153 {dimension_numbers = #tpu.dot_dimension_numbers<[1], [0], [0], [1], [0, 0, 1, 1], [], []>} : vector<4x8xf32>, vector<8x96xf32>, vector<4x96xf32> -> vector<4x96xf32>
    %cst_154 = arith.constant dense<0.000000e+00> : vector<4x96xf32>
    %234 = tpu.matmul %35, %232, %cst_154 {dimension_numbers = #tpu.dot_dimension_numbers<[1], [0], [0], [1], [0, 0, 1, 1], [], []>} : vector<4x8xf32>, vector<8x96xf32>, vector<4x96xf32> -> vector<4x96xf32>
    %235 = arith.maximumf %233, %234 : vector<4x96xf32>
    %cst_155 = arith.constant dense<0.000000e+00> : vector<4x48xf32>
    %236 = tpu.matmul %235, %36, %cst_155 {dimension_numbers = #tpu.dot_dimension_numbers<[1], [0], [0], [1], [0, 0, 1, 1], [], []>} : vector<4x96xf32>, vector<96x48xf32>, vector<4x48xf32> -> vector<4x48xf32>
    %cst_156 = arith.constant dense<0.000000e+00> : vector<4x48xf32>
    %237 = tpu.matmul %235, %37, %cst_156 {dimension_numbers = #tpu.dot_dimension_numbers<[1], [0], [0], [1], [0, 0, 1, 1], [], []>} : vector<4x96xf32>, vector<96x48xf32>, vector<4x48xf32> -> vector<4x48xf32>
    %238 = arith.maximumf %236, %237 : vector<4x48xf32>
    %239 = vector.extract_strided_slice %238 {offsets = [0, 0], sizes = [1, 48], strides = [1, 1]} : vector<4x48xf32> to vector<1x48xf32>
    %cst_157 = arith.constant dense<0.000000e+00> : vector<1x120xf32>
    %240 = tpu.matmul %239, %21, %cst_157 {dimension_numbers = #tpu.dot_dimension_numbers<[1], [0], [0], [1], [0, 0, 1, 1], [], []>} : vector<1x48xf32>, vector<48x120xf32>, vector<1x120xf32> -> vector<1x120xf32>
    %241 = vector.extract_strided_slice %238 {offsets = [1, 0], sizes = [1, 48], strides = [1, 1]} : vector<4x48xf32> to vector<1x48xf32>
    %cst_158 = arith.constant dense<0.000000e+00> : vector<1x120xf32>
    %242 = tpu.matmul %241, %23, %cst_158 {dimension_numbers = #tpu.dot_dimension_numbers<[1], [0], [0], [1], [0, 0, 1, 1], [], []>} : vector<1x48xf32>, vector<48x120xf32>, vector<1x120xf32> -> vector<1x120xf32>
    %243 = arith.addf %240, %242 : vector<1x120xf32>
    %244 = vector.extract_strided_slice %238 {offsets = [2, 0], sizes = [1, 48], strides = [1, 1]} : vector<4x48xf32> to vector<1x48xf32>
    %cst_159 = arith.constant dense<0.000000e+00> : vector<1x120xf32>
    %245 = tpu.matmul %244, %25, %cst_159 {dimension_numbers = #tpu.dot_dimension_numbers<[1], [0], [0], [1], [0, 0, 1, 1], [], []>} : vector<1x48xf32>, vector<48x120xf32>, vector<1x120xf32> -> vector<1x120xf32>
    %246 = arith.addf %243, %245 : vector<1x120xf32>
    %247 = vector.extract_strided_slice %238 {offsets = [3, 0], sizes = [1, 48], strides = [1, 1]} : vector<4x48xf32> to vector<1x48xf32>
    %cst_160 = arith.constant dense<0.000000e+00> : vector<1x120xf32>
    %248 = tpu.matmul %247, %27, %cst_160 {dimension_numbers = #tpu.dot_dimension_numbers<[1], [0], [0], [1], [0, 0, 1, 1], [], []>} : vector<1x48xf32>, vector<48x120xf32>, vector<1x120xf32> -> vector<1x120xf32>
    %249 = arith.addf %246, %248 : vector<1x120xf32>
    %250 = arith.addf %249, %38 : vector<1x120xf32>
    %cst_161 = arith.constant 0.000000e+00 : f32
    %251 = vector.broadcast %cst_161 : f32 to vector<1x120xf32>
    %252 = arith.maximumf %250, %251 : vector<1x120xf32>
    %cst_162 = arith.constant dense<0.000000e+00> : vector<1x60xf32>
    %253 = tpu.matmul %252, %39, %cst_162 {dimension_numbers = #tpu.dot_dimension_numbers<[1], [0], [0], [1], [0, 0, 1, 1], [], []>} : vector<1x120xf32>, vector<120x60xf32>, vector<1x60xf32> -> vector<1x60xf32>
    %254 = arith.addf %253, %40 : vector<1x60xf32>
    %cst_163 = arith.constant 0.000000e+00 : f32
    %255 = vector.broadcast %cst_163 : f32 to vector<1x60xf32>
    %256 = arith.maximumf %254, %255 : vector<1x60xf32>
    %cst_164 = arith.constant dense<0.000000e+00> : vector<1x128xf32>
    %257 = tpu.matmul %256, %41, %cst_164 {dimension_numbers = #tpu.dot_dimension_numbers<[1], [0], [0], [1], [0, 0, 1, 1], [], []>} : vector<1x60xf32>, vector<60x128xf32>, vector<1x128xf32> -> vector<1x128xf32>
    %258 = arith.addf %257, %42 : vector<1x128xf32>
    %c2_165 = arith.constant 2 : index
    %c0_166 = arith.constant 0 : index
    %c0_167 = arith.constant 0 : index
    %259 = vector.load %arg20[%c2_165, %c0_166, %c0_167] : memref<4x1x128xf32, #tpu.memory_space<vmem>>, vector<1x1x128xf32>
    %260 = vector.shape_cast %259 : vector<1x1x128xf32> to vector<1x128xf32>
    %261 = vector.shape_cast %258 : vector<1x128xf32> to vector<1x1x128xf32>
    tpu.vector_store %arg20[%c2_165, %c0_166, %c0_167], %261 {strides = array<i32>} : memref<4x1x128xf32, #tpu.memory_space<vmem>>, vector<1x1x128xf32>,
    %c3_168 = arith.constant 3 : index
    %c0_169 = arith.constant 0 : index
    %c0_170 = arith.constant 0 : index
    %262 = vector.load %arg1[%c3_168, %c0_169, %c0_170] : memref<4x28x28xf32, #tpu.memory_space<vmem>>, vector<1x28x28xf32>
    %263 = vector.shape_cast %262 : vector<1x28x28xf32> to vector<28x28xf32>
    %264 = vector.extract_strided_slice %263 {offsets = [0, 0], sizes = [24, 28], strides = [1, 1]} : vector<28x28xf32> to vector<24x28xf32>
    %cst_171 = arith.constant dense<0.000000e+00> : vector<24x144xf32>
    %265 = tpu.matmul %264, %1, %cst_171 {dimension_numbers = #tpu.dot_dimension_numbers<[1], [0], [0], [1], [0, 0, 1, 1], [], []>} : vector<24x28xf32>, vector<28x144xf32>, vector<24x144xf32> -> vector<24x144xf32>
    %266 = vector.extract_strided_slice %263 {offsets = [1, 0], sizes = [24, 28], strides = [1, 1]} : vector<28x28xf32> to vector<24x28xf32>
    %cst_172 = arith.constant dense<0.000000e+00> : vector<24x144xf32>
    %267 = tpu.matmul %266, %3, %cst_172 {dimension_numbers = #tpu.dot_dimension_numbers<[1], [0], [0], [1], [0, 0, 1, 1], [], []>} : vector<24x28xf32>, vector<28x144xf32>, vector<24x144xf32> -> vector<24x144xf32>
    %268 = arith.addf %265, %267 : vector<24x144xf32>
    %269 = vector.extract_strided_slice %263 {offsets = [2, 0], sizes = [24, 28], strides = [1, 1]} : vector<28x28xf32> to vector<24x28xf32>
    %cst_173 = arith.constant dense<0.000000e+00> : vector<24x144xf32>
    %270 = tpu.matmul %269, %5, %cst_173 {dimension_numbers = #tpu.dot_dimension_numbers<[1], [0], [0], [1], [0, 0, 1, 1], [], []>} : vector<24x28xf32>, vector<28x144xf32>, vector<24x144xf32> -> vector<24x144xf32>
    %271 = arith.addf %268, %270 : vector<24x144xf32>
    %272 = vector.extract_strided_slice %263 {offsets = [3, 0], sizes = [24, 28], strides = [1, 1]} : vector<28x28xf32> to vector<24x28xf32>
    %cst_174 = arith.constant dense<0.000000e+00> : vector<24x144xf32>
    %273 = tpu.matmul %272, %7, %cst_174 {dimension_numbers = #tpu.dot_dimension_numbers<[1], [0], [0], [1], [0, 0, 1, 1], [], []>} : vector<24x28xf32>, vector<28x144xf32>, vector<24x144xf32> -> vector<24x144xf32>
    %274 = arith.addf %271, %273 : vector<24x144xf32>
    %275 = vector.extract_strided_slice %263 {offsets = [4, 0], sizes = [24, 28], strides = [1, 1]} : vector<28x28xf32> to vector<24x28xf32>
    %cst_175 = arith.constant dense<0.000000e+00> : vector<24x144xf32>
    %276 = tpu.matmul %275, %9, %cst_175 {dimension_numbers = #tpu.dot_dimension_numbers<[1], [0], [0], [1], [0, 0, 1, 1], [], []>} : vector<24x28xf32>, vector<28x144xf32>, vector<24x144xf32> -> vector<24x144xf32>
    %277 = arith.addf %274, %276 : vector<24x144xf32>
    %278 = vector.broadcast %28 : vector<1x144xf32> to vector<24x144xf32>
    %279 = arith.addf %277, %278 : vector<24x144xf32>
    %cst_176 = arith.constant 0.000000e+00 : f32
    %280 = vector.broadcast %cst_176 : f32 to vector<24x144xf32>
    %281 = arith.maximumf %279, %280 : vector<24x144xf32>
    %cst_177 = arith.constant dense<0.000000e+00> : vector<12x144xf32>
    %282 = tpu.matmul %30, %281, %cst_177 {dimension_numbers = #tpu.dot_dimension_numbers<[1], [0], [0], [1], [0, 0, 1, 1], [], []>} : vector<12x24xf32>, vector<24x144xf32>, vector<12x144xf32> -> vector<12x144xf32>
    %cst_178 = arith.constant dense<0.000000e+00> : vector<12x144xf32>
    %283 = tpu.matmul %31, %281, %cst_178 {dimension_numbers = #tpu.dot_dimension_numbers<[1], [0], [0], [1], [0, 0, 1, 1], [], []>} : vector<12x24xf32>, vector<24x144xf32>, vector<12x144xf32> -> vector<12x144xf32>
    %284 = arith.maximumf %282, %283 : vector<12x144xf32>
    %cst_179 = arith.constant dense<0.000000e+00> : vector<12x72xf32>
    %285 = tpu.matmul %284, %32, %cst_179 {dimension_numbers = #tpu.dot_dimension_numbers<[1], [0], [0], [1], [0, 0, 1, 1], [], []>} : vector<12x144xf32>, vector<144x72xf32>, vector<12x72xf32> -> vector<12x72xf32>
    %cst_180 = arith.constant dense<0.000000e+00> : vector<12x72xf32>
    %286 = tpu.matmul %284, %33, %cst_180 {dimension_numbers = #tpu.dot_dimension_numbers<[1], [0], [0], [1], [0, 0, 1, 1], [], []>} : vector<12x144xf32>, vector<144x72xf32>, vector<12x72xf32> -> vector<12x72xf32>
    %287 = arith.maximumf %285, %286 : vector<12x72xf32>
    %288 = vector.extract_strided_slice %287 {offsets = [0, 0], sizes = [8, 72], strides = [1, 1]} : vector<12x72xf32> to vector<8x72xf32>
    %cst_181 = arith.constant dense<0.000000e+00> : vector<8x96xf32>
    %289 = tpu.matmul %288, %11, %cst_181 {dimension_numbers = #tpu.dot_dimension_numbers<[1], [0], [0], [1], [0, 0, 1, 1], [], []>} : vector<8x72xf32>, vector<72x96xf32>, vector<8x96xf32> -> vector<8x96xf32>
    %290 = vector.extract_strided_slice %287 {offsets = [1, 0], sizes = [8, 72], strides = [1, 1]} : vector<12x72xf32> to vector<8x72xf32>
    %cst_182 = arith.constant dense<0.000000e+00> : vector<8x96xf32>
    %291 = tpu.matmul %290, %13, %cst_182 {dimension_numbers = #tpu.dot_dimension_numbers<[1], [0], [0], [1], [0, 0, 1, 1], [], []>} : vector<8x72xf32>, vector<72x96xf32>, vector<8x96xf32> -> vector<8x96xf32>
    %292 = arith.addf %289, %291 : vector<8x96xf32>
    %293 = vector.extract_strided_slice %287 {offsets = [2, 0], sizes = [8, 72], strides = [1, 1]} : vector<12x72xf32> to vector<8x72xf32>
    %cst_183 = arith.constant dense<0.000000e+00> : vector<8x96xf32>
    %294 = tpu.matmul %293, %15, %cst_183 {dimension_numbers = #tpu.dot_dimension_numbers<[1], [0], [0], [1], [0, 0, 1, 1], [], []>} : vector<8x72xf32>, vector<72x96xf32>, vector<8x96xf32> -> vector<8x96xf32>
    %295 = arith.addf %292, %294 : vector<8x96xf32>
    %296 = vector.extract_strided_slice %287 {offsets = [3, 0], sizes = [8, 72], strides = [1, 1]} : vector<12x72xf32> to vector<8x72xf32>
    %cst_184 = arith.constant dense<0.000000e+00> : vector<8x96xf32>
    %297 = tpu.matmul %296, %17, %cst_184 {dimension_numbers = #tpu.dot_dimension_numbers<[1], [0], [0], [1], [0, 0, 1, 1], [], []>} : vector<8x72xf32>, vector<72x96xf32>, vector<8x96xf32> -> vector<8x96xf32>
    %298 = arith.addf %295, %297 : vector<8x96xf32>
    %299 = vector.extract_strided_slice %287 {offsets = [4, 0], sizes = [8, 72], strides = [1, 1]} : vector<12x72xf32> to vector<8x72xf32>
    %cst_185 = arith.constant dense<0.000000e+00> : vector<8x96xf32>
    %300 = tpu.matmul %299, %19, %cst_185 {dimension_numbers = #tpu.dot_dimension_numbers<[1], [0], [0], [1], [0, 0, 1, 1], [], []>} : vector<8x72xf32>, vector<72x96xf32>, vector<8x96xf32> -> vector<8x96xf32>
    %301 = arith.addf %298, %300 : vector<8x96xf32>
    %302 = vector.broadcast %29 : vector<1x96xf32> to vector<8x96xf32>
    %303 = arith.addf %301, %302 : vector<8x96xf32>
    %cst_186 = arith.constant 0.000000e+00 : f32
    %304 = vector.broadcast %cst_186 : f32 to vector<8x96xf32>
    %305 = arith.maximumf %303, %304 : vector<8x96xf32>
    %cst_187 = arith.constant dense<0.000000e+00> : vector<4x96xf32>
    %306 = tpu.matmul %34, %305, %cst_187 {dimension_numbers = #tpu.dot_dimension_numbers<[1], [0], [0], [1], [0, 0, 1, 1], [], []>} : vector<4x8xf32>, vector<8x96xf32>, vector<4x96xf32> -> vector<4x96xf32>
    %cst_188 = arith.constant dense<0.000000e+00> : vector<4x96xf32>
    %307 = tpu.matmul %35, %305, %cst_188 {dimension_numbers = #tpu.dot_dimension_numbers<[1], [0], [0], [1], [0, 0, 1, 1], [], []>} : vector<4x8xf32>, vector<8x96xf32>, vector<4x96xf32> -> vector<4x96xf32>
    %308 = arith.maximumf %306, %307 : vector<4x96xf32>
    %cst_189 = arith.constant dense<0.000000e+00> : vector<4x48xf32>
    %309 = tpu.matmul %308, %36, %cst_189 {dimension_numbers = #tpu.dot_dimension_numbers<[1], [0], [0], [1], [0, 0, 1, 1], [], []>} : vector<4x96xf32>, vector<96x48xf32>, vector<4x48xf32> -> vector<4x48xf32>
    %cst_190 = arith.constant dense<0.000000e+00> : vector<4x48xf32>
    %310 = tpu.matmul %308, %37, %cst_190 {dimension_numbers = #tpu.dot_dimension_numbers<[1], [0], [0], [1], [0, 0, 1, 1], [], []>} : vector<4x96xf32>, vector<96x48xf32>, vector<4x48xf32> -> vector<4x48xf32>
    %311 = arith.maximumf %309, %310 : vector<4x48xf32>
    %312 = vector.extract_strided_slice %311 {offsets = [0, 0], sizes = [1, 48], strides = [1, 1]} : vector<4x48xf32> to vector<1x48xf32>
    %cst_191 = arith.constant dense<0.000000e+00> : vector<1x120xf32>
    %313 = tpu.matmul %312, %21, %cst_191 {dimension_numbers = #tpu.dot_dimension_numbers<[1], [0], [0], [1], [0, 0, 1, 1], [], []>} : vector<1x48xf32>, vector<48x120xf32>, vector<1x120xf32> -> vector<1x120xf32>
    %314 = vector.extract_strided_slice %311 {offsets = [1, 0], sizes = [1, 48], strides = [1, 1]} : vector<4x48xf32> to vector<1x48xf32>
    %cst_192 = arith.constant dense<0.000000e+00> : vector<1x120xf32>
    %315 = tpu.matmul %314, %23, %cst_192 {dimension_numbers = #tpu.dot_dimension_numbers<[1], [0], [0], [1], [0, 0, 1, 1], [], []>} : vector<1x48xf32>, vector<48x120xf32>, vector<1x120xf32> -> vector<1x120xf32>
    %316 = arith.addf %313, %315 : vector<1x120xf32>
    %317 = vector.extract_strided_slice %311 {offsets = [2, 0], sizes = [1, 48], strides = [1, 1]} : vector<4x48xf32> to vector<1x48xf32>
    %cst_193 = arith.constant dense<0.000000e+00> : vector<1x120xf32>
    %318 = tpu.matmul %317, %25, %cst_193 {dimension_numbers = #tpu.dot_dimension_numbers<[1], [0], [0], [1], [0, 0, 1, 1], [], []>} : vector<1x48xf32>, vector<48x120xf32>, vector<1x120xf32> -> vector<1x120xf32>
    %319 = arith.addf %316, %318 : vector<1x120xf32>
    %320 = vector.extract_strided_slice %311 {offsets = [3, 0], sizes = [1, 48], strides = [1, 1]} : vector<4x48xf32> to vector<1x48xf32>
    %cst_194 = arith.constant dense<0.000000e+00> : vector<1x120xf32>
    %321 = tpu.matmul %320, %27, %cst_194 {dimension_numbers = #tpu.dot_dimension_numbers<[1], [0], [0], [1], [0, 0, 1, 1], [], []>} : vector<1x48xf32>, vector<48x120xf32>, vector<1x120xf32> -> vector<1x120xf32>
    %322 = arith.addf %319, %321 : vector<1x120xf32>
    %323 = arith.addf %322, %38 : vector<1x120xf32>
    %cst_195 = arith.constant 0.000000e+00 : f32
    %324 = vector.broadcast %cst_195 : f32 to vector<1x120xf32>
    %325 = arith.maximumf %323, %324 : vector<1x120xf32>
    %cst_196 = arith.constant dense<0.000000e+00> : vector<1x60xf32>
    %326 = tpu.matmul %325, %39, %cst_196 {dimension_numbers = #tpu.dot_dimension_numbers<[1], [0], [0], [1], [0, 0, 1, 1], [], []>} : vector<1x120xf32>, vector<120x60xf32>, vector<1x60xf32> -> vector<1x60xf32>
    %327 = arith.addf %326, %40 : vector<1x60xf32>
    %cst_197 = arith.constant 0.000000e+00 : f32
    %328 = vector.broadcast %cst_197 : f32 to vector<1x60xf32>
    %329 = arith.maximumf %327, %328 : vector<1x60xf32>
    %cst_198 = arith.constant dense<0.000000e+00> : vector<1x128xf32>
    %330 = tpu.matmul %329, %41, %cst_198 {dimension_numbers = #tpu.dot_dimension_numbers<[1], [0], [0], [1], [0, 0, 1, 1], [], []>} : vector<1x60xf32>, vector<60x128xf32>, vector<1x128xf32> -> vector<1x128xf32>
    %331 = arith.addf %330, %42 : vector<1x128xf32>
    %c3_199 = arith.constant 3 : index
    %c0_200 = arith.constant 0 : index
    %c0_201 = arith.constant 0 : index
    %332 = vector.load %arg20[%c3_199, %c0_200, %c0_201] : memref<4x1x128xf32, #tpu.memory_space<vmem>>, vector<1x1x128xf32>
    %333 = vector.shape_cast %332 : vector<1x1x128xf32> to vector<1x128xf32>
    %334 = vector.shape_cast %331 : vector<1x128xf32> to vector<1x1x128xf32>
    tpu.vector_store %arg20[%c3_199, %c0_200, %c0_201], %334 {strides = array<i32>} : memref<4x1x128xf32, #tpu.memory_space<vmem>>, vector<1x1x128xf32>,
    return
  }
  func.func @transform_0(%arg0: i32) -> (i32, i32, i32) {
    %c0_i32 = arith.constant 0 : i32
    %c0_i32_0 = arith.constant 0 : i32
    %c0_i32_1 = arith.constant 0 : i32
    return %arg0, %c0_i32, %c0_i32_0 : i32, i32, i32
  }
  func.func @transform_1(%arg0: i32) -> (i32, i32, i32) {
    %c0_i32 = arith.constant 0 : i32
    %c0_i32_0 = arith.constant 0 : i32
    %c0_i32_1 = arith.constant 0 : i32
    %c0_i32_2 = arith.constant 0 : i32
    return %c0_i32, %c0_i32_0, %c0_i32_1 : i32, i32, i32
  }
  func.func @transform_2(%arg0: i32) -> (i32, i32) {
    %c0_i32 = arith.constant 0 : i32
    %c0_i32_0 = arith.constant 0 : i32
    %c0_i32_1 = arith.constant 0 : i32
    return %c0_i32, %c0_i32_0 : i32, i32
  }
  func.func @transform_3(%arg0: i32) -> (i32, i32) {
    %c0_i32 = arith.constant 0 : i32
    %c0_i32_0 = arith.constant 0 : i32
    %c0_i32_1 = arith.constant 0 : i32
    return %c0_i32, %c0_i32_0 : i32, i32
  }
  func.func @transform_4(%arg0: i32) -> (i32, i32) {
    %c0_i32 = arith.constant 0 : i32
    %c0_i32_0 = arith.constant 0 : i32
    %c0_i32_1 = arith.constant 0 : i32
    return %c0_i32, %c0_i32_0 : i32, i32
  }
  func.func @transform_5(%arg0: i32) -> (i32, i32) {
    %c0_i32 = arith.constant 0 : i32
    %c0_i32_0 = arith.constant 0 : i32
    %c0_i32_1 = arith.constant 0 : i32
    return %c0_i32, %c0_i32_0 : i32, i32
  }
  func.func @transform_6(%arg0: i32) -> (i32, i32) {
    %c0_i32 = arith.constant 0 : i32
    %c0_i32_0 = arith.constant 0 : i32
    %c0_i32_1 = arith.constant 0 : i32
    return %c0_i32, %c0_i32_0 : i32, i32
  }
  func.func @transform_7(%arg0: i32) -> (i32, i32, i32) {
    %c0_i32 = arith.constant 0 : i32
    %c0_i32_0 = arith.constant 0 : i32
    %c0_i32_1 = arith.constant 0 : i32
    %c0_i32_2 = arith.constant 0 : i32
    return %c0_i32, %c0_i32_0, %c0_i32_1 : i32, i32, i32
  }
  func.func @transform_8(%arg0: i32) -> (i32, i32) {
    %c0_i32 = arith.constant 0 : i32
    %c0_i32_0 = arith.constant 0 : i32
    %c0_i32_1 = arith.constant 0 : i32
    return %c0_i32, %c0_i32_0 : i32, i32
  }
  func.func @transform_9(%arg0: i32) -> (i32, i32) {
    %c0_i32 = arith.constant 0 : i32
    %c0_i32_0 = arith.constant 0 : i32
    %c0_i32_1 = arith.constant 0 : i32
    return %c0_i32, %c0_i32_0 : i32, i32
  }
  func.func @transform_10(%arg0: i32) -> (i32, i32) {
    %c0_i32 = arith.constant 0 : i32
    %c0_i32_0 = arith.constant 0 : i32
    %c0_i32_1 = arith.constant 0 : i32
    return %c0_i32, %c0_i32_0 : i32, i32
  }
  func.func @transform_11(%arg0: i32) -> (i32, i32) {
    %c0_i32 = arith.constant 0 : i32
    %c0_i32_0 = arith.constant 0 : i32
    %c0_i32_1 = arith.constant 0 : i32
    return %c0_i32, %c0_i32_0 : i32, i32
  }
  func.func @transform_12(%arg0: i32) -> (i32, i32) {
    %c0_i32 = arith.constant 0 : i32
    %c0_i32_0 = arith.constant 0 : i32
    %c0_i32_1 = arith.constant 0 : i32
    return %c0_i32, %c0_i32_0 : i32, i32
  }
  func.func @transform_13(%arg0: i32) -> (i32, i32, i32) {
    %c0_i32 = arith.constant 0 : i32
    %c0_i32_0 = arith.constant 0 : i32
    %c0_i32_1 = arith.constant 0 : i32
    %c0_i32_2 = arith.constant 0 : i32
    return %c0_i32, %c0_i32_0, %c0_i32_1 : i32, i32, i32
  }
  func.func @transform_14(%arg0: i32) -> (i32, i32) {
    %c0_i32 = arith.constant 0 : i32
    %c0_i32_0 = arith.constant 0 : i32
    %c0_i32_1 = arith.constant 0 : i32
    return %c0_i32, %c0_i32_0 : i32, i32
  }
  func.func @transform_15(%arg0: i32) -> (i32, i32) {
    %c0_i32 = arith.constant 0 : i32
    %c0_i32_0 = arith.constant 0 : i32
    %c0_i32_1 = arith.constant 0 : i32
    return %c0_i32, %c0_i32_0 : i32, i32
  }
  func.func @transform_16(%arg0: i32) -> (i32, i32) {
    %c0_i32 = arith.constant 0 : i32
    %c0_i32_0 = arith.constant 0 : i32
    %c0_i32_1 = arith.constant 0 : i32
    return %c0_i32, %c0_i32_0 : i32, i32
  }
  func.func @transform_17(%arg0: i32) -> (i32, i32) {
    %c0_i32 = arith.constant 0 : i32
    %c0_i32_0 = arith.constant 0 : i32
    %c0_i32_1 = arith.constant 0 : i32
    return %c0_i32, %c0_i32_0 : i32, i32
  }
  func.func @transform_18(%arg0: i32) -> (i32, i32) {
    %c0_i32 = arith.constant 0 : i32
    %c0_i32_0 = arith.constant 0 : i32
    %c0_i32_1 = arith.constant 0 : i32
    return %c0_i32, %c0_i32_0 : i32, i32
  }
  func.func @transform_19(%arg0: i32) -> (i32, i32, i32) {
    %c0_i32 = arith.constant 0 : i32
    %c0_i32_0 = arith.constant 0 : i32
    %c0_i32_1 = arith.constant 0 : i32
    return %arg0, %c0_i32, %c0_i32_0 : i32, i32, i32
  }
}

</mosaic_0001>

<llo_original>
// kernel: mnist_classifier_forward.1
$region0: #{mnist_classifier_forward.1}
  #allocation0 [shape = 'u32[]', space=smem, size = 0x4, offset = 0x4, fixed_abs, tag = 'smem constant byte address 0x4 - core index']
  #allocation1 [shape = 'u32[144,128]{1,0:T(1,128)}', space=vmem, size = 0x12000, scoped, tag = 'internal scratch']
  %s0 = inlined_call_operand.vmem [shape: f32[8,28,28], index: 0, kind: input, shape index: {}]
  %s1 = inlined_call_operand.vmem [shape: f32[5,28,144], index: 1, kind: input, shape index: {}]
  %s2 = inlined_call_operand.vmem [shape: f32[1,144], index: 2, kind: input, shape index: {}]
  %s3 = inlined_call_operand.vmem [shape: f32[12,24], index: 3, kind: input, shape index: {}]
  %s4 = inlined_call_operand.vmem [shape: f32[12,24], index: 4, kind: input, shape index: {}]
  %s5 = inlined_call_operand.vmem [shape: f32[144,72], index: 5, kind: input, shape index: {}]
  %s6 = inlined_call_operand.vmem [shape: f32[144,72], index: 6, kind: input, shape index: {}]
  %s7 = inlined_call_operand.vmem [shape: f32[5,72,96], index: 7, kind: input, shape index: {}]
  %s8 = inlined_call_operand.vmem [shape: f32[1,96], index: 8, kind: input, shape index: {}]
  %s9 = inlined_call_operand.vmem [shape: f32[4,8], index: 9, kind: input, shape index: {}]
  %s10 = inlined_call_operand.vmem [shape: f32[4,8], index: 10, kind: input, shape index: {}]
  %s11 = inlined_call_operand.vmem [shape: f32[96,48], index: 11, kind: input, shape index: {}]
  %s12 = inlined_call_operand.vmem [shape: f32[96,48], index: 12, kind: input, shape index: {}]
  %s13 = inlined_call_operand.vmem [shape: f32[4,48,120], index: 13, kind: input, shape index: {}]
  %s14 = inlined_call_operand.vmem [shape: f32[1,120], index: 14, kind: input, shape index: {}]
  %s15 = inlined_call_operand.vmem [shape: f32[120,60], index: 15, kind: input, shape index: {}]
  %s16 = inlined_call_operand.vmem [shape: f32[1,60], index: 16, kind: input, shape index: {}]
  %s17 = inlined_call_operand.vmem [shape: f32[60,128], index: 17, kind: input, shape index: {}]
  %s18 = inlined_call_operand.vmem [shape: f32[1,128], index: 18, kind: input, shape index: {}]
  %s19 = inlined_call_operand.hbm [shape: f32[8,1,128], index: 19, kind: output, shape index: {}]
  %s20 = sld [smem:[#allocation0]]
  $region109: #{mnist_classifier_forward.1} parent=0
    _
  %s22 = ssub.s32 1, %s20
  %s23 = scalar_select 0, %s22, %s20
  $region1: #{mnist_classifier_forward.1} parent=0
    #allocation2 [shape = 'u8[4096]{0}', space=vmem, size = 0x1000, scoped, tag = 'output window, operand 0']
    #allocation3 [shape = 's32[2]{0}', space=sflag, size = 0x8, scoped, tag = 'scoped memory for mnist_classifier_forward.1']
    %24 = vsyncpa [#allocation3], 0
    %s25 = scalar_lea.sflag [#allocation3], 1
    %26 = vsyncpa %s25, 0
    loop: start=0, step=1, limit=4
    $region2: #{mnist_classifier_forward.1} parent=1 // loop_pre_header
      _
    $region3: #{mnist_classifier_forward.1} parent=1 // loop_header
      %s28 = sphi 0, %s32
      %p29 = scmp.ge.s32.totalorder %s28, 4
      %s38 = sphi 0, %s40
      %s41 = sphi 0, %s38
      %s42 = sphi 0, %s41
      %s58 = sphi 0, %s42
      %s62 = sphi 0, %s62
      %s64 = sphi 0, %s62
      %s65 = sphi 0, %s64
      %s79 = sphi 0, %s65
      %s83 = sphi 0, %s83
      %s85 = sphi 0, %s83
      %s86 = sphi 0, %s85
      %s100 = sphi 0, %s86
      %s104 = sphi 0, %s104
      %s106 = sphi 0, %s104
      %s107 = sphi 0, %s106
      %s121 = sphi 0, %s107
      %s125 = sphi 0, %s125
      %s127 = sphi 0, %s125
      %s128 = sphi 0, %s127
      %s142 = sphi 0, %s128
      %s146 = sphi 0, %s146
      %s148 = sphi 0, %s146
      %s149 = sphi 0, %s148
      %s163 = sphi 0, %s149
      %s167 = sphi 0, %s167
      %s169 = sphi 0, %s167
      %s170 = sphi 0, %s169
      %s184 = sphi 0, %s170
      %s188 = sphi 0, %s188
      %s190 = sphi 0, %s188
      %s191 = sphi 0, %s190
      %s205 = sphi 0, %s191
      %s209 = sphi 0, %s209
      %s211 = sphi 0, %s209
      %s212 = sphi 0, %s211
      %s226 = sphi 0, %s212
      %s230 = sphi 0, %s230
      %s232 = sphi 0, %s230
      %s233 = sphi 0, %s232
      %s247 = sphi 0, %s233
      %s251 = sphi 0, %s251
      %s253 = sphi 0, %s251
      %s254 = sphi 0, %s253
      %s268 = sphi 0, %s254
      %s272 = sphi 0, %s272
      %s274 = sphi 0, %s272
      %s275 = sphi 0, %s274
      %s289 = sphi 0, %s275
      %s293 = sphi 0, %s293
      %s295 = sphi 0, %s293
      %s296 = sphi 0, %s295
      %s310 = sphi 0, %s296
      %s314 = sphi 0, %s314
      %s316 = sphi 0, %s314
      %s317 = sphi 0, %s316
      %s331 = sphi 0, %s317
      %s335 = sphi 0, %s335
      %s337 = sphi 0, %s335
      %s338 = sphi 0, %s337
      %s352 = sphi 0, %s338
      %s356 = sphi 0, %s356
      %s358 = sphi 0, %s356
      %s359 = sphi 0, %s358
      %s373 = sphi 0, %s359
      %s377 = sphi 0, %s377
      %s379 = sphi 0, %s377
      %s380 = sphi 0, %s379
      %s394 = sphi 0, %s380
      %s398 = sphi 0, %s398
      %s400 = sphi 0, %s398
      %s401 = sphi 0, %s400
      %s415 = sphi 0, %s401
      %s419 = sphi 0, %s419
      %s421 = sphi 0, %s419
      %s422 = sphi 0, %s421
      %s436 = sphi 0, %s422
      %s442 = sphi 0, %s444
      %s445 = sphi 0, %s442
      %s446 = sphi 0, %s445
      %s462 = sphi 0, %s446
    $region4: #{mnist_classifier_forward.1} parent=1 // loop_header_branch
      %31 = sbr.rel (%p29) target = $region8
    $region5: #{mnist_classifier_forward.1} parent=1 // loop_body
      %s33 = ssub.s32 %s28, 1
      %s34 = ssub.s32 %s28, 2
      %s35 = sadd.s32 %s28, 1
      %s36 = ssub.s32 %s28, %s35
      %p37 = scmp.eq.s32.totalorder %s36, 0
      %s39 = sadd.s32 %s38, 1
      %s40 = scalar_select %p37, %s38, %s39
      %p43 = pneg %p37
      %p44 = scmp.eq.s32.totalorder %s28, 1
      %p45 = por %p43, %p44
      %p46 = scmp.ne.s32.totalorder %s38, %s41
      %p47 = scmp.eq.s32.totalorder %s28, 0
      %p48 = por %p46, %p47
      %p49 = scmp.ne.s32.totalorder %s38, %s41
      %p50 = scmp.eq.s32.totalorder %s33, 1
      %p51 = por %p49, %p50
      %p52 = scmp.ne.s32.totalorder %s41, %s42
      %p53 = scmp.eq.s32.totalorder %s33, 0
      %p54 = por %p52, %p53
      %p55 = scmp.ne.s32.totalorder %s41, %s42
      %p56 = scmp.eq.s32.totalorder %s34, 1
      %p57 = por %p55, %p56
      %p59 = scmp.ne.s32.totalorder %s42, %s58
      %p60 = scmp.eq.s32.totalorder %s34, 0
      %p61 = por %p59, %p60
      %s63 = sadd.s32 %s62, 1
      %p66 = scmp.eq.s32.totalorder %s28, 1
      %p67 = scmp.ne.s32.totalorder %s62, %s64
      %p68 = scmp.eq.s32.totalorder %s28, 0
      %p69 = por %p67, %p68
      %p70 = scmp.ne.s32.totalorder %s62, %s64
      %p71 = scmp.eq.s32.totalorder %s33, 1
      %p72 = por %p70, %p71
      %p73 = scmp.ne.s32.totalorder %s64, %s65
      %p74 = scmp.eq.s32.totalorder %s33, 0
      %p75 = por %p73, %p74
      %p76 = scmp.ne.s32.totalorder %s64, %s65
      %p77 = scmp.eq.s32.totalorder %s34, 1
      %p78 = por %p76, %p77
      %p80 = scmp.ne.s32.totalorder %s65, %s79
      %p81 = scmp.eq.s32.totalorder %s34, 0
      %p82 = por %p80, %p81
      %s84 = sadd.s32 %s83, 1
      %p87 = scmp.eq.s32.totalorder %s28, 1
      %p88 = scmp.ne.s32.totalorder %s83, %s85
      %p89 = scmp.eq.s32.totalorder %s28, 0
      %p90 = por %p88, %p89
      %p91 = scmp.ne.s32.totalorder %s83, %s85
      %p92 = scmp.eq.s32.totalorder %s33, 1
      %p93 = por %p91, %p92
      %p94 = scmp.ne.s32.totalorder %s85, %s86
      %p95 = scmp.eq.s32.totalorder %s33, 0
      %p96 = por %p94, %p95
      %p97 = scmp.ne.s32.totalorder %s85, %s86
      %p98 = scmp.eq.s32.totalorder %s34, 1
      %p99 = por %p97, %p98
      %p101 = scmp.ne.s32.totalorder %s86, %s100
      %p102 = scmp.eq.s32.totalorder %s34, 0
      %p103 = por %p101, %p102
      %s105 = sadd.s32 %s104, 1
      %p108 = scmp.eq.s32.totalorder %s28, 1
      %p109 = scmp.ne.s32.totalorder %s104, %s106
      %p110 = scmp.eq.s32.totalorder %s28, 0
      %p111 = por %p109, %p110
      %p112 = scmp.ne.s32.totalorder %s104, %s106
      %p113 = scmp.eq.s32.totalorder %s33, 1
      %p114 = por %p112, %p113
      %p115 = scmp.ne.s32.totalorder %s106, %s107
      %p116 = scmp.eq.s32.totalorder %s33, 0
      %p117 = por %p115, %p116
      %p118 = scmp.ne.s32.totalorder %s106, %s107
      %p119 = scmp.eq.s32.totalorder %s34, 1
      %p120 = por %p118, %p119
      %p122 = scmp.ne.s32.totalorder %s107, %s121
      %p123 = scmp.eq.s32.totalorder %s34, 0
      %p124 = por %p122, %p123
      %s126 = sadd.s32 %s125, 1
      %p129 = scmp.eq.s32.totalorder %s28, 1
      %p130 = scmp.ne.s32.totalorder %s125, %s127
      %p131 = scmp.eq.s32.totalorder %s28, 0
      %p132 = por %p130, %p131
      %p133 = scmp.ne.s32.totalorder %s125, %s127
      %p134 = scmp.eq.s32.totalorder %s33, 1
      %p135 = por %p133, %p134
      %p136 = scmp.ne.s32.totalorder %s127, %s128
      %p137 = scmp.eq.s32.totalorder %s33, 0
      %p138 = por %p136, %p137
      %p139 = scmp.ne.s32.totalorder %s127, %s128
      %p140 = scmp.eq.s32.totalorder %s34, 1
      %p141 = por %p139, %p140
      %p143 = scmp.ne.s32.totalorder %s128, %s142
      %p144 = scmp.eq.s32.totalorder %s34, 0
      %p145 = por %p143, %p144
      %s147 = sadd.s32 %s146, 1
      %p150 = scmp.eq.s32.totalorder %s28, 1
      %p151 = scmp.ne.s32.totalorder %s146, %s148
      %p152 = scmp.eq.s32.totalorder %s28, 0
      %p153 = por %p151, %p152
      %p154 = scmp.ne.s32.totalorder %s146, %s148
      %p155 = scmp.eq.s32.totalorder %s33, 1
      %p156 = por %p154, %p155
      %p157 = scmp.ne.s32.totalorder %s148, %s149
      %p158 = scmp.eq.s32.totalorder %s33, 0
      %p159 = por %p157, %p158
      %p160 = scmp.ne.s32.totalorder %s148, %s149
      %p161 = scmp.eq.s32.totalorder %s34, 1
      %p162 = por %p160, %p161
      %p164 = scmp.ne.s32.totalorder %s149, %s163
      %p165 = scmp.eq.s32.totalorder %s34, 0
      %p166 = por %p164, %p165
      %s168 = sadd.s32 %s167, 1
      %p171 = scmp.eq.s32.totalorder %s28, 1
      %p172 = scmp.ne.s32.totalorder %s167, %s169
      %p173 = scmp.eq.s32.totalorder %s28, 0
      %p174 = por %p172, %p173
      %p175 = scmp.ne.s32.totalorder %s167, %s169
      %p176 = scmp.eq.s32.totalorder %s33, 1
      %p177 = por %p175, %p176
      %p178 = scmp.ne.s32.totalorder %s169, %s170
      %p179 = scmp.eq.s32.totalorder %s33, 0
      %p180 = por %p178, %p179
      %p181 = scmp.ne.s32.totalorder %s169, %s170
      %p182 = scmp.eq.s32.totalorder %s34, 1
      %p183 = por %p181, %p182
      %p185 = scmp.ne.s32.totalorder %s170, %s184
      %p186 = scmp.eq.s32.totalorder %s34, 0
      %p187 = por %p185, %p186
      %s189 = sadd.s32 %s188, 1
      %p192 = scmp.eq.s32.totalorder %s28, 1
      %p193 = scmp.ne.s32.totalorder %s188, %s190
      %p194 = scmp.eq.s32.totalorder %s28, 0
      %p195 = por %p193, %p194
      %p196 = scmp.ne.s32.totalorder %s188, %s190
      %p197 = scmp.eq.s32.totalorder %s33, 1
      %p198 = por %p196, %p197
      %p199 = scmp.ne.s32.totalorder %s190, %s191
      %p200 = scmp.eq.s32.totalorder %s33, 0
      %p201 = por %p199, %p200
      %p202 = scmp.ne.s32.totalorder %s190, %s191
      %p203 = scmp.eq.s32.totalorder %s34, 1
      %p204 = por %p202, %p203
      %p206 = scmp.ne.s32.totalorder %s191, %s205
      %p207 = scmp.eq.s32.totalorder %s34, 0
      %p208 = por %p206, %p207
      %s210 = sadd.s32 %s209, 1
      %p213 = scmp.eq.s32.totalorder %s28, 1
      %p214 = scmp.ne.s32.totalorder %s209, %s211
      %p215 = scmp.eq.s32.totalorder %s28, 0
      %p216 = por %p214, %p215
      %p217 = scmp.ne.s32.totalorder %s209, %s211
      %p218 = scmp.eq.s32.totalorder %s33, 1
      %p219 = por %p217, %p218
      %p220 = scmp.ne.s32.totalorder %s211, %s212
      %p221 = scmp.eq.s32.totalorder %s33, 0
      %p222 = por %p220, %p221
      %p223 = scmp.ne.s32.totalorder %s211, %s212
      %p224 = scmp.eq.s32.totalorder %s34, 1
      %p225 = por %p223, %p224
      %p227 = scmp.ne.s32.totalorder %s212, %s226
      %p228 = scmp.eq.s32.totalorder %s34, 0
      %p229 = por %p227, %p228
      %s231 = sadd.s32 %s230, 1
      %p234 = scmp.eq.s32.totalorder %s28, 1
      %p235 = scmp.ne.s32.totalorder %s230, %s232
      %p236 = scmp.eq.s32.totalorder %s28, 0
      %p237 = por %p235, %p236
      %p238 = scmp.ne.s32.totalorder %s230, %s232
      %p239 = scmp.eq.s32.totalorder %s33, 1
      %p240 = por %p238, %p239
      %p241 = scmp.ne.s32.totalorder %s232, %s233
      %p242 = scmp.eq.s32.totalorder %s33, 0
      %p243 = por %p241, %p242
      %p244 = scmp.ne.s32.totalorder %s232, %s233
      %p245 = scmp.eq.s32.totalorder %s34, 1
      %p246 = por %p244, %p245
      %p248 = scmp.ne.s32.totalorder %s233, %s247
      %p249 = scmp.eq.s32.totalorder %s34, 0
      %p250 = por %p248, %p249
      %s252 = sadd.s32 %s251, 1
      %p255 = scmp.eq.s32.totalorder %s28, 1
      %p256 = scmp.ne.s32.totalorder %s251, %s253
      %p257 = scmp.eq.s32.totalorder %s28, 0
      %p258 = por %p256, %p257
      %p259 = scmp.ne.s32.totalorder %s251, %s253
      %p260 = scmp.eq.s32.totalorder %s33, 1
      %p261 = por %p259, %p260
      %p262 = scmp.ne.s32.totalorder %s253, %s254
      %p263 = scmp.eq.s32.totalorder %s33, 0
      %p264 = por %p262, %p263
      %p265 = scmp.ne.s32.totalorder %s253, %s254
      %p266 = scmp.eq.s32.totalorder %s34, 1
      %p267 = por %p265, %p266
      %p269 = scmp.ne.s32.totalorder %s254, %s268
      %p270 = scmp.eq.s32.totalorder %s34, 0
      %p271 = por %p269, %p270
      %s273 = sadd.s32 %s272, 1
      %p276 = scmp.eq.s32.totalorder %s28, 1
      %p277 = scmp.ne.s32.totalorder %s272, %s274
      %p278 = scmp.eq.s32.totalorder %s28, 0
      %p279 = por %p277, %p278
      %p280 = scmp.ne.s32.totalorder %s272, %s274
      %p281 = scmp.eq.s32.totalorder %s33, 1
      %p282 = por %p280, %p281
      %p283 = scmp.ne.s32.totalorder %s274, %s275
      %p284 = scmp.eq.s32.totalorder %s33, 0
      %p285 = por %p283, %p284
      %p286 = scmp.ne.s32.totalorder %s274, %s275
      %p287 = scmp.eq.s32.totalorder %s34, 1
      %p288 = por %p286, %p287
      %p290 = scmp.ne.s32.totalorder %s275, %s289
      %p291 = scmp.eq.s32.totalorder %s34, 0
      %p292 = por %p290, %p291
      %s294 = sadd.s32 %s293, 1
      %p297 = scmp.eq.s32.totalorder %s28, 1
      %p298 = scmp.ne.s32.totalorder %s293, %s295
      %p299 = scmp.eq.s32.totalorder %s28, 0
      %p300 = por %p298, %p299
      %p301 = scmp.ne.s32.totalorder %s293, %s295
      %p302 = scmp.eq.s32.totalorder %s33, 1
      %p303 = por %p301, %p302
      %p304 = scmp.ne.s32.totalorder %s295, %s296
      %p305 = scmp.eq.s32.totalorder %s33, 0
      %p306 = por %p304, %p305
      %p307 = scmp.ne.s32.totalorder %s295, %s296
      %p308 = scmp.eq.s32.totalorder %s34, 1
      %p309 = por %p307, %p308
      %p311 = scmp.ne.s32.totalorder %s296, %s310
      %p312 = scmp.eq.s32.totalorder %s34, 0
      %p313 = por %p311, %p312
      %s315 = sadd.s32 %s314, 1
      %p318 = scmp.eq.s32.totalorder %s28, 1
      %p319 = scmp.ne.s32.totalorder %s314, %s316
      %p320 = scmp.eq.s32.totalorder %s28, 0
      %p321 = por %p319, %p320
      %p322 = scmp.ne.s32.totalorder %s314, %s316
      %p323 = scmp.eq.s32.totalorder %s33, 1
      %p324 = por %p322, %p323
      %p325 = scmp.ne.s32.totalorder %s316, %s317
      %p326 = scmp.eq.s32.totalorder %s33, 0
      %p327 = por %p325, %p326
      %p328 = scmp.ne.s32.totalorder %s316, %s317
      %p329 = scmp.eq.s32.totalorder %s34, 1
      %p330 = por %p328, %p329
      %p332 = scmp.ne.s32.totalorder %s317, %s331
      %p333 = scmp.eq.s32.totalorder %s34, 0
      %p334 = por %p332, %p333
      %s336 = sadd.s32 %s335, 1
      %p339 = scmp.eq.s32.totalorder %s28, 1
      %p340 = scmp.ne.s32.totalorder %s335, %s337
      %p341 = scmp.eq.s32.totalorder %s28, 0
      %p342 = por %p340, %p341
      %p343 = scmp.ne.s32.totalorder %s335, %s337
      %p344 = scmp.eq.s32.totalorder %s33, 1
      %p345 = por %p343, %p344
      %p346 = scmp.ne.s32.totalorder %s337, %s338
      %p347 = scmp.eq.s32.totalorder %s33, 0
      %p348 = por %p346, %p347
      %p349 = scmp.ne.s32.totalorder %s337, %s338
      %p350 = scmp.eq.s32.totalorder %s34, 1
      %p351 = por %p349, %p350
      %p353 = scmp.ne.s32.totalorder %s338, %s352
      %p354 = scmp.eq.s32.totalorder %s34, 0
      %p355 = por %p353, %p354
      %s357 = sadd.s32 %s356, 1
      %p360 = scmp.eq.s32.totalorder %s28, 1
      %p361 = scmp.ne.s32.totalorder %s356, %s358
      %p362 = scmp.eq.s32.totalorder %s28, 0
      %p363 = por %p361, %p362
      %p364 = scmp.ne.s32.totalorder %s356, %s358
      %p365 = scmp.eq.s32.totalorder %s33, 1
      %p366 = por %p364, %p365
      %p367 = scmp.ne.s32.totalorder %s358, %s359
      %p368 = scmp.eq.s32.totalorder %s33, 0
      %p369 = por %p367, %p368
      %p370 = scmp.ne.s32.totalorder %s358, %s359
      %p371 = scmp.eq.s32.totalorder %s34, 1
      %p372 = por %p370, %p371
      %p374 = scmp.ne.s32.totalorder %s359, %s373
      %p375 = scmp.eq.s32.totalorder %s34, 0
      %p376 = por %p374, %p375
      %s378 = sadd.s32 %s377, 1
      %p381 = scmp.eq.s32.totalorder %s28, 1
      %p382 = scmp.ne.s32.totalorder %s377, %s379
      %p383 = scmp.eq.s32.totalorder %s28, 0
      %p384 = por %p382, %p383
      %p385 = scmp.ne.s32.totalorder %s377, %s379
      %p386 = scmp.eq.s32.totalorder %s33, 1
      %p387 = por %p385, %p386
      %p388 = scmp.ne.s32.totalorder %s379, %s380
      %p389 = scmp.eq.s32.totalorder %s33, 0
      %p390 = por %p388, %p389
      %p391 = scmp.ne.s32.totalorder %s379, %s380
      %p392 = scmp.eq.s32.totalorder %s34, 1
      %p393 = por %p391, %p392
      %p395 = scmp.ne.s32.totalorder %s380, %s394
      %p396 = scmp.eq.s32.totalorder %s34, 0
      %p397 = por %p395, %p396
      %s399 = sadd.s32 %s398, 1
      %p402 = scmp.eq.s32.totalorder %s28, 1
      %p403 = scmp.ne.s32.totalorder %s398, %s400
      %p404 = scmp.eq.s32.totalorder %s28, 0
      %p405 = por %p403, %p404
      %p406 = scmp.ne.s32.totalorder %s398, %s400
      %p407 = scmp.eq.s32.totalorder %s33, 1
      %p408 = por %p406, %p407
      %p409 = scmp.ne.s32.totalorder %s400, %s401
      %p410 = scmp.eq.s32.totalorder %s33, 0
      %p411 = por %p409, %p410
      %p412 = scmp.ne.s32.totalorder %s400, %s401
      %p413 = scmp.eq.s32.totalorder %s34, 1
      %p414 = por %p412, %p413
      %p416 = scmp.ne.s32.totalorder %s401, %s415
      %p417 = scmp.eq.s32.totalorder %s34, 0
      %p418 = por %p416, %p417
      %s420 = sadd.s32 %s419, 1
      %p423 = scmp.eq.s32.totalorder %s28, 1
      %p424 = scmp.ne.s32.totalorder %s419, %s421
      %p425 = scmp.eq.s32.totalorder %s28, 0
      %p426 = por %p424, %p425
      %p427 = scmp.ne.s32.totalorder %s419, %s421
      %p428 = scmp.eq.s32.totalorder %s33, 1
      %p429 = por %p427, %p428
      %p430 = scmp.ne.s32.totalorder %s421, %s422
      %p431 = scmp.eq.s32.totalorder %s33, 0
      %p432 = por %p430, %p431
      %p433 = scmp.ne.s32.totalorder %s421, %s422
      %p434 = scmp.eq.s32.totalorder %s34, 1
      %p435 = por %p433, %p434
      %p437 = scmp.ne.s32.totalorder %s422, %s436
      %p438 = scmp.eq.s32.totalorder %s34, 0
      %p439 = por %p437, %p438
      %s440 = ssub.s32 %s28, %s35
      %p441 = scmp.eq.s32.totalorder %s440, 0
      %s443 = sadd.s32 %s442, 1
      %s444 = scalar_select %p441, %s442, %s443
      %p447 = pneg %p441
      %p448 = scmp.eq.s32.totalorder %s28, 1
      %p449 = por %p447, %p448
      %p450 = scmp.ne.s32.totalorder %s442, %s445
      %p451 = scmp.eq.s32.totalorder %s28, 0
      %p452 = por %p450, %p451
      %p453 = scmp.ne.s32.totalorder %s442, %s445
      %p454 = scmp.eq.s32.totalorder %s33, 1
      %p455 = por %p453, %p454
      %p456 = scmp.ne.s32.totalorder %s445, %s446
      %p457 = scmp.eq.s32.totalorder %s33, 0
      %p458 = por %p456, %p457
      %p459 = scmp.ne.s32.totalorder %s445, %s446
      %p460 = scmp.eq.s32.totalorder %s34, 1
      %p461 = por %p459, %p460
      %p463 = scmp.ne.s32.totalorder %s446, %s462
      %p464 = scmp.eq.s32.totalorder %s34, 0
      %p465 = por %p463, %p464
      %p466 = scmp.le.s32.totalorder 1, %s28
      %p467 = scmp.lt.s32.totalorder %s28, 3
      %p468 = pnand %p466, %p467
      %p469 = pneg %p468
      // Predicated region
      $region9: #{mnist_classifier_forward.1} parent=5 // pred_check
        _
      $region10: #{mnist_classifier_forward.1} parent=5 // pred_check_branch
        %471 = sbr.rel (%p468) target = $region12
      $region11: #{mnist_classifier_forward.1} parent=5 // pred_region
        %s472 = ssub.s32 %s28, 1
        // Predicated region
        $region13: #{mnist_classifier_forward.1} parent=11 // pred_check
          %p473 = pneg %p75
        $region14: #{mnist_classifier_forward.1} parent=11 // pred_check_branch
          %475 = sbr.rel (%p473) target = $region16
        $region15: #{mnist_classifier_forward.1} parent=11 // pred_region
          _
        $region16: #{mnist_classifier_forward.1} parent=11 // pred_fallthru
          _
        // Predicated region
        $region17: #{mnist_classifier_forward.1} parent=11 // pred_check
          %p476 = pneg %p96
        $region18: #{mnist_classifier_forward.1} parent=11 // pred_check_branch
          %478 = sbr.rel (%p476) target = $region20
        $region19: #{mnist_classifier_forward.1} parent=11 // pred_region
          _
        $region20: #{mnist_classifier_forward.1} parent=11 // pred_fallthru
          _
        // Predicated region
        $region21: #{mnist_classifier_forward.1} parent=11 // pred_check
          %p479 = pneg %p117
        $region22: #{mnist_classifier_forward.1} parent=11 // pred_check_branch
          %481 = sbr.rel (%p479) target = $region24
        $region23: #{mnist_classifier_forward.1} parent=11 // pred_region
          _
        $region24: #{mnist_classifier_forward.1} parent=11 // pred_fallthru
          _
        // Predicated region
        $region25: #{mnist_classifier_forward.1} parent=11 // pred_check
          %p482 = pneg %p138
        $region26: #{mnist_classifier_forward.1} parent=11 // pred_check_branch
          %484 = sbr.rel (%p482) target = $region28
        $region27: #{mnist_classifier_forward.1} parent=11 // pred_region
          _
        $region28: #{mnist_classifier_forward.1} parent=11 // pred_fallthru
          _
        // Predicated region
        $region29: #{mnist_classifier_forward.1} parent=11 // pred_check
          %p485 = pneg %p159
        $region30: #{mnist_classifier_forward.1} parent=11 // pred_check_branch
          %487 = sbr.rel (%p485) target = $region32
        $region31: #{mnist_classifier_forward.1} parent=11 // pred_region
          _
        $region32: #{mnist_classifier_forward.1} parent=11 // pred_fallthru
          _
        // Predicated region
        $region33: #{mnist_classifier_forward.1} parent=11 // pred_check
          %p488 = pneg %p180
        $region34: #{mnist_classifier_forward.1} parent=11 // pred_check_branch
          %490 = sbr.rel (%p488) target = $region36
        $region35: #{mnist_classifier_forward.1} parent=11 // pred_region
          _
        $region36: #{mnist_classifier_forward.1} parent=11 // pred_fallthru
          _
        // Predicated region
        $region37: #{mnist_classifier_forward.1} parent=11 // pred_check
          %p491 = pneg %p201
        $region38: #{mnist_classifier_forward.1} parent=11 // pred_check_branch
          %493 = sbr.rel (%p491) target = $region40
        $region39: #{mnist_classifier_forward.1} parent=11 // pred_region
          _
        $region40: #{mnist_classifier_forward.1} parent=11 // pred_fallthru
          _
        // Predicated region
        $region41: #{mnist_classifier_forward.1} parent=11 // pred_check
          %p494 = pneg %p222
        $region42: #{mnist_classifier_forward.1} parent=11 // pred_check_branch
          %496 = sbr.rel (%p494) target = $region44
        $region43: #{mnist_classifier_forward.1} parent=11 // pred_region
          _
        $region44: #{mnist_classifier_forward.1} parent=11 // pred_fallthru
          _
        // Predicated region
        $region45: #{mnist_classifier_forward.1} parent=11 // pred_check
          %p497 = pneg %p243
        $region46: #{mnist_classifier_forward.1} parent=11 // pred_check_branch
          %499 = sbr.rel (%p497) target = $region48
        $region47: #{mnist_classifier_forward.1} parent=11 // pred_region
          _
        $region48: #{mnist_classifier_forward.1} parent=11 // pred_fallthru
          _
        // Predicated region
        $region49: #{mnist_classifier_forward.1} parent=11 // pred_check
          %p500 = pneg %p264
        $region50: #{mnist_classifier_forward.1} parent=11 // pred_check_branch
          %502 = sbr.rel (%p500) target = $region52
        $region51: #{mnist_classifier_forward.1} parent=11 // pred_region
          _
        $region52: #{mnist_classifier_forward.1} parent=11 // pred_fallthru
          _
        // Predicated region
        $region53: #{mnist_classifier_forward.1} parent=11 // pred_check
          %p503 = pneg %p285
        $region54: #{mnist_classifier_forward.1} parent=11 // pred_check_branch
          %505 = sbr.rel (%p503) target = $region56
        $region55: #{mnist_classifier_forward.1} parent=11 // pred_region
          _
        $region56: #{mnist_classifier_forward.1} parent=11 // pred_fallthru
          _
        // Predicated region
        $region57: #{mnist_classifier_forward.1} parent=11 // pred_check
          %p506 = pneg %p306
        $region58: #{mnist_classifier_forward.1} parent=11 // pred_check_branch
          %508 = sbr.rel (%p506) target = $region60
        $region59: #{mnist_classifier_forward.1} parent=11 // pred_region
          _
        $region60: #{mnist_classifier_forward.1} parent=11 // pred_fallthru
          _
        // Predicated region
        $region61: #{mnist_classifier_forward.1} parent=11 // pred_check
          %p509 = pneg %p327
        $region62: #{mnist_classifier_forward.1} parent=11 // pred_check_branch
          %511 = sbr.rel (%p509) target = $region64
        $region63: #{mnist_classifier_forward.1} parent=11 // pred_region
          _
        $region64: #{mnist_classifier_forward.1} parent=11 // pred_fallthru
          _
        // Predicated region
        $region65: #{mnist_classifier_forward.1} parent=11 // pred_check
          %p512 = pneg %p348
        $region66: #{mnist_classifier_forward.1} parent=11 // pred_check_branch
          %514 = sbr.rel (%p512) target = $region68
        $region67: #{mnist_classifier_forward.1} parent=11 // pred_region
          _
        $region68: #{mnist_classifier_forward.1} parent=11 // pred_fallthru
          _
        // Predicated region
        $region69: #{mnist_classifier_forward.1} parent=11 // pred_check
          %p515 = pneg %p369
        $region70: #{mnist_classifier_forward.1} parent=11 // pred_check_branch
          %517 = sbr.rel (%p515) target = $region72
        $region71: #{mnist_classifier_forward.1} parent=11 // pred_region
          _
        $region72: #{mnist_classifier_forward.1} parent=11 // pred_fallthru
          _
        // Predicated region
        $region73: #{mnist_classifier_forward.1} parent=11 // pred_check
          %p518 = pneg %p390
        $region74: #{mnist_classifier_forward.1} parent=11 // pred_check_branch
          %520 = sbr.rel (%p518) target = $region76
        $region75: #{mnist_classifier_forward.1} parent=11 // pred_region
          _
        $region76: #{mnist_classifier_forward.1} parent=11 // pred_fallthru
          _
        // Predicated region
        $region77: #{mnist_classifier_forward.1} parent=11 // pred_check
          %p521 = pneg %p411
        $region78: #{mnist_classifier_forward.1} parent=11 // pred_check_branch
          %523 = sbr.rel (%p521) target = $region80
        $region79: #{mnist_classifier_forward.1} parent=11 // pred_region
          _
        $region80: #{mnist_classifier_forward.1} parent=11 // pred_fallthru
          _
        // Predicated region
        $region81: #{mnist_classifier_forward.1} parent=11 // pred_check
          %p524 = pneg %p432
        $region82: #{mnist_classifier_forward.1} parent=11 // pred_check_branch
          %526 = sbr.rel (%p524) target = $region84
        $region83: #{mnist_classifier_forward.1} parent=11 // pred_region
          _
        $region84: #{mnist_classifier_forward.1} parent=11 // pred_fallthru
          _
      $region12: #{mnist_classifier_forward.1} parent=5 // pred_fallthru
        _
      %p527 = scmp.lt.s32.totalorder %s28, 2
      // Predicated region
      $region85: #{mnist_classifier_forward.1} parent=5 // pred_check
        %p528 = pneg %p527
      $region86: #{mnist_classifier_forward.1} parent=5 // pred_check_branch
        %530 = sbr.rel (%p528) target = $region88
      $region87: #{mnist_classifier_forward.1} parent=5 // pred_region
        // Predicated region
        $region89: #{mnist_classifier_forward.1} parent=87 // pred_check
          %p531 = pneg %p48
        $region90: #{mnist_classifier_forward.1} parent=87 // pred_check_branch
          %533 = sbr.rel (%p531) target = $region92
        $region91: #{mnist_classifier_forward.1} parent=87 // pred_region
          %s534 = smul.u32 4, %s28
          %p535 = scmp.lt.s32.totalorder %s534, 7
          %s536 = scalar_select %p535, %s534, 7
          %s537 = smul.addr %s536, 4
          %s538 = smul.addr %s537, 8
          %s539 = scalar_lea.vmem %s0, %s538
          %s540 = smul.u32 4, %s28
        $region92: #{mnist_classifier_forward.1} parent=87 // pred_fallthru
          _
      $region88: #{mnist_classifier_forward.1} parent=5 // pred_fallthru
        _
      %p541 = scmp.le.s32.totalorder 1, %s28
      %p542 = scmp.lt.s32.totalorder %s28, 3
      %p543 = pnand %p541, %p542
      %p544 = pneg %p543
      // Predicated region
      $region93: #{mnist_classifier_forward.1} parent=5 // pred_check
        _
      $region94: #{mnist_classifier_forward.1} parent=5 // pred_check_branch
        %546 = sbr.rel (%p543) target = $region96
      $region95: #{mnist_classifier_forward.1} parent=5 // pred_region
        %s547 = ssub.s32 %s28, 1
        %s548 = smul.u32 4, %s33
        %p549 = scmp.lt.s32.totalorder %s548, 7
        %s550 = scalar_select %p549, %s548, 7
        %s551 = smul.addr %s550, 4
        %s552 = smul.addr %s551, 8
        %s553 = scalar_lea.vmem %s0, %s552
        %p554 = pneg %p54
        %p555 = pneg %p51
        %p556 = pneg %p75
        %p557 = pneg %p72
        %p558 = pneg %p96
        %p559 = pneg %p93
        %p560 = pneg %p117
        %p561 = pneg %p114
        %p562 = pneg %p138
        %p563 = pneg %p135
        %p564 = pneg %p159
        %p565 = pneg %p156
        %p566 = pneg %p180
        %p567 = pneg %p177
        %p568 = pneg %p201
        %p569 = pneg %p198
        %p570 = pneg %p222
        %p571 = pneg %p219
        %p572 = pneg %p243
        %p573 = pneg %p240
        %p574 = pneg %p264
        %p575 = pneg %p261
        %p576 = pneg %p285
        %p577 = pneg %p282
        %p578 = pneg %p306
        %p579 = pneg %p303
        %p580 = pneg %p327
        %p581 = pneg %p324
        %p582 = pneg %p348
        %p583 = pneg %p345
        %p584 = pneg %p369
        %p585 = pneg %p366
        %p586 = pneg %p390
        %p587 = pneg %p387
        %p588 = pneg %p411
        %p589 = pneg %p408
        %p590 = pneg %p432
        %p591 = pneg %p429
        %p592 = pneg %p458
        %p593 = pneg %p455
        %s594 = sand.u32 %s445, 1
        %s595 = scalar_lea.sflag [#allocation3], %s594
        %s596 = sand.u32 %s445, 1
        %s597 = smul.addr %s596, 4
        %s598 = scalar_lea.vmem [#allocation2], %s597
        %s599 = smul.u32 4, %s33
        %p600 = scmp.lt.s32.totalorder %s599, 7
        %s601 = scalar_select %p600, %s599, 7
        %s602 = smul.addr %s601, 4
        %s603 = smul.addr %s602, 8
        %s604 = scalar_lea.vmem %s0, %s603
        %s605 = smul.u32 4, %s33
        %s606 = smul.u32 4, %s33
        %v607 = vld [vmem:[%s1] sm:$0xff]
        %v608 = vld [vmem:[%s1 + $0x8] sm:$0xff]
        %v609 = vld [vmem:[%s1 + $0x10] sm:$0xff]
        %v610 = vld [vmem:[%s1 + $0x18] sm:$0xff]
        %v611 = vld [vmem:[%s1 + $0x20] sm:$0xff]
        %v612 = vld [vmem:[%s1 + $0x28] sm:$0xff]
        %v613 = vld [vmem:[%s1 + $0x30] sm:$0xf]
        %v614 = vld [vmem:[%s1 + $0x38] sm:$0xf]
        %s615 = scalar_lea.vmem %s1, 64
        %v616 = vld [vmem:[%s615] sm:$0xff]
        %v617 = vld [vmem:[%s615 + $0x8] sm:$0xff]
        %v618 = vld [vmem:[%s615 + $0x10] sm:$0xff]
        %v619 = vld [vmem:[%s615 + $0x18] sm:$0xff]
        %v620 = vld [vmem:[%s615 + $0x20] sm:$0xff]
        %v621 = vld [vmem:[%s615 + $0x28] sm:$0xff]
        %v622 = vld [vmem:[%s615 + $0x30] sm:$0xf]
        %v623 = vld [vmem:[%s615 + $0x38] sm:$0xf]
        %s624 = scalar_lea.vmem %s1, 128
        %v625 = vld [vmem:[%s624] sm:$0xff]
        %v626 = vld [vmem:[%s624 + $0x8] sm:$0xff]
        %v627 = vld [vmem:[%s624 + $0x10] sm:$0xff]
        %v628 = vld [vmem:[%s624 + $0x18] sm:$0xff]
        %v629 = vld [vmem:[%s624 + $0x20] sm:$0xff]
        %v630 = vld [vmem:[%s624 + $0x28] sm:$0xff]
        %v631 = vld [vmem:[%s624 + $0x30] sm:$0xf]
        %v632 = vld [vmem:[%s624 + $0x38] sm:$0xf]
        %s633 = scalar_lea.vmem %s1, 192
        %v634 = vld [vmem:[%s633] sm:$0xff]
        %v635 = vld [vmem:[%s633 + $0x8] sm:$0xff]
        %v636 = vld [vmem:[%s633 + $0x10] sm:$0xff]
        %v637 = vld [vmem:[%s633 + $0x18] sm:$0xff]
        %v638 = vld [vmem:[%s633 + $0x20] sm:$0xff]
        %v639 = vld [vmem:[%s633 + $0x28] sm:$0xff]
        %v640 = vld [vmem:[%s633 + $0x30] sm:$0xf]
        %v641 = vld [vmem:[%s633 + $0x38] sm:$0xf]
        %s642 = scalar_lea.vmem %s1, 256
        %v643 = vld [vmem:[%s642] sm:$0xff]
        %v644 = vld [vmem:[%s642 + $0x8] sm:$0xff]
        %v645 = vld [vmem:[%s642 + $0x10] sm:$0xff]
        %v646 = vld [vmem:[%s642 + $0x18] sm:$0xff]
        %v647 = vld [vmem:[%s642 + $0x20] sm:$0xff]
        %v648 = vld [vmem:[%s642 + $0x28] sm:$0xff]
        %v649 = vld [vmem:[%s642 + $0x30] sm:$0xf]
        %v650 = vld [vmem:[%s642 + $0x38] sm:$0xf]
        %v651 = vld [vmem:[%s7] sm:$0xff]
        %v652 = vld [vmem:[%s7 + $0x8] sm:$0xff]
        %v653 = vld [vmem:[%s7 + $0x10] sm:$0xff]
        %v654 = vld [vmem:[%s7 + $0x18] sm:$0xff]
        %v655 = vld [vmem:[%s7 + $0x20] sm:$0xff]
        %v656 = vld [vmem:[%s7 + $0x28] sm:$0xff]
        %v657 = vld [vmem:[%s7 + $0x30] sm:$0xff]
        %v658 = vld [vmem:[%s7 + $0x38] sm:$0xff]
        %v659 = vld [vmem:[%s7 + $0x40] sm:$0xff]
        %s660 = scalar_lea.vmem %s7, 72
        %v661 = vld [vmem:[%s660] sm:$0xff]
        %v662 = vld [vmem:[%s660 + $0x8] sm:$0xff]
        %v663 = vld [vmem:[%s660 + $0x10] sm:$0xff]
        %v664 = vld [vmem:[%s660 + $0x18] sm:$0xff]
        %v665 = vld [vmem:[%s660 + $0x20] sm:$0xff]
        %v666 = vld [vmem:[%s660 + $0x28] sm:$0xff]
        %v667 = vld [vmem:[%s660 + $0x30] sm:$0xff]
        %v668 = vld [vmem:[%s660 + $0x38] sm:$0xff]
        %v669 = vld [vmem:[%s660 + $0x40] sm:$0xff]
        %s670 = scalar_lea.vmem %s7, 144
        %v671 = vld [vmem:[%s670] sm:$0xff]
        %v672 = vld [vmem:[%s670 + $0x8] sm:$0xff]
        %v673 = vld [vmem:[%s670 + $0x10] sm:$0xff]
        %v674 = vld [vmem:[%s670 + $0x18] sm:$0xff]
        %v675 = vld [vmem:[%s670 + $0x20] sm:$0xff]
        %v676 = vld [vmem:[%s670 + $0x28] sm:$0xff]
        %v677 = vld [vmem:[%s670 + $0x30] sm:$0xff]
        %v678 = vld [vmem:[%s670 + $0x38] sm:$0xff]
        %v679 = vld [vmem:[%s670 + $0x40] sm:$0xff]
        %s680 = scalar_lea.vmem %s7, 216
        %v681 = vld [vmem:[%s680] sm:$0xff]
        %v682 = vld [vmem:[%s680 + $0x8] sm:$0xff]
        %v683 = vld [vmem:[%s680 + $0x10] sm:$0xff]
        %v684 = vld [vmem:[%s680 + $0x18] sm:$0xff]
        %v685 = vld [vmem:[%s680 + $0x20] sm:$0xff]
        %v686 = vld [vmem:[%s680 + $0x28] sm:$0xff]
        %v687 = vld [vmem:[%s680 + $0x30] sm:$0xff]
        %v688 = vld [vmem:[%s680 + $0x38] sm:$0xff]
        %v689 = vld [vmem:[%s680 + $0x40] sm:$0xff]
        %s690 = scalar_lea.vmem %s7, 288
        %v691 = vld [vmem:[%s690] sm:$0xff]
        %v692 = vld [vmem:[%s690 + $0x8] sm:$0xff]
        %v693 = vld [vmem:[%s690 + $0x10] sm:$0xff]
        %v694 = vld [vmem:[%s690 + $0x18] sm:$0xff]
        %v695 = vld [vmem:[%s690 + $0x20] sm:$0xff]
        %v696 = vld [vmem:[%s690 + $0x28] sm:$0xff]
        %v697 = vld [vmem:[%s690 + $0x30] sm:$0xff]
        %v698 = vld [vmem:[%s690 + $0x38] sm:$0xff]
        %v699 = vld [vmem:[%s690 + $0x40] sm:$0xff]
        %v700 = vld [vmem:[%s13] sm:$0xff]
        %v701 = vld [vmem:[%s13 + $0x8] sm:$0xff]
        %v702 = vld [vmem:[%s13 + $0x10] sm:$0xff]
        %v703 = vld [vmem:[%s13 + $0x18] sm:$0xff]
        %v704 = vld [vmem:[%s13 + $0x20] sm:$0xff]
        %v705 = vld [vmem:[%s13 + $0x28] sm:$0xff]
        %s706 = scalar_lea.vmem %s13, 48
        %v707 = vld [vmem:[%s706] sm:$0xff]
        %v708 = vld [vmem:[%s706 + $0x8] sm:$0xff]
        %v709 = vld [vmem:[%s706 + $0x10] sm:$0xff]
        %v710 = vld [vmem:[%s706 + $0x18] sm:$0xff]
        %v711 = vld [vmem:[%s706 + $0x20] sm:$0xff]
        %v712 = vld [vmem:[%s706 + $0x28] sm:$0xff]
        %s713 = scalar_lea.vmem %s13, 96
        %v714 = vld [vmem:[%s713] sm:$0xff]
        %v715 = vld [vmem:[%s713 + $0x8] sm:$0xff]
        %v716 = vld [vmem:[%s713 + $0x10] sm:$0xff]
        %v717 = vld [vmem:[%s713 + $0x18] sm:$0xff]
        %v718 = vld [vmem:[%s713 + $0x20] sm:$0xff]
        %v719 = vld [vmem:[%s713 + $0x28] sm:$0xff]
        %s720 = scalar_lea.vmem %s13, 144
        %v721 = vld [vmem:[%s720] sm:$0xff]
        %v722 = vld [vmem:[%s720 + $0x8] sm:$0xff]
        %v723 = vld [vmem:[%s720 + $0x10] sm:$0xff]
        %v724 = vld [vmem:[%s720 + $0x18] sm:$0xff]
        %v725 = vld [vmem:[%s720 + $0x20] sm:$0xff]
        %v726 = vld [vmem:[%s720 + $0x28] sm:$0xff]
        %v727 = vld [vmem:[%s2] sm:$0x3]
        %v728 = vld [vmem:[%s8] sm:$0x1]
        %v729 = vld [vmem:[%s3] sm:$0xff]
        %v730 = vld [vmem:[%s3 + $0x8] sm:$0xf]
        %v731 = vld [vmem:[%s4] sm:$0xff]
        %v732 = vld [vmem:[%s4 + $0x8] sm:$0xf]
        %v733 = vld [vmem:[%s5] sm:$0xff]
        %v734 = vld [vmem:[%s5 + $0x8] sm:$0xff]
        %v735 = vld [vmem:[%s5 + $0x10] sm:$0xff]
        %v736 = vld [vmem:[%s5 + $0x18] sm:$0xff]
        %v737 = vld [vmem:[%s5 + $0x20] sm:$0xff]
        %v738 = vld [vmem:[%s5 + $0x28] sm:$0xff]
        %v739 = vld [vmem:[%s5 + $0x30] sm:$0xff]
        %v740 = vld [vmem:[%s5 + $0x38] sm:$0xff]
        %v741 = vld [vmem:[%s5 + $0x40] sm:$0xff]
        %v742 = vld [vmem:[%s5 + $0x48] sm:$0xff]
        %v743 = vld [vmem:[%s5 + $0x50] sm:$0xff]
        %v744 = vld [vmem:[%s5 + $0x58] sm:$0xff]
        %v745 = vld [vmem:[%s5 + $0x60] sm:$0xff]
        %v746 = vld [vmem:[%s5 + $0x68] sm:$0xff]
        %v747 = vld [vmem:[%s5 + $0x70] sm:$0xff]
        %v748 = vld [vmem:[%s5 + $0x78] sm:$0xff]
        %v749 = vld [vmem:[%s5 + $0x80] sm:$0xff]
        %v750 = vld [vmem:[%s5 + $0x88] sm:$0xff]
        %v751 = vld [vmem:[%s6] sm:$0xff]
        %v752 = vld [vmem:[%s6 + $0x8] sm:$0xff]
        %v753 = vld [vmem:[%s6 + $0x10] sm:$0xff]
        %v754 = vld [vmem:[%s6 + $0x18] sm:$0xff]
        %v755 = vld [vmem:[%s6 + $0x20] sm:$0xff]
        %v756 = vld [vmem:[%s6 + $0x28] sm:$0xff]
        %v757 = vld [vmem:[%s6 + $0x30] sm:$0xff]
        %v758 = vld [vmem:[%s6 + $0x38] sm:$0xff]
        %v759 = vld [vmem:[%s6 + $0x40] sm:$0xff]
        %v760 = vld [vmem:[%s6 + $0x48] sm:$0xff]
        %v761 = vld [vmem:[%s6 + $0x50] sm:$0xff]
        %v762 = vld [vmem:[%s6 + $0x58] sm:$0xff]
        %v763 = vld [vmem:[%s6 + $0x60] sm:$0xff]
        %v764 = vld [vmem:[%s6 + $0x68] sm:$0xff]
        %v765 = vld [vmem:[%s6 + $0x70] sm:$0xff]
        %v766 = vld [vmem:[%s6 + $0x78] sm:$0xff]
        %v767 = vld [vmem:[%s6 + $0x80] sm:$0xff]
        %v768 = vld [vmem:[%s6 + $0x88] sm:$0xff]
        %v769 = vld [vmem:[%s9] sm:$0xf]
        %v770 = vld [vmem:[%s10] sm:$0xf]
        %v771 = vld [vmem:[%s11] sm:$0xff]
        %v772 = vld [vmem:[%s11 + $0x8] sm:$0xff]
        %v773 = vld [vmem:[%s11 + $0x10] sm:$0xff]
        %v774 = vld [vmem:[%s11 + $0x18] sm:$0xff]
        %v775 = vld [vmem:[%s11 + $0x20] sm:$0xff]
        %v776 = vld [vmem:[%s11 + $0x28] sm:$0xff]
        %v777 = vld [vmem:[%s11 + $0x30] sm:$0xff]
        %v778 = vld [vmem:[%s11 + $0x38] sm:$0xff]
        %v779 = vld [vmem:[%s11 + $0x40] sm:$0xff]
        %v780 = vld [vmem:[%s11 + $0x48] sm:$0xff]
        %v781 = vld [vmem:[%s11 + $0x50] sm:$0xff]
        %v782 = vld [vmem:[%s11 + $0x58] sm:$0xff]
        %v783 = vld [vmem:[%s12] sm:$0xff]
        %v784 = vld [vmem:[%s12 + $0x8] sm:$0xff]
        %v785 = vld [vmem:[%s12 + $0x10] sm:$0xff]
        %v786 = vld [vmem:[%s12 + $0x18] sm:$0xff]
        %v787 = vld [vmem:[%s12 + $0x20] sm:$0xff]
        %v788 = vld [vmem:[%s12 + $0x28] sm:$0xff]
        %v789 = vld [vmem:[%s12 + $0x30] sm:$0xff]
        %v790 = vld [vmem:[%s12 + $0x38] sm:$0xff]
        %v791 = vld [vmem:[%s12 + $0x40] sm:$0xff]
        %v792 = vld [vmem:[%s12 + $0x48] sm:$0xff]
        %v793 = vld [vmem:[%s12 + $0x50] sm:$0xff]
        %v794 = vld [vmem:[%s12 + $0x58] sm:$0xff]
        %v795 = vld [vmem:[%s14] sm:$0x1]
        %v796 = vld [vmem:[%s15] sm:$0xff]
        %v797 = vld [vmem:[%s15 + $0x8] sm:$0xff]
        %v798 = vld [vmem:[%s15 + $0x10] sm:$0xff]
        %v799 = vld [vmem:[%s15 + $0x18] sm:$0xff]
        %v800 = vld [vmem:[%s15 + $0x20] sm:$0xff]
        %v801 = vld [vmem:[%s15 + $0x28] sm:$0xff]
        %v802 = vld [vmem:[%s15 + $0x30] sm:$0xff]
        %v803 = vld [vmem:[%s15 + $0x38] sm:$0xff]
        %v804 = vld [vmem:[%s15 + $0x40] sm:$0xff]
        %v805 = vld [vmem:[%s15 + $0x48] sm:$0xff]
        %v806 = vld [vmem:[%s15 + $0x50] sm:$0xff]
        %v807 = vld [vmem:[%s15 + $0x58] sm:$0xff]
        %v808 = vld [vmem:[%s15 + $0x60] sm:$0xff]
        %v809 = vld [vmem:[%s15 + $0x68] sm:$0xff]
        %v810 = vld [vmem:[%s15 + $0x70] sm:$0xff]
        %v811 = vld [vmem:[%s16] sm:$0x1]
        %v812 = vld [vmem:[%s17] sm:$0xff]
        %v813 = vld [vmem:[%s17 + $0x8] sm:$0xff]
        %v814 = vld [vmem:[%s17 + $0x10] sm:$0xff]
        %v815 = vld [vmem:[%s17 + $0x18] sm:$0xff]
        %v816 = vld [vmem:[%s17 + $0x20] sm:$0xff]
        %v817 = vld [vmem:[%s17 + $0x28] sm:$0xff]
        %v818 = vld [vmem:[%s17 + $0x30] sm:$0xff]
        %v819 = vld [vmem:[%s17 + $0x38] sm:$0xf]
        %v820 = vld [vmem:[%s18] sm:$0x1]
        %v821 = vld [vmem:[%s604] sm:$0xff]
        %v822 = vld [vmem:[%s604 + $0x8] sm:$0xff]
        %v823 = vld [vmem:[%s604 + $0x10] sm:$0xff]
        %v824 = vld [vmem:[%s604 + $0x18] sm:$0xf]
        %vm829 = vcmask 1046528
        %v830 = vrot.slane %v821, 1
        %v831 = vrot.slane %v822, 1
        %v832 = vsel %vm829, %v830, %v831
        %v833 = vrot.slane %v823, 1
        %v834 = vsel %vm829, %v831, %v833
        %v835 = vrot.slane %v824, 1
        %v836 = vsel %vm829, %v833, %v835
        %vm837 = vcmask 228352
        %v838 = vsel %vm837, %v832, 0
        %v840 = vsel %vm837, %v834, 0
        %v842 = vsel %vm837, %v836, 0
        %vm844 = vcmask 1043456
        %v846 = vsel %vm844, %v622, 0
        %v849 = vsel %vm844, %v623, 0
        %851 = vmatprep.subr.mxu0 %v617
        %852 = vmatpush1.msra.mxu0 %v616
        %853 = vmatprep.subr.mxu0 %v619
        %854 = vmatpush1.msra.mxu0 %v618
        %855 = vmatprep.subr.mxu0 %v621
        %856 = vmatpush1.msra.mxu0 %v620
        %857 = vmatprep.subr.mxu0 %v849
        %858 = vmatpush1.msra.mxu0 %v846
        %859 = vmatprep.subr.mxu0 0.0
        %860 = vmatpush1.msra.mxu0 0.0
        %861 = vmatprep.subr.mxu0 0.0
        %862 = vmatpush1.msra.mxu0 0.0
        %863 = vmatprep.subr.mxu0 0.0
        %864 = vmatpush1.msra.mxu0 0.0
        %865 = vmatprep.subr.mxu0 0.0
        %866 = vmatpush1.msra.mxu0 0.0
        %867 = vmatprep.subr.mxu0 0.0
        %868 = vmatpush1.msra.mxu0 0.0
        %869 = vmatprep.subr.mxu0 0.0
        %870 = vmatpush1.msra.mxu0 0.0
        %871 = vmatprep.subr.mxu0 0.0
        %872 = vmatpush1.msra.mxu0 0.0
        %873 = vmatprep.subr.mxu0 0.0
        %874 = vmatpush1.msra.mxu0 0.0
        %875 = vmatprep.subr.mxu0 0.0
        %876 = vmatpush1.msra.mxu0 0.0
        %877 = vmatprep.subr.mxu0 0.0
        %878 = vmatpush1.msra.mxu0 0.0
        %879 = vmatprep.subr.mxu0 0.0
        %880 = vmatpush1.msra.mxu0 0.0
        %881 = vmatprep.subr.mxu0 0.0
        %882 = vmatpush1.msra.mxu0 0.0
        %883 = vmatprep.subr.mxu0 0.0
        %884 = vmatpush1.msra.mxu0 0.0
        %885 = vmatprep.subr.mxu0 0.0
        %886 = vmatpush1.msra.mxu0 0.0
        %887 = vmatprep.subr.mxu0 0.0
        %888 = vmatpush1.msra.mxu0 0.0
        %889 = vmatprep.subr.mxu0 0.0
        %890 = vmatpush1.msra.mxu0 0.0
        %891 = vmatprep.subr.mxu0 0.0
        %892 = vmatpush1.msra.mxu0 0.0
        %893 = vmatprep.subr.mxu0 0.0
        %894 = vmatpush1.msra.mxu0 0.0
        %895 = vmatprep.subr.mxu0 0.0
        %896 = vmatpush1.msra.mxu0 0.0
        %897 = vmatprep.subr.mxu0 0.0
        %898 = vmatpush1.msra.mxu0 0.0
        %899 = vmatprep.subr.mxu0 0.0
        %900 = vmatpush1.msra.mxu0 0.0
        %901 = vmatprep.subr.mxu0 0.0
        %902 = vmatpush1.msra.mxu0 0.0
        %903 = vmatprep.subr.mxu0 0.0
        %904 = vmatpush1.msra.mxu0 0.0
        %905 = vmatprep.subr.mxu0 0.0
        %906 = vmatpush1.msra.mxu0 0.0
        %907 = vmatprep.subr.mxu0 0.0
        %908 = vmatpush1.msra.mxu0 0.0
        %909 = vmatprep.subr.mxu0 0.0
        %910 = vmatpush1.msra.mxu0 0.0
        %911 = vmatprep.subr.mxu0 0.0
        %912 = vmatpush1.msra.mxu0 0.0
        %913 = vmatprep.subr.mxu0 0.0
        %914 = vmatpush1.msra.mxu0 0.0
        %915 = vmatprep.mubr.f32.mxu0 0.0
        %916 = vmatmul.mubr.f32.gmra.mrb[0].mxu0 %v838
        %v917 = vpop.f32.mrb[0].mxu0
        %v918 = vadd.f32 0.0, %v917
        %v919 = vpop.f32.mrb[0].mxu0
        %v920 = vadd.f32 0.0, %v919
        %921 = vmatprep.mubr.f32.mxu0 0.0
        %922 = vmatmul.mubr.f32.gmra.mrb[0].mxu0 %v840
        %v923 = vpop.f32.mrb[0].mxu0
        %v924 = vadd.f32 0.0, %v923
        %v925 = vpop.f32.mrb[0].mxu0
        %v926 = vadd.f32 0.0, %v925
        %927 = vmatprep.mubr.f32.mxu0 0.0
        %928 = vmatmul.mubr.f32.gmra.mrb[0].mxu0 %v842
        %v929 = vpop.f32.mrb[0].mxu0
        %v930 = vadd.f32 0.0, %v929
        %v931 = vpop.f32.mrb[0].mxu0
        %v932 = vadd.f32 0.0, %v931
        %933 = vdwg.mxu0
        %v934 = vsel %vm837, %v821, 0
        %v936 = vsel %vm837, %v822, 0
        %v938 = vsel %vm837, %v823, 0
        %v941 = vsel %vm844, %v613, 0
        %v944 = vsel %vm844, %v614, 0
        %946 = vmatprep.subr.mxu0 %v608
        %947 = vmatpush1.msra.mxu0 %v607
        %948 = vmatprep.subr.mxu0 %v610
        %949 = vmatpush1.msra.mxu0 %v609
        %950 = vmatprep.subr.mxu0 %v612
        %951 = vmatpush1.msra.mxu0 %v611
        %952 = vmatprep.subr.mxu0 %v944
        %953 = vmatpush1.msra.mxu0 %v941
        %954 = vmatprep.subr.mxu0 0.0
        %955 = vmatpush1.msra.mxu0 0.0
        %956 = vmatprep.subr.mxu0 0.0
        %957 = vmatpush1.msra.mxu0 0.0
        %958 = vmatprep.subr.mxu0 0.0
        %959 = vmatpush1.msra.mxu0 0.0
        %960 = vmatprep.subr.mxu0 0.0
        %961 = vmatpush1.msra.mxu0 0.0
        %962 = vmatprep.subr.mxu0 0.0
        %963 = vmatpush1.msra.mxu0 0.0
        %964 = vmatprep.subr.mxu0 0.0
        %965 = vmatpush1.msra.mxu0 0.0
        %966 = vmatprep.subr.mxu0 0.0
        %967 = vmatpush1.msra.mxu0 0.0
        %968 = vmatprep.subr.mxu0 0.0
        %969 = vmatpush1.msra.mxu0 0.0
        %970 = vmatprep.subr.mxu0 0.0
        %971 = vmatpush1.msra.mxu0 0.0
        %972 = vmatprep.subr.mxu0 0.0
        %973 = vmatpush1.msra.mxu0 0.0
        %974 = vmatprep.subr.mxu0 0.0
        %975 = vmatpush1.msra.mxu0 0.0
        %976 = vmatprep.subr.mxu0 0.0
        %977 = vmatpush1.msra.mxu0 0.0
        %978 = vmatprep.subr.mxu0 0.0
        %979 = vmatpush1.msra.mxu0 0.0
        %980 = vmatprep.subr.mxu0 0.0
        %981 = vmatpush1.msra.mxu0 0.0
        %982 = vmatprep.subr.mxu0 0.0
        %983 = vmatpush1.msra.mxu0 0.0
        %984 = vmatprep.subr.mxu0 0.0
        %985 = vmatpush1.msra.mxu0 0.0
        %986 = vmatprep.subr.mxu0 0.0
        %987 = vmatpush1.msra.mxu0 0.0
        %988 = vmatprep.subr.mxu0 0.0
        %989 = vmatpush1.msra.mxu0 0.0
        %990 = vmatprep.subr.mxu0 0.0
        %991 = vmatpush1.msra.mxu0 0.0
        %992 = vmatprep.subr.mxu0 0.0
        %993 = vmatpush1.msra.mxu0 0.0
        %994 = vmatprep.subr.mxu0 0.0
        %995 = vmatpush1.msra.mxu0 0.0
        %996 = vmatprep.subr.mxu0 0.0
        %997 = vmatpush1.msra.mxu0 0.0
        %998 = vmatprep.subr.mxu0 0.0
        %999 = vmatpush1.msra.mxu0 0.0
        %1000 = vmatprep.subr.mxu0 0.0
        %1001 = vmatpush1.msra.mxu0 0.0
        %1002 = vmatprep.subr.mxu0 0.0
        %1003 = vmatpush1.msra.mxu0 0.0
        %1004 = vmatprep.subr.mxu0 0.0
        %1005 = vmatpush1.msra.mxu0 0.0
        %1006 = vmatprep.subr.mxu0 0.0
        %1007 = vmatpush1.msra.mxu0 0.0
        %1008 = vmatprep.subr.mxu0 0.0
        %1009 = vmatpush1.msra.mxu0 0.0
        %1010 = vmatprep.mubr.f32.mxu0 0.0
        %1011 = vmatmul.mubr.f32.gmra.mrb[0].mxu0 %v934
        %v1012 = vpop.f32.mrb[0].mxu0
        %v1013 = vadd.f32 %v918, %v1012
        %v1014 = vpop.f32.mrb[0].mxu0
        %v1015 = vadd.f32 %v920, %v1014
        %1016 = vmatprep.mubr.f32.mxu0 0.0
        %1017 = vmatmul.mubr.f32.gmra.mrb[0].mxu0 %v936
        %v1018 = vpop.f32.mrb[0].mxu0
        %v1019 = vadd.f32 %v924, %v1018
        %v1020 = vpop.f32.mrb[0].mxu0
        %v1021 = vadd.f32 %v926, %v1020
        %1022 = vmatprep.mubr.f32.mxu0 0.0
        %1023 = vmatmul.mubr.f32.gmra.mrb[0].mxu0 %v938
        %v1024 = vpop.f32.mrb[0].mxu0
        %v1025 = vadd.f32 %v930, %v1024
        %v1026 = vpop.f32.mrb[0].mxu0
        %v1027 = vadd.f32 %v932, %v1026
        %1028 = vdwg.mxu0
        %vm1029 = vcmask 1045504
        %v1030 = vrot.slane %v821, 2
        %v1031 = vrot.slane %v822, 2
        %v1032 = vsel %vm1029, %v1030, %v1031
        %v1033 = vrot.slane %v823, 2
        %v1034 = vsel %vm1029, %v1031, %v1033
        %v1035 = vrot.slane %v824, 2
        %v1036 = vsel %vm1029, %v1033, %v1035
        %v1037 = vsel %vm837, %v1032, 0
        %v1039 = vsel %vm837, %v1034, 0
        %v1041 = vsel %vm837, %v1036, 0
        %v1044 = vsel %vm844, %v631, 0
        %v1047 = vsel %vm844, %v632, 0
        %1049 = vmatprep.subr.mxu0 %v626
        %1050 = vmatpush1.msra.mxu0 %v625
        %1051 = vmatprep.subr.mxu0 %v628
        %1052 = vmatpush1.msra.mxu0 %v627
        %1053 = vmatprep.subr.mxu0 %v630
        %1054 = vmatpush1.msra.mxu0 %v629
        %1055 = vmatprep.subr.mxu0 %v1047
        %1056 = vmatpush1.msra.mxu0 %v1044
        %1057 = vmatprep.subr.mxu0 0.0
        %1058 = vmatpush1.msra.mxu0 0.0
        %1059 = vmatprep.subr.mxu0 0.0
        %1060 = vmatpush1.msra.mxu0 0.0
        %1061 = vmatprep.subr.mxu0 0.0
        %1062 = vmatpush1.msra.mxu0 0.0
        %1063 = vmatprep.subr.mxu0 0.0
        %1064 = vmatpush1.msra.mxu0 0.0
        %1065 = vmatprep.subr.mxu0 0.0
        %1066 = vmatpush1.msra.mxu0 0.0
        %1067 = vmatprep.subr.mxu0 0.0
        %1068 = vmatpush1.msra.mxu0 0.0
        %1069 = vmatprep.subr.mxu0 0.0
        %1070 = vmatpush1.msra.mxu0 0.0
        %1071 = vmatprep.subr.mxu0 0.0
        %1072 = vmatpush1.msra.mxu0 0.0
        %1073 = vmatprep.subr.mxu0 0.0
        %1074 = vmatpush1.msra.mxu0 0.0
        %1075 = vmatprep.subr.mxu0 0.0
        %1076 = vmatpush1.msra.mxu0 0.0
        %1077 = vmatprep.subr.mxu0 0.0
        %1078 = vmatpush1.msra.mxu0 0.0
        %1079 = vmatprep.subr.mxu0 0.0
        %1080 = vmatpush1.msra.mxu0 0.0
        %1081 = vmatprep.subr.mxu0 0.0
        %1082 = vmatpush1.msra.mxu0 0.0
        %1083 = vmatprep.subr.mxu0 0.0
        %1084 = vmatpush1.msra.mxu0 0.0
        %1085 = vmatprep.subr.mxu0 0.0
        %1086 = vmatpush1.msra.mxu0 0.0
        %1087 = vmatprep.subr.mxu0 0.0
        %1088 = vmatpush1.msra.mxu0 0.0
        %1089 = vmatprep.subr.mxu0 0.0
        %1090 = vmatpush1.msra.mxu0 0.0
        %1091 = vmatprep.subr.mxu0 0.0
        %1092 = vmatpush1.msra.mxu0 0.0
        %1093 = vmatprep.subr.mxu0 0.0
        %1094 = vmatpush1.msra.mxu0 0.0
        %1095 = vmatprep.subr.mxu0 0.0
        %1096 = vmatpush1.msra.mxu0 0.0
        %1097 = vmatprep.subr.mxu0 0.0
        %1098 = vmatpush1.msra.mxu0 0.0
        %1099 = vmatprep.subr.mxu0 0.0
        %1100 = vmatpush1.msra.mxu0 0.0
        %1101 = vmatprep.subr.mxu0 0.0
        %1102 = vmatpush1.msra.mxu0 0.0
        %1103 = vmatprep.subr.mxu0 0.0
        %1104 = vmatpush1.msra.mxu0 0.0
        %1105 = vmatprep.subr.mxu0 0.0
        %1106 = vmatpush1.msra.mxu0 0.0
        %1107 = vmatprep.subr.mxu0 0.0
        %1108 = vmatpush1.msra.mxu0 0.0
        %1109 = vmatprep.subr.mxu0 0.0
        %1110 = vmatpush1.msra.mxu0 0.0
        %1111 = vmatprep.subr.mxu0 0.0
        %1112 = vmatpush1.msra.mxu0 0.0
        %1113 = vmatprep.mubr.f32.mxu0 0.0
        %1114 = vmatmul.mubr.f32.gmra.mrb[0].mxu0 %v1037
        %v1115 = vpop.f32.mrb[0].mxu0
        %v1116 = vadd.f32 0.0, %v1115
        %v1117 = vpop.f32.mrb[0].mxu0
        %v1118 = vadd.f32 0.0, %v1117
        %1119 = vmatprep.mubr.f32.mxu0 0.0
        %1120 = vmatmul.mubr.f32.gmra.mrb[0].mxu0 %v1039
        %v1121 = vpop.f32.mrb[0].mxu0
        %v1122 = vadd.f32 0.0, %v1121
        %v1123 = vpop.f32.mrb[0].mxu0
        %v1124 = vadd.f32 0.0, %v1123
        %1125 = vmatprep.mubr.f32.mxu0 0.0
        %1126 = vmatmul.mubr.f32.gmra.mrb[0].mxu0 %v1041
        %v1127 = vpop.f32.mrb[0].mxu0
        %v1128 = vadd.f32 0.0, %v1127
        %v1129 = vpop.f32.mrb[0].mxu0
        %v1130 = vadd.f32 0.0, %v1129
        %1131 = vdwg.mxu0
        %v1132 = vadd.f32 %v1013, %v1116
        %v1133 = vadd.f32 %v1015, %v1118
        %v1134 = vadd.f32 %v1019, %v1122
        %v1135 = vadd.f32 %v1021, %v1124
        %v1136 = vadd.f32 %v1025, %v1128
        %v1137 = vadd.f32 %v1027, %v1130
        %vm1138 = vcmask 1044480
        %v1139 = vrot.slane %v821, 3
        %v1140 = vrot.slane %v822, 3
        %v1141 = vsel %vm1138, %v1139, %v1140
        %v1142 = vrot.slane %v823, 3
        %v1143 = vsel %vm1138, %v1140, %v1142
        %v1144 = vrot.slane %v824, 3
        %v1145 = vsel %vm1138, %v1142, %v1144
        %v1146 = vsel %vm837, %v1141, 0
        %v1148 = vsel %vm837, %v1143, 0
        %v1150 = vsel %vm837, %v1145, 0
        %v1153 = vsel %vm844, %v640, 0
        %v1156 = vsel %vm844, %v641, 0
        %1158 = vmatprep.subr.mxu0 %v635
        %1159 = vmatpush1.msra.mxu0 %v634
        %1160 = vmatprep.subr.mxu0 %v637
        %1161 = vmatpush1.msra.mxu0 %v636
        %1162 = vmatprep.subr.mxu0 %v639
        %1163 = vmatpush1.msra.mxu0 %v638
        %1164 = vmatprep.subr.mxu0 %v1156
        %1165 = vmatpush1.msra.mxu0 %v1153
        %1166 = vmatprep.subr.mxu0 0.0
        %1167 = vmatpush1.msra.mxu0 0.0
        %1168 = vmatprep.subr.mxu0 0.0
        %1169 = vmatpush1.msra.mxu0 0.0
        %1170 = vmatprep.subr.mxu0 0.0
        %1171 = vmatpush1.msra.mxu0 0.0
        %1172 = vmatprep.subr.mxu0 0.0
        %1173 = vmatpush1.msra.mxu0 0.0
        %1174 = vmatprep.subr.mxu0 0.0
        %1175 = vmatpush1.msra.mxu0 0.0
        %1176 = vmatprep.subr.mxu0 0.0
        %1177 = vmatpush1.msra.mxu0 0.0
        %1178 = vmatprep.subr.mxu0 0.0
        %1179 = vmatpush1.msra.mxu0 0.0
        %1180 = vmatprep.subr.mxu0 0.0
        %1181 = vmatpush1.msra.mxu0 0.0
        %1182 = vmatprep.subr.mxu0 0.0
        %1183 = vmatpush1.msra.mxu0 0.0
        %1184 = vmatprep.subr.mxu0 0.0
        %1185 = vmatpush1.msra.mxu0 0.0
        %1186 = vmatprep.subr.mxu0 0.0
        %1187 = vmatpush1.msra.mxu0 0.0
        %1188 = vmatprep.subr.mxu0 0.0
        %1189 = vmatpush1.msra.mxu0 0.0
        %1190 = vmatprep.subr.mxu0 0.0
        %1191 = vmatpush1.msra.mxu0 0.0
        %1192 = vmatprep.subr.mxu0 0.0
        %1193 = vmatpush1.msra.mxu0 0.0
        %1194 = vmatprep.subr.mxu0 0.0
        %1195 = vmatpush1.msra.mxu0 0.0
        %1196 = vmatprep.subr.mxu0 0.0
        %1197 = vmatpush1.msra.mxu0 0.0
        %1198 = vmatprep.subr.mxu0 0.0
        %1199 = vmatpush1.msra.mxu0 0.0
        %1200 = vmatprep.subr.mxu0 0.0
        %1201 = vmatpush1.msra.mxu0 0.0
        %1202 = vmatprep.subr.mxu0 0.0
        %1203 = vmatpush1.msra.mxu0 0.0
        %1204 = vmatprep.subr.mxu0 0.0
        %1205 = vmatpush1.msra.mxu0 0.0
        %1206 = vmatprep.subr.mxu0 0.0
        %1207 = vmatpush1.msra.mxu0 0.0
        %1208 = vmatprep.subr.mxu0 0.0
        %1209 = vmatpush1.msra.mxu0 0.0
        %1210 = vmatprep.subr.mxu0 0.0
        %1211 = vmatpush1.msra.mxu0 0.0
        %1212 = vmatprep.subr.mxu0 0.0
        %1213 = vmatpush1.msra.mxu0 0.0
        %1214 = vmatprep.subr.mxu0 0.0
        %1215 = vmatpush1.msra.mxu0 0.0
        %1216 = vmatprep.subr.mxu0 0.0
        %1217 = vmatpush1.msra.mxu0 0.0
        %1218 = vmatprep.subr.mxu0 0.0
        %1219 = vmatpush1.msra.mxu0 0.0
        %1220 = vmatprep.subr.mxu0 0.0
        %1221 = vmatpush1.msra.mxu0 0.0
        %1222 = vmatprep.mubr.f32.mxu0 0.0
        %1223 = vmatmul.mubr.f32.gmra.mrb[0].mxu0 %v1146
        %v1224 = vpop.f32.mrb[0].mxu0
        %v1225 = vadd.f32 0.0, %v1224
        %v1226 = vpop.f32.mrb[0].mxu0
        %v1227 = vadd.f32 0.0, %v1226
        %1228 = vmatprep.mubr.f32.mxu0 0.0
        %1229 = vmatmul.mubr.f32.gmra.mrb[0].mxu0 %v1148
        %v1230 = vpop.f32.mrb[0].mxu0
        %v1231 = vadd.f32 0.0, %v1230
        %v1232 = vpop.f32.mrb[0].mxu0
        %v1233 = vadd.f32 0.0, %v1232
        %1234 = vmatprep.mubr.f32.mxu0 0.0
        %1235 = vmatmul.mubr.f32.gmra.mrb[0].mxu0 %v1150
        %v1236 = vpop.f32.mrb[0].mxu0
        %v1237 = vadd.f32 0.0, %v1236
        %v1238 = vpop.f32.mrb[0].mxu0
        %v1239 = vadd.f32 0.0, %v1238
        %1240 = vdwg.mxu0
        %v1241 = vadd.f32 %v1132, %v1225
        %v1242 = vadd.f32 %v1133, %v1227
        %v1243 = vadd.f32 %v1134, %v1231
        %v1244 = vadd.f32 %v1135, %v1233
        %v1245 = vadd.f32 %v1136, %v1237
        %v1246 = vadd.f32 %v1137, %v1239
        %v1247 = vrot.slane %v821, 4
        %v1248 = vrot.slane %v822, 4
        %v1249 = vsel %vm844, %v1247, %v1248
        %v1250 = vrot.slane %v823, 4
        %v1251 = vsel %vm844, %v1248, %v1250
        %v1252 = vrot.slane %v824, 4
        %v1253 = vsel %vm844, %v1250, %v1252
        %v1254 = vsel %vm837, %v1249, 0
        %v1256 = vsel %vm837, %v1251, 0
        %v1258 = vsel %vm837, %v1253, 0
        %v1261 = vsel %vm844, %v649, 0
        %v1264 = vsel %vm844, %v650, 0
        %1266 = vmatprep.subr.mxu0 %v644
        %1267 = vmatpush1.msra.mxu0 %v643
        %1268 = vmatprep.subr.mxu0 %v646
        %1269 = vmatpush1.msra.mxu0 %v645
        %1270 = vmatprep.subr.mxu0 %v648
        %1271 = vmatpush1.msra.mxu0 %v647
        %1272 = vmatprep.subr.mxu0 %v1264
        %1273 = vmatpush1.msra.mxu0 %v1261
        %1274 = vmatprep.subr.mxu0 0.0
        %1275 = vmatpush1.msra.mxu0 0.0
        %1276 = vmatprep.subr.mxu0 0.0
        %1277 = vmatpush1.msra.mxu0 0.0
        %1278 = vmatprep.subr.mxu0 0.0
        %1279 = vmatpush1.msra.mxu0 0.0
        %1280 = vmatprep.subr.mxu0 0.0
        %1281 = vmatpush1.msra.mxu0 0.0
        %1282 = vmatprep.subr.mxu0 0.0
        %1283 = vmatpush1.msra.mxu0 0.0
        %1284 = vmatprep.subr.mxu0 0.0
        %1285 = vmatpush1.msra.mxu0 0.0
        %1286 = vmatprep.subr.mxu0 0.0
        %1287 = vmatpush1.msra.mxu0 0.0
        %1288 = vmatprep.subr.mxu0 0.0
        %1289 = vmatpush1.msra.mxu0 0.0
        %1290 = vmatprep.subr.mxu0 0.0
        %1291 = vmatpush1.msra.mxu0 0.0
        %1292 = vmatprep.subr.mxu0 0.0
        %1293 = vmatpush1.msra.mxu0 0.0
        %1294 = vmatprep.subr.mxu0 0.0
        %1295 = vmatpush1.msra.mxu0 0.0
        %1296 = vmatprep.subr.mxu0 0.0
        %1297 = vmatpush1.msra.mxu0 0.0
        %1298 = vmatprep.subr.mxu0 0.0
        %1299 = vmatpush1.msra.mxu0 0.0
        %1300 = vmatprep.subr.mxu0 0.0
        %1301 = vmatpush1.msra.mxu0 0.0
        %1302 = vmatprep.subr.mxu0 0.0
        %1303 = vmatpush1.msra.mxu0 0.0
        %1304 = vmatprep.subr.mxu0 0.0
        %1305 = vmatpush1.msra.mxu0 0.0
        %1306 = vmatprep.subr.mxu0 0.0
        %1307 = vmatpush1.msra.mxu0 0.0
        %1308 = vmatprep.subr.mxu0 0.0
        %1309 = vmatpush1.msra.mxu0 0.0
        %1310 = vmatprep.subr.mxu0 0.0
        %1311 = vmatpush1.msra.mxu0 0.0
        %1312 = vmatprep.subr.mxu0 0.0
        %1313 = vmatpush1.msra.mxu0 0.0
        %1314 = vmatprep.subr.mxu0 0.0
        %1315 = vmatpush1.msra.mxu0 0.0
        %1316 = vmatprep.subr.mxu0 0.0
        %1317 = vmatpush1.msra.mxu0 0.0
        %1318 = vmatprep.subr.mxu0 0.0
        %1319 = vmatpush1.msra.mxu0 0.0
        %1320 = vmatprep.subr.mxu0 0.0
        %1321 = vmatpush1.msra.mxu0 0.0
        %1322 = vmatprep.subr.mxu0 0.0
        %1323 = vmatpush1.msra.mxu0 0.0
        %1324 = vmatprep.subr.mxu0 0.0
        %1325 = vmatpush1.msra.mxu0 0.0
        %1326 = vmatprep.subr.mxu0 0.0
        %1327 = vmatpush1.msra.mxu0 0.0
        %1328 = vmatprep.subr.mxu0 0.0
        %1329 = vmatpush1.msra.mxu0 0.0
        %1330 = vmatprep.mubr.f32.mxu0 0.0
        %1331 = vmatmul.mubr.f32.gmra.mrb[0].mxu0 %v1254
        %v1332 = vpop.f32.mrb[0].mxu0
        %v1333 = vadd.f32 0.0, %v1332
        %v1334 = vpop.f32.mrb[0].mxu0
        %v1335 = vadd.f32 0.0, %v1334
        %1336 = vmatprep.mubr.f32.mxu0 0.0
        %1337 = vmatmul.mubr.f32.gmra.mrb[0].mxu0 %v1256
        %v1338 = vpop.f32.mrb[0].mxu0
        %v1339 = vadd.f32 0.0, %v1338
        %v1340 = vpop.f32.mrb[0].mxu0
        %v1341 = vadd.f32 0.0, %v1340
        %1342 = vmatprep.mubr.f32.mxu0 0.0
        %1343 = vmatmul.mubr.f32.gmra.mrb[0].mxu0 %v1258
        %v1344 = vpop.f32.mrb[0].mxu0
        %v1345 = vadd.f32 0.0, %v1344
        %v1346 = vpop.f32.mrb[0].mxu0
        %v1347 = vadd.f32 0.0, %v1346
        %1348 = vdwg.mxu0
        %v1349 = vadd.f32 %v1241, %v1333
        %v1350 = vadd.f32 %v1242, %v1335
        %v1351 = vadd.f32 %v1243, %v1339
        %v1352 = vadd.f32 %v1244, %v1341
        %v1353 = vadd.f32 %v1245, %v1345
        %v1354 = vadd.f32 %v1246, %v1347
        %v1356 = vlaneseq
        %v1357 = vshrl.u32 %v1356, 7
        %v1358 = vsub.s32 0, %v1357
        %v1359 = vrot.slane %v727, %v1358
        %v1360 = vlaneseq
        %v1361 = vshrl.u32 %v1360, 7
        %v1362 = vsub.s32 1, %v1361
        %v1363 = vrot.slane %v727, %v1362
        %v1366 = vadd.f32 %v1349, %v1359
        %v1367 = vadd.f32 %v1350, %v1363
        %v1368 = vadd.f32 %v1351, %v1359
        %v1369 = vadd.f32 %v1352, %v1363
        %v1370 = vadd.f32 %v1353, %v1359
        %v1371 = vadd.f32 %v1354, %v1363
        %v1372 = vmax.f32 %v1366, 0.0
        %v1373 = vmax.f32 %v1367, 0.0
        %v1374 = vmax.f32 %v1368, 0.0
        %v1375 = vmax.f32 %v1369, 0.0
        %v1376 = vmax.f32 %v1370, 0.0
        %v1377 = vmax.f32 %v1371, 0.0
        %vm1378 = vcmask 195584
        %v1380 = vsel %vm1378, %v729, 0
        %v1383 = vsel %vm1378, %v730, 0
        %1385 = vmatprep.subr.mxu0 %v1373
        %1386 = vmatpush1.msra.mxu0 %v1372
        %1387 = vmatprep.subr.mxu0 %v1375
        %1388 = vmatpush1.msra.mxu0 %v1374
        %1389 = vmatprep.subr.mxu0 %v1377
        %1390 = vmatpush1.msra.mxu0 %v1376
        %1391 = vmatprep.subr.mxu0 0.0
        %1392 = vmatpush1.msra.mxu0 0.0
        %1393 = vmatprep.subr.mxu0 0.0
        %1394 = vmatpush1.msra.mxu0 0.0
        %1395 = vmatprep.subr.mxu0 0.0
        %1396 = vmatpush1.msra.mxu0 0.0
        %1397 = vmatprep.subr.mxu0 0.0
        %1398 = vmatpush1.msra.mxu0 0.0
        %1399 = vmatprep.subr.mxu0 0.0
        %1400 = vmatpush1.msra.mxu0 0.0
        %1401 = vmatprep.subr.mxu0 0.0
        %1402 = vmatpush1.msra.mxu0 0.0
        %1403 = vmatprep.subr.mxu0 0.0
        %1404 = vmatpush1.msra.mxu0 0.0
        %1405 = vmatprep.subr.mxu0 0.0
        %1406 = vmatpush1.msra.mxu0 0.0
        %1407 = vmatprep.subr.mxu0 0.0
        %1408 = vmatpush1.msra.mxu0 0.0
        %1409 = vmatprep.subr.mxu0 0.0
        %1410 = vmatpush1.msra.mxu0 0.0
        %1411 = vmatprep.subr.mxu0 0.0
        %1412 = vmatpush1.msra.mxu0 0.0
        %1413 = vmatprep.subr.mxu0 0.0
        %1414 = vmatpush1.msra.mxu0 0.0
        %1415 = vmatprep.subr.mxu0 0.0
        %1416 = vmatpush1.msra.mxu0 0.0
        %1417 = vmatprep.subr.mxu0 0.0
        %1418 = vmatpush1.msra.mxu0 0.0
        %1419 = vmatprep.subr.mxu0 0.0
        %1420 = vmatpush1.msra.mxu0 0.0
        %1421 = vmatprep.subr.mxu0 0.0
        %1422 = vmatpush1.msra.mxu0 0.0
        %1423 = vmatprep.subr.mxu0 0.0
        %1424 = vmatpush1.msra.mxu0 0.0
        %1425 = vmatprep.subr.mxu0 0.0
        %1426 = vmatpush1.msra.mxu0 0.0
        %1427 = vmatprep.subr.mxu0 0.0
        %1428 = vmatpush1.msra.mxu0 0.0
        %1429 = vmatprep.subr.mxu0 0.0
        %1430 = vmatpush1.msra.mxu0 0.0
        %1431 = vmatprep.subr.mxu0 0.0
        %1432 = vmatpush1.msra.mxu0 0.0
        %1433 = vmatprep.subr.mxu0 0.0
        %1434 = vmatpush1.msra.mxu0 0.0
        %1435 = vmatprep.subr.mxu0 0.0
        %1436 = vmatpush1.msra.mxu0 0.0
        %1437 = vmatprep.subr.mxu0 0.0
        %1438 = vmatpush1.msra.mxu0 0.0
        %1439 = vmatprep.subr.mxu0 0.0
        %1440 = vmatpush1.msra.mxu0 0.0
        %1441 = vmatprep.subr.mxu0 0.0
        %1442 = vmatpush1.msra.mxu0 0.0
        %1443 = vmatprep.subr.mxu0 0.0
        %1444 = vmatpush1.msra.mxu0 0.0
        %1445 = vmatprep.subr.mxu0 0.0
        %1446 = vmatpush1.msra.mxu0 0.0
        %1447 = vmatprep.subr.mxu0 0.0
        %1448 = vmatpush1.msra.mxu0 0.0
        %1449 = vmatprep.mubr.f32.mxu0 0.0
        %1450 = vmatmul.mubr.f32.gmra.mrb[0].mxu0 %v1380
        %v1451 = vpop.f32.mrb[0].mxu0
        %v1452 = vadd.f32 0.0, %v1451
        %v1453 = vpop.f32.mrb[0].mxu0
        %v1454 = vadd.f32 0.0, %v1453
        %1455 = vmatprep.mubr.f32.mxu0 0.0
        %1456 = vmatmul.mubr.f32.gmra.mrb[0].mxu0 %v1383
        %v1457 = vpop.f32.mrb[0].mxu0
        %v1458 = vadd.f32 0.0, %v1457
        %v1459 = vpop.f32.mrb[0].mxu0
        %v1460 = vadd.f32 0.0, %v1459
        %1461 = vdwg.mxu0
        %v1463 = vsel %vm1378, %v731, 0
        %v1466 = vsel %vm1378, %v732, 0
        %1468 = vmatprep.subr.mxu0 %v1373
        %1469 = vmatpush1.msra.mxu0 %v1372
        %1470 = vmatprep.subr.mxu0 %v1375
        %1471 = vmatpush1.msra.mxu0 %v1374
        %1472 = vmatprep.subr.mxu0 %v1377
        %1473 = vmatpush1.msra.mxu0 %v1376
        %1474 = vmatprep.subr.mxu0 0.0
        %1475 = vmatpush1.msra.mxu0 0.0
        %1476 = vmatprep.subr.mxu0 0.0
        %1477 = vmatpush1.msra.mxu0 0.0
        %1478 = vmatprep.subr.mxu0 0.0
        %1479 = vmatpush1.msra.mxu0 0.0
        %1480 = vmatprep.subr.mxu0 0.0
        %1481 = vmatpush1.msra.mxu0 0.0
        %1482 = vmatprep.subr.mxu0 0.0
        %1483 = vmatpush1.msra.mxu0 0.0
        %1484 = vmatprep.subr.mxu0 0.0
        %1485 = vmatpush1.msra.mxu0 0.0
        %1486 = vmatprep.subr.mxu0 0.0
        %1487 = vmatpush1.msra.mxu0 0.0
        %1488 = vmatprep.subr.mxu0 0.0
        %1489 = vmatpush1.msra.mxu0 0.0
        %1490 = vmatprep.subr.mxu0 0.0
        %1491 = vmatpush1.msra.mxu0 0.0
        %1492 = vmatprep.subr.mxu0 0.0
        %1493 = vmatpush1.msra.mxu0 0.0
        %1494 = vmatprep.subr.mxu0 0.0
        %1495 = vmatpush1.msra.mxu0 0.0
        %1496 = vmatprep.subr.mxu0 0.0
        %1497 = vmatpush1.msra.mxu0 0.0
        %1498 = vmatprep.subr.mxu0 0.0
        %1499 = vmatpush1.msra.mxu0 0.0
        %1500 = vmatprep.subr.mxu0 0.0
        %1501 = vmatpush1.msra.mxu0 0.0
        %1502 = vmatprep.subr.mxu0 0.0
        %1503 = vmatpush1.msra.mxu0 0.0
        %1504 = vmatprep.subr.mxu0 0.0
        %1505 = vmatpush1.msra.mxu0 0.0
        %1506 = vmatprep.subr.mxu0 0.0
        %1507 = vmatpush1.msra.mxu0 0.0
        %1508 = vmatprep.subr.mxu0 0.0
        %1509 = vmatpush1.msra.mxu0 0.0
        %1510 = vmatprep.subr.mxu0 0.0
        %1511 = vmatpush1.msra.mxu0 0.0
        %1512 = vmatprep.subr.mxu0 0.0
        %1513 = vmatpush1.msra.mxu0 0.0
        %1514 = vmatprep.subr.mxu0 0.0
        %1515 = vmatpush1.msra.mxu0 0.0
        %1516 = vmatprep.subr.mxu0 0.0
        %1517 = vmatpush1.msra.mxu0 0.0
        %1518 = vmatprep.subr.mxu0 0.0
        %1519 = vmatpush1.msra.mxu0 0.0
        %1520 = vmatprep.subr.mxu0 0.0
        %1521 = vmatpush1.msra.mxu0 0.0
        %1522 = vmatprep.subr.mxu0 0.0
        %1523 = vmatpush1.msra.mxu0 0.0
        %1524 = vmatprep.subr.mxu0 0.0
        %1525 = vmatpush1.msra.mxu0 0.0
        %1526 = vmatprep.subr.mxu0 0.0
        %1527 = vmatpush1.msra.mxu0 0.0
        %1528 = vmatprep.subr.mxu0 0.0
        %1529 = vmatpush1.msra.mxu0 0.0
        %1530 = vmatprep.subr.mxu0 0.0
        %1531 = vmatpush1.msra.mxu0 0.0
        %1532 = vmatprep.mubr.f32.mxu0 0.0
        %1533 = vmatmul.mubr.f32.gmra.mrb[0].mxu0 %v1463
        %v1534 = vpop.f32.mrb[0].mxu0
        %v1535 = vadd.f32 0.0, %v1534
        %v1536 = vpop.f32.mrb[0].mxu0
        %v1537 = vadd.f32 0.0, %v1536
        %1538 = vmatprep.mubr.f32.mxu0 0.0
        %1539 = vmatmul.mubr.f32.gmra.mrb[0].mxu0 %v1466
        %v1540 = vpop.f32.mrb[0].mxu0
        %v1541 = vadd.f32 0.0, %v1540
        %v1542 = vpop.f32.mrb[0].mxu0
        %v1543 = vadd.f32 0.0, %v1542
        %1544 = vdwg.mxu0
        %v1545 = vmax.f32 %v1452, %v1535
        %v1546 = vmax.f32 %v1454, %v1537
        %v1547 = vmax.f32 %v1458, %v1541
        %v1548 = vmax.f32 %v1460, %v1543
        %vm1549 = vcmask 130048
        %v1551 = vsel %vm1549, %v1546, 0
        %v1554 = vsel %vm1549, %v1548, 0
        %1556 = vmatprep.subr.mxu0 0.0
        %1557 = vmatpush1.msra.mxu0 %v733
        %1558 = vmatprep.subr.mxu0 0.0
        %1559 = vmatpush1.msra.mxu0 %v734
        %1560 = vmatprep.subr.mxu0 0.0
        %1561 = vmatpush1.msra.mxu0 %v735
        %1562 = vmatprep.subr.mxu0 0.0
        %1563 = vmatpush1.msra.mxu0 %v736
        %1564 = vmatprep.subr.mxu0 0.0
        %1565 = vmatpush1.msra.mxu0 %v737
        %1566 = vmatprep.subr.mxu0 0.0
        %1567 = vmatpush1.msra.mxu0 %v738
        %1568 = vmatprep.subr.mxu0 0.0
        %1569 = vmatpush1.msra.mxu0 %v739
        %1570 = vmatprep.subr.mxu0 0.0
        %1571 = vmatpush1.msra.mxu0 %v740
        %1572 = vmatprep.subr.mxu0 0.0
        %1573 = vmatpush1.msra.mxu0 %v741
        %1574 = vmatprep.subr.mxu0 0.0
        %1575 = vmatpush1.msra.mxu0 %v742
        %1576 = vmatprep.subr.mxu0 0.0
        %1577 = vmatpush1.msra.mxu0 %v743
        %1578 = vmatprep.subr.mxu0 0.0
        %1579 = vmatpush1.msra.mxu0 %v744
        %1580 = vmatprep.subr.mxu0 0.0
        %1581 = vmatpush1.msra.mxu0 %v745
        %1582 = vmatprep.subr.mxu0 0.0
        %1583 = vmatpush1.msra.mxu0 %v746
        %1584 = vmatprep.subr.mxu0 0.0
        %1585 = vmatpush1.msra.mxu0 %v747
        %1586 = vmatprep.subr.mxu0 0.0
        %1587 = vmatpush1.msra.mxu0 %v748
        %1588 = vmatprep.subr.mxu0 0.0
        %1589 = vmatpush1.msra.mxu0 %v749
        %1590 = vmatprep.subr.mxu0 0.0
        %1591 = vmatpush1.msra.mxu0 %v750
        %1592 = vmatprep.subr.mxu0 0.0
        %1593 = vmatpush1.msra.mxu0 0.0
        %1594 = vmatprep.subr.mxu0 0.0
        %1595 = vmatpush1.msra.mxu0 0.0
        %1596 = vmatprep.subr.mxu0 0.0
        %1597 = vmatpush1.msra.mxu0 0.0
        %1598 = vmatprep.subr.mxu0 0.0
        %1599 = vmatpush1.msra.mxu0 0.0
        %1600 = vmatprep.subr.mxu0 0.0
        %1601 = vmatpush1.msra.mxu0 0.0
        %1602 = vmatprep.subr.mxu0 0.0
        %1603 = vmatpush1.msra.mxu0 0.0
        %1604 = vmatprep.subr.mxu0 0.0
        %1605 = vmatpush1.msra.mxu0 0.0
        %1606 = vmatprep.subr.mxu0 0.0
        %1607 = vmatpush1.msra.mxu0 0.0
        %1608 = vmatprep.subr.mxu0 0.0
        %1609 = vmatpush1.msra.mxu0 0.0
        %1610 = vmatprep.subr.mxu0 0.0
        %1611 = vmatpush1.msra.mxu0 0.0
        %1612 = vmatprep.subr.mxu0 0.0
        %1613 = vmatpush1.msra.mxu0 0.0
        %1614 = vmatprep.subr.mxu0 0.0
        %1615 = vmatpush1.msra.mxu0 0.0
        %1616 = vmatprep.subr.mxu0 0.0
        %1617 = vmatpush1.msra.mxu0 0.0
        %1618 = vmatprep.subr.mxu0 0.0
        %1619 = vmatpush1.msra.mxu0 0.0
        %1620 = vmatprep.mubr.f32.mxu0 %v1551
        %1621 = vmatmul.mubr.f32.gmra.mrb[0].mxu0 %v1545
        %v1622 = vpop.f32.mrb[0].mxu0
        %v1623 = vadd.f32 0.0, %v1622
        %v1624 = vpop.f32.mrb[0].mxu0
        %1625 = vmatprep.mubr.f32.mxu0 %v1554
        %1626 = vmatmul.mubr.f32.gmra.mrb[0].mxu0 %v1547
        %v1627 = vpop.f32.mrb[0].mxu0
        %v1628 = vadd.f32 0.0, %v1627
        %v1629 = vpop.f32.mrb[0].mxu0
        %1630 = vdwg.mxu0
        %1631 = vmatprep.subr.mxu0 0.0
        %1632 = vmatpush1.msra.mxu0 %v751
        %1633 = vmatprep.subr.mxu0 0.0
        %1634 = vmatpush1.msra.mxu0 %v752
        %1635 = vmatprep.subr.mxu0 0.0
        %1636 = vmatpush1.msra.mxu0 %v753
        %1637 = vmatprep.subr.mxu0 0.0
        %1638 = vmatpush1.msra.mxu0 %v754
        %1639 = vmatprep.subr.mxu0 0.0
        %1640 = vmatpush1.msra.mxu0 %v755
        %1641 = vmatprep.subr.mxu0 0.0
        %1642 = vmatpush1.msra.mxu0 %v756
        %1643 = vmatprep.subr.mxu0 0.0
        %1644 = vmatpush1.msra.mxu0 %v757
        %1645 = vmatprep.subr.mxu0 0.0
        %1646 = vmatpush1.msra.mxu0 %v758
        %1647 = vmatprep.subr.mxu0 0.0
        %1648 = vmatpush1.msra.mxu0 %v759
        %1649 = vmatprep.subr.mxu0 0.0
        %1650 = vmatpush1.msra.mxu0 %v760
        %1651 = vmatprep.subr.mxu0 0.0
        %1652 = vmatpush1.msra.mxu0 %v761
        %1653 = vmatprep.subr.mxu0 0.0
        %1654 = vmatpush1.msra.mxu0 %v762
        %1655 = vmatprep.subr.mxu0 0.0
        %1656 = vmatpush1.msra.mxu0 %v763
        %1657 = vmatprep.subr.mxu0 0.0
        %1658 = vmatpush1.msra.mxu0 %v764
        %1659 = vmatprep.subr.mxu0 0.0
        %1660 = vmatpush1.msra.mxu0 %v765
        %1661 = vmatprep.subr.mxu0 0.0
        %1662 = vmatpush1.msra.mxu0 %v766
        %1663 = vmatprep.subr.mxu0 0.0
        %1664 = vmatpush1.msra.mxu0 %v767
        %1665 = vmatprep.subr.mxu0 0.0
        %1666 = vmatpush1.msra.mxu0 %v768
        %1667 = vmatprep.subr.mxu0 0.0
        %1668 = vmatpush1.msra.mxu0 0.0
        %1669 = vmatprep.subr.mxu0 0.0
        %1670 = vmatpush1.msra.mxu0 0.0
        %1671 = vmatprep.subr.mxu0 0.0
        %1672 = vmatpush1.msra.mxu0 0.0
        %1673 = vmatprep.subr.mxu0 0.0
        %1674 = vmatpush1.msra.mxu0 0.0
        %1675 = vmatprep.subr.mxu0 0.0
        %1676 = vmatpush1.msra.mxu0 0.0
        %1677 = vmatprep.subr.mxu0 0.0
        %1678 = vmatpush1.msra.mxu0 0.0
        %1679 = vmatprep.subr.mxu0 0.0
        %1680 = vmatpush1.msra.mxu0 0.0
        %1681 = vmatprep.subr.mxu0 0.0
        %1682 = vmatpush1.msra.mxu0 0.0
        %1683 = vmatprep.subr.mxu0 0.0
        %1684 = vmatpush1.msra.mxu0 0.0
        %1685 = vmatprep.subr.mxu0 0.0
        %1686 = vmatpush1.msra.mxu0 0.0
        %1687 = vmatprep.subr.mxu0 0.0
        %1688 = vmatpush1.msra.mxu0 0.0
        %1689 = vmatprep.subr.mxu0 0.0
        %1690 = vmatpush1.msra.mxu0 0.0
        %1691 = vmatprep.subr.mxu0 0.0
        %1692 = vmatpush1.msra.mxu0 0.0
        %1693 = vmatprep.subr.mxu0 0.0
        %1694 = vmatpush1.msra.mxu0 0.0
        %1695 = vmatprep.mubr.f32.mxu0 %v1551
        %1696 = vmatmul.mubr.f32.gmra.mrb[0].mxu0 %v1545
        %v1697 = vpop.f32.mrb[0].mxu0
        %v1698 = vadd.f32 0.0, %v1697
        %v1699 = vpop.f32.mrb[0].mxu0
        %1700 = vmatprep.mubr.f32.mxu0 %v1554
        %1701 = vmatmul.mubr.f32.gmra.mrb[0].mxu0 %v1547
        %v1702 = vpop.f32.mrb[0].mxu0
        %v1703 = vadd.f32 0.0, %v1702
        %v1704 = vpop.f32.mrb[0].mxu0
        %1705 = vdwg.mxu0
        %v1706 = vmax.f32 %v1623, %v1698
        %v1707 = vmax.f32 %v1628, %v1703
        %v1710 = vrot.slane %v1706, 1
        %v1711 = vrot.slane %v1707, 1
        %v1712 = vsel %vm829, %v1710, %v1711
        %vm1713 = vcmask 588800
        %v1714 = vsel %vm1713, %v1712, 0
        %1716 = vmatprep.subr.mxu0 0.0
        %1717 = vmatpush1.msra.mxu0 %v661
        %1718 = vmatprep.subr.mxu0 0.0
        %1719 = vmatpush1.msra.mxu0 %v662
        %1720 = vmatprep.subr.mxu0 0.0
        %1721 = vmatpush1.msra.mxu0 %v663
        %1722 = vmatprep.subr.mxu0 0.0
        %1723 = vmatpush1.msra.mxu0 %v664
        %1724 = vmatprep.subr.mxu0 0.0
        %1725 = vmatpush1.msra.mxu0 %v665
        %1726 = vmatprep.subr.mxu0 0.0
        %1727 = vmatpush1.msra.mxu0 %v666
        %1728 = vmatprep.subr.mxu0 0.0
        %1729 = vmatpush1.msra.mxu0 %v667
        %1730 = vmatprep.subr.mxu0 0.0
        %1731 = vmatpush1.msra.mxu0 %v668
        %1732 = vmatprep.subr.mxu0 0.0
        %1733 = vmatpush1.msra.mxu0 %v669
        %1734 = vmatprep.subr.mxu0 0.0
        %1735 = vmatpush1.msra.mxu0 0.0
        %1736 = vmatprep.subr.mxu0 0.0
        %1737 = vmatpush1.msra.mxu0 0.0
        %1738 = vmatprep.subr.mxu0 0.0
        %1739 = vmatpush1.msra.mxu0 0.0
        %1740 = vmatprep.subr.mxu0 0.0
        %1741 = vmatpush1.msra.mxu0 0.0
        %1742 = vmatprep.subr.mxu0 0.0
        %1743 = vmatpush1.msra.mxu0 0.0
        %1744 = vmatprep.subr.mxu0 0.0
        %1745 = vmatpush1.msra.mxu0 0.0
        %1746 = vmatprep.subr.mxu0 0.0
        %1747 = vmatpush1.msra.mxu0 0.0
        %1748 = vmatprep.subr.mxu0 0.0
        %1749 = vmatpush1.msra.mxu0 0.0
        %1750 = vmatprep.subr.mxu0 0.0
        %1751 = vmatpush1.msra.mxu0 0.0
        %1752 = vmatprep.subr.mxu0 0.0
        %1753 = vmatpush1.msra.mxu0 0.0
        %1754 = vmatprep.subr.mxu0 0.0
        %1755 = vmatpush1.msra.mxu0 0.0
        %1756 = vmatprep.subr.mxu0 0.0
        %1757 = vmatpush1.msra.mxu0 0.0
        %1758 = vmatprep.subr.mxu0 0.0
        %1759 = vmatpush1.msra.mxu0 0.0
        %1760 = vmatprep.subr.mxu0 0.0
        %1761 = vmatpush1.msra.mxu0 0.0
        %1762 = vmatprep.subr.mxu0 0.0
        %1763 = vmatpush1.msra.mxu0 0.0
        %1764 = vmatprep.subr.mxu0 0.0
        %1765 = vmatpush1.msra.mxu0 0.0
        %1766 = vmatprep.subr.mxu0 0.0
        %1767 = vmatpush1.msra.mxu0 0.0
        %1768 = vmatprep.subr.mxu0 0.0
        %1769 = vmatpush1.msra.mxu0 0.0
        %1770 = vmatprep.subr.mxu0 0.0
        %1771 = vmatpush1.msra.mxu0 0.0
        %1772 = vmatprep.subr.mxu0 0.0
        %1773 = vmatpush1.msra.mxu0 0.0
        %1774 = vmatprep.subr.mxu0 0.0
        %1775 = vmatpush1.msra.mxu0 0.0
        %1776 = vmatprep.subr.mxu0 0.0
        %1777 = vmatpush1.msra.mxu0 0.0
        %1778 = vmatprep.subr.mxu0 0.0
        %1779 = vmatpush1.msra.mxu0 0.0
        %1780 = vmatprep.mubr.f32.mxu0 0.0
        %1781 = vmatmul.mubr.f32.gmra.mrb[0].mxu0 %v1714
        %v1782 = vpop.f32.mrb[0].mxu0
        %v1783 = vadd.f32 0.0, %v1782
        %v1784 = vpop.f32.mrb[0].mxu0
        %1785 = vdwg.mxu0
        %v1786 = vsel %vm1713, %v1706, 0
        %1788 = vmatprep.subr.mxu0 0.0
        %1789 = vmatpush1.msra.mxu0 %v651
        %1790 = vmatprep.subr.mxu0 0.0
        %1791 = vmatpush1.msra.mxu0 %v652
        %1792 = vmatprep.subr.mxu0 0.0
        %1793 = vmatpush1.msra.mxu0 %v653
        %1794 = vmatprep.subr.mxu0 0.0
        %1795 = vmatpush1.msra.mxu0 %v654
        %1796 = vmatprep.subr.mxu0 0.0
        %1797 = vmatpush1.msra.mxu0 %v655
        %1798 = vmatprep.subr.mxu0 0.0
        %1799 = vmatpush1.msra.mxu0 %v656
        %1800 = vmatprep.subr.mxu0 0.0
        %1801 = vmatpush1.msra.mxu0 %v657
        %1802 = vmatprep.subr.mxu0 0.0
        %1803 = vmatpush1.msra.mxu0 %v658
        %1804 = vmatprep.subr.mxu0 0.0
        %1805 = vmatpush1.msra.mxu0 %v659
        %1806 = vmatprep.subr.mxu0 0.0
        %1807 = vmatpush1.msra.mxu0 0.0
        %1808 = vmatprep.subr.mxu0 0.0
        %1809 = vmatpush1.msra.mxu0 0.0
        %1810 = vmatprep.subr.mxu0 0.0
        %1811 = vmatpush1.msra.mxu0 0.0
        %1812 = vmatprep.subr.mxu0 0.0
        %1813 = vmatpush1.msra.mxu0 0.0
        %1814 = vmatprep.subr.mxu0 0.0
        %1815 = vmatpush1.msra.mxu0 0.0
        %1816 = vmatprep.subr.mxu0 0.0
        %1817 = vmatpush1.msra.mxu0 0.0
        %1818 = vmatprep.subr.mxu0 0.0
        %1819 = vmatpush1.msra.mxu0 0.0
        %1820 = vmatprep.subr.mxu0 0.0
        %1821 = vmatpush1.msra.mxu0 0.0
        %1822 = vmatprep.subr.mxu0 0.0
        %1823 = vmatpush1.msra.mxu0 0.0
        %1824 = vmatprep.subr.mxu0 0.0
        %1825 = vmatpush1.msra.mxu0 0.0
        %1826 = vmatprep.subr.mxu0 0.0
        %1827 = vmatpush1.msra.mxu0 0.0
        %1828 = vmatprep.subr.mxu0 0.0
        %1829 = vmatpush1.msra.mxu0 0.0
        %1830 = vmatprep.subr.mxu0 0.0
        %1831 = vmatpush1.msra.mxu0 0.0
        %1832 = vmatprep.subr.mxu0 0.0
        %1833 = vmatpush1.msra.mxu0 0.0
        %1834 = vmatprep.subr.mxu0 0.0
        %1835 = vmatpush1.msra.mxu0 0.0
        %1836 = vmatprep.subr.mxu0 0.0
        %1837 = vmatpush1.msra.mxu0 0.0
        %1838 = vmatprep.subr.mxu0 0.0
        %1839 = vmatpush1.msra.mxu0 0.0
        %1840 = vmatprep.subr.mxu0 0.0
        %1841 = vmatpush1.msra.mxu0 0.0
        %1842 = vmatprep.subr.mxu0 0.0
        %1843 = vmatpush1.msra.mxu0 0.0
        %1844 = vmatprep.subr.mxu0 0.0
        %1845 = vmatpush1.msra.mxu0 0.0
        %1846 = vmatprep.subr.mxu0 0.0
        %1847 = vmatpush1.msra.mxu0 0.0
        %1848 = vmatprep.subr.mxu0 0.0
        %1849 = vmatpush1.msra.mxu0 0.0
        %1850 = vmatprep.subr.mxu0 0.0
        %1851 = vmatpush1.msra.mxu0 0.0
        %1852 = vmatprep.mubr.f32.mxu0 0.0
        %1853 = vmatmul.mubr.f32.gmra.mrb[0].mxu0 %v1786
        %v1854 = vpop.f32.mrb[0].mxu0
        %v1855 = vadd.f32 %v1783, %v1854
        %v1856 = vpop.f32.mrb[0].mxu0
        %1857 = vdwg.mxu0
        %v1858 = vrot.slane %v1706, 2
        %v1859 = vrot.slane %v1707, 2
        %v1860 = vsel %vm1029, %v1858, %v1859
        %v1861 = vsel %vm1713, %v1860, 0
        %1863 = vmatprep.subr.mxu0 0.0
        %1864 = vmatpush1.msra.mxu0 %v671
        %1865 = vmatprep.subr.mxu0 0.0
        %1866 = vmatpush1.msra.mxu0 %v672
        %1867 = vmatprep.subr.mxu0 0.0
        %1868 = vmatpush1.msra.mxu0 %v673
        %1869 = vmatprep.subr.mxu0 0.0
        %1870 = vmatpush1.msra.mxu0 %v674
        %1871 = vmatprep.subr.mxu0 0.0
        %1872 = vmatpush1.msra.mxu0 %v675
        %1873 = vmatprep.subr.mxu0 0.0
        %1874 = vmatpush1.msra.mxu0 %v676
        %1875 = vmatprep.subr.mxu0 0.0
        %1876 = vmatpush1.msra.mxu0 %v677
        %1877 = vmatprep.subr.mxu0 0.0
        %1878 = vmatpush1.msra.mxu0 %v678
        %1879 = vmatprep.subr.mxu0 0.0
        %1880 = vmatpush1.msra.mxu0 %v679
        %1881 = vmatprep.subr.mxu0 0.0
        %1882 = vmatpush1.msra.mxu0 0.0
        %1883 = vmatprep.subr.mxu0 0.0
        %1884 = vmatpush1.msra.mxu0 0.0
        %1885 = vmatprep.subr.mxu0 0.0
        %1886 = vmatpush1.msra.mxu0 0.0
        %1887 = vmatprep.subr.mxu0 0.0
        %1888 = vmatpush1.msra.mxu0 0.0
        %1889 = vmatprep.subr.mxu0 0.0
        %1890 = vmatpush1.msra.mxu0 0.0
        %1891 = vmatprep.subr.mxu0 0.0
        %1892 = vmatpush1.msra.mxu0 0.0
        %1893 = vmatprep.subr.mxu0 0.0
        %1894 = vmatpush1.msra.mxu0 0.0
        %1895 = vmatprep.subr.mxu0 0.0
        %1896 = vmatpush1.msra.mxu0 0.0
        %1897 = vmatprep.subr.mxu0 0.0
        %1898 = vmatpush1.msra.mxu0 0.0
        %1899 = vmatprep.subr.mxu0 0.0
        %1900 = vmatpush1.msra.mxu0 0.0
        %1901 = vmatprep.subr.mxu0 0.0
        %1902 = vmatpush1.msra.mxu0 0.0
        %1903 = vmatprep.subr.mxu0 0.0
        %1904 = vmatpush1.msra.mxu0 0.0
        %1905 = vmatprep.subr.mxu0 0.0
        %1906 = vmatpush1.msra.mxu0 0.0
        %1907 = vmatprep.subr.mxu0 0.0
        %1908 = vmatpush1.msra.mxu0 0.0
        %1909 = vmatprep.subr.mxu0 0.0
        %1910 = vmatpush1.msra.mxu0 0.0
        %1911 = vmatprep.subr.mxu0 0.0
        %1912 = vmatpush1.msra.mxu0 0.0
        %1913 = vmatprep.subr.mxu0 0.0
        %1914 = vmatpush1.msra.mxu0 0.0
        %1915 = vmatprep.subr.mxu0 0.0
        %1916 = vmatpush1.msra.mxu0 0.0
        %1917 = vmatprep.subr.mxu0 0.0
        %1918 = vmatpush1.msra.mxu0 0.0
        %1919 = vmatprep.subr.mxu0 0.0
        %1920 = vmatpush1.msra.mxu0 0.0
        %1921 = vmatprep.subr.mxu0 0.0
        %1922 = vmatpush1.msra.mxu0 0.0
        %1923 = vmatprep.subr.mxu0 0.0
        %1924 = vmatpush1.msra.mxu0 0.0
        %1925 = vmatprep.subr.mxu0 0.0
        %1926 = vmatpush1.msra.mxu0 0.0
        %1927 = vmatprep.mubr.f32.mxu0 0.0
        %1928 = vmatmul.mubr.f32.gmra.mrb[0].mxu0 %v1861
        %v1929 = vpop.f32.mrb[0].mxu0
        %v1930 = vadd.f32 0.0, %v1929
        %v1931 = vpop.f32.mrb[0].mxu0
        %1932 = vdwg.mxu0
        %v1933 = vadd.f32 %v1855, %v1930
        %v1934 = vrot.slane %v1706, 3
        %v1935 = vrot.slane %v1707, 3
        %v1936 = vsel %vm1138, %v1934, %v1935
        %v1937 = vsel %vm1713, %v1936, 0
        %1939 = vmatprep.subr.mxu0 0.0
        %1940 = vmatpush1.msra.mxu0 %v681
        %1941 = vmatprep.subr.mxu0 0.0
        %1942 = vmatpush1.msra.mxu0 %v682
        %1943 = vmatprep.subr.mxu0 0.0
        %1944 = vmatpush1.msra.mxu0 %v683
        %1945 = vmatprep.subr.mxu0 0.0
        %1946 = vmatpush1.msra.mxu0 %v684
        %1947 = vmatprep.subr.mxu0 0.0
        %1948 = vmatpush1.msra.mxu0 %v685
        %1949 = vmatprep.subr.mxu0 0.0
        %1950 = vmatpush1.msra.mxu0 %v686
        %1951 = vmatprep.subr.mxu0 0.0
        %1952 = vmatpush1.msra.mxu0 %v687
        %1953 = vmatprep.subr.mxu0 0.0
        %1954 = vmatpush1.msra.mxu0 %v688
        %1955 = vmatprep.subr.mxu0 0.0
        %1956 = vmatpush1.msra.mxu0 %v689
        %1957 = vmatprep.subr.mxu0 0.0
        %1958 = vmatpush1.msra.mxu0 0.0
        %1959 = vmatprep.subr.mxu0 0.0
        %1960 = vmatpush1.msra.mxu0 0.0
        %1961 = vmatprep.subr.mxu0 0.0
        %1962 = vmatpush1.msra.mxu0 0.0
        %1963 = vmatprep.subr.mxu0 0.0
        %1964 = vmatpush1.msra.mxu0 0.0
        %1965 = vmatprep.subr.mxu0 0.0
        %1966 = vmatpush1.msra.mxu0 0.0
        %1967 = vmatprep.subr.mxu0 0.0
        %1968 = vmatpush1.msra.mxu0 0.0
        %1969 = vmatprep.subr.mxu0 0.0
        %1970 = vmatpush1.msra.mxu0 0.0
        %1971 = vmatprep.subr.mxu0 0.0
        %1972 = vmatpush1.msra.mxu0 0.0
        %1973 = vmatprep.subr.mxu0 0.0
        %1974 = vmatpush1.msra.mxu0 0.0
        %1975 = vmatprep.subr.mxu0 0.0
        %1976 = vmatpush1.msra.mxu0 0.0
        %1977 = vmatprep.subr.mxu0 0.0
        %1978 = vmatpush1.msra.mxu0 0.0
        %1979 = vmatprep.subr.mxu0 0.0
        %1980 = vmatpush1.msra.mxu0 0.0
        %1981 = vmatprep.subr.mxu0 0.0
        %1982 = vmatpush1.msra.mxu0 0.0
        %1983 = vmatprep.subr.mxu0 0.0
        %1984 = vmatpush1.msra.mxu0 0.0
        %1985 = vmatprep.subr.mxu0 0.0
        %1986 = vmatpush1.msra.mxu0 0.0
        %1987 = vmatprep.subr.mxu0 0.0
        %1988 = vmatpush1.msra.mxu0 0.0
        %1989 = vmatprep.subr.mxu0 0.0
        %1990 = vmatpush1.msra.mxu0 0.0
        %1991 = vmatprep.subr.mxu0 0.0
        %1992 = vmatpush1.msra.mxu0 0.0
        %1993 = vmatprep.subr.mxu0 0.0
        %1994 = vmatpush1.msra.mxu0 0.0
        %1995 = vmatprep.subr.mxu0 0.0
        %1996 = vmatpush1.msra.mxu0 0.0
        %1997 = vmatprep.subr.mxu0 0.0
        %1998 = vmatpush1.msra.mxu0 0.0
        %1999 = vmatprep.subr.mxu0 0.0
        %2000 = vmatpush1.msra.mxu0 0.0
        %2001 = vmatprep.subr.mxu0 0.0
        %2002 = vmatpush1.msra.mxu0 0.0
        %2003 = vmatprep.mubr.f32.mxu0 0.0
        %2004 = vmatmul.mubr.f32.gmra.mrb[0].mxu0 %v1937
        %v2005 = vpop.f32.mrb[0].mxu0
        %v2006 = vadd.f32 0.0, %v2005
        %v2007 = vpop.f32.mrb[0].mxu0
        %2008 = vdwg.mxu0
        %v2009 = vadd.f32 %v1933, %v2006
        %v2010 = vrot.slane %v1706, 4
        %v2011 = vrot.slane %v1707, 4
        %v2012 = vsel %vm844, %v2010, %v2011
        %v2013 = vsel %vm1713, %v2012, 0
        %2015 = vmatprep.subr.mxu0 0.0
        %2016 = vmatpush1.msra.mxu0 %v691
        %2017 = vmatprep.subr.mxu0 0.0
        %2018 = vmatpush1.msra.mxu0 %v692
        %2019 = vmatprep.subr.mxu0 0.0
        %2020 = vmatpush1.msra.mxu0 %v693
        %2021 = vmatprep.subr.mxu0 0.0
        %2022 = vmatpush1.msra.mxu0 %v694
        %2023 = vmatprep.subr.mxu0 0.0
        %2024 = vmatpush1.msra.mxu0 %v695
        %2025 = vmatprep.subr.mxu0 0.0
        %2026 = vmatpush1.msra.mxu0 %v696
        %2027 = vmatprep.subr.mxu0 0.0
        %2028 = vmatpush1.msra.mxu0 %v697
        %2029 = vmatprep.subr.mxu0 0.0
        %2030 = vmatpush1.msra.mxu0 %v698
        %2031 = vmatprep.subr.mxu0 0.0
        %2032 = vmatpush1.msra.mxu0 %v699
        %2033 = vmatprep.subr.mxu0 0.0
        %2034 = vmatpush1.msra.mxu0 0.0
        %2035 = vmatprep.subr.mxu0 0.0
        %2036 = vmatpush1.msra.mxu0 0.0
        %2037 = vmatprep.subr.mxu0 0.0
        %2038 = vmatpush1.msra.mxu0 0.0
        %2039 = vmatprep.subr.mxu0 0.0
        %2040 = vmatpush1.msra.mxu0 0.0
        %2041 = vmatprep.subr.mxu0 0.0
        %2042 = vmatpush1.msra.mxu0 0.0
        %2043 = vmatprep.subr.mxu0 0.0
        %2044 = vmatpush1.msra.mxu0 0.0
        %2045 = vmatprep.subr.mxu0 0.0
        %2046 = vmatpush1.msra.mxu0 0.0
        %2047 = vmatprep.subr.mxu0 0.0
        %2048 = vmatpush1.msra.mxu0 0.0
        %2049 = vmatprep.subr.mxu0 0.0
        %2050 = vmatpush1.msra.mxu0 0.0
        %2051 = vmatprep.subr.mxu0 0.0
        %2052 = vmatpush1.msra.mxu0 0.0
        %2053 = vmatprep.subr.mxu0 0.0
        %2054 = vmatpush1.msra.mxu0 0.0
        %2055 = vmatprep.subr.mxu0 0.0
        %2056 = vmatpush1.msra.mxu0 0.0
        %2057 = vmatprep.subr.mxu0 0.0
        %2058 = vmatpush1.msra.mxu0 0.0
        %2059 = vmatprep.subr.mxu0 0.0
        %2060 = vmatpush1.msra.mxu0 0.0
        %2061 = vmatprep.subr.mxu0 0.0
        %2062 = vmatpush1.msra.mxu0 0.0
        %2063 = vmatprep.subr.mxu0 0.0
        %2064 = vmatpush1.msra.mxu0 0.0
        %2065 = vmatprep.subr.mxu0 0.0
        %2066 = vmatpush1.msra.mxu0 0.0
        %2067 = vmatprep.subr.mxu0 0.0
        %2068 = vmatpush1.msra.mxu0 0.0
        %2069 = vmatprep.subr.mxu0 0.0
        %2070 = vmatpush1.msra.mxu0 0.0
        %2071 = vmatprep.subr.mxu0 0.0
        %2072 = vmatpush1.msra.mxu0 0.0
        %2073 = vmatprep.subr.mxu0 0.0
        %2074 = vmatpush1.msra.mxu0 0.0
        %2075 = vmatprep.subr.mxu0 0.0
        %2076 = vmatpush1.msra.mxu0 0.0
        %2077 = vmatprep.subr.mxu0 0.0
        %2078 = vmatpush1.msra.mxu0 0.0
        %2079 = vmatprep.mubr.f32.mxu0 0.0
        %2080 = vmatmul.mubr.f32.gmra.mrb[0].mxu0 %v2013
        %v2081 = vpop.f32.mrb[0].mxu0
        %v2082 = vadd.f32 0.0, %v2081
        %v2083 = vpop.f32.mrb[0].mxu0
        %2084 = vdwg.mxu0
        %v2085 = vadd.f32 %v2009, %v2082
        %v2087 = vlaneseq
        %v2088 = vshrl.u32 %v2087, 7
        %v2089 = vsub.s32 0, %v2088
        %v2090 = vrot.slane %v728, %v2089
        %v2092 = vadd.f32 %v2085, %v2090
        %v2093 = vmax.f32 %v2092, 0.0
        %vm2094 = vcmask 64512
        %v2096 = vsel %vm2094, %v769, 0
        %2098 = vmatprep.subr.mxu0 0.0
        %2099 = vmatpush1.msra.mxu0 %v2093
        %2100 = vmatprep.subr.mxu0 0.0
        %2101 = vmatpush1.msra.mxu0 0.0
        %2102 = vmatprep.subr.mxu0 0.0
        %2103 = vmatpush1.msra.mxu0 0.0
        %2104 = vmatprep.subr.mxu0 0.0
        %2105 = vmatpush1.msra.mxu0 0.0
        %2106 = vmatprep.subr.mxu0 0.0
        %2107 = vmatpush1.msra.mxu0 0.0
        %2108 = vmatprep.subr.mxu0 0.0
        %2109 = vmatpush1.msra.mxu0 0.0
        %2110 = vmatprep.subr.mxu0 0.0
        %2111 = vmatpush1.msra.mxu0 0.0
        %2112 = vmatprep.subr.mxu0 0.0
        %2113 = vmatpush1.msra.mxu0 0.0
        %2114 = vmatprep.subr.mxu0 0.0
        %2115 = vmatpush1.msra.mxu0 0.0
        %2116 = vmatprep.subr.mxu0 0.0
        %2117 = vmatpush1.msra.mxu0 0.0
        %2118 = vmatprep.subr.mxu0 0.0
        %2119 = vmatpush1.msra.mxu0 0.0
        %2120 = vmatprep.subr.mxu0 0.0
        %2121 = vmatpush1.msra.mxu0 0.0
        %2122 = vmatprep.subr.mxu0 0.0
        %2123 = vmatpush1.msra.mxu0 0.0
        %2124 = vmatprep.subr.mxu0 0.0
        %2125 = vmatpush1.msra.mxu0 0.0
        %2126 = vmatprep.subr.mxu0 0.0
        %2127 = vmatpush1.msra.mxu0 0.0
        %2128 = vmatprep.subr.mxu0 0.0
        %2129 = vmatpush1.msra.mxu0 0.0
        %2130 = vmatprep.subr.mxu0 0.0
        %2131 = vmatpush1.msra.mxu0 0.0
        %2132 = vmatprep.subr.mxu0 0.0
        %2133 = vmatpush1.msra.mxu0 0.0
        %2134 = vmatprep.subr.mxu0 0.0
        %2135 = vmatpush1.msra.mxu0 0.0
        %2136 = vmatprep.subr.mxu0 0.0
        %2137 = vmatpush1.msra.mxu0 0.0
        %2138 = vmatprep.subr.mxu0 0.0
        %2139 = vmatpush1.msra.mxu0 0.0
        %2140 = vmatprep.subr.mxu0 0.0
        %2141 = vmatpush1.msra.mxu0 0.0
        %2142 = vmatprep.subr.mxu0 0.0
        %2143 = vmatpush1.msra.mxu0 0.0
        %2144 = vmatprep.subr.mxu0 0.0
        %2145 = vmatpush1.msra.mxu0 0.0
        %2146 = vmatprep.subr.mxu0 0.0
        %2147 = vmatpush1.msra.mxu0 0.0
        %2148 = vmatprep.subr.mxu0 0.0
        %2149 = vmatpush1.msra.mxu0 0.0
        %2150 = vmatprep.subr.mxu0 0.0
        %2151 = vmatpush1.msra.mxu0 0.0
        %2152 = vmatprep.subr.mxu0 0.0
        %2153 = vmatpush1.msra.mxu0 0.0
        %2154 = vmatprep.subr.mxu0 0.0
        %2155 = vmatpush1.msra.mxu0 0.0
        %2156 = vmatprep.subr.mxu0 0.0
        %2157 = vmatpush1.msra.mxu0 0.0
        %2158 = vmatprep.subr.mxu0 0.0
        %2159 = vmatpush1.msra.mxu0 0.0
        %2160 = vmatprep.subr.mxu0 0.0
        %2161 = vmatpush1.msra.mxu0 0.0
        %2162 = vmatprep.mubr.f32.mxu0 0.0
        %2163 = vmatmul.mubr.f32.gmra.mrb[0].mxu0 %v2096
        %v2164 = vpop.f32.mrb[0].mxu0
        %v2165 = vadd.f32 0.0, %v2164
        %v2166 = vpop.f32.mrb[0].mxu0
        %2167 = vdwg.mxu0
        %v2169 = vsel %vm2094, %v770, 0
        %2171 = vmatprep.subr.mxu0 0.0
        %2172 = vmatpush1.msra.mxu0 %v2093
        %2173 = vmatprep.subr.mxu0 0.0
        %2174 = vmatpush1.msra.mxu0 0.0
        %2175 = vmatprep.subr.mxu0 0.0
        %2176 = vmatpush1.msra.mxu0 0.0
        %2177 = vmatprep.subr.mxu0 0.0
        %2178 = vmatpush1.msra.mxu0 0.0
        %2179 = vmatprep.subr.mxu0 0.0
        %2180 = vmatpush1.msra.mxu0 0.0
        %2181 = vmatprep.subr.mxu0 0.0
        %2182 = vmatpush1.msra.mxu0 0.0
        %2183 = vmatprep.subr.mxu0 0.0
        %2184 = vmatpush1.msra.mxu0 0.0
        %2185 = vmatprep.subr.mxu0 0.0
        %2186 = vmatpush1.msra.mxu0 0.0
        %2187 = vmatprep.subr.mxu0 0.0
        %2188 = vmatpush1.msra.mxu0 0.0
        %2189 = vmatprep.subr.mxu0 0.0
        %2190 = vmatpush1.msra.mxu0 0.0
        %2191 = vmatprep.subr.mxu0 0.0
        %2192 = vmatpush1.msra.mxu0 0.0
        %2193 = vmatprep.subr.mxu0 0.0
        %2194 = vmatpush1.msra.mxu0 0.0
        %2195 = vmatprep.subr.mxu0 0.0
        %2196 = vmatpush1.msra.mxu0 0.0
        %2197 = vmatprep.subr.mxu0 0.0
        %2198 = vmatpush1.msra.mxu0 0.0
        %2199 = vmatprep.subr.mxu0 0.0
        %2200 = vmatpush1.msra.mxu0 0.0
        %2201 = vmatprep.subr.mxu0 0.0
        %2202 = vmatpush1.msra.mxu0 0.0
        %2203 = vmatprep.subr.mxu0 0.0
        %2204 = vmatpush1.msra.mxu0 0.0
        %2205 = vmatprep.subr.mxu0 0.0
        %2206 = vmatpush1.msra.mxu0 0.0
        %2207 = vmatprep.subr.mxu0 0.0
        %2208 = vmatpush1.msra.mxu0 0.0
        %2209 = vmatprep.subr.mxu0 0.0
        %2210 = vmatpush1.msra.mxu0 0.0
        %2211 = vmatprep.subr.mxu0 0.0
        %2212 = vmatpush1.msra.mxu0 0.0
        %2213 = vmatprep.subr.mxu0 0.0
        %2214 = vmatpush1.msra.mxu0 0.0
        %2215 = vmatprep.subr.mxu0 0.0
        %2216 = vmatpush1.msra.mxu0 0.0
        %2217 = vmatprep.subr.mxu0 0.0
        %2218 = vmatpush1.msra.mxu0 0.0
        %2219 = vmatprep.subr.mxu0 0.0
        %2220 = vmatpush1.msra.mxu0 0.0
        %2221 = vmatprep.subr.mxu0 0.0
        %2222 = vmatpush1.msra.mxu0 0.0
        %2223 = vmatprep.subr.mxu0 0.0
        %2224 = vmatpush1.msra.mxu0 0.0
        %2225 = vmatprep.subr.mxu0 0.0
        %2226 = vmatpush1.msra.mxu0 0.0
        %2227 = vmatprep.subr.mxu0 0.0
        %2228 = vmatpush1.msra.mxu0 0.0
        %2229 = vmatprep.subr.mxu0 0.0
        %2230 = vmatpush1.msra.mxu0 0.0
        %2231 = vmatprep.subr.mxu0 0.0
        %2232 = vmatpush1.msra.mxu0 0.0
        %2233 = vmatprep.subr.mxu0 0.0
        %2234 = vmatpush1.msra.mxu0 0.0
        %2235 = vmatprep.mubr.f32.mxu0 0.0
        %2236 = vmatmul.mubr.f32.gmra.mrb[0].mxu0 %v2169
        %v2237 = vpop.f32.mrb[0].mxu0
        %v2238 = vadd.f32 0.0, %v2237
        %v2239 = vpop.f32.mrb[0].mxu0
        %2240 = vdwg.mxu0
        %v2241 = vmax.f32 %v2165, %v2238
        %vm2242 = vcmask 785408
        %v2244 = vsel %vm2242, %v2241, 0
        %2246 = vmatprep.subr.mxu0 0.0
        %2247 = vmatpush1.msra.mxu0 %v771
        %2248 = vmatprep.subr.mxu0 0.0
        %2249 = vmatpush1.msra.mxu0 %v772
        %2250 = vmatprep.subr.mxu0 0.0
        %2251 = vmatpush1.msra.mxu0 %v773
        %2252 = vmatprep.subr.mxu0 0.0
        %2253 = vmatpush1.msra.mxu0 %v774
        %2254 = vmatprep.subr.mxu0 0.0
        %2255 = vmatpush1.msra.mxu0 %v775
        %2256 = vmatprep.subr.mxu0 0.0
        %2257 = vmatpush1.msra.mxu0 %v776
        %2258 = vmatprep.subr.mxu0 0.0
        %2259 = vmatpush1.msra.mxu0 %v777
        %2260 = vmatprep.subr.mxu0 0.0
        %2261 = vmatpush1.msra.mxu0 %v778
        %2262 = vmatprep.subr.mxu0 0.0
        %2263 = vmatpush1.msra.mxu0 %v779
        %2264 = vmatprep.subr.mxu0 0.0
        %2265 = vmatpush1.msra.mxu0 %v780
        %2266 = vmatprep.subr.mxu0 0.0
        %2267 = vmatpush1.msra.mxu0 %v781
        %2268 = vmatprep.subr.mxu0 0.0
        %2269 = vmatpush1.msra.mxu0 %v782
        %2270 = vmatprep.subr.mxu0 0.0
        %2271 = vmatpush1.msra.mxu0 0.0
        %2272 = vmatprep.subr.mxu0 0.0
        %2273 = vmatpush1.msra.mxu0 0.0
        %2274 = vmatprep.subr.mxu0 0.0
        %2275 = vmatpush1.msra.mxu0 0.0
        %2276 = vmatprep.subr.mxu0 0.0
        %2277 = vmatpush1.msra.mxu0 0.0
        %2278 = vmatprep.subr.mxu0 0.0
        %2279 = vmatpush1.msra.mxu0 0.0
        %2280 = vmatprep.subr.mxu0 0.0
        %2281 = vmatpush1.msra.mxu0 0.0
        %2282 = vmatprep.subr.mxu0 0.0
        %2283 = vmatpush1.msra.mxu0 0.0
        %2284 = vmatprep.subr.mxu0 0.0
        %2285 = vmatpush1.msra.mxu0 0.0
        %2286 = vmatprep.subr.mxu0 0.0
        %2287 = vmatpush1.msra.mxu0 0.0
        %2288 = vmatprep.subr.mxu0 0.0
        %2289 = vmatpush1.msra.mxu0 0.0
        %2290 = vmatprep.subr.mxu0 0.0
        %2291 = vmatpush1.msra.mxu0 0.0
        %2292 = vmatprep.subr.mxu0 0.0
        %2293 = vmatpush1.msra.mxu0 0.0
        %2294 = vmatprep.subr.mxu0 0.0
        %2295 = vmatpush1.msra.mxu0 0.0
        %2296 = vmatprep.subr.mxu0 0.0
        %2297 = vmatpush1.msra.mxu0 0.0
        %2298 = vmatprep.subr.mxu0 0.0
        %2299 = vmatpush1.msra.mxu0 0.0
        %2300 = vmatprep.subr.mxu0 0.0
        %2301 = vmatpush1.msra.mxu0 0.0
        %2302 = vmatprep.subr.mxu0 0.0
        %2303 = vmatpush1.msra.mxu0 0.0
        %2304 = vmatprep.subr.mxu0 0.0
        %2305 = vmatpush1.msra.mxu0 0.0
        %2306 = vmatprep.subr.mxu0 0.0
        %2307 = vmatpush1.msra.mxu0 0.0
        %2308 = vmatprep.subr.mxu0 0.0
        %2309 = vmatpush1.msra.mxu0 0.0
        %2310 = vmatprep.mubr.f32.mxu0 0.0
        %2311 = vmatmul.mubr.f32.gmra.mrb[0].mxu0 %v2244
        %v2312 = vpop.f32.mrb[0].mxu0
        %v2313 = vadd.f32 0.0, %v2312
        %v2314 = vpop.f32.mrb[0].mxu0
        %2315 = vdwg.mxu0
        %2316 = vmatprep.subr.mxu0 0.0
        %2317 = vmatpush1.msra.mxu0 %v783
        %2318 = vmatprep.subr.mxu0 0.0
        %2319 = vmatpush1.msra.mxu0 %v784
        %2320 = vmatprep.subr.mxu0 0.0
        %2321 = vmatpush1.msra.mxu0 %v785
        %2322 = vmatprep.subr.mxu0 0.0
        %2323 = vmatpush1.msra.mxu0 %v786
        %2324 = vmatprep.subr.mxu0 0.0
        %2325 = vmatpush1.msra.mxu0 %v787
        %2326 = vmatprep.subr.mxu0 0.0
        %2327 = vmatpush1.msra.mxu0 %v788
        %2328 = vmatprep.subr.mxu0 0.0
        %2329 = vmatpush1.msra.mxu0 %v789
        %2330 = vmatprep.subr.mxu0 0.0
        %2331 = vmatpush1.msra.mxu0 %v790
        %2332 = vmatprep.subr.mxu0 0.0
        %2333 = vmatpush1.msra.mxu0 %v791
        %2334 = vmatprep.subr.mxu0 0.0
        %2335 = vmatpush1.msra.mxu0 %v792
        %2336 = vmatprep.subr.mxu0 0.0
        %2337 = vmatpush1.msra.mxu0 %v793
        %2338 = vmatprep.subr.mxu0 0.0
        %2339 = vmatpush1.msra.mxu0 %v794
        %2340 = vmatprep.subr.mxu0 0.0
        %2341 = vmatpush1.msra.mxu0 0.0
        %2342 = vmatprep.subr.mxu0 0.0
        %2343 = vmatpush1.msra.mxu0 0.0
        %2344 = vmatprep.subr.mxu0 0.0
        %2345 = vmatpush1.msra.mxu0 0.0
        %2346 = vmatprep.subr.mxu0 0.0
        %2347 = vmatpush1.msra.mxu0 0.0
        %2348 = vmatprep.subr.mxu0 0.0
        %2349 = vmatpush1.msra.mxu0 0.0
        %2350 = vmatprep.subr.mxu0 0.0
        %2351 = vmatpush1.msra.mxu0 0.0
        %2352 = vmatprep.subr.mxu0 0.0
        %2353 = vmatpush1.msra.mxu0 0.0
        %2354 = vmatprep.subr.mxu0 0.0
        %2355 = vmatpush1.msra.mxu0 0.0
        %2356 = vmatprep.subr.mxu0 0.0
        %2357 = vmatpush1.msra.mxu0 0.0
        %2358 = vmatprep.subr.mxu0 0.0
        %2359 = vmatpush1.msra.mxu0 0.0
        %2360 = vmatprep.subr.mxu0 0.0
        %2361 = vmatpush1.msra.mxu0 0.0
        %2362 = vmatprep.subr.mxu0 0.0
        %2363 = vmatpush1.msra.mxu0 0.0
        %2364 = vmatprep.subr.mxu0 0.0
        %2365 = vmatpush1.msra.mxu0 0.0
        %2366 = vmatprep.subr.mxu0 0.0
        %2367 = vmatpush1.msra.mxu0 0.0
        %2368 = vmatprep.subr.mxu0 0.0
        %2369 = vmatpush1.msra.mxu0 0.0
        %2370 = vmatprep.subr.mxu0 0.0
        %2371 = vmatpush1.msra.mxu0 0.0
        %2372 = vmatprep.subr.mxu0 0.0
        %2373 = vmatpush1.msra.mxu0 0.0
        %2374 = vmatprep.subr.mxu0 0.0
        %2375 = vmatpush1.msra.mxu0 0.0
        %2376 = vmatprep.subr.mxu0 0.0
        %2377 = vmatpush1.msra.mxu0 0.0
        %2378 = vmatprep.subr.mxu0 0.0
        %2379 = vmatpush1.msra.mxu0 0.0
        %2380 = vmatprep.mubr.f32.mxu0 0.0
        %2381 = vmatmul.mubr.f32.gmra.mrb[0].mxu0 %v2244
        %v2382 = vpop.f32.mrb[0].mxu0
        %v2383 = vadd.f32 0.0, %v2382
        %v2384 = vpop.f32.mrb[0].mxu0
        %2385 = vdwg.mxu0
        %v2386 = vmax.f32 %v2313, %v2383
        %v2388 = vrot.slane %v2386, 1
        %vm2389 = vcmask 392192
        %v2390 = vsel %vm2389, %v2388, 0
        %2392 = vmatprep.subr.mxu0 0.0
        %2393 = vmatpush1.msra.mxu0 %v707
        %2394 = vmatprep.subr.mxu0 0.0
        %2395 = vmatpush1.msra.mxu0 %v708
        %2396 = vmatprep.subr.mxu0 0.0
        %2397 = vmatpush1.msra.mxu0 %v709
        %2398 = vmatprep.subr.mxu0 0.0
        %2399 = vmatpush1.msra.mxu0 %v710
        %2400 = vmatprep.subr.mxu0 0.0
        %2401 = vmatpush1.msra.mxu0 %v711
        %2402 = vmatprep.subr.mxu0 0.0
        %2403 = vmatpush1.msra.mxu0 %v712
        %2404 = vmatprep.subr.mxu0 0.0
        %2405 = vmatpush1.msra.mxu0 0.0
        %2406 = vmatprep.subr.mxu0 0.0
        %2407 = vmatpush1.msra.mxu0 0.0
        %2408 = vmatprep.subr.mxu0 0.0
        %2409 = vmatpush1.msra.mxu0 0.0
        %2410 = vmatprep.subr.mxu0 0.0
        %2411 = vmatpush1.msra.mxu0 0.0
        %2412 = vmatprep.subr.mxu0 0.0
        %2413 = vmatpush1.msra.mxu0 0.0
        %2414 = vmatprep.subr.mxu0 0.0
        %2415 = vmatpush1.msra.mxu0 0.0
        %2416 = vmatprep.subr.mxu0 0.0
        %2417 = vmatpush1.msra.mxu0 0.0
        %2418 = vmatprep.subr.mxu0 0.0
        %2419 = vmatpush1.msra.mxu0 0.0
        %2420 = vmatprep.subr.mxu0 0.0
        %2421 = vmatpush1.msra.mxu0 0.0
        %2422 = vmatprep.subr.mxu0 0.0
        %2423 = vmatpush1.msra.mxu0 0.0
        %2424 = vmatprep.subr.mxu0 0.0
        %2425 = vmatpush1.msra.mxu0 0.0
        %2426 = vmatprep.subr.mxu0 0.0
        %2427 = vmatpush1.msra.mxu0 0.0
        %2428 = vmatprep.subr.mxu0 0.0
        %2429 = vmatpush1.msra.mxu0 0.0
        %2430 = vmatprep.subr.mxu0 0.0
        %2431 = vmatpush1.msra.mxu0 0.0
        %2432 = vmatprep.subr.mxu0 0.0
        %2433 = vmatpush1.msra.mxu0 0.0
        %2434 = vmatprep.subr.mxu0 0.0
        %2435 = vmatpush1.msra.mxu0 0.0
        %2436 = vmatprep.subr.mxu0 0.0
        %2437 = vmatpush1.msra.mxu0 0.0
        %2438 = vmatprep.subr.mxu0 0.0
        %2439 = vmatpush1.msra.mxu0 0.0
        %2440 = vmatprep.subr.mxu0 0.0
        %2441 = vmatpush1.msra.mxu0 0.0
        %2442 = vmatprep.subr.mxu0 0.0
        %2443 = vmatpush1.msra.mxu0 0.0
        %2444 = vmatprep.subr.mxu0 0.0
        %2445 = vmatpush1.msra.mxu0 0.0
        %2446 = vmatprep.subr.mxu0 0.0
        %2447 = vmatpush1.msra.mxu0 0.0
        %2448 = vmatprep.subr.mxu0 0.0
        %2449 = vmatpush1.msra.mxu0 0.0
        %2450 = vmatprep.subr.mxu0 0.0
        %2451 = vmatpush1.msra.mxu0 0.0
        %2452 = vmatprep.subr.mxu0 0.0
        %2453 = vmatpush1.msra.mxu0 0.0
        %2454 = vmatprep.subr.mxu0 0.0
        %2455 = vmatpush1.msra.mxu0 0.0
        %2456 = vmatprep.mubr.f32.mxu0 0.0
        %2457 = vmatmul.mubr.f32.gmra.mrb[0].mxu0 %v2390
        %v2458 = vpop.f32.mrb[0].mxu0
        %v2459 = vadd.f32 0.0, %v2458
        %v2460 = vpop.f32.mrb[0].mxu0
        %2461 = vdwg.mxu0
        %v2462 = vsel %vm2389, %v2386, 0
        %2464 = vmatprep.subr.mxu0 0.0
        %2465 = vmatpush1.msra.mxu0 %v700
        %2466 = vmatprep.subr.mxu0 0.0
        %2467 = vmatpush1.msra.mxu0 %v701
        %2468 = vmatprep.subr.mxu0 0.0
        %2469 = vmatpush1.msra.mxu0 %v702
        %2470 = vmatprep.subr.mxu0 0.0
        %2471 = vmatpush1.msra.mxu0 %v703
        %2472 = vmatprep.subr.mxu0 0.0
        %2473 = vmatpush1.msra.mxu0 %v704
        %2474 = vmatprep.subr.mxu0 0.0
        %2475 = vmatpush1.msra.mxu0 %v705
        %2476 = vmatprep.subr.mxu0 0.0
        %2477 = vmatpush1.msra.mxu0 0.0
        %2478 = vmatprep.subr.mxu0 0.0
        %2479 = vmatpush1.msra.mxu0 0.0
        %2480 = vmatprep.subr.mxu0 0.0
        %2481 = vmatpush1.msra.mxu0 0.0
        %2482 = vmatprep.subr.mxu0 0.0
        %2483 = vmatpush1.msra.mxu0 0.0
        %2484 = vmatprep.subr.mxu0 0.0
        %2485 = vmatpush1.msra.mxu0 0.0
        %2486 = vmatprep.subr.mxu0 0.0
        %2487 = vmatpush1.msra.mxu0 0.0
        %2488 = vmatprep.subr.mxu0 0.0
        %2489 = vmatpush1.msra.mxu0 0.0
        %2490 = vmatprep.subr.mxu0 0.0
        %2491 = vmatpush1.msra.mxu0 0.0
        %2492 = vmatprep.subr.mxu0 0.0
        %2493 = vmatpush1.msra.mxu0 0.0
        %2494 = vmatprep.subr.mxu0 0.0
        %2495 = vmatpush1.msra.mxu0 0.0
        %2496 = vmatprep.subr.mxu0 0.0
        %2497 = vmatpush1.msra.mxu0 0.0
        %2498 = vmatprep.subr.mxu0 0.0
        %2499 = vmatpush1.msra.mxu0 0.0
        %2500 = vmatprep.subr.mxu0 0.0
        %2501 = vmatpush1.msra.mxu0 0.0
        %2502 = vmatprep.subr.mxu0 0.0
        %2503 = vmatpush1.msra.mxu0 0.0
        %2504 = vmatprep.subr.mxu0 0.0
        %2505 = vmatpush1.msra.mxu0 0.0
        %2506 = vmatprep.subr.mxu0 0.0
        %2507 = vmatpush1.msra.mxu0 0.0
        %2508 = vmatprep.subr.mxu0 0.0
        %2509 = vmatpush1.msra.mxu0 0.0
        %2510 = vmatprep.subr.mxu0 0.0
        %2511 = vmatpush1.msra.mxu0 0.0
        %2512 = vmatprep.subr.mxu0 0.0
        %2513 = vmatpush1.msra.mxu0 0.0
        %2514 = vmatprep.subr.mxu0 0.0
        %2515 = vmatpush1.msra.mxu0 0.0
        %2516 = vmatprep.subr.mxu0 0.0
        %2517 = vmatpush1.msra.mxu0 0.0
        %2518 = vmatprep.subr.mxu0 0.0
        %2519 = vmatpush1.msra.mxu0 0.0
        %2520 = vmatprep.subr.mxu0 0.0
        %2521 = vmatpush1.msra.mxu0 0.0
        %2522 = vmatprep.subr.mxu0 0.0
        %2523 = vmatpush1.msra.mxu0 0.0
        %2524 = vmatprep.subr.mxu0 0.0
        %2525 = vmatpush1.msra.mxu0 0.0
        %2526 = vmatprep.subr.mxu0 0.0
        %2527 = vmatpush1.msra.mxu0 0.0
        %2528 = vmatprep.mubr.f32.mxu0 0.0
        %2529 = vmatmul.mubr.f32.gmra.mrb[0].mxu0 %v2462
        %v2530 = vpop.f32.mrb[0].mxu0
        %v2531 = vadd.f32 %v2459, %v2530
        %v2532 = vpop.f32.mrb[0].mxu0
        %2533 = vdwg.mxu0
        %v2534 = vrot.slane %v2386, 2
        %v2535 = vsel %vm2389, %v2534, 0
        %2537 = vmatprep.subr.mxu0 0.0
        %2538 = vmatpush1.msra.mxu0 %v714
        %2539 = vmatprep.subr.mxu0 0.0
        %2540 = vmatpush1.msra.mxu0 %v715
        %2541 = vmatprep.subr.mxu0 0.0
        %2542 = vmatpush1.msra.mxu0 %v716
        %2543 = vmatprep.subr.mxu0 0.0
        %2544 = vmatpush1.msra.mxu0 %v717
        %2545 = vmatprep.subr.mxu0 0.0
        %2546 = vmatpush1.msra.mxu0 %v718
        %2547 = vmatprep.subr.mxu0 0.0
        %2548 = vmatpush1.msra.mxu0 %v719
        %2549 = vmatprep.subr.mxu0 0.0
        %2550 = vmatpush1.msra.mxu0 0.0
        %2551 = vmatprep.subr.mxu0 0.0
        %2552 = vmatpush1.msra.mxu0 0.0
        %2553 = vmatprep.subr.mxu0 0.0
        %2554 = vmatpush1.msra.mxu0 0.0
        %2555 = vmatprep.subr.mxu0 0.0
        %2556 = vmatpush1.msra.mxu0 0.0
        %2557 = vmatprep.subr.mxu0 0.0
        %2558 = vmatpush1.msra.mxu0 0.0
        %2559 = vmatprep.subr.mxu0 0.0
        %2560 = vmatpush1.msra.mxu0 0.0
        %2561 = vmatprep.subr.mxu0 0.0
        %2562 = vmatpush1.msra.mxu0 0.0
        %2563 = vmatprep.subr.mxu0 0.0
        %2564 = vmatpush1.msra.mxu0 0.0
        %2565 = vmatprep.subr.mxu0 0.0
        %2566 = vmatpush1.msra.mxu0 0.0
        %2567 = vmatprep.subr.mxu0 0.0
        %2568 = vmatpush1.msra.mxu0 0.0
        %2569 = vmatprep.subr.mxu0 0.0
        %2570 = vmatpush1.msra.mxu0 0.0
        %2571 = vmatprep.subr.mxu0 0.0
        %2572 = vmatpush1.msra.mxu0 0.0
        %2573 = vmatprep.subr.mxu0 0.0
        %2574 = vmatpush1.msra.mxu0 0.0
        %2575 = vmatprep.subr.mxu0 0.0
        %2576 = vmatpush1.msra.mxu0 0.0
        %2577 = vmatprep.subr.mxu0 0.0
        %2578 = vmatpush1.msra.mxu0 0.0
        %2579 = vmatprep.subr.mxu0 0.0
        %2580 = vmatpush1.msra.mxu0 0.0
        %2581 = vmatprep.subr.mxu0 0.0
        %2582 = vmatpush1.msra.mxu0 0.0
        %2583 = vmatprep.subr.mxu0 0.0
        %2584 = vmatpush1.msra.mxu0 0.0
        %2585 = vmatprep.subr.mxu0 0.0
        %2586 = vmatpush1.msra.mxu0 0.0
        %2587 = vmatprep.subr.mxu0 0.0
        %2588 = vmatpush1.msra.mxu0 0.0
        %2589 = vmatprep.subr.mxu0 0.0
        %2590 = vmatpush1.msra.mxu0 0.0
        %2591 = vmatprep.subr.mxu0 0.0
        %2592 = vmatpush1.msra.mxu0 0.0
        %2593 = vmatprep.subr.mxu0 0.0
        %2594 = vmatpush1.msra.mxu0 0.0
        %2595 = vmatprep.subr.mxu0 0.0
        %2596 = vmatpush1.msra.mxu0 0.0
        %2597 = vmatprep.subr.mxu0 0.0
        %2598 = vmatpush1.msra.mxu0 0.0
        %2599 = vmatprep.subr.mxu0 0.0
        %2600 = vmatpush1.msra.mxu0 0.0
        %2601 = vmatprep.mubr.f32.mxu0 0.0
        %2602 = vmatmul.mubr.f32.gmra.mrb[0].mxu0 %v2535
        %v2603 = vpop.f32.mrb[0].mxu0
        %v2604 = vadd.f32 0.0, %v2603
        %v2605 = vpop.f32.mrb[0].mxu0
        %2606 = vdwg.mxu0
        %v2607 = vadd.f32 %v2531, %v2604
        %v2608 = vrot.slane %v2386, 3
        %v2609 = vsel %vm2389, %v2608, 0
        %2611 = vmatprep.subr.mxu0 0.0
        %2612 = vmatpush1.msra.mxu0 %v721
        %2613 = vmatprep.subr.mxu0 0.0
        %2614 = vmatpush1.msra.mxu0 %v722
        %2615 = vmatprep.subr.mxu0 0.0
        %2616 = vmatpush1.msra.mxu0 %v723
        %2617 = vmatprep.subr.mxu0 0.0
        %2618 = vmatpush1.msra.mxu0 %v724
        %2619 = vmatprep.subr.mxu0 0.0
        %2620 = vmatpush1.msra.mxu0 %v725
        %2621 = vmatprep.subr.mxu0 0.0
        %2622 = vmatpush1.msra.mxu0 %v726
        %2623 = vmatprep.subr.mxu0 0.0
        %2624 = vmatpush1.msra.mxu0 0.0
        %2625 = vmatprep.subr.mxu0 0.0
        %2626 = vmatpush1.msra.mxu0 0.0
        %2627 = vmatprep.subr.mxu0 0.0
        %2628 = vmatpush1.msra.mxu0 0.0
        %2629 = vmatprep.subr.mxu0 0.0
        %2630 = vmatpush1.msra.mxu0 0.0
        %2631 = vmatprep.subr.mxu0 0.0
        %2632 = vmatpush1.msra.mxu0 0.0
        %2633 = vmatprep.subr.mxu0 0.0
        %2634 = vmatpush1.msra.mxu0 0.0
        %2635 = vmatprep.subr.mxu0 0.0
        %2636 = vmatpush1.msra.mxu0 0.0
        %2637 = vmatprep.subr.mxu0 0.0
        %2638 = vmatpush1.msra.mxu0 0.0
        %2639 = vmatprep.subr.mxu0 0.0
        %2640 = vmatpush1.msra.mxu0 0.0
        %2641 = vmatprep.subr.mxu0 0.0
        %2642 = vmatpush1.msra.mxu0 0.0
        %2643 = vmatprep.subr.mxu0 0.0
        %2644 = vmatpush1.msra.mxu0 0.0
        %2645 = vmatprep.subr.mxu0 0.0
        %2646 = vmatpush1.msra.mxu0 0.0
        %2647 = vmatprep.subr.mxu0 0.0
        %2648 = vmatpush1.msra.mxu0 0.0
        %2649 = vmatprep.subr.mxu0 0.0
        %2650 = vmatpush1.msra.mxu0 0.0
        %2651 = vmatprep.subr.mxu0 0.0
        %2652 = vmatpush1.msra.mxu0 0.0
        %2653 = vmatprep.subr.mxu0 0.0
        %2654 = vmatpush1.msra.mxu0 0.0
        %2655 = vmatprep.subr.mxu0 0.0
        %2656 = vmatpush1.msra.mxu0 0.0
        %2657 = vmatprep.subr.mxu0 0.0
        %2658 = vmatpush1.msra.mxu0 0.0
        %2659 = vmatprep.subr.mxu0 0.0
        %2660 = vmatpush1.msra.mxu0 0.0
        %2661 = vmatprep.subr.mxu0 0.0
        %2662 = vmatpush1.msra.mxu0 0.0
        %2663 = vmatprep.subr.mxu0 0.0
        %2664 = vmatpush1.msra.mxu0 0.0
        %2665 = vmatprep.subr.mxu0 0.0
        %2666 = vmatpush1.msra.mxu0 0.0
        %2667 = vmatprep.subr.mxu0 0.0
        %2668 = vmatpush1.msra.mxu0 0.0
        %2669 = vmatprep.subr.mxu0 0.0
        %2670 = vmatpush1.msra.mxu0 0.0
        %2671 = vmatprep.subr.mxu0 0.0
        %2672 = vmatpush1.msra.mxu0 0.0
        %2673 = vmatprep.subr.mxu0 0.0
        %2674 = vmatpush1.msra.mxu0 0.0
        %2675 = vmatprep.mubr.f32.mxu0 0.0
        %2676 = vmatmul.mubr.f32.gmra.mrb[0].mxu0 %v2609
        %v2677 = vpop.f32.mrb[0].mxu0
        %v2678 = vadd.f32 0.0, %v2677
        %v2679 = vpop.f32.mrb[0].mxu0
        %2680 = vdwg.mxu0
        %v2681 = vadd.f32 %v2607, %v2678
        %v2682 = vadd.f32 %v2681, %v795
        %v2683 = vmax.f32 %v2682, 0.0
        %vm2684 = vcmask 982016
        %v2686 = vsel %vm2684, %v2683, 0
        %2688 = vmatprep.subr.mxu0 0.0
        %2689 = vmatpush1.msra.mxu0 %v796
        %2690 = vmatprep.subr.mxu0 0.0
        %2691 = vmatpush1.msra.mxu0 %v797
        %2692 = vmatprep.subr.mxu0 0.0
        %2693 = vmatpush1.msra.mxu0 %v798
        %2694 = vmatprep.subr.mxu0 0.0
        %2695 = vmatpush1.msra.mxu0 %v799
        %2696 = vmatprep.subr.mxu0 0.0
        %2697 = vmatpush1.msra.mxu0 %v800
        %2698 = vmatprep.subr.mxu0 0.0
        %2699 = vmatpush1.msra.mxu0 %v801
        %2700 = vmatprep.subr.mxu0 0.0
        %2701 = vmatpush1.msra.mxu0 %v802
        %2702 = vmatprep.subr.mxu0 0.0
        %2703 = vmatpush1.msra.mxu0 %v803
        %2704 = vmatprep.subr.mxu0 0.0
        %2705 = vmatpush1.msra.mxu0 %v804
        %2706 = vmatprep.subr.mxu0 0.0
        %2707 = vmatpush1.msra.mxu0 %v805
        %2708 = vmatprep.subr.mxu0 0.0
        %2709 = vmatpush1.msra.mxu0 %v806
        %2710 = vmatprep.subr.mxu0 0.0
        %2711 = vmatpush1.msra.mxu0 %v807
        %2712 = vmatprep.subr.mxu0 0.0
        %2713 = vmatpush1.msra.mxu0 %v808
        %2714 = vmatprep.subr.mxu0 0.0
        %2715 = vmatpush1.msra.mxu0 %v809
        %2716 = vmatprep.subr.mxu0 0.0
        %2717 = vmatpush1.msra.mxu0 %v810
        %2718 = vmatprep.subr.mxu0 0.0
        %2719 = vmatpush1.msra.mxu0 0.0
        %2720 = vmatprep.subr.mxu0 0.0
        %2721 = vmatpush1.msra.mxu0 0.0
        %2722 = vmatprep.subr.mxu0 0.0
        %2723 = vmatpush1.msra.mxu0 0.0
        %2724 = vmatprep.subr.mxu0 0.0
        %2725 = vmatpush1.msra.mxu0 0.0
        %2726 = vmatprep.subr.mxu0 0.0
        %2727 = vmatpush1.msra.mxu0 0.0
        %2728 = vmatprep.subr.mxu0 0.0
        %2729 = vmatpush1.msra.mxu0 0.0
        %2730 = vmatprep.subr.mxu0 0.0
        %2731 = vmatpush1.msra.mxu0 0.0
        %2732 = vmatprep.subr.mxu0 0.0
        %2733 = vmatpush1.msra.mxu0 0.0
        %2734 = vmatprep.subr.mxu0 0.0
        %2735 = vmatpush1.msra.mxu0 0.0
        %2736 = vmatprep.subr.mxu0 0.0
        %2737 = vmatpush1.msra.mxu0 0.0
        %2738 = vmatprep.subr.mxu0 0.0
        %2739 = vmatpush1.msra.mxu0 0.0
        %2740 = vmatprep.subr.mxu0 0.0
        %2741 = vmatpush1.msra.mxu0 0.0
        %2742 = vmatprep.subr.mxu0 0.0
        %2743 = vmatpush1.msra.mxu0 0.0
        %2744 = vmatprep.subr.mxu0 0.0
        %2745 = vmatpush1.msra.mxu0 0.0
        %2746 = vmatprep.subr.mxu0 0.0
        %2747 = vmatpush1.msra.mxu0 0.0
        %2748 = vmatprep.subr.mxu0 0.0
        %2749 = vmatpush1.msra.mxu0 0.0
        %2750 = vmatprep.subr.mxu0 0.0
        %2751 = vmatpush1.msra.mxu0 0.0
        %2752 = vmatprep.mubr.f32.mxu0 0.0
        %2753 = vmatmul.mubr.f32.gmra.mrb[0].mxu0 %v2686
        %v2754 = vpop.f32.mrb[0].mxu0
        %v2755 = vadd.f32 %v811, %v2754
        %v2756 = vpop.f32.mrb[0].mxu0
        %2757 = vdwg.mxu0
        %v2758 = vmax.f32 %v2755, 0.0
        %vm2759 = vcmask 490496
        %v2761 = vsel %vm2759, %v2758, 0
        %v2764 = vsel %vm844, %v819, 0
        %2766 = vmatprep.subr.mxu0 0.0
        %2767 = vmatpush1.msra.mxu0 %v812
        %2768 = vmatprep.subr.mxu0 0.0
        %2769 = vmatpush1.msra.mxu0 %v813
        %2770 = vmatprep.subr.mxu0 0.0
        %2771 = vmatpush1.msra.mxu0 %v814
        %2772 = vmatprep.subr.mxu0 0.0
        %2773 = vmatpush1.msra.mxu0 %v815
        %2774 = vmatprep.subr.mxu0 0.0
        %2775 = vmatpush1.msra.mxu0 %v816
        %2776 = vmatprep.subr.mxu0 0.0
        %2777 = vmatpush1.msra.mxu0 %v817
        %2778 = vmatprep.subr.mxu0 0.0
        %2779 = vmatpush1.msra.mxu0 %v818
        %2780 = vmatprep.subr.mxu0 0.0
        %2781 = vmatpush1.msra.mxu0 %v2764
        %2782 = vmatprep.subr.mxu0 0.0
        %2783 = vmatpush1.msra.mxu0 0.0
        %2784 = vmatprep.subr.mxu0 0.0
        %2785 = vmatpush1.msra.mxu0 0.0
        %2786 = vmatprep.subr.mxu0 0.0
        %2787 = vmatpush1.msra.mxu0 0.0
        %2788 = vmatprep.subr.mxu0 0.0
        %2789 = vmatpush1.msra.mxu0 0.0
        %2790 = vmatprep.subr.mxu0 0.0
        %2791 = vmatpush1.msra.mxu0 0.0
        %2792 = vmatprep.subr.mxu0 0.0
        %2793 = vmatpush1.msra.mxu0 0.0
        %2794 = vmatprep.subr.mxu0 0.0
        %2795 = vmatpush1.msra.mxu0 0.0
        %2796 = vmatprep.subr.mxu0 0.0
        %2797 = vmatpush1.msra.mxu0 0.0
        %2798 = vmatprep.subr.mxu0 0.0
        %2799 = vmatpush1.msra.mxu0 0.0
        %2800 = vmatprep.subr.mxu0 0.0
        %2801 = vmatpush1.msra.mxu0 0.0
        %2802 = vmatprep.subr.mxu0 0.0
        %2803 = vmatpush1.msra.mxu0 0.0
        %2804 = vmatprep.subr.mxu0 0.0
        %2805 = vmatpush1.msra.mxu0 0.0
        %2806 = vmatprep.subr.mxu0 0.0
        %2807 = vmatpush1.msra.mxu0 0.0
        %2808 = vmatprep.subr.mxu0 0.0
        %2809 = vmatpush1.msra.mxu0 0.0
        %2810 = vmatprep.subr.mxu0 0.0
        %2811 = vmatpush1.msra.mxu0 0.0
        %2812 = vmatprep.subr.mxu0 0.0
        %2813 = vmatpush1.msra.mxu0 0.0
        %2814 = vmatprep.subr.mxu0 0.0
        %2815 = vmatpush1.msra.mxu0 0.0
        %2816 = vmatprep.subr.mxu0 0.0
        %2817 = vmatpush1.msra.mxu0 0.0
        %2818 = vmatprep.subr.mxu0 0.0
        %2819 = vmatpush1.msra.mxu0 0.0
        %2820 = vmatprep.subr.mxu0 0.0
        %2821 = vmatpush1.msra.mxu0 0.0
        %2822 = vmatprep.subr.mxu0 0.0
        %2823 = vmatpush1.msra.mxu0 0.0
        %2824 = vmatprep.subr.mxu0 0.0
        %2825 = vmatpush1.msra.mxu0 0.0
        %2826 = vmatprep.subr.mxu0 0.0
        %2827 = vmatpush1.msra.mxu0 0.0
        %2828 = vmatprep.subr.mxu0 0.0
        %2829 = vmatpush1.msra.mxu0 0.0
        %2830 = vmatprep.mubr.f32.mxu0 0.0
        %2831 = vmatmul.mubr.f32.gmra.mrb[0].mxu0 %v2761
        %v2832 = vpop.f32.mrb[0].mxu0
        %v2833 = vadd.f32 %v820, %v2832
        %v2834 = vpop.f32.mrb[0].mxu0
        %2835 = vdwg.mxu0
        %2836 = vst [vmem:[%s598] sm:$0x1] %v2833
        %s2837 = scalar_lea.vmem %s604, 32
        %v2838 = vld [vmem:[%s2837] sm:$0xff]
        %v2839 = vld [vmem:[%s2837 + $0x8] sm:$0xff]
        %v2840 = vld [vmem:[%s2837 + $0x10] sm:$0xff]
        %v2841 = vld [vmem:[%s2837 + $0x18] sm:$0xf]
        %v2846 = vrot.slane %v2838, 1
        %v2847 = vrot.slane %v2839, 1
        %v2848 = vsel %vm829, %v2846, %v2847
        %v2849 = vrot.slane %v2840, 1
        %v2850 = vsel %vm829, %v2847, %v2849
        %v2851 = vrot.slane %v2841, 1
        %v2852 = vsel %vm829, %v2849, %v2851
        %v2853 = vsel %vm837, %v2848, 0
        %v2855 = vsel %vm837, %v2850, 0
        %v2857 = vsel %vm837, %v2852, 0
        %2859 = vmatprep.subr.mxu0 %v617
        %2860 = vmatpush1.msra.mxu0 %v616
        %2861 = vmatprep.subr.mxu0 %v619
        %2862 = vmatpush1.msra.mxu0 %v618
        %2863 = vmatprep.subr.mxu0 %v621
        %2864 = vmatpush1.msra.mxu0 %v620
        %2865 = vmatprep.subr.mxu0 %v849
        %2866 = vmatpush1.msra.mxu0 %v846
        %2867 = vmatprep.subr.mxu0 0.0
        %2868 = vmatpush1.msra.mxu0 0.0
        %2869 = vmatprep.subr.mxu0 0.0
        %2870 = vmatpush1.msra.mxu0 0.0
        %2871 = vmatprep.subr.mxu0 0.0
        %2872 = vmatpush1.msra.mxu0 0.0
        %2873 = vmatprep.subr.mxu0 0.0
        %2874 = vmatpush1.msra.mxu0 0.0
        %2875 = vmatprep.subr.mxu0 0.0
        %2876 = vmatpush1.msra.mxu0 0.0
        %2877 = vmatprep.subr.mxu0 0.0
        %2878 = vmatpush1.msra.mxu0 0.0
        %2879 = vmatprep.subr.mxu0 0.0
        %2880 = vmatpush1.msra.mxu0 0.0
        %2881 = vmatprep.subr.mxu0 0.0
        %2882 = vmatpush1.msra.mxu0 0.0
        %2883 = vmatprep.subr.mxu0 0.0
        %2884 = vmatpush1.msra.mxu0 0.0
        %2885 = vmatprep.subr.mxu0 0.0
        %2886 = vmatpush1.msra.mxu0 0.0
        %2887 = vmatprep.subr.mxu0 0.0
        %2888 = vmatpush1.msra.mxu0 0.0
        %2889 = vmatprep.subr.mxu0 0.0
        %2890 = vmatpush1.msra.mxu0 0.0
        %2891 = vmatprep.subr.mxu0 0.0
        %2892 = vmatpush1.msra.mxu0 0.0
        %2893 = vmatprep.subr.mxu0 0.0
        %2894 = vmatpush1.msra.mxu0 0.0
        %2895 = vmatprep.subr.mxu0 0.0
        %2896 = vmatpush1.msra.mxu0 0.0
        %2897 = vmatprep.subr.mxu0 0.0
        %2898 = vmatpush1.msra.mxu0 0.0
        %2899 = vmatprep.subr.mxu0 0.0
        %2900 = vmatpush1.msra.mxu0 0.0
        %2901 = vmatprep.subr.mxu0 0.0
        %2902 = vmatpush1.msra.mxu0 0.0
        %2903 = vmatprep.subr.mxu0 0.0
        %2904 = vmatpush1.msra.mxu0 0.0
        %2905 = vmatprep.subr.mxu0 0.0
        %2906 = vmatpush1.msra.mxu0 0.0
        %2907 = vmatprep.subr.mxu0 0.0
        %2908 = vmatpush1.msra.mxu0 0.0
        %2909 = vmatprep.subr.mxu0 0.0
        %2910 = vmatpush1.msra.mxu0 0.0
        %2911 = vmatprep.subr.mxu0 0.0
        %2912 = vmatpush1.msra.mxu0 0.0
        %2913 = vmatprep.subr.mxu0 0.0
        %2914 = vmatpush1.msra.mxu0 0.0
        %2915 = vmatprep.subr.mxu0 0.0
        %2916 = vmatpush1.msra.mxu0 0.0
        %2917 = vmatprep.subr.mxu0 0.0
        %2918 = vmatpush1.msra.mxu0 0.0
        %2919 = vmatprep.subr.mxu0 0.0
        %2920 = vmatpush1.msra.mxu0 0.0
        %2921 = vmatprep.subr.mxu0 0.0
        %2922 = vmatpush1.msra.mxu0 0.0
        %2923 = vmatprep.mubr.f32.mxu0 0.0
        %2924 = vmatmul.mubr.f32.gmra.mrb[0].mxu0 %v2853
        %v2925 = vpop.f32.mrb[0].mxu0
        %v2926 = vadd.f32 0.0, %v2925
        %v2927 = vpop.f32.mrb[0].mxu0
        %v2928 = vadd.f32 0.0, %v2927
        %2929 = vmatprep.mubr.f32.mxu0 0.0
        %2930 = vmatmul.mubr.f32.gmra.mrb[0].mxu0 %v2855
        %v2931 = vpop.f32.mrb[0].mxu0
        %v2932 = vadd.f32 0.0, %v2931
        %v2933 = vpop.f32.mrb[0].mxu0
        %v2934 = vadd.f32 0.0, %v2933
        %2935 = vmatprep.mubr.f32.mxu0 0.0
        %2936 = vmatmul.mubr.f32.gmra.mrb[0].mxu0 %v2857
        %v2937 = vpop.f32.mrb[0].mxu0
        %v2938 = vadd.f32 0.0, %v2937
        %v2939 = vpop.f32.mrb[0].mxu0
        %v2940 = vadd.f32 0.0, %v2939
        %2941 = vdwg.mxu0
        %v2942 = vsel %vm837, %v2838, 0
        %v2944 = vsel %vm837, %v2839, 0
        %v2946 = vsel %vm837, %v2840, 0
        %2948 = vmatprep.subr.mxu0 %v608
        %2949 = vmatpush1.msra.mxu0 %v607
        %2950 = vmatprep.subr.mxu0 %v610
        %2951 = vmatpush1.msra.mxu0 %v609
        %2952 = vmatprep.subr.mxu0 %v612
        %2953 = vmatpush1.msra.mxu0 %v611
        %2954 = vmatprep.subr.mxu0 %v944
        %2955 = vmatpush1.msra.mxu0 %v941
        %2956 = vmatprep.subr.mxu0 0.0
        %2957 = vmatpush1.msra.mxu0 0.0
        %2958 = vmatprep.subr.mxu0 0.0
        %2959 = vmatpush1.msra.mxu0 0.0
        %2960 = vmatprep.subr.mxu0 0.0
        %2961 = vmatpush1.msra.mxu0 0.0
        %2962 = vmatprep.subr.mxu0 0.0
        %2963 = vmatpush1.msra.mxu0 0.0
        %2964 = vmatprep.subr.mxu0 0.0
        %2965 = vmatpush1.msra.mxu0 0.0
        %2966 = vmatprep.subr.mxu0 0.0
        %2967 = vmatpush1.msra.mxu0 0.0
        %2968 = vmatprep.subr.mxu0 0.0
        %2969 = vmatpush1.msra.mxu0 0.0
        %2970 = vmatprep.subr.mxu0 0.0
        %2971 = vmatpush1.msra.mxu0 0.0
        %2972 = vmatprep.subr.mxu0 0.0
        %2973 = vmatpush1.msra.mxu0 0.0
        %2974 = vmatprep.subr.mxu0 0.0
        %2975 = vmatpush1.msra.mxu0 0.0
        %2976 = vmatprep.subr.mxu0 0.0
        %2977 = vmatpush1.msra.mxu0 0.0
        %2978 = vmatprep.subr.mxu0 0.0
        %2979 = vmatpush1.msra.mxu0 0.0
        %2980 = vmatprep.subr.mxu0 0.0
        %2981 = vmatpush1.msra.mxu0 0.0
        %2982 = vmatprep.subr.mxu0 0.0
        %2983 = vmatpush1.msra.mxu0 0.0
        %2984 = vmatprep.subr.mxu0 0.0
        %2985 = vmatpush1.msra.mxu0 0.0
        %2986 = vmatprep.subr.mxu0 0.0
        %2987 = vmatpush1.msra.mxu0 0.0
        %2988 = vmatprep.subr.mxu0 0.0
        %2989 = vmatpush1.msra.mxu0 0.0
        %2990 = vmatprep.subr.mxu0 0.0
        %2991 = vmatpush1.msra.mxu0 0.0
        %2992 = vmatprep.subr.mxu0 0.0
        %2993 = vmatpush1.msra.mxu0 0.0
        %2994 = vmatprep.subr.mxu0 0.0
        %2995 = vmatpush1.msra.mxu0 0.0
        %2996 = vmatprep.subr.mxu0 0.0
        %2997 = vmatpush1.msra.mxu0 0.0
        %2998 = vmatprep.subr.mxu0 0.0
        %2999 = vmatpush1.msra.mxu0 0.0
        %3000 = vmatprep.subr.mxu0 0.0
        %3001 = vmatpush1.msra.mxu0 0.0
        %3002 = vmatprep.subr.mxu0 0.0
        %3003 = vmatpush1.msra.mxu0 0.0
        %3004 = vmatprep.subr.mxu0 0.0
        %3005 = vmatpush1.msra.mxu0 0.0
        %3006 = vmatprep.subr.mxu0 0.0
        %3007 = vmatpush1.msra.mxu0 0.0
        %3008 = vmatprep.subr.mxu0 0.0
        %3009 = vmatpush1.msra.mxu0 0.0
        %3010 = vmatprep.subr.mxu0 0.0
        %3011 = vmatpush1.msra.mxu0 0.0
        %3012 = vmatprep.mubr.f32.mxu0 0.0
        %3013 = vmatmul.mubr.f32.gmra.mrb[0].mxu0 %v2942
        %v3014 = vpop.f32.mrb[0].mxu0
        %v3015 = vadd.f32 %v2926, %v3014
        %v3016 = vpop.f32.mrb[0].mxu0
        %v3017 = vadd.f32 %v2928, %v3016
        %3018 = vmatprep.mubr.f32.mxu0 0.0
        %3019 = vmatmul.mubr.f32.gmra.mrb[0].mxu0 %v2944
        %v3020 = vpop.f32.mrb[0].mxu0
        %v3021 = vadd.f32 %v2932, %v3020
        %v3022 = vpop.f32.mrb[0].mxu0
        %v3023 = vadd.f32 %v2934, %v3022
        %3024 = vmatprep.mubr.f32.mxu0 0.0
        %3025 = vmatmul.mubr.f32.gmra.mrb[0].mxu0 %v2946
        %v3026 = vpop.f32.mrb[0].mxu0
        %v3027 = vadd.f32 %v2938, %v3026
        %v3028 = vpop.f32.mrb[0].mxu0
        %v3029 = vadd.f32 %v2940, %v3028
        %3030 = vdwg.mxu0
        %v3031 = vrot.slane %v2838, 2
        %v3032 = vrot.slane %v2839, 2
        %v3033 = vsel %vm1029, %v3031, %v3032
        %v3034 = vrot.slane %v2840, 2
        %v3035 = vsel %vm1029, %v3032, %v3034
        %v3036 = vrot.slane %v2841, 2
        %v3037 = vsel %vm1029, %v3034, %v3036
        %v3038 = vsel %vm837, %v3033, 0
        %v3040 = vsel %vm837, %v3035, 0
        %v3042 = vsel %vm837, %v3037, 0
        %3044 = vmatprep.subr.mxu0 %v626
        %3045 = vmatpush1.msra.mxu0 %v625
        %3046 = vmatprep.subr.mxu0 %v628
        %3047 = vmatpush1.msra.mxu0 %v627
        %3048 = vmatprep.subr.mxu0 %v630
        %3049 = vmatpush1.msra.mxu0 %v629
        %3050 = vmatprep.subr.mxu0 %v1047
        %3051 = vmatpush1.msra.mxu0 %v1044
        %3052 = vmatprep.subr.mxu0 0.0
        %3053 = vmatpush1.msra.mxu0 0.0
        %3054 = vmatprep.subr.mxu0 0.0
        %3055 = vmatpush1.msra.mxu0 0.0
        %3056 = vmatprep.subr.mxu0 0.0
        %3057 = vmatpush1.msra.mxu0 0.0
        %3058 = vmatprep.subr.mxu0 0.0
        %3059 = vmatpush1.msra.mxu0 0.0
        %3060 = vmatprep.subr.mxu0 0.0
        %3061 = vmatpush1.msra.mxu0 0.0
        %3062 = vmatprep.subr.mxu0 0.0
        %3063 = vmatpush1.msra.mxu0 0.0
        %3064 = vmatprep.subr.mxu0 0.0
        %3065 = vmatpush1.msra.mxu0 0.0
        %3066 = vmatprep.subr.mxu0 0.0
        %3067 = vmatpush1.msra.mxu0 0.0
        %3068 = vmatprep.subr.mxu0 0.0
        %3069 = vmatpush1.msra.mxu0 0.0
        %3070 = vmatprep.subr.mxu0 0.0
        %3071 = vmatpush1.msra.mxu0 0.0
        %3072 = vmatprep.subr.mxu0 0.0
        %3073 = vmatpush1.msra.mxu0 0.0
        %3074 = vmatprep.subr.mxu0 0.0
        %3075 = vmatpush1.msra.mxu0 0.0
        %3076 = vmatprep.subr.mxu0 0.0
        %3077 = vmatpush1.msra.mxu0 0.0
        %3078 = vmatprep.subr.mxu0 0.0
        %3079 = vmatpush1.msra.mxu0 0.0
        %3080 = vmatprep.subr.mxu0 0.0
        %3081 = vmatpush1.msra.mxu0 0.0
        %3082 = vmatprep.subr.mxu0 0.0
        %3083 = vmatpush1.msra.mxu0 0.0
        %3084 = vmatprep.subr.mxu0 0.0
        %3085 = vmatpush1.msra.mxu0 0.0
        %3086 = vmatprep.subr.mxu0 0.0
        %3087 = vmatpush1.msra.mxu0 0.0
        %3088 = vmatprep.subr.mxu0 0.0
        %3089 = vmatpush1.msra.mxu0 0.0
        %3090 = vmatprep.subr.mxu0 0.0
        %3091 = vmatpush1.msra.mxu0 0.0
        %3092 = vmatprep.subr.mxu0 0.0
        %3093 = vmatpush1.msra.mxu0 0.0
        %3094 = vmatprep.subr.mxu0 0.0
        %3095 = vmatpush1.msra.mxu0 0.0
        %3096 = vmatprep.subr.mxu0 0.0
        %3097 = vmatpush1.msra.mxu0 0.0
        %3098 = vmatprep.subr.mxu0 0.0
        %3099 = vmatpush1.msra.mxu0 0.0
        %3100 = vmatprep.subr.mxu0 0.0
        %3101 = vmatpush1.msra.mxu0 0.0
        %3102 = vmatprep.subr.mxu0 0.0
        %3103 = vmatpush1.msra.mxu0 0.0
        %3104 = vmatprep.subr.mxu0 0.0
        %3105 = vmatpush1.msra.mxu0 0.0
        %3106 = vmatprep.subr.mxu0 0.0
        %3107 = vmatpush1.msra.mxu0 0.0
        %3108 = vmatprep.mubr.f32.mxu0 0.0
        %3109 = vmatmul.mubr.f32.gmra.mrb[0].mxu0 %v3038
        %v3110 = vpop.f32.mrb[0].mxu0
        %v3111 = vadd.f32 0.0, %v3110
        %v3112 = vpop.f32.mrb[0].mxu0
        %v3113 = vadd.f32 0.0, %v3112
        %3114 = vmatprep.mubr.f32.mxu0 0.0
        %3115 = vmatmul.mubr.f32.gmra.mrb[0].mxu0 %v3040
        %v3116 = vpop.f32.mrb[0].mxu0
        %v3117 = vadd.f32 0.0, %v3116
        %v3118 = vpop.f32.mrb[0].mxu0
        %v3119 = vadd.f32 0.0, %v3118
        %3120 = vmatprep.mubr.f32.mxu0 0.0
        %3121 = vmatmul.mubr.f32.gmra.mrb[0].mxu0 %v3042
        %v3122 = vpop.f32.mrb[0].mxu0
        %v3123 = vadd.f32 0.0, %v3122
        %v3124 = vpop.f32.mrb[0].mxu0
        %v3125 = vadd.f32 0.0, %v3124
        %3126 = vdwg.mxu0
        %v3127 = vadd.f32 %v3015, %v3111
        %v3128 = vadd.f32 %v3017, %v3113
        %v3129 = vadd.f32 %v3021, %v3117
        %v3130 = vadd.f32 %v3023, %v3119
        %v3131 = vadd.f32 %v3027, %v3123
        %v3132 = vadd.f32 %v3029, %v3125
        %v3133 = vrot.slane %v2838, 3
        %v3134 = vrot.slane %v2839, 3
        %v3135 = vsel %vm1138, %v3133, %v3134
        %v3136 = vrot.slane %v2840, 3
        %v3137 = vsel %vm1138, %v3134, %v3136
        %v3138 = vrot.slane %v2841, 3
        %v3139 = vsel %vm1138, %v3136, %v3138
        %v3140 = vsel %vm837, %v3135, 0
        %v3142 = vsel %vm837, %v3137, 0
        %v3144 = vsel %vm837, %v3139, 0
        %3146 = vmatprep.subr.mxu0 %v635
        %3147 = vmatpush1.msra.mxu0 %v634
        %3148 = vmatprep.subr.mxu0 %v637
        %3149 = vmatpush1.msra.mxu0 %v636
        %3150 = vmatprep.subr.mxu0 %v639
        %3151 = vmatpush1.msra.mxu0 %v638
        %3152 = vmatprep.subr.mxu0 %v1156
        %3153 = vmatpush1.msra.mxu0 %v1153
        %3154 = vmatprep.subr.mxu0 0.0
        %3155 = vmatpush1.msra.mxu0 0.0
        %3156 = vmatprep.subr.mxu0 0.0
        %3157 = vmatpush1.msra.mxu0 0.0
        %3158 = vmatprep.subr.mxu0 0.0
        %3159 = vmatpush1.msra.mxu0 0.0
        %3160 = vmatprep.subr.mxu0 0.0
        %3161 = vmatpush1.msra.mxu0 0.0
        %3162 = vmatprep.subr.mxu0 0.0
        %3163 = vmatpush1.msra.mxu0 0.0
        %3164 = vmatprep.subr.mxu0 0.0
        %3165 = vmatpush1.msra.mxu0 0.0
        %3166 = vmatprep.subr.mxu0 0.0
        %3167 = vmatpush1.msra.mxu0 0.0
        %3168 = vmatprep.subr.mxu0 0.0
        %3169 = vmatpush1.msra.mxu0 0.0
        %3170 = vmatprep.subr.mxu0 0.0
        %3171 = vmatpush1.msra.mxu0 0.0
        %3172 = vmatprep.subr.mxu0 0.0
        %3173 = vmatpush1.msra.mxu0 0.0
        %3174 = vmatprep.subr.mxu0 0.0
        %3175 = vmatpush1.msra.mxu0 0.0
        %3176 = vmatprep.subr.mxu0 0.0
        %3177 = vmatpush1.msra.mxu0 0.0
        %3178 = vmatprep.subr.mxu0 0.0
        %3179 = vmatpush1.msra.mxu0 0.0
        %3180 = vmatprep.subr.mxu0 0.0
        %3181 = vmatpush1.msra.mxu0 0.0
        %3182 = vmatprep.subr.mxu0 0.0
        %3183 = vmatpush1.msra.mxu0 0.0
        %3184 = vmatprep.subr.mxu0 0.0
        %3185 = vmatpush1.msra.mxu0 0.0
        %3186 = vmatprep.subr.mxu0 0.0
        %3187 = vmatpush1.msra.mxu0 0.0
        %3188 = vmatprep.subr.mxu0 0.0
        %3189 = vmatpush1.msra.mxu0 0.0
        %3190 = vmatprep.subr.mxu0 0.0
        %3191 = vmatpush1.msra.mxu0 0.0
        %3192 = vmatprep.subr.mxu0 0.0
        %3193 = vmatpush1.msra.mxu0 0.0
        %3194 = vmatprep.subr.mxu0 0.0
        %3195 = vmatpush1.msra.mxu0 0.0
        %3196 = vmatprep.subr.mxu0 0.0
        %3197 = vmatpush1.msra.mxu0 0.0
        %3198 = vmatprep.subr.mxu0 0.0
        %3199 = vmatpush1.msra.mxu0 0.0
        %3200 = vmatprep.subr.mxu0 0.0
        %3201 = vmatpush1.msra.mxu0 0.0
        %3202 = vmatprep.subr.mxu0 0.0
        %3203 = vmatpush1.msra.mxu0 0.0
        %3204 = vmatprep.subr.mxu0 0.0
        %3205 = vmatpush1.msra.mxu0 0.0
        %3206 = vmatprep.subr.mxu0 0.0
        %3207 = vmatpush1.msra.mxu0 0.0
        %3208 = vmatprep.subr.mxu0 0.0
        %3209 = vmatpush1.msra.mxu0 0.0
        %3210 = vmatprep.mubr.f32.mxu0 0.0
        %3211 = vmatmul.mubr.f32.gmra.mrb[0].mxu0 %v3140
        %v3212 = vpop.f32.mrb[0].mxu0
        %v3213 = vadd.f32 0.0, %v3212
        %v3214 = vpop.f32.mrb[0].mxu0
        %v3215 = vadd.f32 0.0, %v3214
        %3216 = vmatprep.mubr.f32.mxu0 0.0
        %3217 = vmatmul.mubr.f32.gmra.mrb[0].mxu0 %v3142
        %v3218 = vpop.f32.mrb[0].mxu0
        %v3219 = vadd.f32 0.0, %v3218
        %v3220 = vpop.f32.mrb[0].mxu0
        %v3221 = vadd.f32 0.0, %v3220
        %3222 = vmatprep.mubr.f32.mxu0 0.0
        %3223 = vmatmul.mubr.f32.gmra.mrb[0].mxu0 %v3144
        %v3224 = vpop.f32.mrb[0].mxu0
        %v3225 = vadd.f32 0.0, %v3224
        %v3226 = vpop.f32.mrb[0].mxu0
        %v3227 = vadd.f32 0.0, %v3226
        %3228 = vdwg.mxu0
        %v3229 = vadd.f32 %v3127, %v3213
        %v3230 = vadd.f32 %v3128, %v3215
        %v3231 = vadd.f32 %v3129, %v3219
        %v3232 = vadd.f32 %v3130, %v3221
        %v3233 = vadd.f32 %v3131, %v3225
        %v3234 = vadd.f32 %v3132, %v3227
        %v3235 = vrot.slane %v2838, 4
        %v3236 = vrot.slane %v2839, 4
        %v3237 = vsel %vm844, %v3235, %v3236
        %v3238 = vrot.slane %v2840, 4
        %v3239 = vsel %vm844, %v3236, %v3238
        %v3240 = vrot.slane %v2841, 4
        %v3241 = vsel %vm844, %v3238, %v3240
        %v3242 = vsel %vm837, %v3237, 0
        %v3244 = vsel %vm837, %v3239, 0
        %v3246 = vsel %vm837, %v3241, 0
        %3248 = vmatprep.subr.mxu0 %v644
        %3249 = vmatpush1.msra.mxu0 %v643
        %3250 = vmatprep.subr.mxu0 %v646
        %3251 = vmatpush1.msra.mxu0 %v645
        %3252 = vmatprep.subr.mxu0 %v648
        %3253 = vmatpush1.msra.mxu0 %v647
        %3254 = vmatprep.subr.mxu0 %v1264
        %3255 = vmatpush1.msra.mxu0 %v1261
        %3256 = vmatprep.subr.mxu0 0.0
        %3257 = vmatpush1.msra.mxu0 0.0
        %3258 = vmatprep.subr.mxu0 0.0
        %3259 = vmatpush1.msra.mxu0 0.0
        %3260 = vmatprep.subr.mxu0 0.0
        %3261 = vmatpush1.msra.mxu0 0.0
        %3262 = vmatprep.subr.mxu0 0.0
        %3263 = vmatpush1.msra.mxu0 0.0
        %3264 = vmatprep.subr.mxu0 0.0
        %3265 = vmatpush1.msra.mxu0 0.0
        %3266 = vmatprep.subr.mxu0 0.0
        %3267 = vmatpush1.msra.mxu0 0.0
        %3268 = vmatprep.subr.mxu0 0.0
        %3269 = vmatpush1.msra.mxu0 0.0
        %3270 = vmatprep.subr.mxu0 0.0
        %3271 = vmatpush1.msra.mxu0 0.0
        %3272 = vmatprep.subr.mxu0 0.0
        %3273 = vmatpush1.msra.mxu0 0.0
        %3274 = vmatprep.subr.mxu0 0.0
        %3275 = vmatpush1.msra.mxu0 0.0
        %3276 = vmatprep.subr.mxu0 0.0
        %3277 = vmatpush1.msra.mxu0 0.0
        %3278 = vmatprep.subr.mxu0 0.0
        %3279 = vmatpush1.msra.mxu0 0.0
        %3280 = vmatprep.subr.mxu0 0.0
        %3281 = vmatpush1.msra.mxu0 0.0
        %3282 = vmatprep.subr.mxu0 0.0
        %3283 = vmatpush1.msra.mxu0 0.0
        %3284 = vmatprep.subr.mxu0 0.0
        %3285 = vmatpush1.msra.mxu0 0.0
        %3286 = vmatprep.subr.mxu0 0.0
        %3287 = vmatpush1.msra.mxu0 0.0
        %3288 = vmatprep.subr.mxu0 0.0
        %3289 = vmatpush1.msra.mxu0 0.0
        %3290 = vmatprep.subr.mxu0 0.0
        %3291 = vmatpush1.msra.mxu0 0.0
        %3292 = vmatprep.subr.mxu0 0.0
        %3293 = vmatpush1.msra.mxu0 0.0
        %3294 = vmatprep.subr.mxu0 0.0
        %3295 = vmatpush1.msra.mxu0 0.0
        %3296 = vmatprep.subr.mxu0 0.0
        %3297 = vmatpush1.msra.mxu0 0.0
        %3298 = vmatprep.subr.mxu0 0.0
        %3299 = vmatpush1.msra.mxu0 0.0
        %3300 = vmatprep.subr.mxu0 0.0
        %3301 = vmatpush1.msra.mxu0 0.0
        %3302 = vmatprep.subr.mxu0 0.0
        %3303 = vmatpush1.msra.mxu0 0.0
        %3304 = vmatprep.subr.mxu0 0.0
        %3305 = vmatpush1.msra.mxu0 0.0
        %3306 = vmatprep.subr.mxu0 0.0
        %3307 = vmatpush1.msra.mxu0 0.0
        %3308 = vmatprep.subr.mxu0 0.0
        %3309 = vmatpush1.msra.mxu0 0.0
        %3310 = vmatprep.subr.mxu0 0.0
        %3311 = vmatpush1.msra.mxu0 0.0
        %3312 = vmatprep.mubr.f32.mxu0 0.0
        %3313 = vmatmul.mubr.f32.gmra.mrb[0].mxu0 %v3242
        %v3314 = vpop.f32.mrb[0].mxu0
        %v3315 = vadd.f32 0.0, %v3314
        %v3316 = vpop.f32.mrb[0].mxu0
        %v3317 = vadd.f32 0.0, %v3316
        %3318 = vmatprep.mubr.f32.mxu0 0.0
        %3319 = vmatmul.mubr.f32.gmra.mrb[0].mxu0 %v3244
        %v3320 = vpop.f32.mrb[0].mxu0
        %v3321 = vadd.f32 0.0, %v3320
        %v3322 = vpop.f32.mrb[0].mxu0
        %v3323 = vadd.f32 0.0, %v3322
        %3324 = vmatprep.mubr.f32.mxu0 0.0
        %3325 = vmatmul.mubr.f32.gmra.mrb[0].mxu0 %v3246
        %v3326 = vpop.f32.mrb[0].mxu0
        %v3327 = vadd.f32 0.0, %v3326
        %v3328 = vpop.f32.mrb[0].mxu0
        %v3329 = vadd.f32 0.0, %v3328
        %3330 = vdwg.mxu0
        %v3331 = vadd.f32 %v3229, %v3315
        %v3332 = vadd.f32 %v3230, %v3317
        %v3333 = vadd.f32 %v3231, %v3321
        %v3334 = vadd.f32 %v3232, %v3323
        %v3335 = vadd.f32 %v3233, %v3327
        %v3336 = vadd.f32 %v3234, %v3329
        %v3337 = vadd.f32 %v3331, %v1359
        %v3338 = vadd.f32 %v3332, %v1363
        %v3339 = vadd.f32 %v3333, %v1359
        %v3340 = vadd.f32 %v3334, %v1363
        %v3341 = vadd.f32 %v3335, %v1359
        %v3342 = vadd.f32 %v3336, %v1363
        %v3343 = vmax.f32 %v3337, 0.0
        %v3344 = vmax.f32 %v3338, 0.0
        %v3345 = vmax.f32 %v3339, 0.0
        %v3346 = vmax.f32 %v3340, 0.0
        %v3347 = vmax.f32 %v3341, 0.0
        %v3348 = vmax.f32 %v3342, 0.0
        %3349 = vmatprep.subr.mxu0 %v3344
        %3350 = vmatpush1.msra.mxu0 %v3343
        %3351 = vmatprep.subr.mxu0 %v3346
        %3352 = vmatpush1.msra.mxu0 %v3345
        %3353 = vmatprep.subr.mxu0 %v3348
        %3354 = vmatpush1.msra.mxu0 %v3347
        %3355 = vmatprep.subr.mxu0 0.0
        %3356 = vmatpush1.msra.mxu0 0.0
        %3357 = vmatprep.subr.mxu0 0.0
        %3358 = vmatpush1.msra.mxu0 0.0
        %3359 = vmatprep.subr.mxu0 0.0
        %3360 = vmatpush1.msra.mxu0 0.0
        %3361 = vmatprep.subr.mxu0 0.0
        %3362 = vmatpush1.msra.mxu0 0.0
        %3363 = vmatprep.subr.mxu0 0.0
        %3364 = vmatpush1.msra.mxu0 0.0
        %3365 = vmatprep.subr.mxu0 0.0
        %3366 = vmatpush1.msra.mxu0 0.0
        %3367 = vmatprep.subr.mxu0 0.0
        %3368 = vmatpush1.msra.mxu0 0.0
        %3369 = vmatprep.subr.mxu0 0.0
        %3370 = vmatpush1.msra.mxu0 0.0
        %3371 = vmatprep.subr.mxu0 0.0
        %3372 = vmatpush1.msra.mxu0 0.0
        %3373 = vmatprep.subr.mxu0 0.0
        %3374 = vmatpush1.msra.mxu0 0.0
        %3375 = vmatprep.subr.mxu0 0.0
        %3376 = vmatpush1.msra.mxu0 0.0
        %3377 = vmatprep.subr.mxu0 0.0
        %3378 = vmatpush1.msra.mxu0 0.0
        %3379 = vmatprep.subr.mxu0 0.0
        %3380 = vmatpush1.msra.mxu0 0.0
        %3381 = vmatprep.subr.mxu0 0.0
        %3382 = vmatpush1.msra.mxu0 0.0
        %3383 = vmatprep.subr.mxu0 0.0
        %3384 = vmatpush1.msra.mxu0 0.0
        %3385 = vmatprep.subr.mxu0 0.0
        %3386 = vmatpush1.msra.mxu0 0.0
        %3387 = vmatprep.subr.mxu0 0.0
        %3388 = vmatpush1.msra.mxu0 0.0
        %3389 = vmatprep.subr.mxu0 0.0
        %3390 = vmatpush1.msra.mxu0 0.0
        %3391 = vmatprep.subr.mxu0 0.0
        %3392 = vmatpush1.msra.mxu0 0.0
        %3393 = vmatprep.subr.mxu0 0.0
        %3394 = vmatpush1.msra.mxu0 0.0
        %3395 = vmatprep.subr.mxu0 0.0
        %3396 = vmatpush1.msra.mxu0 0.0
        %3397 = vmatprep.subr.mxu0 0.0
        %3398 = vmatpush1.msra.mxu0 0.0
        %3399 = vmatprep.subr.mxu0 0.0
        %3400 = vmatpush1.msra.mxu0 0.0
        %3401 = vmatprep.subr.mxu0 0.0
        %3402 = vmatpush1.msra.mxu0 0.0
        %3403 = vmatprep.subr.mxu0 0.0
        %3404 = vmatpush1.msra.mxu0 0.0
        %3405 = vmatprep.subr.mxu0 0.0
        %3406 = vmatpush1.msra.mxu0 0.0
        %3407 = vmatprep.subr.mxu0 0.0
        %3408 = vmatpush1.msra.mxu0 0.0
        %3409 = vmatprep.subr.mxu0 0.0
        %3410 = vmatpush1.msra.mxu0 0.0
        %3411 = vmatprep.subr.mxu0 0.0
        %3412 = vmatpush1.msra.mxu0 0.0
        %3413 = vmatprep.mubr.f32.mxu0 0.0
        %3414 = vmatmul.mubr.f32.gmra.mrb[0].mxu0 %v1380
        %v3415 = vpop.f32.mrb[0].mxu0
        %v3416 = vadd.f32 0.0, %v3415
        %v3417 = vpop.f32.mrb[0].mxu0
        %v3418 = vadd.f32 0.0, %v3417
        %3419 = vmatprep.mubr.f32.mxu0 0.0
        %3420 = vmatmul.mubr.f32.gmra.mrb[0].mxu0 %v1383
        %v3421 = vpop.f32.mrb[0].mxu0
        %v3422 = vadd.f32 0.0, %v3421
        %v3423 = vpop.f32.mrb[0].mxu0
        %v3424 = vadd.f32 0.0, %v3423
        %3425 = vdwg.mxu0
        %3426 = vmatprep.subr.mxu0 %v3344
        %3427 = vmatpush1.msra.mxu0 %v3343
        %3428 = vmatprep.subr.mxu0 %v3346
        %3429 = vmatpush1.msra.mxu0 %v3345
        %3430 = vmatprep.subr.mxu0 %v3348
        %3431 = vmatpush1.msra.mxu0 %v3347
        %3432 = vmatprep.subr.mxu0 0.0
        %3433 = vmatpush1.msra.mxu0 0.0
        %3434 = vmatprep.subr.mxu0 0.0
        %3435 = vmatpush1.msra.mxu0 0.0
        %3436 = vmatprep.subr.mxu0 0.0
        %3437 = vmatpush1.msra.mxu0 0.0
        %3438 = vmatprep.subr.mxu0 0.0
        %3439 = vmatpush1.msra.mxu0 0.0
        %3440 = vmatprep.subr.mxu0 0.0
        %3441 = vmatpush1.msra.mxu0 0.0
        %3442 = vmatprep.subr.mxu0 0.0
        %3443 = vmatpush1.msra.mxu0 0.0
        %3444 = vmatprep.subr.mxu0 0.0
        %3445 = vmatpush1.msra.mxu0 0.0
        %3446 = vmatprep.subr.mxu0 0.0
        %3447 = vmatpush1.msra.mxu0 0.0
        %3448 = vmatprep.subr.mxu0 0.0
        %3449 = vmatpush1.msra.mxu0 0.0
        %3450 = vmatprep.subr.mxu0 0.0
        %3451 = vmatpush1.msra.mxu0 0.0
        %3452 = vmatprep.subr.mxu0 0.0
        %3453 = vmatpush1.msra.mxu0 0.0
        %3454 = vmatprep.subr.mxu0 0.0
        %3455 = vmatpush1.msra.mxu0 0.0
        %3456 = vmatprep.subr.mxu0 0.0
        %3457 = vmatpush1.msra.mxu0 0.0
        %3458 = vmatprep.subr.mxu0 0.0
        %3459 = vmatpush1.msra.mxu0 0.0
        %3460 = vmatprep.subr.mxu0 0.0
        %3461 = vmatpush1.msra.mxu0 0.0
        %3462 = vmatprep.subr.mxu0 0.0
        %3463 = vmatpush1.msra.mxu0 0.0
        %3464 = vmatprep.subr.mxu0 0.0
        %3465 = vmatpush1.msra.mxu0 0.0
        %3466 = vmatprep.subr.mxu0 0.0
        %3467 = vmatpush1.msra.mxu0 0.0
        %3468 = vmatprep.subr.mxu0 0.0
        %3469 = vmatpush1.msra.mxu0 0.0
        %3470 = vmatprep.subr.mxu0 0.0
        %3471 = vmatpush1.msra.mxu0 0.0
        %3472 = vmatprep.subr.mxu0 0.0
        %3473 = vmatpush1.msra.mxu0 0.0
        %3474 = vmatprep.subr.mxu0 0.0
        %3475 = vmatpush1.msra.mxu0 0.0
        %3476 = vmatprep.subr.mxu0 0.0
        %3477 = vmatpush1.msra.mxu0 0.0
        %3478 = vmatprep.subr.mxu0 0.0
        %3479 = vmatpush1.msra.mxu0 0.0
        %3480 = vmatprep.subr.mxu0 0.0
        %3481 = vmatpush1.msra.mxu0 0.0
        %3482 = vmatprep.subr.mxu0 0.0
        %3483 = vmatpush1.msra.mxu0 0.0
        %3484 = vmatprep.subr.mxu0 0.0
        %3485 = vmatpush1.msra.mxu0 0.0
        %3486 = vmatprep.subr.mxu0 0.0
        %3487 = vmatpush1.msra.mxu0 0.0
        %3488 = vmatprep.subr.mxu0 0.0
        %3489 = vmatpush1.msra.mxu0 0.0
        %3490 = vmatprep.mubr.f32.mxu0 0.0
        %3491 = vmatmul.mubr.f32.gmra.mrb[0].mxu0 %v1463
        %v3492 = vpop.f32.mrb[0].mxu0
        %v3493 = vadd.f32 0.0, %v3492
        %v3494 = vpop.f32.mrb[0].mxu0
        %v3495 = vadd.f32 0.0, %v3494
        %3496 = vmatprep.mubr.f32.mxu0 0.0
        %3497 = vmatmul.mubr.f32.gmra.mrb[0].mxu0 %v1466
        %v3498 = vpop.f32.mrb[0].mxu0
        %v3499 = vadd.f32 0.0, %v3498
        %v3500 = vpop.f32.mrb[0].mxu0
        %v3501 = vadd.f32 0.0, %v3500
        %3502 = vdwg.mxu0
        %v3503 = vmax.f32 %v3416, %v3493
        %v3504 = vmax.f32 %v3418, %v3495
        %v3505 = vmax.f32 %v3422, %v3499
        %v3506 = vmax.f32 %v3424, %v3501
        %v3508 = vsel %vm1549, %v3504, 0
        %v3511 = vsel %vm1549, %v3506, 0
        %3513 = vmatprep.subr.mxu0 0.0
        %3514 = vmatpush1.msra.mxu0 %v733
        %3515 = vmatprep.subr.mxu0 0.0
        %3516 = vmatpush1.msra.mxu0 %v734
        %3517 = vmatprep.subr.mxu0 0.0
        %3518 = vmatpush1.msra.mxu0 %v735
        %3519 = vmatprep.subr.mxu0 0.0
        %3520 = vmatpush1.msra.mxu0 %v736
        %3521 = vmatprep.subr.mxu0 0.0
        %3522 = vmatpush1.msra.mxu0 %v737
        %3523 = vmatprep.subr.mxu0 0.0
        %3524 = vmatpush1.msra.mxu0 %v738
        %3525 = vmatprep.subr.mxu0 0.0
        %3526 = vmatpush1.msra.mxu0 %v739
        %3527 = vmatprep.subr.mxu0 0.0
        %3528 = vmatpush1.msra.mxu0 %v740
        %3529 = vmatprep.subr.mxu0 0.0
        %3530 = vmatpush1.msra.mxu0 %v741
        %3531 = vmatprep.subr.mxu0 0.0
        %3532 = vmatpush1.msra.mxu0 %v742
        %3533 = vmatprep.subr.mxu0 0.0
        %3534 = vmatpush1.msra.mxu0 %v743
        %3535 = vmatprep.subr.mxu0 0.0
        %3536 = vmatpush1.msra.mxu0 %v744
        %3537 = vmatprep.subr.mxu0 0.0
        %3538 = vmatpush1.msra.mxu0 %v745
        %3539 = vmatprep.subr.mxu0 0.0
        %3540 = vmatpush1.msra.mxu0 %v746
        %3541 = vmatprep.subr.mxu0 0.0
        %3542 = vmatpush1.msra.mxu0 %v747
        %3543 = vmatprep.subr.mxu0 0.0
        %3544 = vmatpush1.msra.mxu0 %v748
        %3545 = vmatprep.subr.mxu0 0.0
        %3546 = vmatpush1.msra.mxu0 %v749
        %3547 = vmatprep.subr.mxu0 0.0
        %3548 = vmatpush1.msra.mxu0 %v750
        %3549 = vmatprep.subr.mxu0 0.0
        %3550 = vmatpush1.msra.mxu0 0.0
        %3551 = vmatprep.subr.mxu0 0.0
        %3552 = vmatpush1.msra.mxu0 0.0
        %3553 = vmatprep.subr.mxu0 0.0
        %3554 = vmatpush1.msra.mxu0 0.0
        %3555 = vmatprep.subr.mxu0 0.0
        %3556 = vmatpush1.msra.mxu0 0.0
        %3557 = vmatprep.subr.mxu0 0.0
        %3558 = vmatpush1.msra.mxu0 0.0
        %3559 = vmatprep.subr.mxu0 0.0
        %3560 = vmatpush1.msra.mxu0 0.0
        %3561 = vmatprep.subr.mxu0 0.0
        %3562 = vmatpush1.msra.mxu0 0.0
        %3563 = vmatprep.subr.mxu0 0.0
        %3564 = vmatpush1.msra.mxu0 0.0
        %3565 = vmatprep.subr.mxu0 0.0
        %3566 = vmatpush1.msra.mxu0 0.0
        %3567 = vmatprep.subr.mxu0 0.0
        %3568 = vmatpush1.msra.mxu0 0.0
        %3569 = vmatprep.subr.mxu0 0.0
        %3570 = vmatpush1.msra.mxu0 0.0
        %3571 = vmatprep.subr.mxu0 0.0
        %3572 = vmatpush1.msra.mxu0 0.0
        %3573 = vmatprep.subr.mxu0 0.0
        %3574 = vmatpush1.msra.mxu0 0.0
        %3575 = vmatprep.subr.mxu0 0.0
        %3576 = vmatpush1.msra.mxu0 0.0
        %3577 = vmatprep.mubr.f32.mxu0 %v3508
        %3578 = vmatmul.mubr.f32.gmra.mrb[0].mxu0 %v3503
        %v3579 = vpop.f32.mrb[0].mxu0
        %v3580 = vadd.f32 0.0, %v3579
        %v3581 = vpop.f32.mrb[0].mxu0
        %3582 = vmatprep.mubr.f32.mxu0 %v3511
        %3583 = vmatmul.mubr.f32.gmra.mrb[0].mxu0 %v3505
        %v3584 = vpop.f32.mrb[0].mxu0
        %v3585 = vadd.f32 0.0, %v3584
        %v3586 = vpop.f32.mrb[0].mxu0
        %3587 = vdwg.mxu0
        %3588 = vmatprep.subr.mxu0 0.0
        %3589 = vmatpush1.msra.mxu0 %v751
        %3590 = vmatprep.subr.mxu0 0.0
        %3591 = vmatpush1.msra.mxu0 %v752
        %3592 = vmatprep.subr.mxu0 0.0
        %3593 = vmatpush1.msra.mxu0 %v753
        %3594 = vmatprep.subr.mxu0 0.0
        %3595 = vmatpush1.msra.mxu0 %v754
        %3596 = vmatprep.subr.mxu0 0.0
        %3597 = vmatpush1.msra.mxu0 %v755
        %3598 = vmatprep.subr.mxu0 0.0
        %3599 = vmatpush1.msra.mxu0 %v756
        %3600 = vmatprep.subr.mxu0 0.0
        %3601 = vmatpush1.msra.mxu0 %v757
        %3602 = vmatprep.subr.mxu0 0.0
        %3603 = vmatpush1.msra.mxu0 %v758
        %3604 = vmatprep.subr.mxu0 0.0
        %3605 = vmatpush1.msra.mxu0 %v759
        %3606 = vmatprep.subr.mxu0 0.0
        %3607 = vmatpush1.msra.mxu0 %v760
        %3608 = vmatprep.subr.mxu0 0.0
        %3609 = vmatpush1.msra.mxu0 %v761
        %3610 = vmatprep.subr.mxu0 0.0
        %3611 = vmatpush1.msra.mxu0 %v762
        %3612 = vmatprep.subr.mxu0 0.0
        %3613 = vmatpush1.msra.mxu0 %v763
        %3614 = vmatprep.subr.mxu0 0.0
        %3615 = vmatpush1.msra.mxu0 %v764
        %3616 = vmatprep.subr.mxu0 0.0
        %3617 = vmatpush1.msra.mxu0 %v765
        %3618 = vmatprep.subr.mxu0 0.0
        %3619 = vmatpush1.msra.mxu0 %v766
        %3620 = vmatprep.subr.mxu0 0.0
        %3621 = vmatpush1.msra.mxu0 %v767
        %3622 = vmatprep.subr.mxu0 0.0
        %3623 = vmatpush1.msra.mxu0 %v768
        %3624 = vmatprep.subr.mxu0 0.0
        %3625 = vmatpush1.msra.mxu0 0.0
        %3626 = vmatprep.subr.mxu0 0.0
        %3627 = vmatpush1.msra.mxu0 0.0
        %3628 = vmatprep.subr.mxu0 0.0
        %3629 = vmatpush1.msra.mxu0 0.0
        %3630 = vmatprep.subr.mxu0 0.0
        %3631 = vmatpush1.msra.mxu0 0.0
        %3632 = vmatprep.subr.mxu0 0.0
        %3633 = vmatpush1.msra.mxu0 0.0
        %3634 = vmatprep.subr.mxu0 0.0
        %3635 = vmatpush1.msra.mxu0 0.0
        %3636 = vmatprep.subr.mxu0 0.0
        %3637 = vmatpush1.msra.mxu0 0.0
        %3638 = vmatprep.subr.mxu0 0.0
        %3639 = vmatpush1.msra.mxu0 0.0
        %3640 = vmatprep.subr.mxu0 0.0
        %3641 = vmatpush1.msra.mxu0 0.0
        %3642 = vmatprep.subr.mxu0 0.0
        %3643 = vmatpush1.msra.mxu0 0.0
        %3644 = vmatprep.subr.mxu0 0.0
        %3645 = vmatpush1.msra.mxu0 0.0
        %3646 = vmatprep.subr.mxu0 0.0
        %3647 = vmatpush1.msra.mxu0 0.0
        %3648 = vmatprep.subr.mxu0 0.0
        %3649 = vmatpush1.msra.mxu0 0.0
        %3650 = vmatprep.subr.mxu0 0.0
        %3651 = vmatpush1.msra.mxu0 0.0
        %3652 = vmatprep.mubr.f32.mxu0 %v3508
        %3653 = vmatmul.mubr.f32.gmra.mrb[0].mxu0 %v3503
        %v3654 = vpop.f32.mrb[0].mxu0
        %v3655 = vadd.f32 0.0, %v3654
        %v3656 = vpop.f32.mrb[0].mxu0
        %3657 = vmatprep.mubr.f32.mxu0 %v3511
        %3658 = vmatmul.mubr.f32.gmra.mrb[0].mxu0 %v3505
        %v3659 = vpop.f32.mrb[0].mxu0
        %v3660 = vadd.f32 0.0, %v3659
        %v3661 = vpop.f32.mrb[0].mxu0
        %3662 = vdwg.mxu0
        %v3663 = vmax.f32 %v3580, %v3655
        %v3664 = vmax.f32 %v3585, %v3660
        %v3667 = vrot.slane %v3663, 1
        %v3668 = vrot.slane %v3664, 1
        %v3669 = vsel %vm829, %v3667, %v3668
        %v3670 = vsel %vm1713, %v3669, 0
        %3672 = vmatprep.subr.mxu0 0.0
        %3673 = vmatpush1.msra.mxu0 %v661
        %3674 = vmatprep.subr.mxu0 0.0
        %3675 = vmatpush1.msra.mxu0 %v662
        %3676 = vmatprep.subr.mxu0 0.0
        %3677 = vmatpush1.msra.mxu0 %v663
        %3678 = vmatprep.subr.mxu0 0.0
        %3679 = vmatpush1.msra.mxu0 %v664
        %3680 = vmatprep.subr.mxu0 0.0
        %3681 = vmatpush1.msra.mxu0 %v665
        %3682 = vmatprep.subr.mxu0 0.0
        %3683 = vmatpush1.msra.mxu0 %v666
        %3684 = vmatprep.subr.mxu0 0.0
        %3685 = vmatpush1.msra.mxu0 %v667
        %3686 = vmatprep.subr.mxu0 0.0
        %3687 = vmatpush1.msra.mxu0 %v668
        %3688 = vmatprep.subr.mxu0 0.0
        %3689 = vmatpush1.msra.mxu0 %v669
        %3690 = vmatprep.subr.mxu0 0.0
        %3691 = vmatpush1.msra.mxu0 0.0
        %3692 = vmatprep.subr.mxu0 0.0
        %3693 = vmatpush1.msra.mxu0 0.0
        %3694 = vmatprep.subr.mxu0 0.0
        %3695 = vmatpush1.msra.mxu0 0.0
        %3696 = vmatprep.subr.mxu0 0.0
        %3697 = vmatpush1.msra.mxu0 0.0
        %3698 = vmatprep.subr.mxu0 0.0
        %3699 = vmatpush1.msra.mxu0 0.0
        %3700 = vmatprep.subr.mxu0 0.0
        %3701 = vmatpush1.msra.mxu0 0.0
        %3702 = vmatprep.subr.mxu0 0.0
        %3703 = vmatpush1.msra.mxu0 0.0
        %3704 = vmatprep.subr.mxu0 0.0
        %3705 = vmatpush1.msra.mxu0 0.0
        %3706 = vmatprep.subr.mxu0 0.0
        %3707 = vmatpush1.msra.mxu0 0.0
        %3708 = vmatprep.subr.mxu0 0.0
        %3709 = vmatpush1.msra.mxu0 0.0
        %3710 = vmatprep.subr.mxu0 0.0
        %3711 = vmatpush1.msra.mxu0 0.0
        %3712 = vmatprep.subr.mxu0 0.0
        %3713 = vmatpush1.msra.mxu0 0.0
        %3714 = vmatprep.subr.mxu0 0.0
        %3715 = vmatpush1.msra.mxu0 0.0
        %3716 = vmatprep.subr.mxu0 0.0
        %3717 = vmatpush1.msra.mxu0 0.0
        %3718 = vmatprep.subr.mxu0 0.0
        %3719 = vmatpush1.msra.mxu0 0.0
        %3720 = vmatprep.subr.mxu0 0.0
        %3721 = vmatpush1.msra.mxu0 0.0
        %3722 = vmatprep.subr.mxu0 0.0
        %3723 = vmatpush1.msra.mxu0 0.0
        %3724 = vmatprep.subr.mxu0 0.0
        %3725 = vmatpush1.msra.mxu0 0.0
        %3726 = vmatprep.subr.mxu0 0.0
        %3727 = vmatpush1.msra.mxu0 0.0
        %3728 = vmatprep.subr.mxu0 0.0
        %3729 = vmatpush1.msra.mxu0 0.0
        %3730 = vmatprep.subr.mxu0 0.0
        %3731 = vmatpush1.msra.mxu0 0.0
        %3732 = vmatprep.subr.mxu0 0.0
        %3733 = vmatpush1.msra.mxu0 0.0
        %3734 = vmatprep.subr.mxu0 0.0
        %3735 = vmatpush1.msra.mxu0 0.0
        %3736 = vmatprep.mubr.f32.mxu0 0.0
        %3737 = vmatmul.mubr.f32.gmra.mrb[0].mxu0 %v3670
        %v3738 = vpop.f32.mrb[0].mxu0
        %v3739 = vadd.f32 0.0, %v3738
        %v3740 = vpop.f32.mrb[0].mxu0
        %3741 = vdwg.mxu0
        %v3742 = vsel %vm1713, %v3663, 0
        %3744 = vmatprep.subr.mxu0 0.0
        %3745 = vmatpush1.msra.mxu0 %v651
        %3746 = vmatprep.subr.mxu0 0.0
        %3747 = vmatpush1.msra.mxu0 %v652
        %3748 = vmatprep.subr.mxu0 0.0
        %3749 = vmatpush1.msra.mxu0 %v653
        %3750 = vmatprep.subr.mxu0 0.0
        %3751 = vmatpush1.msra.mxu0 %v654
        %3752 = vmatprep.subr.mxu0 0.0
        %3753 = vmatpush1.msra.mxu0 %v655
        %3754 = vmatprep.subr.mxu0 0.0
        %3755 = vmatpush1.msra.mxu0 %v656
        %3756 = vmatprep.subr.mxu0 0.0
        %3757 = vmatpush1.msra.mxu0 %v657
        %3758 = vmatprep.subr.mxu0 0.0
        %3759 = vmatpush1.msra.mxu0 %v658
        %3760 = vmatprep.subr.mxu0 0.0
        %3761 = vmatpush1.msra.mxu0 %v659
        %3762 = vmatprep.subr.mxu0 0.0
        %3763 = vmatpush1.msra.mxu0 0.0
        %3764 = vmatprep.subr.mxu0 0.0
        %3765 = vmatpush1.msra.mxu0 0.0
        %3766 = vmatprep.subr.mxu0 0.0
        %3767 = vmatpush1.msra.mxu0 0.0
        %3768 = vmatprep.subr.mxu0 0.0
        %3769 = vmatpush1.msra.mxu0 0.0
        %3770 = vmatprep.subr.mxu0 0.0
        %3771 = vmatpush1.msra.mxu0 0.0
        %3772 = vmatprep.subr.mxu0 0.0
        %3773 = vmatpush1.msra.mxu0 0.0
        %3774 = vmatprep.subr.mxu0 0.0
        %3775 = vmatpush1.msra.mxu0 0.0
        %3776 = vmatprep.subr.mxu0 0.0
        %3777 = vmatpush1.msra.mxu0 0.0
        %3778 = vmatprep.subr.mxu0 0.0
        %3779 = vmatpush1.msra.mxu0 0.0
        %3780 = vmatprep.subr.mxu0 0.0
        %3781 = vmatpush1.msra.mxu0 0.0
        %3782 = vmatprep.subr.mxu0 0.0
        %3783 = vmatpush1.msra.mxu0 0.0
        %3784 = vmatprep.subr.mxu0 0.0
        %3785 = vmatpush1.msra.mxu0 0.0
        %3786 = vmatprep.subr.mxu0 0.0
        %3787 = vmatpush1.msra.mxu0 0.0
        %3788 = vmatprep.subr.mxu0 0.0
        %3789 = vmatpush1.msra.mxu0 0.0
        %3790 = vmatprep.subr.mxu0 0.0
        %3791 = vmatpush1.msra.mxu0 0.0
        %3792 = vmatprep.subr.mxu0 0.0
        %3793 = vmatpush1.msra.mxu0 0.0
        %3794 = vmatprep.subr.mxu0 0.0
        %3795 = vmatpush1.msra.mxu0 0.0
        %3796 = vmatprep.subr.mxu0 0.0
        %3797 = vmatpush1.msra.mxu0 0.0
        %3798 = vmatprep.subr.mxu0 0.0
        %3799 = vmatpush1.msra.mxu0 0.0
        %3800 = vmatprep.subr.mxu0 0.0
        %3801 = vmatpush1.msra.mxu0 0.0
        %3802 = vmatprep.subr.mxu0 0.0
        %3803 = vmatpush1.msra.mxu0 0.0
        %3804 = vmatprep.subr.mxu0 0.0
        %3805 = vmatpush1.msra.mxu0 0.0
        %3806 = vmatprep.subr.mxu0 0.0
        %3807 = vmatpush1.msra.mxu0 0.0
        %3808 = vmatprep.mubr.f32.mxu0 0.0
        %3809 = vmatmul.mubr.f32.gmra.mrb[0].mxu0 %v3742
        %v3810 = vpop.f32.mrb[0].mxu0
        %v3811 = vadd.f32 %v3739, %v3810
        %v3812 = vpop.f32.mrb[0].mxu0
        %3813 = vdwg.mxu0
        %v3814 = vrot.slane %v3663, 2
        %v3815 = vrot.slane %v3664, 2
        %v3816 = vsel %vm1029, %v3814, %v3815
        %v3817 = vsel %vm1713, %v3816, 0
        %3819 = vmatprep.subr.mxu0 0.0
        %3820 = vmatpush1.msra.mxu0 %v671
        %3821 = vmatprep.subr.mxu0 0.0
        %3822 = vmatpush1.msra.mxu0 %v672
        %3823 = vmatprep.subr.mxu0 0.0
        %3824 = vmatpush1.msra.mxu0 %v673
        %3825 = vmatprep.subr.mxu0 0.0
        %3826 = vmatpush1.msra.mxu0 %v674
        %3827 = vmatprep.subr.mxu0 0.0
        %3828 = vmatpush1.msra.mxu0 %v675
        %3829 = vmatprep.subr.mxu0 0.0
        %3830 = vmatpush1.msra.mxu0 %v676
        %3831 = vmatprep.subr.mxu0 0.0
        %3832 = vmatpush1.msra.mxu0 %v677
        %3833 = vmatprep.subr.mxu0 0.0
        %3834 = vmatpush1.msra.mxu0 %v678
        %3835 = vmatprep.subr.mxu0 0.0
        %3836 = vmatpush1.msra.mxu0 %v679
        %3837 = vmatprep.subr.mxu0 0.0
        %3838 = vmatpush1.msra.mxu0 0.0
        %3839 = vmatprep.subr.mxu0 0.0
        %3840 = vmatpush1.msra.mxu0 0.0
        %3841 = vmatprep.subr.mxu0 0.0
        %3842 = vmatpush1.msra.mxu0 0.0
        %3843 = vmatprep.subr.mxu0 0.0
        %3844 = vmatpush1.msra.mxu0 0.0
        %3845 = vmatprep.subr.mxu0 0.0
        %3846 = vmatpush1.msra.mxu0 0.0
        %3847 = vmatprep.subr.mxu0 0.0
        %3848 = vmatpush1.msra.mxu0 0.0
        %3849 = vmatprep.subr.mxu0 0.0
        %3850 = vmatpush1.msra.mxu0 0.0
        %3851 = vmatprep.subr.mxu0 0.0
        %3852 = vmatpush1.msra.mxu0 0.0
        %3853 = vmatprep.subr.mxu0 0.0
        %3854 = vmatpush1.msra.mxu0 0.0
        %3855 = vmatprep.subr.mxu0 0.0
        %3856 = vmatpush1.msra.mxu0 0.0
        %3857 = vmatprep.subr.mxu0 0.0
        %3858 = vmatpush1.msra.mxu0 0.0
        %3859 = vmatprep.subr.mxu0 0.0
        %3860 = vmatpush1.msra.mxu0 0.0
        %3861 = vmatprep.subr.mxu0 0.0
        %3862 = vmatpush1.msra.mxu0 0.0
        %3863 = vmatprep.subr.mxu0 0.0
        %3864 = vmatpush1.msra.mxu0 0.0
        %3865 = vmatprep.subr.mxu0 0.0
        %3866 = vmatpush1.msra.mxu0 0.0
        %3867 = vmatprep.subr.mxu0 0.0
        %3868 = vmatpush1.msra.mxu0 0.0
        %3869 = vmatprep.subr.mxu0 0.0
        %3870 = vmatpush1.msra.mxu0 0.0
        %3871 = vmatprep.subr.mxu0 0.0
        %3872 = vmatpush1.msra.mxu0 0.0
        %3873 = vmatprep.subr.mxu0 0.0
        %3874 = vmatpush1.msra.mxu0 0.0
        %3875 = vmatprep.subr.mxu0 0.0
        %3876 = vmatpush1.msra.mxu0 0.0
        %3877 = vmatprep.subr.mxu0 0.0
        %3878 = vmatpush1.msra.mxu0 0.0
        %3879 = vmatprep.subr.mxu0 0.0
        %3880 = vmatpush1.msra.mxu0 0.0
        %3881 = vmatprep.subr.mxu0 0.0
        %3882 = vmatpush1.msra.mxu0 0.0
        %3883 = vmatprep.mubr.f32.mxu0 0.0
        %3884 = vmatmul.mubr.f32.gmra.mrb[0].mxu0 %v3817
        %v3885 = vpop.f32.mrb[0].mxu0
        %v3886 = vadd.f32 0.0, %v3885
        %v3887 = vpop.f32.mrb[0].mxu0
        %3888 = vdwg.mxu0
        %v3889 = vadd.f32 %v3811, %v3886
        %v3890 = vrot.slane %v3663, 3
        %v3891 = vrot.slane %v3664, 3
        %v3892 = vsel %vm1138, %v3890, %v3891
        %v3893 = vsel %vm1713, %v3892, 0
        %3895 = vmatprep.subr.mxu0 0.0
        %3896 = vmatpush1.msra.mxu0 %v681
        %3897 = vmatprep.subr.mxu0 0.0
        %3898 = vmatpush1.msra.mxu0 %v682
        %3899 = vmatprep.subr.mxu0 0.0
        %3900 = vmatpush1.msra.mxu0 %v683
        %3901 = vmatprep.subr.mxu0 0.0
        %3902 = vmatpush1.msra.mxu0 %v684
        %3903 = vmatprep.subr.mxu0 0.0
        %3904 = vmatpush1.msra.mxu0 %v685
        %3905 = vmatprep.subr.mxu0 0.0
        %3906 = vmatpush1.msra.mxu0 %v686
        %3907 = vmatprep.subr.mxu0 0.0
        %3908 = vmatpush1.msra.mxu0 %v687
        %3909 = vmatprep.subr.mxu0 0.0
        %3910 = vmatpush1.msra.mxu0 %v688
        %3911 = vmatprep.subr.mxu0 0.0
        %3912 = vmatpush1.msra.mxu0 %v689
        %3913 = vmatprep.subr.mxu0 0.0
        %3914 = vmatpush1.msra.mxu0 0.0
        %3915 = vmatprep.subr.mxu0 0.0
        %3916 = vmatpush1.msra.mxu0 0.0
        %3917 = vmatprep.subr.mxu0 0.0
        %3918 = vmatpush1.msra.mxu0 0.0
        %3919 = vmatprep.subr.mxu0 0.0
        %3920 = vmatpush1.msra.mxu0 0.0
        %3921 = vmatprep.subr.mxu0 0.0
        %3922 = vmatpush1.msra.mxu0 0.0
        %3923 = vmatprep.subr.mxu0 0.0
        %3924 = vmatpush1.msra.mxu0 0.0
        %3925 = vmatprep.subr.mxu0 0.0
        %3926 = vmatpush1.msra.mxu0 0.0
        %3927 = vmatprep.subr.mxu0 0.0
        %3928 = vmatpush1.msra.mxu0 0.0
        %3929 = vmatprep.subr.mxu0 0.0
        %3930 = vmatpush1.msra.mxu0 0.0
        %3931 = vmatprep.subr.mxu0 0.0
        %3932 = vmatpush1.msra.mxu0 0.0
        %3933 = vmatprep.subr.mxu0 0.0
        %3934 = vmatpush1.msra.mxu0 0.0
        %3935 = vmatprep.subr.mxu0 0.0
        %3936 = vmatpush1.msra.mxu0 0.0
        %3937 = vmatprep.subr.mxu0 0.0
        %3938 = vmatpush1.msra.mxu0 0.0
        %3939 = vmatprep.subr.mxu0 0.0
        %3940 = vmatpush1.msra.mxu0 0.0
        %3941 = vmatprep.subr.mxu0 0.0
        %3942 = vmatpush1.msra.mxu0 0.0
        %3943 = vmatprep.subr.mxu0 0.0
        %3944 = vmatpush1.msra.mxu0 0.0
        %3945 = vmatprep.subr.mxu0 0.0
        %3946 = vmatpush1.msra.mxu0 0.0
        %3947 = vmatprep.subr.mxu0 0.0
        %3948 = vmatpush1.msra.mxu0 0.0
        %3949 = vmatprep.subr.mxu0 0.0
        %3950 = vmatpush1.msra.mxu0 0.0
        %3951 = vmatprep.subr.mxu0 0.0
        %3952 = vmatpush1.msra.mxu0 0.0
        %3953 = vmatprep.subr.mxu0 0.0
        %3954 = vmatpush1.msra.mxu0 0.0
        %3955 = vmatprep.subr.mxu0 0.0
        %3956 = vmatpush1.msra.mxu0 0.0
        %3957 = vmatprep.subr.mxu0 0.0
        %3958 = vmatpush1.msra.mxu0 0.0
        %3959 = vmatprep.mubr.f32.mxu0 0.0
        %3960 = vmatmul.mubr.f32.gmra.mrb[0].mxu0 %v3893
        %v3961 = vpop.f32.mrb[0].mxu0
        %v3962 = vadd.f32 0.0, %v3961
        %v3963 = vpop.f32.mrb[0].mxu0
        %3964 = vdwg.mxu0
        %v3965 = vadd.f32 %v3889, %v3962
        %v3966 = vrot.slane %v3663, 4
        %v3967 = vrot.slane %v3664, 4
        %v3968 = vsel %vm844, %v3966, %v3967
        %v3969 = vsel %vm1713, %v3968, 0
        %3971 = vmatprep.subr.mxu0 0.0
        %3972 = vmatpush1.msra.mxu0 %v691
        %3973 = vmatprep.subr.mxu0 0.0
        %3974 = vmatpush1.msra.mxu0 %v692
        %3975 = vmatprep.subr.mxu0 0.0
        %3976 = vmatpush1.msra.mxu0 %v693
        %3977 = vmatprep.subr.mxu0 0.0
        %3978 = vmatpush1.msra.mxu0 %v694
        %3979 = vmatprep.subr.mxu0 0.0
        %3980 = vmatpush1.msra.mxu0 %v695
        %3981 = vmatprep.subr.mxu0 0.0
        %3982 = vmatpush1.msra.mxu0 %v696
        %3983 = vmatprep.subr.mxu0 0.0
        %3984 = vmatpush1.msra.mxu0 %v697
        %3985 = vmatprep.subr.mxu0 0.0
        %3986 = vmatpush1.msra.mxu0 %v698
        %3987 = vmatprep.subr.mxu0 0.0
        %3988 = vmatpush1.msra.mxu0 %v699
        %3989 = vmatprep.subr.mxu0 0.0
        %3990 = vmatpush1.msra.mxu0 0.0
        %3991 = vmatprep.subr.mxu0 0.0
        %3992 = vmatpush1.msra.mxu0 0.0
        %3993 = vmatprep.subr.mxu0 0.0
        %3994 = vmatpush1.msra.mxu0 0.0
        %3995 = vmatprep.subr.mxu0 0.0
        %3996 = vmatpush1.msra.mxu0 0.0
        %3997 = vmatprep.subr.mxu0 0.0
        %3998 = vmatpush1.msra.mxu0 0.0
        %3999 = vmatprep.subr.mxu0 0.0
        %4000 = vmatpush1.msra.mxu0 0.0
        %4001 = vmatprep.subr.mxu0 0.0
        %4002 = vmatpush1.msra.mxu0 0.0
        %4003 = vmatprep.subr.mxu0 0.0
        %4004 = vmatpush1.msra.mxu0 0.0
        %4005 = vmatprep.subr.mxu0 0.0
        %4006 = vmatpush1.msra.mxu0 0.0
        %4007 = vmatprep.subr.mxu0 0.0
        %4008 = vmatpush1.msra.mxu0 0.0
        %4009 = vmatprep.subr.mxu0 0.0
        %4010 = vmatpush1.msra.mxu0 0.0
        %4011 = vmatprep.subr.mxu0 0.0
        %4012 = vmatpush1.msra.mxu0 0.0
        %4013 = vmatprep.subr.mxu0 0.0
        %4014 = vmatpush1.msra.mxu0 0.0
        %4015 = vmatprep.subr.mxu0 0.0
        %4016 = vmatpush1.msra.mxu0 0.0
        %4017 = vmatprep.subr.mxu0 0.0
        %4018 = vmatpush1.msra.mxu0 0.0
        %4019 = vmatprep.subr.mxu0 0.0
        %4020 = vmatpush1.msra.mxu0 0.0
        %4021 = vmatprep.subr.mxu0 0.0
        %4022 = vmatpush1.msra.mxu0 0.0
        %4023 = vmatprep.subr.mxu0 0.0
        %4024 = vmatpush1.msra.mxu0 0.0
        %4025 = vmatprep.subr.mxu0 0.0
        %4026 = vmatpush1.msra.mxu0 0.0
        %4027 = vmatprep.subr.mxu0 0.0
        %4028 = vmatpush1.msra.mxu0 0.0
        %4029 = vmatprep.subr.mxu0 0.0
        %4030 = vmatpush1.msra.mxu0 0.0
        %4031 = vmatprep.subr.mxu0 0.0
        %4032 = vmatpush1.msra.mxu0 0.0
        %4033 = vmatprep.subr.mxu0 0.0
        %4034 = vmatpush1.msra.mxu0 0.0
        %4035 = vmatprep.mubr.f32.mxu0 0.0
        %4036 = vmatmul.mubr.f32.gmra.mrb[0].mxu0 %v3969
        %v4037 = vpop.f32.mrb[0].mxu0
        %v4038 = vadd.f32 0.0, %v4037
        %v4039 = vpop.f32.mrb[0].mxu0
        %4040 = vdwg.mxu0
        %v4041 = vadd.f32 %v3965, %v4038
        %v4042 = vadd.f32 %v4041, %v2090
        %v4043 = vmax.f32 %v4042, 0.0
        %4044 = vmatprep.subr.mxu0 0.0
        %4045 = vmatpush1.msra.mxu0 %v4043
        %4046 = vmatprep.subr.mxu0 0.0
        %4047 = vmatpush1.msra.mxu0 0.0
        %4048 = vmatprep.subr.mxu0 0.0
        %4049 = vmatpush1.msra.mxu0 0.0
        %4050 = vmatprep.subr.mxu0 0.0
        %4051 = vmatpush1.msra.mxu0 0.0
        %4052 = vmatprep.subr.mxu0 0.0
        %4053 = vmatpush1.msra.mxu0 0.0
        %4054 = vmatprep.subr.mxu0 0.0
        %4055 = vmatpush1.msra.mxu0 0.0
        %4056 = vmatprep.subr.mxu0 0.0
        %4057 = vmatpush1.msra.mxu0 0.0
        %4058 = vmatprep.subr.mxu0 0.0
        %4059 = vmatpush1.msra.mxu0 0.0
        %4060 = vmatprep.subr.mxu0 0.0
        %4061 = vmatpush1.msra.mxu0 0.0
        %4062 = vmatprep.subr.mxu0 0.0
        %4063 = vmatpush1.msra.mxu0 0.0
        %4064 = vmatprep.subr.mxu0 0.0
        %4065 = vmatpush1.msra.mxu0 0.0
        %4066 = vmatprep.subr.mxu0 0.0
        %4067 = vmatpush1.msra.mxu0 0.0
        %4068 = vmatprep.subr.mxu0 0.0
        %4069 = vmatpush1.msra.mxu0 0.0
        %4070 = vmatprep.subr.mxu0 0.0
        %4071 = vmatpush1.msra.mxu0 0.0
        %4072 = vmatprep.subr.mxu0 0.0
        %4073 = vmatpush1.msra.mxu0 0.0
        %4074 = vmatprep.subr.mxu0 0.0
        %4075 = vmatpush1.msra.mxu0 0.0
        %4076 = vmatprep.subr.mxu0 0.0
        %4077 = vmatpush1.msra.mxu0 0.0
        %4078 = vmatprep.subr.mxu0 0.0
        %4079 = vmatpush1.msra.mxu0 0.0
        %4080 = vmatprep.subr.mxu0 0.0
        %4081 = vmatpush1.msra.mxu0 0.0
        %4082 = vmatprep.subr.mxu0 0.0
        %4083 = vmatpush1.msra.mxu0 0.0
        %4084 = vmatprep.subr.mxu0 0.0
        %4085 = vmatpush1.msra.mxu0 0.0
        %4086 = vmatprep.subr.mxu0 0.0
        %4087 = vmatpush1.msra.mxu0 0.0
        %4088 = vmatprep.subr.mxu0 0.0
        %4089 = vmatpush1.msra.mxu0 0.0
        %4090 = vmatprep.subr.mxu0 0.0
        %4091 = vmatpush1.msra.mxu0 0.0
        %4092 = vmatprep.subr.mxu0 0.0
        %4093 = vmatpush1.msra.mxu0 0.0
        %4094 = vmatprep.subr.mxu0 0.0
        %4095 = vmatpush1.msra.mxu0 0.0
        %4096 = vmatprep.subr.mxu0 0.0
        %4097 = vmatpush1.msra.mxu0 0.0
        %4098 = vmatprep.subr.mxu0 0.0
        %4099 = vmatpush1.msra.mxu0 0.0
        %4100 = vmatprep.subr.mxu0 0.0
        %4101 = vmatpush1.msra.mxu0 0.0
        %4102 = vmatprep.subr.mxu0 0.0
        %4103 = vmatpush1.msra.mxu0 0.0
        %4104 = vmatprep.subr.mxu0 0.0
        %4105 = vmatpush1.msra.mxu0 0.0
        %4106 = vmatprep.subr.mxu0 0.0
        %4107 = vmatpush1.msra.mxu0 0.0
        %4108 = vmatprep.mubr.f32.mxu0 0.0
        %4109 = vmatmul.mubr.f32.gmra.mrb[0].mxu0 %v2096
        %v4110 = vpop.f32.mrb[0].mxu0
        %v4111 = vadd.f32 0.0, %v4110
        %v4112 = vpop.f32.mrb[0].mxu0
        %4113 = vdwg.mxu0
        %4114 = vmatprep.subr.mxu0 0.0
        %4115 = vmatpush1.msra.mxu0 %v4043
        %4116 = vmatprep.subr.mxu0 0.0
        %4117 = vmatpush1.msra.mxu0 0.0
        %4118 = vmatprep.subr.mxu0 0.0
        %4119 = vmatpush1.msra.mxu0 0.0
        %4120 = vmatprep.subr.mxu0 0.0
        %4121 = vmatpush1.msra.mxu0 0.0
        %4122 = vmatprep.subr.mxu0 0.0
        %4123 = vmatpush1.msra.mxu0 0.0
        %4124 = vmatprep.subr.mxu0 0.0
        %4125 = vmatpush1.msra.mxu0 0.0
        %4126 = vmatprep.subr.mxu0 0.0
        %4127 = vmatpush1.msra.mxu0 0.0
        %4128 = vmatprep.subr.mxu0 0.0
        %4129 = vmatpush1.msra.mxu0 0.0
        %4130 = vmatprep.subr.mxu0 0.0
        %4131 = vmatpush1.msra.mxu0 0.0
        %4132 = vmatprep.subr.mxu0 0.0
        %4133 = vmatpush1.msra.mxu0 0.0
        %4134 = vmatprep.subr.mxu0 0.0
        %4135 = vmatpush1.msra.mxu0 0.0
        %4136 = vmatprep.subr.mxu0 0.0
        %4137 = vmatpush1.msra.mxu0 0.0
        %4138 = vmatprep.subr.mxu0 0.0
        %4139 = vmatpush1.msra.mxu0 0.0
        %4140 = vmatprep.subr.mxu0 0.0
        %4141 = vmatpush1.msra.mxu0 0.0
        %4142 = vmatprep.subr.mxu0 0.0
        %4143 = vmatpush1.msra.mxu0 0.0
        %4144 = vmatprep.subr.mxu0 0.0
        %4145 = vmatpush1.msra.mxu0 0.0
        %4146 = vmatprep.subr.mxu0 0.0
        %4147 = vmatpush1.msra.mxu0 0.0
        %4148 = vmatprep.subr.mxu0 0.0
        %4149 = vmatpush1.msra.mxu0 0.0
        %4150 = vmatprep.subr.mxu0 0.0
        %4151 = vmatpush1.msra.mxu0 0.0
        %4152 = vmatprep.subr.mxu0 0.0
        %4153 = vmatpush1.msra.mxu0 0.0
        %4154 = vmatprep.subr.mxu0 0.0
        %4155 = vmatpush1.msra.mxu0 0.0
        %4156 = vmatprep.subr.mxu0 0.0
        %4157 = vmatpush1.msra.mxu0 0.0
        %4158 = vmatprep.subr.mxu0 0.0
        %4159 = vmatpush1.msra.mxu0 0.0
        %4160 = vmatprep.subr.mxu0 0.0
        %4161 = vmatpush1.msra.mxu0 0.0
        %4162 = vmatprep.subr.mxu0 0.0
        %4163 = vmatpush1.msra.mxu0 0.0
        %4164 = vmatprep.subr.mxu0 0.0
        %4165 = vmatpush1.msra.mxu0 0.0
        %4166 = vmatprep.subr.mxu0 0.0
        %4167 = vmatpush1.msra.mxu0 0.0
        %4168 = vmatprep.subr.mxu0 0.0
        %4169 = vmatpush1.msra.mxu0 0.0
        %4170 = vmatprep.subr.mxu0 0.0
        %4171 = vmatpush1.msra.mxu0 0.0
        %4172 = vmatprep.subr.mxu0 0.0
        %4173 = vmatpush1.msra.mxu0 0.0
        %4174 = vmatprep.subr.mxu0 0.0
        %4175 = vmatpush1.msra.mxu0 0.0
        %4176 = vmatprep.subr.mxu0 0.0
        %4177 = vmatpush1.msra.mxu0 0.0
        %4178 = vmatprep.mubr.f32.mxu0 0.0
        %4179 = vmatmul.mubr.f32.gmra.mrb[0].mxu0 %v2169
        %v4180 = vpop.f32.mrb[0].mxu0
        %v4181 = vadd.f32 0.0, %v4180
        %v4182 = vpop.f32.mrb[0].mxu0
        %4183 = vdwg.mxu0
        %v4184 = vmax.f32 %v4111, %v4181
        %v4186 = vsel %vm2242, %v4184, 0
        %4188 = vmatprep.subr.mxu0 0.0
        %4189 = vmatpush1.msra.mxu0 %v771
        %4190 = vmatprep.subr.mxu0 0.0
        %4191 = vmatpush1.msra.mxu0 %v772
        %4192 = vmatprep.subr.mxu0 0.0
        %4193 = vmatpush1.msra.mxu0 %v773
        %4194 = vmatprep.subr.mxu0 0.0
        %4195 = vmatpush1.msra.mxu0 %v774
        %4196 = vmatprep.subr.mxu0 0.0
        %4197 = vmatpush1.msra.mxu0 %v775
        %4198 = vmatprep.subr.mxu0 0.0
        %4199 = vmatpush1.msra.mxu0 %v776
        %4200 = vmatprep.subr.mxu0 0.0
        %4201 = vmatpush1.msra.mxu0 %v777
        %4202 = vmatprep.subr.mxu0 0.0
        %4203 = vmatpush1.msra.mxu0 %v778
        %4204 = vmatprep.subr.mxu0 0.0
        %4205 = vmatpush1.msra.mxu0 %v779
        %4206 = vmatprep.subr.mxu0 0.0
        %4207 = vmatpush1.msra.mxu0 %v780
        %4208 = vmatprep.subr.mxu0 0.0
        %4209 = vmatpush1.msra.mxu0 %v781
        %4210 = vmatprep.subr.mxu0 0.0
        %4211 = vmatpush1.msra.mxu0 %v782
        %4212 = vmatprep.subr.mxu0 0.0
        %4213 = vmatpush1.msra.mxu0 0.0
        %4214 = vmatprep.subr.mxu0 0.0
        %4215 = vmatpush1.msra.mxu0 0.0
        %4216 = vmatprep.subr.mxu0 0.0
        %4217 = vmatpush1.msra.mxu0 0.0
        %4218 = vmatprep.subr.mxu0 0.0
        %4219 = vmatpush1.msra.mxu0 0.0
        %4220 = vmatprep.subr.mxu0 0.0
        %4221 = vmatpush1.msra.mxu0 0.0
        %4222 = vmatprep.subr.mxu0 0.0
        %4223 = vmatpush1.msra.mxu0 0.0
        %4224 = vmatprep.subr.mxu0 0.0
        %4225 = vmatpush1.msra.mxu0 0.0
        %4226 = vmatprep.subr.mxu0 0.0
        %4227 = vmatpush1.msra.mxu0 0.0
        %4228 = vmatprep.subr.mxu0 0.0
        %4229 = vmatpush1.msra.mxu0 0.0
        %4230 = vmatprep.subr.mxu0 0.0
        %4231 = vmatpush1.msra.mxu0 0.0
        %4232 = vmatprep.subr.mxu0 0.0
        %4233 = vmatpush1.msra.mxu0 0.0
        %4234 = vmatprep.subr.mxu0 0.0
        %4235 = vmatpush1.msra.mxu0 0.0
        %4236 = vmatprep.subr.mxu0 0.0
        %4237 = vmatpush1.msra.mxu0 0.0
        %4238 = vmatprep.subr.mxu0 0.0
        %4239 = vmatpush1.msra.mxu0 0.0
        %4240 = vmatprep.subr.mxu0 0.0
        %4241 = vmatpush1.msra.mxu0 0.0
        %4242 = vmatprep.subr.mxu0 0.0
        %4243 = vmatpush1.msra.mxu0 0.0
        %4244 = vmatprep.subr.mxu0 0.0
        %4245 = vmatpush1.msra.mxu0 0.0
        %4246 = vmatprep.subr.mxu0 0.0
        %4247 = vmatpush1.msra.mxu0 0.0
        %4248 = vmatprep.subr.mxu0 0.0
        %4249 = vmatpush1.msra.mxu0 0.0
        %4250 = vmatprep.subr.mxu0 0.0
        %4251 = vmatpush1.msra.mxu0 0.0
        %4252 = vmatprep.mubr.f32.mxu0 0.0
        %4253 = vmatmul.mubr.f32.gmra.mrb[0].mxu0 %v4186
        %v4254 = vpop.f32.mrb[0].mxu0
        %v4255 = vadd.f32 0.0, %v4254
        %v4256 = vpop.f32.mrb[0].mxu0
        %4257 = vdwg.mxu0
        %4258 = vmatprep.subr.mxu0 0.0
        %4259 = vmatpush1.msra.mxu0 %v783
        %4260 = vmatprep.subr.mxu0 0.0
        %4261 = vmatpush1.msra.mxu0 %v784
        %4262 = vmatprep.subr.mxu0 0.0
        %4263 = vmatpush1.msra.mxu0 %v785
        %4264 = vmatprep.subr.mxu0 0.0
        %4265 = vmatpush1.msra.mxu0 %v786
        %4266 = vmatprep.subr.mxu0 0.0
        %4267 = vmatpush1.msra.mxu0 %v787
        %4268 = vmatprep.subr.mxu0 0.0
        %4269 = vmatpush1.msra.mxu0 %v788
        %4270 = vmatprep.subr.mxu0 0.0
        %4271 = vmatpush1.msra.mxu0 %v789
        %4272 = vmatprep.subr.mxu0 0.0
        %4273 = vmatpush1.msra.mxu0 %v790
        %4274 = vmatprep.subr.mxu0 0.0
        %4275 = vmatpush1.msra.mxu0 %v791
        %4276 = vmatprep.subr.mxu0 0.0
        %4277 = vmatpush1.msra.mxu0 %v792
        %4278 = vmatprep.subr.mxu0 0.0
        %4279 = vmatpush1.msra.mxu0 %v793
        %4280 = vmatprep.subr.mxu0 0.0
        %4281 = vmatpush1.msra.mxu0 %v794
        %4282 = vmatprep.subr.mxu0 0.0
        %4283 = vmatpush1.msra.mxu0 0.0
        %4284 = vmatprep.subr.mxu0 0.0
        %4285 = vmatpush1.msra.mxu0 0.0
        %4286 = vmatprep.subr.mxu0 0.0
        %4287 = vmatpush1.msra.mxu0 0.0
        %4288 = vmatprep.subr.mxu0 0.0
        %4289 = vmatpush1.msra.mxu0 0.0
        %4290 = vmatprep.subr.mxu0 0.0
        %4291 = vmatpush1.msra.mxu0 0.0
        %4292 = vmatprep.subr.mxu0 0.0
        %4293 = vmatpush1.msra.mxu0 0.0
        %4294 = vmatprep.subr.mxu0 0.0
        %4295 = vmatpush1.msra.mxu0 0.0
        %4296 = vmatprep.subr.mxu0 0.0
        %4297 = vmatpush1.msra.mxu0 0.0
        %4298 = vmatprep.subr.mxu0 0.0
        %4299 = vmatpush1.msra.mxu0 0.0
        %4300 = vmatprep.subr.mxu0 0.0
        %4301 = vmatpush1.msra.mxu0 0.0
        %4302 = vmatprep.subr.mxu0 0.0
        %4303 = vmatpush1.msra.mxu0 0.0
        %4304 = vmatprep.subr.mxu0 0.0
        %4305 = vmatpush1.msra.mxu0 0.0
        %4306 = vmatprep.subr.mxu0 0.0
        %4307 = vmatpush1.msra.mxu0 0.0
        %4308 = vmatprep.subr.mxu0 0.0
        %4309 = vmatpush1.msra.mxu0 0.0
        %4310 = vmatprep.subr.mxu0 0.0
        %4311 = vmatpush1.msra.mxu0 0.0
        %4312 = vmatprep.subr.mxu0 0.0
        %4313 = vmatpush1.msra.mxu0 0.0
        %4314 = vmatprep.subr.mxu0 0.0
        %4315 = vmatpush1.msra.mxu0 0.0
        %4316 = vmatprep.subr.mxu0 0.0
        %4317 = vmatpush1.msra.mxu0 0.0
        %4318 = vmatprep.subr.mxu0 0.0
        %4319 = vmatpush1.msra.mxu0 0.0
        %4320 = vmatprep.subr.mxu0 0.0
        %4321 = vmatpush1.msra.mxu0 0.0
        %4322 = vmatprep.mubr.f32.mxu0 0.0
        %4323 = vmatmul.mubr.f32.gmra.mrb[0].mxu0 %v4186
        %v4324 = vpop.f32.mrb[0].mxu0
        %v4325 = vadd.f32 0.0, %v4324
        %v4326 = vpop.f32.mrb[0].mxu0
        %4327 = vdwg.mxu0
        %v4328 = vmax.f32 %v4255, %v4325
        %v4330 = vrot.slane %v4328, 1
        %v4331 = vsel %vm2389, %v4330, 0
        %4333 = vmatprep.subr.mxu0 0.0
        %4334 = vmatpush1.msra.mxu0 %v707
        %4335 = vmatprep.subr.mxu0 0.0
        %4336 = vmatpush1.msra.mxu0 %v708
        %4337 = vmatprep.subr.mxu0 0.0
        %4338 = vmatpush1.msra.mxu0 %v709
        %4339 = vmatprep.subr.mxu0 0.0
        %4340 = vmatpush1.msra.mxu0 %v710
        %4341 = vmatprep.subr.mxu0 0.0
        %4342 = vmatpush1.msra.mxu0 %v711
        %4343 = vmatprep.subr.mxu0 0.0
        %4344 = vmatpush1.msra.mxu0 %v712
        %4345 = vmatprep.subr.mxu0 0.0
        %4346 = vmatpush1.msra.mxu0 0.0
        %4347 = vmatprep.subr.mxu0 0.0
        %4348 = vmatpush1.msra.mxu0 0.0
        %4349 = vmatprep.subr.mxu0 0.0
        %4350 = vmatpush1.msra.mxu0 0.0
        %4351 = vmatprep.subr.mxu0 0.0
        %4352 = vmatpush1.msra.mxu0 0.0
        %4353 = vmatprep.subr.mxu0 0.0
        %4354 = vmatpush1.msra.mxu0 0.0
        %4355 = vmatprep.subr.mxu0 0.0
        %4356 = vmatpush1.msra.mxu0 0.0
        %4357 = vmatprep.subr.mxu0 0.0
        %4358 = vmatpush1.msra.mxu0 0.0
        %4359 = vmatprep.subr.mxu0 0.0
        %4360 = vmatpush1.msra.mxu0 0.0
        %4361 = vmatprep.subr.mxu0 0.0
        %4362 = vmatpush1.msra.mxu0 0.0
        %4363 = vmatprep.subr.mxu0 0.0
        %4364 = vmatpush1.msra.mxu0 0.0
        %4365 = vmatprep.subr.mxu0 0.0
        %4366 = vmatpush1.msra.mxu0 0.0
        %4367 = vmatprep.subr.mxu0 0.0
        %4368 = vmatpush1.msra.mxu0 0.0
        %4369 = vmatprep.subr.mxu0 0.0
        %4370 = vmatpush1.msra.mxu0 0.0
        %4371 = vmatprep.subr.mxu0 0.0
        %4372 = vmatpush1.msra.mxu0 0.0
        %4373 = vmatprep.subr.mxu0 0.0
        %4374 = vmatpush1.msra.mxu0 0.0
        %4375 = vmatprep.subr.mxu0 0.0
        %4376 = vmatpush1.msra.mxu0 0.0
        %4377 = vmatprep.subr.mxu0 0.0
        %4378 = vmatpush1.msra.mxu0 0.0
        %4379 = vmatprep.subr.mxu0 0.0
        %4380 = vmatpush1.msra.mxu0 0.0
        %4381 = vmatprep.subr.mxu0 0.0
        %4382 = vmatpush1.msra.mxu0 0.0
        %4383 = vmatprep.subr.mxu0 0.0
        %4384 = vmatpush1.msra.mxu0 0.0
        %4385 = vmatprep.subr.mxu0 0.0
        %4386 = vmatpush1.msra.mxu0 0.0
        %4387 = vmatprep.subr.mxu0 0.0
        %4388 = vmatpush1.msra.mxu0 0.0
        %4389 = vmatprep.subr.mxu0 0.0
        %4390 = vmatpush1.msra.mxu0 0.0
        %4391 = vmatprep.subr.mxu0 0.0
        %4392 = vmatpush1.msra.mxu0 0.0
        %4393 = vmatprep.subr.mxu0 0.0
        %4394 = vmatpush1.msra.mxu0 0.0
        %4395 = vmatprep.subr.mxu0 0.0
        %4396 = vmatpush1.msra.mxu0 0.0
        %4397 = vmatprep.mubr.f32.mxu0 0.0
        %4398 = vmatmul.mubr.f32.gmra.mrb[0].mxu0 %v4331
        %v4399 = vpop.f32.mrb[0].mxu0
        %v4400 = vadd.f32 0.0, %v4399
        %v4401 = vpop.f32.mrb[0].mxu0
        %4402 = vdwg.mxu0
        %v4403 = vsel %vm2389, %v4328, 0
        %4405 = vmatprep.subr.mxu0 0.0
        %4406 = vmatpush1.msra.mxu0 %v700
        %4407 = vmatprep.subr.mxu0 0.0
        %4408 = vmatpush1.msra.mxu0 %v701
        %4409 = vmatprep.subr.mxu0 0.0
        %4410 = vmatpush1.msra.mxu0 %v702
        %4411 = vmatprep.subr.mxu0 0.0
        %4412 = vmatpush1.msra.mxu0 %v703
        %4413 = vmatprep.subr.mxu0 0.0
        %4414 = vmatpush1.msra.mxu0 %v704
        %4415 = vmatprep.subr.mxu0 0.0
        %4416 = vmatpush1.msra.mxu0 %v705
        %4417 = vmatprep.subr.mxu0 0.0
        %4418 = vmatpush1.msra.mxu0 0.0
        %4419 = vmatprep.subr.mxu0 0.0
        %4420 = vmatpush1.msra.mxu0 0.0
        %4421 = vmatprep.subr.mxu0 0.0
        %4422 = vmatpush1.msra.mxu0 0.0
        %4423 = vmatprep.subr.mxu0 0.0
        %4424 = vmatpush1.msra.mxu0 0.0
        %4425 = vmatprep.subr.mxu0 0.0
        %4426 = vmatpush1.msra.mxu0 0.0
        %4427 = vmatprep.subr.mxu0 0.0
        %4428 = vmatpush1.msra.mxu0 0.0
        %4429 = vmatprep.subr.mxu0 0.0
        %4430 = vmatpush1.msra.mxu0 0.0
        %4431 = vmatprep.subr.mxu0 0.0
        %4432 = vmatpush1.msra.mxu0 0.0
        %4433 = vmatprep.subr.mxu0 0.0
        %4434 = vmatpush1.msra.mxu0 0.0
        %4435 = vmatprep.subr.mxu0 0.0
        %4436 = vmatpush1.msra.mxu0 0.0
        %4437 = vmatprep.subr.mxu0 0.0
        %4438 = vmatpush1.msra.mxu0 0.0
        %4439 = vmatprep.subr.mxu0 0.0
        %4440 = vmatpush1.msra.mxu0 0.0
        %4441 = vmatprep.subr.mxu0 0.0
        %4442 = vmatpush1.msra.mxu0 0.0
        %4443 = vmatprep.subr.mxu0 0.0
        %4444 = vmatpush1.msra.mxu0 0.0
        %4445 = vmatprep.subr.mxu0 0.0
        %4446 = vmatpush1.msra.mxu0 0.0
        %4447 = vmatprep.subr.mxu0 0.0
        %4448 = vmatpush1.msra.mxu0 0.0
        %4449 = vmatprep.subr.mxu0 0.0
        %4450 = vmatpush1.msra.mxu0 0.0
        %4451 = vmatprep.subr.mxu0 0.0
        %4452 = vmatpush1.msra.mxu0 0.0
        %4453 = vmatprep.subr.mxu0 0.0
        %4454 = vmatpush1.msra.mxu0 0.0
        %4455 = vmatprep.subr.mxu0 0.0
        %4456 = vmatpush1.msra.mxu0 0.0
        %4457 = vmatprep.subr.mxu0 0.0
        %4458 = vmatpush1.msra.mxu0 0.0
        %4459 = vmatprep.subr.mxu0 0.0
        %4460 = vmatpush1.msra.mxu0 0.0
        %4461 = vmatprep.subr.mxu0 0.0
        %4462 = vmatpush1.msra.mxu0 0.0
        %4463 = vmatprep.subr.mxu0 0.0
        %4464 = vmatpush1.msra.mxu0 0.0
        %4465 = vmatprep.subr.mxu0 0.0
        %4466 = vmatpush1.msra.mxu0 0.0
        %4467 = vmatprep.subr.mxu0 0.0
        %4468 = vmatpush1.msra.mxu0 0.0
        %4469 = vmatprep.mubr.f32.mxu0 0.0
        %4470 = vmatmul.mubr.f32.gmra.mrb[0].mxu0 %v4403
        %v4471 = vpop.f32.mrb[0].mxu0
        %v4472 = vadd.f32 %v4400, %v4471
        %v4473 = vpop.f32.mrb[0].mxu0
        %4474 = vdwg.mxu0
        %v4475 = vrot.slane %v4328, 2
        %v4476 = vsel %vm2389, %v4475, 0
        %4478 = vmatprep.subr.mxu0 0.0
        %4479 = vmatpush1.msra.mxu0 %v714
        %4480 = vmatprep.subr.mxu0 0.0
        %4481 = vmatpush1.msra.mxu0 %v715
        %4482 = vmatprep.subr.mxu0 0.0
        %4483 = vmatpush1.msra.mxu0 %v716
        %4484 = vmatprep.subr.mxu0 0.0
        %4485 = vmatpush1.msra.mxu0 %v717
        %4486 = vmatprep.subr.mxu0 0.0
        %4487 = vmatpush1.msra.mxu0 %v718
        %4488 = vmatprep.subr.mxu0 0.0
        %4489 = vmatpush1.msra.mxu0 %v719
        %4490 = vmatprep.subr.mxu0 0.0
        %4491 = vmatpush1.msra.mxu0 0.0
        %4492 = vmatprep.subr.mxu0 0.0
        %4493 = vmatpush1.msra.mxu0 0.0
        %4494 = vmatprep.subr.mxu0 0.0
        %4495 = vmatpush1.msra.mxu0 0.0
        %4496 = vmatprep.subr.mxu0 0.0
        %4497 = vmatpush1.msra.mxu0 0.0
        %4498 = vmatprep.subr.mxu0 0.0
        %4499 = vmatpush1.msra.mxu0 0.0
        %4500 = vmatprep.subr.mxu0 0.0
        %4501 = vmatpush1.msra.mxu0 0.0
        %4502 = vmatprep.subr.mxu0 0.0
        %4503 = vmatpush1.msra.mxu0 0.0
        %4504 = vmatprep.subr.mxu0 0.0
        %4505 = vmatpush1.msra.mxu0 0.0
        %4506 = vmatprep.subr.mxu0 0.0
        %4507 = vmatpush1.msra.mxu0 0.0
        %4508 = vmatprep.subr.mxu0 0.0
        %4509 = vmatpush1.msra.mxu0 0.0
        %4510 = vmatprep.subr.mxu0 0.0
        %4511 = vmatpush1.msra.mxu0 0.0
        %4512 = vmatprep.subr.mxu0 0.0
        %4513 = vmatpush1.msra.mxu0 0.0
        %4514 = vmatprep.subr.mxu0 0.0
        %4515 = vmatpush1.msra.mxu0 0.0
        %4516 = vmatprep.subr.mxu0 0.0
        %4517 = vmatpush1.msra.mxu0 0.0
        %4518 = vmatprep.subr.mxu0 0.0
        %4519 = vmatpush1.msra.mxu0 0.0
        %4520 = vmatprep.subr.mxu0 0.0
        %4521 = vmatpush1.msra.mxu0 0.0
        %4522 = vmatprep.subr.mxu0 0.0
        %4523 = vmatpush1.msra.mxu0 0.0
        %4524 = vmatprep.subr.mxu0 0.0
        %4525 = vmatpush1.msra.mxu0 0.0
        %4526 = vmatprep.subr.mxu0 0.0
        %4527 = vmatpush1.msra.mxu0 0.0
        %4528 = vmatprep.subr.mxu0 0.0
        %4529 = vmatpush1.msra.mxu0 0.0
        %4530 = vmatprep.subr.mxu0 0.0
        %4531 = vmatpush1.msra.mxu0 0.0
        %4532 = vmatprep.subr.mxu0 0.0
        %4533 = vmatpush1.msra.mxu0 0.0
        %4534 = vmatprep.subr.mxu0 0.0
        %4535 = vmatpush1.msra.mxu0 0.0
        %4536 = vmatprep.subr.mxu0 0.0
        %4537 = vmatpush1.msra.mxu0 0.0
        %4538 = vmatprep.subr.mxu0 0.0
        %4539 = vmatpush1.msra.mxu0 0.0
        %4540 = vmatprep.subr.mxu0 0.0
        %4541 = vmatpush1.msra.mxu0 0.0
        %4542 = vmatprep.mubr.f32.mxu0 0.0
        %4543 = vmatmul.mubr.f32.gmra.mrb[0].mxu0 %v4476
        %v4544 = vpop.f32.mrb[0].mxu0
        %v4545 = vadd.f32 0.0, %v4544
        %v4546 = vpop.f32.mrb[0].mxu0
        %4547 = vdwg.mxu0
        %v4548 = vadd.f32 %v4472, %v4545
        %v4549 = vrot.slane %v4328, 3
        %v4550 = vsel %vm2389, %v4549, 0
        %4552 = vmatprep.subr.mxu0 0.0
        %4553 = vmatpush1.msra.mxu0 %v721
        %4554 = vmatprep.subr.mxu0 0.0
        %4555 = vmatpush1.msra.mxu0 %v722
        %4556 = vmatprep.subr.mxu0 0.0
        %4557 = vmatpush1.msra.mxu0 %v723
        %4558 = vmatprep.subr.mxu0 0.0
        %4559 = vmatpush1.msra.mxu0 %v724
        %4560 = vmatprep.subr.mxu0 0.0
        %4561 = vmatpush1.msra.mxu0 %v725
        %4562 = vmatprep.subr.mxu0 0.0
        %4563 = vmatpush1.msra.mxu0 %v726
        %4564 = vmatprep.subr.mxu0 0.0
        %4565 = vmatpush1.msra.mxu0 0.0
        %4566 = vmatprep.subr.mxu0 0.0
        %4567 = vmatpush1.msra.mxu0 0.0
        %4568 = vmatprep.subr.mxu0 0.0
        %4569 = vmatpush1.msra.mxu0 0.0
        %4570 = vmatprep.subr.mxu0 0.0
        %4571 = vmatpush1.msra.mxu0 0.0
        %4572 = vmatprep.subr.mxu0 0.0
        %4573 = vmatpush1.msra.mxu0 0.0
        %4574 = vmatprep.subr.mxu0 0.0
        %4575 = vmatpush1.msra.mxu0 0.0
        %4576 = vmatprep.subr.mxu0 0.0
        %4577 = vmatpush1.msra.mxu0 0.0
        %4578 = vmatprep.subr.mxu0 0.0
        %4579 = vmatpush1.msra.mxu0 0.0
        %4580 = vmatprep.subr.mxu0 0.0
        %4581 = vmatpush1.msra.mxu0 0.0
        %4582 = vmatprep.subr.mxu0 0.0
        %4583 = vmatpush1.msra.mxu0 0.0
        %4584 = vmatprep.subr.mxu0 0.0
        %4585 = vmatpush1.msra.mxu0 0.0
        %4586 = vmatprep.subr.mxu0 0.0
        %4587 = vmatpush1.msra.mxu0 0.0
        %4588 = vmatprep.subr.mxu0 0.0
        %4589 = vmatpush1.msra.mxu0 0.0
        %4590 = vmatprep.subr.mxu0 0.0
        %4591 = vmatpush1.msra.mxu0 0.0
        %4592 = vmatprep.subr.mxu0 0.0
        %4593 = vmatpush1.msra.mxu0 0.0
        %4594 = vmatprep.subr.mxu0 0.0
        %4595 = vmatpush1.msra.mxu0 0.0
        %4596 = vmatprep.subr.mxu0 0.0
        %4597 = vmatpush1.msra.mxu0 0.0
        %4598 = vmatprep.subr.mxu0 0.0
        %4599 = vmatpush1.msra.mxu0 0.0
        %4600 = vmatprep.subr.mxu0 0.0
        %4601 = vmatpush1.msra.mxu0 0.0
        %4602 = vmatprep.subr.mxu0 0.0
        %4603 = vmatpush1.msra.mxu0 0.0
        %4604 = vmatprep.subr.mxu0 0.0
        %4605 = vmatpush1.msra.mxu0 0.0
        %4606 = vmatprep.subr.mxu0 0.0
        %4607 = vmatpush1.msra.mxu0 0.0
        %4608 = vmatprep.subr.mxu0 0.0
        %4609 = vmatpush1.msra.mxu0 0.0
        %4610 = vmatprep.subr.mxu0 0.0
        %4611 = vmatpush1.msra.mxu0 0.0
        %4612 = vmatprep.subr.mxu0 0.0
        %4613 = vmatpush1.msra.mxu0 0.0
        %4614 = vmatprep.subr.mxu0 0.0
        %4615 = vmatpush1.msra.mxu0 0.0
        %4616 = vmatprep.mubr.f32.mxu0 0.0
        %4617 = vmatmul.mubr.f32.gmra.mrb[0].mxu0 %v4550
        %v4618 = vpop.f32.mrb[0].mxu0
        %v4619 = vadd.f32 0.0, %v4618
        %v4620 = vpop.f32.mrb[0].mxu0
        %4621 = vdwg.mxu0
        %v4622 = vadd.f32 %v4548, %v4619
        %v4623 = vadd.f32 %v4622, %v795
        %v4624 = vmax.f32 %v4623, 0.0
        %v4626 = vsel %vm2684, %v4624, 0
        %4628 = vmatprep.subr.mxu0 0.0
        %4629 = vmatpush1.msra.mxu0 %v796
        %4630 = vmatprep.subr.mxu0 0.0
        %4631 = vmatpush1.msra.mxu0 %v797
        %4632 = vmatprep.subr.mxu0 0.0
        %4633 = vmatpush1.msra.mxu0 %v798
        %4634 = vmatprep.subr.mxu0 0.0
        %4635 = vmatpush1.msra.mxu0 %v799
        %4636 = vmatprep.subr.mxu0 0.0
        %4637 = vmatpush1.msra.mxu0 %v800
        %4638 = vmatprep.subr.mxu0 0.0
        %4639 = vmatpush1.msra.mxu0 %v801
        %4640 = vmatprep.subr.mxu0 0.0
        %4641 = vmatpush1.msra.mxu0 %v802
        %4642 = vmatprep.subr.mxu0 0.0
        %4643 = vmatpush1.msra.mxu0 %v803
        %4644 = vmatprep.subr.mxu0 0.0
        %4645 = vmatpush1.msra.mxu0 %v804
        %4646 = vmatprep.subr.mxu0 0.0
        %4647 = vmatpush1.msra.mxu0 %v805
        %4648 = vmatprep.subr.mxu0 0.0
        %4649 = vmatpush1.msra.mxu0 %v806
        %4650 = vmatprep.subr.mxu0 0.0
        %4651 = vmatpush1.msra.mxu0 %v807
        %4652 = vmatprep.subr.mxu0 0.0
        %4653 = vmatpush1.msra.mxu0 %v808
        %4654 = vmatprep.subr.mxu0 0.0
        %4655 = vmatpush1.msra.mxu0 %v809
        %4656 = vmatprep.subr.mxu0 0.0
        %4657 = vmatpush1.msra.mxu0 %v810
        %4658 = vmatprep.subr.mxu0 0.0
        %4659 = vmatpush1.msra.mxu0 0.0
        %4660 = vmatprep.subr.mxu0 0.0
        %4661 = vmatpush1.msra.mxu0 0.0
        %4662 = vmatprep.subr.mxu0 0.0
        %4663 = vmatpush1.msra.mxu0 0.0
        %4664 = vmatprep.subr.mxu0 0.0
        %4665 = vmatpush1.msra.mxu0 0.0
        %4666 = vmatprep.subr.mxu0 0.0
        %4667 = vmatpush1.msra.mxu0 0.0
        %4668 = vmatprep.subr.mxu0 0.0
        %4669 = vmatpush1.msra.mxu0 0.0
        %4670 = vmatprep.subr.mxu0 0.0
        %4671 = vmatpush1.msra.mxu0 0.0
        %4672 = vmatprep.subr.mxu0 0.0
        %4673 = vmatpush1.msra.mxu0 0.0
        %4674 = vmatprep.subr.mxu0 0.0
        %4675 = vmatpush1.msra.mxu0 0.0
        %4676 = vmatprep.subr.mxu0 0.0
        %4677 = vmatpush1.msra.mxu0 0.0
        %4678 = vmatprep.subr.mxu0 0.0
        %4679 = vmatpush1.msra.mxu0 0.0
        %4680 = vmatprep.subr.mxu0 0.0
        %4681 = vmatpush1.msra.mxu0 0.0
        %4682 = vmatprep.subr.mxu0 0.0
        %4683 = vmatpush1.msra.mxu0 0.0
        %4684 = vmatprep.subr.mxu0 0.0
        %4685 = vmatpush1.msra.mxu0 0.0
        %4686 = vmatprep.subr.mxu0 0.0
        %4687 = vmatpush1.msra.mxu0 0.0
        %4688 = vmatprep.subr.mxu0 0.0
        %4689 = vmatpush1.msra.mxu0 0.0
        %4690 = vmatprep.subr.mxu0 0.0
        %4691 = vmatpush1.msra.mxu0 0.0
        %4692 = vmatprep.mubr.f32.mxu0 0.0
        %4693 = vmatmul.mubr.f32.gmra.mrb[0].mxu0 %v4626
        %v4694 = vpop.f32.mrb[0].mxu0
        %v4695 = vadd.f32 %v811, %v4694
        %v4696 = vpop.f32.mrb[0].mxu0
        %4697 = vdwg.mxu0
        %v4698 = vmax.f32 %v4695, 0.0
        %v4700 = vsel %vm2759, %v4698, 0
        %4702 = vmatprep.subr.mxu0 0.0
        %4703 = vmatpush1.msra.mxu0 %v812
        %4704 = vmatprep.subr.mxu0 0.0
        %4705 = vmatpush1.msra.mxu0 %v813
        %4706 = vmatprep.subr.mxu0 0.0
        %4707 = vmatpush1.msra.mxu0 %v814
        %4708 = vmatprep.subr.mxu0 0.0
        %4709 = vmatpush1.msra.mxu0 %v815
        %4710 = vmatprep.subr.mxu0 0.0
        %4711 = vmatpush1.msra.mxu0 %v816
        %4712 = vmatprep.subr.mxu0 0.0
        %4713 = vmatpush1.msra.mxu0 %v817
        %4714 = vmatprep.subr.mxu0 0.0
        %4715 = vmatpush1.msra.mxu0 %v818
        %4716 = vmatprep.subr.mxu0 0.0
        %4717 = vmatpush1.msra.mxu0 %v2764
        %4718 = vmatprep.subr.mxu0 0.0
        %4719 = vmatpush1.msra.mxu0 0.0
        %4720 = vmatprep.subr.mxu0 0.0
        %4721 = vmatpush1.msra.mxu0 0.0
        %4722 = vmatprep.subr.mxu0 0.0
        %4723 = vmatpush1.msra.mxu0 0.0
        %4724 = vmatprep.subr.mxu0 0.0
        %4725 = vmatpush1.msra.mxu0 0.0
        %4726 = vmatprep.subr.mxu0 0.0
        %4727 = vmatpush1.msra.mxu0 0.0
        %4728 = vmatprep.subr.mxu0 0.0
        %4729 = vmatpush1.msra.mxu0 0.0
        %4730 = vmatprep.subr.mxu0 0.0
        %4731 = vmatpush1.msra.mxu0 0.0
        %4732 = vmatprep.subr.mxu0 0.0
        %4733 = vmatpush1.msra.mxu0 0.0
        %4734 = vmatprep.subr.mxu0 0.0
        %4735 = vmatpush1.msra.mxu0 0.0
        %4736 = vmatprep.subr.mxu0 0.0
        %4737 = vmatpush1.msra.mxu0 0.0
        %4738 = vmatprep.subr.mxu0 0.0
        %4739 = vmatpush1.msra.mxu0 0.0
        %4740 = vmatprep.subr.mxu0 0.0
        %4741 = vmatpush1.msra.mxu0 0.0
        %4742 = vmatprep.subr.mxu0 0.0
        %4743 = vmatpush1.msra.mxu0 0.0
        %4744 = vmatprep.subr.mxu0 0.0
        %4745 = vmatpush1.msra.mxu0 0.0
        %4746 = vmatprep.subr.mxu0 0.0
        %4747 = vmatpush1.msra.mxu0 0.0
        %4748 = vmatprep.subr.mxu0 0.0
        %4749 = vmatpush1.msra.mxu0 0.0
        %4750 = vmatprep.subr.mxu0 0.0
        %4751 = vmatpush1.msra.mxu0 0.0
        %4752 = vmatprep.subr.mxu0 0.0
        %4753 = vmatpush1.msra.mxu0 0.0
        %4754 = vmatprep.subr.mxu0 0.0
        %4755 = vmatpush1.msra.mxu0 0.0
        %4756 = vmatprep.subr.mxu0 0.0
        %4757 = vmatpush1.msra.mxu0 0.0
        %4758 = vmatprep.subr.mxu0 0.0
        %4759 = vmatpush1.msra.mxu0 0.0
        %4760 = vmatprep.subr.mxu0 0.0
        %4761 = vmatpush1.msra.mxu0 0.0
        %4762 = vmatprep.subr.mxu0 0.0
        %4763 = vmatpush1.msra.mxu0 0.0
        %4764 = vmatprep.subr.mxu0 0.0
        %4765 = vmatpush1.msra.mxu0 0.0
        %4766 = vmatprep.mubr.f32.mxu0 0.0
        %4767 = vmatmul.mubr.f32.gmra.mrb[0].mxu0 %v4700
        %v4768 = vpop.f32.mrb[0].mxu0
        %v4769 = vadd.f32 %v820, %v4768
        %v4770 = vpop.f32.mrb[0].mxu0
        %4771 = vdwg.mxu0
        %s4772 = scalar_lea.vmem %s598, 1 [#allocation2]
        %4773 = vst [vmem:[%s4772] sm:$0x1] %v4769
        %s4774 = scalar_lea.vmem %s604, 64
        %v4775 = vld [vmem:[%s4774] sm:$0xff]
        %v4776 = vld [vmem:[%s4774 + $0x8] sm:$0xff]
        %v4777 = vld [vmem:[%s4774 + $0x10] sm:$0xff]
        %v4778 = vld [vmem:[%s4774 + $0x18] sm:$0xf]
        %v4783 = vrot.slane %v4775, 1
        %v4784 = vrot.slane %v4776, 1
        %v4785 = vsel %vm829, %v4783, %v4784
        %v4786 = vrot.slane %v4777, 1
        %v4787 = vsel %vm829, %v4784, %v4786
        %v4788 = vrot.slane %v4778, 1
        %v4789 = vsel %vm829, %v4786, %v4788
        %v4790 = vsel %vm837, %v4785, 0
        %v4792 = vsel %vm837, %v4787, 0
        %v4794 = vsel %vm837, %v4789, 0
        %4796 = vmatprep.subr.mxu0 %v617
        %4797 = vmatpush1.msra.mxu0 %v616
        %4798 = vmatprep.subr.mxu0 %v619
        %4799 = vmatpush1.msra.mxu0 %v618
        %4800 = vmatprep.subr.mxu0 %v621
        %4801 = vmatpush1.msra.mxu0 %v620
        %4802 = vmatprep.subr.mxu0 %v849
        %4803 = vmatpush1.msra.mxu0 %v846
        %4804 = vmatprep.subr.mxu0 0.0
        %4805 = vmatpush1.msra.mxu0 0.0
        %4806 = vmatprep.subr.mxu0 0.0
        %4807 = vmatpush1.msra.mxu0 0.0
        %4808 = vmatprep.subr.mxu0 0.0
        %4809 = vmatpush1.msra.mxu0 0.0
        %4810 = vmatprep.subr.mxu0 0.0
        %4811 = vmatpush1.msra.mxu0 0.0
        %4812 = vmatprep.subr.mxu0 0.0
        %4813 = vmatpush1.msra.mxu0 0.0
        %4814 = vmatprep.subr.mxu0 0.0
        %4815 = vmatpush1.msra.mxu0 0.0
        %4816 = vmatprep.subr.mxu0 0.0
        %4817 = vmatpush1.msra.mxu0 0.0
        %4818 = vmatprep.subr.mxu0 0.0
        %4819 = vmatpush1.msra.mxu0 0.0
        %4820 = vmatprep.subr.mxu0 0.0
        %4821 = vmatpush1.msra.mxu0 0.0
        %4822 = vmatprep.subr.mxu0 0.0
        %4823 = vmatpush1.msra.mxu0 0.0
        %4824 = vmatprep.subr.mxu0 0.0
        %4825 = vmatpush1.msra.mxu0 0.0
        %4826 = vmatprep.subr.mxu0 0.0
        %4827 = vmatpush1.msra.mxu0 0.0
        %4828 = vmatprep.subr.mxu0 0.0
        %4829 = vmatpush1.msra.mxu0 0.0
        %4830 = vmatprep.subr.mxu0 0.0
        %4831 = vmatpush1.msra.mxu0 0.0
        %4832 = vmatprep.subr.mxu0 0.0
        %4833 = vmatpush1.msra.mxu0 0.0
        %4834 = vmatprep.subr.mxu0 0.0
        %4835 = vmatpush1.msra.mxu0 0.0
        %4836 = vmatprep.subr.mxu0 0.0
        %4837 = vmatpush1.msra.mxu0 0.0
        %4838 = vmatprep.subr.mxu0 0.0
        %4839 = vmatpush1.msra.mxu0 0.0
        %4840 = vmatprep.subr.mxu0 0.0
        %4841 = vmatpush1.msra.mxu0 0.0
        %4842 = vmatprep.subr.mxu0 0.0
        %4843 = vmatpush1.msra.mxu0 0.0
        %4844 = vmatprep.subr.mxu0 0.0
        %4845 = vmatpush1.msra.mxu0 0.0
        %4846 = vmatprep.subr.mxu0 0.0
        %4847 = vmatpush1.msra.mxu0 0.0
        %4848 = vmatprep.subr.mxu0 0.0
        %4849 = vmatpush1.msra.mxu0 0.0
        %4850 = vmatprep.subr.mxu0 0.0
        %4851 = vmatpush1.msra.mxu0 0.0
        %4852 = vmatprep.subr.mxu0 0.0
        %4853 = vmatpush1.msra.mxu0 0.0
        %4854 = vmatprep.subr.mxu0 0.0
        %4855 = vmatpush1.msra.mxu0 0.0
        %4856 = vmatprep.subr.mxu0 0.0
        %4857 = vmatpush1.msra.mxu0 0.0
        %4858 = vmatprep.subr.mxu0 0.0
        %4859 = vmatpush1.msra.mxu0 0.0
        %4860 = vmatprep.mubr.f32.mxu0 0.0
        %4861 = vmatmul.mubr.f32.gmra.mrb[0].mxu0 %v4790
        %v4862 = vpop.f32.mrb[0].mxu0
        %v4863 = vadd.f32 0.0, %v4862
        %v4864 = vpop.f32.mrb[0].mxu0
        %v4865 = vadd.f32 0.0, %v4864
        %4866 = vmatprep.mubr.f32.mxu0 0.0
        %4867 = vmatmul.mubr.f32.gmra.mrb[0].mxu0 %v4792
        %v4868 = vpop.f32.mrb[0].mxu0
        %v4869 = vadd.f32 0.0, %v4868
        %v4870 = vpop.f32.mrb[0].mxu0
        %v4871 = vadd.f32 0.0, %v4870
        %4872 = vmatprep.mubr.f32.mxu0 0.0
        %4873 = vmatmul.mubr.f32.gmra.mrb[0].mxu0 %v4794
        %v4874 = vpop.f32.mrb[0].mxu0
        %v4875 = vadd.f32 0.0, %v4874
        %v4876 = vpop.f32.mrb[0].mxu0
        %v4877 = vadd.f32 0.0, %v4876
        %4878 = vdwg.mxu0
        %v4879 = vsel %vm837, %v4775, 0
        %v4881 = vsel %vm837, %v4776, 0
        %v4883 = vsel %vm837, %v4777, 0
        %4885 = vmatprep.subr.mxu0 %v608
        %4886 = vmatpush1.msra.mxu0 %v607
        %4887 = vmatprep.subr.mxu0 %v610
        %4888 = vmatpush1.msra.mxu0 %v609
        %4889 = vmatprep.subr.mxu0 %v612
        %4890 = vmatpush1.msra.mxu0 %v611
        %4891 = vmatprep.subr.mxu0 %v944
        %4892 = vmatpush1.msra.mxu0 %v941
        %4893 = vmatprep.subr.mxu0 0.0
        %4894 = vmatpush1.msra.mxu0 0.0
        %4895 = vmatprep.subr.mxu0 0.0
        %4896 = vmatpush1.msra.mxu0 0.0
        %4897 = vmatprep.subr.mxu0 0.0
        %4898 = vmatpush1.msra.mxu0 0.0
        %4899 = vmatprep.subr.mxu0 0.0
        %4900 = vmatpush1.msra.mxu0 0.0
        %4901 = vmatprep.subr.mxu0 0.0
        %4902 = vmatpush1.msra.mxu0 0.0
        %4903 = vmatprep.subr.mxu0 0.0
        %4904 = vmatpush1.msra.mxu0 0.0
        %4905 = vmatprep.subr.mxu0 0.0
        %4906 = vmatpush1.msra.mxu0 0.0
        %4907 = vmatprep.subr.mxu0 0.0
        %4908 = vmatpush1.msra.mxu0 0.0
        %4909 = vmatprep.subr.mxu0 0.0
        %4910 = vmatpush1.msra.mxu0 0.0
        %4911 = vmatprep.subr.mxu0 0.0
        %4912 = vmatpush1.msra.mxu0 0.0
        %4913 = vmatprep.subr.mxu0 0.0
        %4914 = vmatpush1.msra.mxu0 0.0
        %4915 = vmatprep.subr.mxu0 0.0
        %4916 = vmatpush1.msra.mxu0 0.0
        %4917 = vmatprep.subr.mxu0 0.0
        %4918 = vmatpush1.msra.mxu0 0.0
        %4919 = vmatprep.subr.mxu0 0.0
        %4920 = vmatpush1.msra.mxu0 0.0
        %4921 = vmatprep.subr.mxu0 0.0
        %4922 = vmatpush1.msra.mxu0 0.0
        %4923 = vmatprep.subr.mxu0 0.0
        %4924 = vmatpush1.msra.mxu0 0.0
        %4925 = vmatprep.subr.mxu0 0.0
        %4926 = vmatpush1.msra.mxu0 0.0
        %4927 = vmatprep.subr.mxu0 0.0
        %4928 = vmatpush1.msra.mxu0 0.0
        %4929 = vmatprep.subr.mxu0 0.0
        %4930 = vmatpush1.msra.mxu0 0.0
        %4931 = vmatprep.subr.mxu0 0.0
        %4932 = vmatpush1.msra.mxu0 0.0
        %4933 = vmatprep.subr.mxu0 0.0
        %4934 = vmatpush1.msra.mxu0 0.0
        %4935 = vmatprep.subr.mxu0 0.0
        %4936 = vmatpush1.msra.mxu0 0.0
        %4937 = vmatprep.subr.mxu0 0.0
        %4938 = vmatpush1.msra.mxu0 0.0
        %4939 = vmatprep.subr.mxu0 0.0
        %4940 = vmatpush1.msra.mxu0 0.0
        %4941 = vmatprep.subr.mxu0 0.0
        %4942 = vmatpush1.msra.mxu0 0.0
        %4943 = vmatprep.subr.mxu0 0.0
        %4944 = vmatpush1.msra.mxu0 0.0
        %4945 = vmatprep.subr.mxu0 0.0
        %4946 = vmatpush1.msra.mxu0 0.0
        %4947 = vmatprep.subr.mxu0 0.0
        %4948 = vmatpush1.msra.mxu0 0.0
        %4949 = vmatprep.mubr.f32.mxu0 0.0
        %4950 = vmatmul.mubr.f32.gmra.mrb[0].mxu0 %v4879
        %v4951 = vpop.f32.mrb[0].mxu0
        %v4952 = vadd.f32 %v4863, %v4951
        %v4953 = vpop.f32.mrb[0].mxu0
        %v4954 = vadd.f32 %v4865, %v4953
        %4955 = vmatprep.mubr.f32.mxu0 0.0
        %4956 = vmatmul.mubr.f32.gmra.mrb[0].mxu0 %v4881
        %v4957 = vpop.f32.mrb[0].mxu0
        %v4958 = vadd.f32 %v4869, %v4957
        %v4959 = vpop.f32.mrb[0].mxu0
        %v4960 = vadd.f32 %v4871, %v4959
        %4961 = vmatprep.mubr.f32.mxu0 0.0
        %4962 = vmatmul.mubr.f32.gmra.mrb[0].mxu0 %v4883
        %v4963 = vpop.f32.mrb[0].mxu0
        %v4964 = vadd.f32 %v4875, %v4963
        %v4965 = vpop.f32.mrb[0].mxu0
        %v4966 = vadd.f32 %v4877, %v4965
        %4967 = vdwg.mxu0
        %v4968 = vrot.slane %v4775, 2
        %v4969 = vrot.slane %v4776, 2
        %v4970 = vsel %vm1029, %v4968, %v4969
        %v4971 = vrot.slane %v4777, 2
        %v4972 = vsel %vm1029, %v4969, %v4971
        %v4973 = vrot.slane %v4778, 2
        %v4974 = vsel %vm1029, %v4971, %v4973
        %v4975 = vsel %vm837, %v4970, 0
        %v4977 = vsel %vm837, %v4972, 0
        %v4979 = vsel %vm837, %v4974, 0
        %4981 = vmatprep.subr.mxu0 %v626
        %4982 = vmatpush1.msra.mxu0 %v625
        %4983 = vmatprep.subr.mxu0 %v628
        %4984 = vmatpush1.msra.mxu0 %v627
        %4985 = vmatprep.subr.mxu0 %v630
        %4986 = vmatpush1.msra.mxu0 %v629
        %4987 = vmatprep.subr.mxu0 %v1047
        %4988 = vmatpush1.msra.mxu0 %v1044
        %4989 = vmatprep.subr.mxu0 0.0
        %4990 = vmatpush1.msra.mxu0 0.0
        %4991 = vmatprep.subr.mxu0 0.0
        %4992 = vmatpush1.msra.mxu0 0.0
        %4993 = vmatprep.subr.mxu0 0.0
        %4994 = vmatpush1.msra.mxu0 0.0
        %4995 = vmatprep.subr.mxu0 0.0
        %4996 = vmatpush1.msra.mxu0 0.0
        %4997 = vmatprep.subr.mxu0 0.0
        %4998 = vmatpush1.msra.mxu0 0.0
        %4999 = vmatprep.subr.mxu0 0.0
        %5000 = vmatpush1.msra.mxu0 0.0
        %5001 = vmatprep.subr.mxu0 0.0
        %5002 = vmatpush1.msra.mxu0 0.0
        %5003 = vmatprep.subr.mxu0 0.0
        %5004 = vmatpush1.msra.mxu0 0.0
        %5005 = vmatprep.subr.mxu0 0.0
        %5006 = vmatpush1.msra.mxu0 0.0
        %5007 = vmatprep.subr.mxu0 0.0
        %5008 = vmatpush1.msra.mxu0 0.0
        %5009 = vmatprep.subr.mxu0 0.0
        %5010 = vmatpush1.msra.mxu0 0.0
        %5011 = vmatprep.subr.mxu0 0.0
        %5012 = vmatpush1.msra.mxu0 0.0
        %5013 = vmatprep.subr.mxu0 0.0
        %5014 = vmatpush1.msra.mxu0 0.0
        %5015 = vmatprep.subr.mxu0 0.0
        %5016 = vmatpush1.msra.mxu0 0.0
        %5017 = vmatprep.subr.mxu0 0.0
        %5018 = vmatpush1.msra.mxu0 0.0
        %5019 = vmatprep.subr.mxu0 0.0
        %5020 = vmatpush1.msra.mxu0 0.0
        %5021 = vmatprep.subr.mxu0 0.0
        %5022 = vmatpush1.msra.mxu0 0.0
        %5023 = vmatprep.subr.mxu0 0.0
        %5024 = vmatpush1.msra.mxu0 0.0
        %5025 = vmatprep.subr.mxu0 0.0
        %5026 = vmatpush1.msra.mxu0 0.0
        %5027 = vmatprep.subr.mxu0 0.0
        %5028 = vmatpush1.msra.mxu0 0.0
        %5029 = vmatprep.subr.mxu0 0.0
        %5030 = vmatpush1.msra.mxu0 0.0
        %5031 = vmatprep.subr.mxu0 0.0
        %5032 = vmatpush1.msra.mxu0 0.0
        %5033 = vmatprep.subr.mxu0 0.0
        %5034 = vmatpush1.msra.mxu0 0.0
        %5035 = vmatprep.subr.mxu0 0.0
        %5036 = vmatpush1.msra.mxu0 0.0
        %5037 = vmatprep.subr.mxu0 0.0
        %5038 = vmatpush1.msra.mxu0 0.0
        %5039 = vmatprep.subr.mxu0 0.0
        %5040 = vmatpush1.msra.mxu0 0.0
        %5041 = vmatprep.subr.mxu0 0.0
        %5042 = vmatpush1.msra.mxu0 0.0
        %5043 = vmatprep.subr.mxu0 0.0
        %5044 = vmatpush1.msra.mxu0 0.0
        %5045 = vmatprep.mubr.f32.mxu0 0.0
        %5046 = vmatmul.mubr.f32.gmra.mrb[0].mxu0 %v4975
        %v5047 = vpop.f32.mrb[0].mxu0
        %v5048 = vadd.f32 0.0, %v5047
        %v5049 = vpop.f32.mrb[0].mxu0
        %v5050 = vadd.f32 0.0, %v5049
        %5051 = vmatprep.mubr.f32.mxu0 0.0
        %5052 = vmatmul.mubr.f32.gmra.mrb[0].mxu0 %v4977
        %v5053 = vpop.f32.mrb[0].mxu0
        %v5054 = vadd.f32 0.0, %v5053
        %v5055 = vpop.f32.mrb[0].mxu0
        %v5056 = vadd.f32 0.0, %v5055
        %5057 = vmatprep.mubr.f32.mxu0 0.0
        %5058 = vmatmul.mubr.f32.gmra.mrb[0].mxu0 %v4979
        %v5059 = vpop.f32.mrb[0].mxu0
        %v5060 = vadd.f32 0.0, %v5059
        %v5061 = vpop.f32.mrb[0].mxu0
        %v5062 = vadd.f32 0.0, %v5061
        %5063 = vdwg.mxu0
        %v5064 = vadd.f32 %v4952, %v5048
        %v5065 = vadd.f32 %v4954, %v5050
        %v5066 = vadd.f32 %v4958, %v5054
        %v5067 = vadd.f32 %v4960, %v5056
        %v5068 = vadd.f32 %v4964, %v5060
        %v5069 = vadd.f32 %v4966, %v5062
        %v5070 = vrot.slane %v4775, 3
        %v5071 = vrot.slane %v4776, 3
        %v5072 = vsel %vm1138, %v5070, %v5071
        %v5073 = vrot.slane %v4777, 3
        %v5074 = vsel %vm1138, %v5071, %v5073
        %v5075 = vrot.slane %v4778, 3
        %v5076 = vsel %vm1138, %v5073, %v5075
        %v5077 = vsel %vm837, %v5072, 0
        %v5079 = vsel %vm837, %v5074, 0
        %v5081 = vsel %vm837, %v5076, 0
        %5083 = vmatprep.subr.mxu0 %v635
        %5084 = vmatpush1.msra.mxu0 %v634
        %5085 = vmatprep.subr.mxu0 %v637
        %5086 = vmatpush1.msra.mxu0 %v636
        %5087 = vmatprep.subr.mxu0 %v639
        %5088 = vmatpush1.msra.mxu0 %v638
        %5089 = vmatprep.subr.mxu0 %v1156
        %5090 = vmatpush1.msra.mxu0 %v1153
        %5091 = vmatprep.subr.mxu0 0.0
        %5092 = vmatpush1.msra.mxu0 0.0
        %5093 = vmatprep.subr.mxu0 0.0
        %5094 = vmatpush1.msra.mxu0 0.0
        %5095 = vmatprep.subr.mxu0 0.0
        %5096 = vmatpush1.msra.mxu0 0.0
        %5097 = vmatprep.subr.mxu0 0.0
        %5098 = vmatpush1.msra.mxu0 0.0
        %5099 = vmatprep.subr.mxu0 0.0
        %5100 = vmatpush1.msra.mxu0 0.0
        %5101 = vmatprep.subr.mxu0 0.0
        %5102 = vmatpush1.msra.mxu0 0.0
        %5103 = vmatprep.subr.mxu0 0.0
        %5104 = vmatpush1.msra.mxu0 0.0
        %5105 = vmatprep.subr.mxu0 0.0
        %5106 = vmatpush1.msra.mxu0 0.0
        %5107 = vmatprep.subr.mxu0 0.0
        %5108 = vmatpush1.msra.mxu0 0.0
        %5109 = vmatprep.subr.mxu0 0.0
        %5110 = vmatpush1.msra.mxu0 0.0
        %5111 = vmatprep.subr.mxu0 0.0
        %5112 = vmatpush1.msra.mxu0 0.0
        %5113 = vmatprep.subr.mxu0 0.0
        %5114 = vmatpush1.msra.mxu0 0.0
        %5115 = vmatprep.subr.mxu0 0.0
        %5116 = vmatpush1.msra.mxu0 0.0
        %5117 = vmatprep.subr.mxu0 0.0
        %5118 = vmatpush1.msra.mxu0 0.0
        %5119 = vmatprep.subr.mxu0 0.0
        %5120 = vmatpush1.msra.mxu0 0.0
        %5121 = vmatprep.subr.mxu0 0.0
        %5122 = vmatpush1.msra.mxu0 0.0
        %5123 = vmatprep.subr.mxu0 0.0
        %5124 = vmatpush1.msra.mxu0 0.0
        %5125 = vmatprep.subr.mxu0 0.0
        %5126 = vmatpush1.msra.mxu0 0.0
        %5127 = vmatprep.subr.mxu0 0.0
        %5128 = vmatpush1.msra.mxu0 0.0
        %5129 = vmatprep.subr.mxu0 0.0
        %5130 = vmatpush1.msra.mxu0 0.0
        %5131 = vmatprep.subr.mxu0 0.0
        %5132 = vmatpush1.msra.mxu0 0.0
        %5133 = vmatprep.subr.mxu0 0.0
        %5134 = vmatpush1.msra.mxu0 0.0
        %5135 = vmatprep.subr.mxu0 0.0
        %5136 = vmatpush1.msra.mxu0 0.0
        %5137 = vmatprep.subr.mxu0 0.0
        %5138 = vmatpush1.msra.mxu0 0.0
        %5139 = vmatprep.subr.mxu0 0.0
        %5140 = vmatpush1.msra.mxu0 0.0
        %5141 = vmatprep.subr.mxu0 0.0
        %5142 = vmatpush1.msra.mxu0 0.0
        %5143 = vmatprep.subr.mxu0 0.0
        %5144 = vmatpush1.msra.mxu0 0.0
        %5145 = vmatprep.subr.mxu0 0.0
        %5146 = vmatpush1.msra.mxu0 0.0
        %5147 = vmatprep.mubr.f32.mxu0 0.0
        %5148 = vmatmul.mubr.f32.gmra.mrb[0].mxu0 %v5077
        %v5149 = vpop.f32.mrb[0].mxu0
        %v5150 = vadd.f32 0.0, %v5149
        %v5151 = vpop.f32.mrb[0].mxu0
        %v5152 = vadd.f32 0.0, %v5151
        %5153 = vmatprep.mubr.f32.mxu0 0.0
        %5154 = vmatmul.mubr.f32.gmra.mrb[0].mxu0 %v5079
        %v5155 = vpop.f32.mrb[0].mxu0
        %v5156 = vadd.f32 0.0, %v5155
        %v5157 = vpop.f32.mrb[0].mxu0
        %v5158 = vadd.f32 0.0, %v5157
        %5159 = vmatprep.mubr.f32.mxu0 0.0
        %5160 = vmatmul.mubr.f32.gmra.mrb[0].mxu0 %v5081
        %v5161 = vpop.f32.mrb[0].mxu0
        %v5162 = vadd.f32 0.0, %v5161
        %v5163 = vpop.f32.mrb[0].mxu0
        %v5164 = vadd.f32 0.0, %v5163
        %5165 = vdwg.mxu0
        %v5166 = vadd.f32 %v5064, %v5150
        %v5167 = vadd.f32 %v5065, %v5152
        %v5168 = vadd.f32 %v5066, %v5156
        %v5169 = vadd.f32 %v5067, %v5158
        %v5170 = vadd.f32 %v5068, %v5162
        %v5171 = vadd.f32 %v5069, %v5164
        %v5172 = vrot.slane %v4775, 4
        %v5173 = vrot.slane %v4776, 4
        %v5174 = vsel %vm844, %v5172, %v5173
        %v5175 = vrot.slane %v4777, 4
        %v5176 = vsel %vm844, %v5173, %v5175
        %v5177 = vrot.slane %v4778, 4
        %v5178 = vsel %vm844, %v5175, %v5177
        %v5179 = vsel %vm837, %v5174, 0
        %v5181 = vsel %vm837, %v5176, 0
        %v5183 = vsel %vm837, %v5178, 0
        %5185 = vmatprep.subr.mxu0 %v644
        %5186 = vmatpush1.msra.mxu0 %v643
        %5187 = vmatprep.subr.mxu0 %v646
        %5188 = vmatpush1.msra.mxu0 %v645
        %5189 = vmatprep.subr.mxu0 %v648
        %5190 = vmatpush1.msra.mxu0 %v647
        %5191 = vmatprep.subr.mxu0 %v1264
        %5192 = vmatpush1.msra.mxu0 %v1261
        %5193 = vmatprep.subr.mxu0 0.0
        %5194 = vmatpush1.msra.mxu0 0.0
        %5195 = vmatprep.subr.mxu0 0.0
        %5196 = vmatpush1.msra.mxu0 0.0
        %5197 = vmatprep.subr.mxu0 0.0
        %5198 = vmatpush1.msra.mxu0 0.0
        %5199 = vmatprep.subr.mxu0 0.0
        %5200 = vmatpush1.msra.mxu0 0.0
        %5201 = vmatprep.subr.mxu0 0.0
        %5202 = vmatpush1.msra.mxu0 0.0
        %5203 = vmatprep.subr.mxu0 0.0
        %5204 = vmatpush1.msra.mxu0 0.0
        %5205 = vmatprep.subr.mxu0 0.0
        %5206 = vmatpush1.msra.mxu0 0.0
        %5207 = vmatprep.subr.mxu0 0.0
        %5208 = vmatpush1.msra.mxu0 0.0
        %5209 = vmatprep.subr.mxu0 0.0
        %5210 = vmatpush1.msra.mxu0 0.0
        %5211 = vmatprep.subr.mxu0 0.0
        %5212 = vmatpush1.msra.mxu0 0.0
        %5213 = vmatprep.subr.mxu0 0.0
        %5214 = vmatpush1.msra.mxu0 0.0
        %5215 = vmatprep.subr.mxu0 0.0
        %5216 = vmatpush1.msra.mxu0 0.0
        %5217 = vmatprep.subr.mxu0 0.0
        %5218 = vmatpush1.msra.mxu0 0.0
        %5219 = vmatprep.subr.mxu0 0.0
        %5220 = vmatpush1.msra.mxu0 0.0
        %5221 = vmatprep.subr.mxu0 0.0
        %5222 = vmatpush1.msra.mxu0 0.0
        %5223 = vmatprep.subr.mxu0 0.0
        %5224 = vmatpush1.msra.mxu0 0.0
        %5225 = vmatprep.subr.mxu0 0.0
        %5226 = vmatpush1.msra.mxu0 0.0
        %5227 = vmatprep.subr.mxu0 0.0
        %5228 = vmatpush1.msra.mxu0 0.0
        %5229 = vmatprep.subr.mxu0 0.0
        %5230 = vmatpush1.msra.mxu0 0.0
        %5231 = vmatprep.subr.mxu0 0.0
        %5232 = vmatpush1.msra.mxu0 0.0
        %5233 = vmatprep.subr.mxu0 0.0
        %5234 = vmatpush1.msra.mxu0 0.0
        %5235 = vmatprep.subr.mxu0 0.0
        %5236 = vmatpush1.msra.mxu0 0.0
        %5237 = vmatprep.subr.mxu0 0.0
        %5238 = vmatpush1.msra.mxu0 0.0
        %5239 = vmatprep.subr.mxu0 0.0
        %5240 = vmatpush1.msra.mxu0 0.0
        %5241 = vmatprep.subr.mxu0 0.0
        %5242 = vmatpush1.msra.mxu0 0.0
        %5243 = vmatprep.subr.mxu0 0.0
        %5244 = vmatpush1.msra.mxu0 0.0
        %5245 = vmatprep.subr.mxu0 0.0
        %5246 = vmatpush1.msra.mxu0 0.0
        %5247 = vmatprep.subr.mxu0 0.0
        %5248 = vmatpush1.msra.mxu0 0.0
        %5249 = vmatprep.mubr.f32.mxu0 0.0
        %5250 = vmatmul.mubr.f32.gmra.mrb[0].mxu0 %v5179
        %v5251 = vpop.f32.mrb[0].mxu0
        %v5252 = vadd.f32 0.0, %v5251
        %v5253 = vpop.f32.mrb[0].mxu0
        %v5254 = vadd.f32 0.0, %v5253
        %5255 = vmatprep.mubr.f32.mxu0 0.0
        %5256 = vmatmul.mubr.f32.gmra.mrb[0].mxu0 %v5181
        %v5257 = vpop.f32.mrb[0].mxu0
        %v5258 = vadd.f32 0.0, %v5257
        %v5259 = vpop.f32.mrb[0].mxu0
        %v5260 = vadd.f32 0.0, %v5259
        %5261 = vmatprep.mubr.f32.mxu0 0.0
        %5262 = vmatmul.mubr.f32.gmra.mrb[0].mxu0 %v5183
        %v5263 = vpop.f32.mrb[0].mxu0
        %v5264 = vadd.f32 0.0, %v5263
        %v5265 = vpop.f32.mrb[0].mxu0
        %v5266 = vadd.f32 0.0, %v5265
        %5267 = vdwg.mxu0
        %v5268 = vadd.f32 %v5166, %v5252
        %v5269 = vadd.f32 %v5167, %v5254
        %v5270 = vadd.f32 %v5168, %v5258
        %v5271 = vadd.f32 %v5169, %v5260
        %v5272 = vadd.f32 %v5170, %v5264
        %v5273 = vadd.f32 %v5171, %v5266
        %v5274 = vadd.f32 %v5268, %v1359
        %v5275 = vadd.f32 %v5269, %v1363
        %v5276 = vadd.f32 %v5270, %v1359
        %v5277 = vadd.f32 %v5271, %v1363
        %v5278 = vadd.f32 %v5272, %v1359
        %v5279 = vadd.f32 %v5273, %v1363
        %v5280 = vmax.f32 %v5274, 0.0
        %v5281 = vmax.f32 %v5275, 0.0
        %v5282 = vmax.f32 %v5276, 0.0
        %v5283 = vmax.f32 %v5277, 0.0
        %v5284 = vmax.f32 %v5278, 0.0
        %v5285 = vmax.f32 %v5279, 0.0
        %5286 = vmatprep.subr.mxu0 %v5281
        %5287 = vmatpush1.msra.mxu0 %v5280
        %5288 = vmatprep.subr.mxu0 %v5283
        %5289 = vmatpush1.msra.mxu0 %v5282
        %5290 = vmatprep.subr.mxu0 %v5285
        %5291 = vmatpush1.msra.mxu0 %v5284
        %5292 = vmatprep.subr.mxu0 0.0
        %5293 = vmatpush1.msra.mxu0 0.0
        %5294 = vmatprep.subr.mxu0 0.0
        %5295 = vmatpush1.msra.mxu0 0.0
        %5296 = vmatprep.subr.mxu0 0.0
        %5297 = vmatpush1.msra.mxu0 0.0
        %5298 = vmatprep.subr.mxu0 0.0
        %5299 = vmatpush1.msra.mxu0 0.0
        %5300 = vmatprep.subr.mxu0 0.0
        %5301 = vmatpush1.msra.mxu0 0.0
        %5302 = vmatprep.subr.mxu0 0.0
        %5303 = vmatpush1.msra.mxu0 0.0
        %5304 = vmatprep.subr.mxu0 0.0
        %5305 = vmatpush1.msra.mxu0 0.0
        %5306 = vmatprep.subr.mxu0 0.0
        %5307 = vmatpush1.msra.mxu0 0.0
        %5308 = vmatprep.subr.mxu0 0.0
        %5309 = vmatpush1.msra.mxu0 0.0
        %5310 = vmatprep.subr.mxu0 0.0
        %5311 = vmatpush1.msra.mxu0 0.0
        %5312 = vmatprep.subr.mxu0 0.0
        %5313 = vmatpush1.msra.mxu0 0.0
        %5314 = vmatprep.subr.mxu0 0.0
        %5315 = vmatpush1.msra.mxu0 0.0
        %5316 = vmatprep.subr.mxu0 0.0
        %5317 = vmatpush1.msra.mxu0 0.0
        %5318 = vmatprep.subr.mxu0 0.0
        %5319 = vmatpush1.msra.mxu0 0.0
        %5320 = vmatprep.subr.mxu0 0.0
        %5321 = vmatpush1.msra.mxu0 0.0
        %5322 = vmatprep.subr.mxu0 0.0
        %5323 = vmatpush1.msra.mxu0 0.0
        %5324 = vmatprep.subr.mxu0 0.0
        %5325 = vmatpush1.msra.mxu0 0.0
        %5326 = vmatprep.subr.mxu0 0.0
        %5327 = vmatpush1.msra.mxu0 0.0
        %5328 = vmatprep.subr.mxu0 0.0
        %5329 = vmatpush1.msra.mxu0 0.0
        %5330 = vmatprep.subr.mxu0 0.0
        %5331 = vmatpush1.msra.mxu0 0.0
        %5332 = vmatprep.subr.mxu0 0.0
        %5333 = vmatpush1.msra.mxu0 0.0
        %5334 = vmatprep.subr.mxu0 0.0
        %5335 = vmatpush1.msra.mxu0 0.0
        %5336 = vmatprep.subr.mxu0 0.0
        %5337 = vmatpush1.msra.mxu0 0.0
        %5338 = vmatprep.subr.mxu0 0.0
        %5339 = vmatpush1.msra.mxu0 0.0
        %5340 = vmatprep.subr.mxu0 0.0
        %5341 = vmatpush1.msra.mxu0 0.0
        %5342 = vmatprep.subr.mxu0 0.0
        %5343 = vmatpush1.msra.mxu0 0.0
        %5344 = vmatprep.subr.mxu0 0.0
        %5345 = vmatpush1.msra.mxu0 0.0
        %5346 = vmatprep.subr.mxu0 0.0
        %5347 = vmatpush1.msra.mxu0 0.0
        %5348 = vmatprep.subr.mxu0 0.0
        %5349 = vmatpush1.msra.mxu0 0.0
        %5350 = vmatprep.mubr.f32.mxu0 0.0
        %5351 = vmatmul.mubr.f32.gmra.mrb[0].mxu0 %v1380
        %v5352 = vpop.f32.mrb[0].mxu0
        %v5353 = vadd.f32 0.0, %v5352
        %v5354 = vpop.f32.mrb[0].mxu0
        %v5355 = vadd.f32 0.0, %v5354
        %5356 = vmatprep.mubr.f32.mxu0 0.0
        %5357 = vmatmul.mubr.f32.gmra.mrb[0].mxu0 %v1383
        %v5358 = vpop.f32.mrb[0].mxu0
        %v5359 = vadd.f32 0.0, %v5358
        %v5360 = vpop.f32.mrb[0].mxu0
        %v5361 = vadd.f32 0.0, %v5360
        %5362 = vdwg.mxu0
        %5363 = vmatprep.subr.mxu0 %v5281
        %5364 = vmatpush1.msra.mxu0 %v5280
        %5365 = vmatprep.subr.mxu0 %v5283
        %5366 = vmatpush1.msra.mxu0 %v5282
        %5367 = vmatprep.subr.mxu0 %v5285
        %5368 = vmatpush1.msra.mxu0 %v5284
        %5369 = vmatprep.subr.mxu0 0.0
        %5370 = vmatpush1.msra.mxu0 0.0
        %5371 = vmatprep.subr.mxu0 0.0
        %5372 = vmatpush1.msra.mxu0 0.0
        %5373 = vmatprep.subr.mxu0 0.0
        %5374 = vmatpush1.msra.mxu0 0.0
        %5375 = vmatprep.subr.mxu0 0.0
        %5376 = vmatpush1.msra.mxu0 0.0
        %5377 = vmatprep.subr.mxu0 0.0
        %5378 = vmatpush1.msra.mxu0 0.0
        %5379 = vmatprep.subr.mxu0 0.0
        %5380 = vmatpush1.msra.mxu0 0.0
        %5381 = vmatprep.subr.mxu0 0.0
        %5382 = vmatpush1.msra.mxu0 0.0
        %5383 = vmatprep.subr.mxu0 0.0
        %5384 = vmatpush1.msra.mxu0 0.0
        %5385 = vmatprep.subr.mxu0 0.0
        %5386 = vmatpush1.msra.mxu0 0.0
        %5387 = vmatprep.subr.mxu0 0.0
        %5388 = vmatpush1.msra.mxu0 0.0
        %5389 = vmatprep.subr.mxu0 0.0
        %5390 = vmatpush1.msra.mxu0 0.0
        %5391 = vmatprep.subr.mxu0 0.0
        %5392 = vmatpush1.msra.mxu0 0.0
        %5393 = vmatprep.subr.mxu0 0.0
        %5394 = vmatpush1.msra.mxu0 0.0
        %5395 = vmatprep.subr.mxu0 0.0
        %5396 = vmatpush1.msra.mxu0 0.0
        %5397 = vmatprep.subr.mxu0 0.0
        %5398 = vmatpush1.msra.mxu0 0.0
        %5399 = vmatprep.subr.mxu0 0.0
        %5400 = vmatpush1.msra.mxu0 0.0
        %5401 = vmatprep.subr.mxu0 0.0
        %5402 = vmatpush1.msra.mxu0 0.0
        %5403 = vmatprep.subr.mxu0 0.0
        %5404 = vmatpush1.msra.mxu0 0.0
        %5405 = vmatprep.subr.mxu0 0.0
        %5406 = vmatpush1.msra.mxu0 0.0
        %5407 = vmatprep.subr.mxu0 0.0
        %5408 = vmatpush1.msra.mxu0 0.0
        %5409 = vmatprep.subr.mxu0 0.0
        %5410 = vmatpush1.msra.mxu0 0.0
        %5411 = vmatprep.subr.mxu0 0.0
        %5412 = vmatpush1.msra.mxu0 0.0
        %5413 = vmatprep.subr.mxu0 0.0
        %5414 = vmatpush1.msra.mxu0 0.0
        %5415 = vmatprep.subr.mxu0 0.0
        %5416 = vmatpush1.msra.mxu0 0.0
        %5417 = vmatprep.subr.mxu0 0.0
        %5418 = vmatpush1.msra.mxu0 0.0
        %5419 = vmatprep.subr.mxu0 0.0
        %5420 = vmatpush1.msra.mxu0 0.0
        %5421 = vmatprep.subr.mxu0 0.0
        %5422 = vmatpush1.msra.mxu0 0.0
        %5423 = vmatprep.subr.mxu0 0.0
        %5424 = vmatpush1.msra.mxu0 0.0
        %5425 = vmatprep.subr.mxu0 0.0
        %5426 = vmatpush1.msra.mxu0 0.0
        %5427 = vmatprep.mubr.f32.mxu0 0.0
        %5428 = vmatmul.mubr.f32.gmra.mrb[0].mxu0 %v1463
        %v5429 = vpop.f32.mrb[0].mxu0
        %v5430 = vadd.f32 0.0, %v5429
        %v5431 = vpop.f32.mrb[0].mxu0
        %v5432 = vadd.f32 0.0, %v5431
        %5433 = vmatprep.mubr.f32.mxu0 0.0
        %5434 = vmatmul.mubr.f32.gmra.mrb[0].mxu0 %v1466
        %v5435 = vpop.f32.mrb[0].mxu0
        %v5436 = vadd.f32 0.0, %v5435
        %v5437 = vpop.f32.mrb[0].mxu0
        %v5438 = vadd.f32 0.0, %v5437
        %5439 = vdwg.mxu0
        %v5440 = vmax.f32 %v5353, %v5430
        %v5441 = vmax.f32 %v5355, %v5432
        %v5442 = vmax.f32 %v5359, %v5436
        %v5443 = vmax.f32 %v5361, %v5438
        %v5445 = vsel %vm1549, %v5441, 0
        %v5448 = vsel %vm1549, %v5443, 0
        %5450 = vmatprep.subr.mxu0 0.0
        %5451 = vmatpush1.msra.mxu0 %v733
        %5452 = vmatprep.subr.mxu0 0.0
        %5453 = vmatpush1.msra.mxu0 %v734
        %5454 = vmatprep.subr.mxu0 0.0
        %5455 = vmatpush1.msra.mxu0 %v735
        %5456 = vmatprep.subr.mxu0 0.0
        %5457 = vmatpush1.msra.mxu0 %v736
        %5458 = vmatprep.subr.mxu0 0.0
        %5459 = vmatpush1.msra.mxu0 %v737
        %5460 = vmatprep.subr.mxu0 0.0
        %5461 = vmatpush1.msra.mxu0 %v738
        %5462 = vmatprep.subr.mxu0 0.0
        %5463 = vmatpush1.msra.mxu0 %v739
        %5464 = vmatprep.subr.mxu0 0.0
        %5465 = vmatpush1.msra.mxu0 %v740
        %5466 = vmatprep.subr.mxu0 0.0
        %5467 = vmatpush1.msra.mxu0 %v741
        %5468 = vmatprep.subr.mxu0 0.0
        %5469 = vmatpush1.msra.mxu0 %v742
        %5470 = vmatprep.subr.mxu0 0.0
        %5471 = vmatpush1.msra.mxu0 %v743
        %5472 = vmatprep.subr.mxu0 0.0
        %5473 = vmatpush1.msra.mxu0 %v744
        %5474 = vmatprep.subr.mxu0 0.0
        %5475 = vmatpush1.msra.mxu0 %v745
        %5476 = vmatprep.subr.mxu0 0.0
        %5477 = vmatpush1.msra.mxu0 %v746
        %5478 = vmatprep.subr.mxu0 0.0
        %5479 = vmatpush1.msra.mxu0 %v747
        %5480 = vmatprep.subr.mxu0 0.0
        %5481 = vmatpush1.msra.mxu0 %v748
        %5482 = vmatprep.subr.mxu0 0.0
        %5483 = vmatpush1.msra.mxu0 %v749
        %5484 = vmatprep.subr.mxu0 0.0
        %5485 = vmatpush1.msra.mxu0 %v750
        %5486 = vmatprep.subr.mxu0 0.0
        %5487 = vmatpush1.msra.mxu0 0.0
        %5488 = vmatprep.subr.mxu0 0.0
        %5489 = vmatpush1.msra.mxu0 0.0
        %5490 = vmatprep.subr.mxu0 0.0
        %5491 = vmatpush1.msra.mxu0 0.0
        %5492 = vmatprep.subr.mxu0 0.0
        %5493 = vmatpush1.msra.mxu0 0.0
        %5494 = vmatprep.subr.mxu0 0.0
        %5495 = vmatpush1.msra.mxu0 0.0
        %5496 = vmatprep.subr.mxu0 0.0
        %5497 = vmatpush1.msra.mxu0 0.0
        %5498 = vmatprep.subr.mxu0 0.0
        %5499 = vmatpush1.msra.mxu0 0.0
        %5500 = vmatprep.subr.mxu0 0.0
        %5501 = vmatpush1.msra.mxu0 0.0
        %5502 = vmatprep.subr.mxu0 0.0
        %5503 = vmatpush1.msra.mxu0 0.0
        %5504 = vmatprep.subr.mxu0 0.0
        %5505 = vmatpush1.msra.mxu0 0.0
        %5506 = vmatprep.subr.mxu0 0.0
        %5507 = vmatpush1.msra.mxu0 0.0
        %5508 = vmatprep.subr.mxu0 0.0
        %5509 = vmatpush1.msra.mxu0 0.0
        %5510 = vmatprep.subr.mxu0 0.0
        %5511 = vmatpush1.msra.mxu0 0.0
        %5512 = vmatprep.subr.mxu0 0.0
        %5513 = vmatpush1.msra.mxu0 0.0
        %5514 = vmatprep.mubr.f32.mxu0 %v5445
        %5515 = vmatmul.mubr.f32.gmra.mrb[0].mxu0 %v5440
        %v5516 = vpop.f32.mrb[0].mxu0
        %v5517 = vadd.f32 0.0, %v5516
        %v5518 = vpop.f32.mrb[0].mxu0
        %5519 = vmatprep.mubr.f32.mxu0 %v5448
        %5520 = vmatmul.mubr.f32.gmra.mrb[0].mxu0 %v5442
        %v5521 = vpop.f32.mrb[0].mxu0
        %v5522 = vadd.f32 0.0, %v5521
        %v5523 = vpop.f32.mrb[0].mxu0
        %5524 = vdwg.mxu0
        %5525 = vmatprep.subr.mxu0 0.0
        %5526 = vmatpush1.msra.mxu0 %v751
        %5527 = vmatprep.subr.mxu0 0.0
        %5528 = vmatpush1.msra.mxu0 %v752
        %5529 = vmatprep.subr.mxu0 0.0
        %5530 = vmatpush1.msra.mxu0 %v753
        %5531 = vmatprep.subr.mxu0 0.0
        %5532 = vmatpush1.msra.mxu0 %v754
        %5533 = vmatprep.subr.mxu0 0.0
        %5534 = vmatpush1.msra.mxu0 %v755
        %5535 = vmatprep.subr.mxu0 0.0
        %5536 = vmatpush1.msra.mxu0 %v756
        %5537 = vmatprep.subr.mxu0 0.0
        %5538 = vmatpush1.msra.mxu0 %v757
        %5539 = vmatprep.subr.mxu0 0.0
        %5540 = vmatpush1.msra.mxu0 %v758
        %5541 = vmatprep.subr.mxu0 0.0
        %5542 = vmatpush1.msra.mxu0 %v759
        %5543 = vmatprep.subr.mxu0 0.0
        %5544 = vmatpush1.msra.mxu0 %v760
        %5545 = vmatprep.subr.mxu0 0.0
        %5546 = vmatpush1.msra.mxu0 %v761
        %5547 = vmatprep.subr.mxu0 0.0
        %5548 = vmatpush1.msra.mxu0 %v762
        %5549 = vmatprep.subr.mxu0 0.0
        %5550 = vmatpush1.msra.mxu0 %v763
        %5551 = vmatprep.subr.mxu0 0.0
        %5552 = vmatpush1.msra.mxu0 %v764
        %5553 = vmatprep.subr.mxu0 0.0
        %5554 = vmatpush1.msra.mxu0 %v765
        %5555 = vmatprep.subr.mxu0 0.0
        %5556 = vmatpush1.msra.mxu0 %v766
        %5557 = vmatprep.subr.mxu0 0.0
        %5558 = vmatpush1.msra.mxu0 %v767
        %5559 = vmatprep.subr.mxu0 0.0
        %5560 = vmatpush1.msra.mxu0 %v768
        %5561 = vmatprep.subr.mxu0 0.0
        %5562 = vmatpush1.msra.mxu0 0.0
        %5563 = vmatprep.subr.mxu0 0.0
        %5564 = vmatpush1.msra.mxu0 0.0
        %5565 = vmatprep.subr.mxu0 0.0
        %5566 = vmatpush1.msra.mxu0 0.0
        %5567 = vmatprep.subr.mxu0 0.0
        %5568 = vmatpush1.msra.mxu0 0.0
        %5569 = vmatprep.subr.mxu0 0.0
        %5570 = vmatpush1.msra.mxu0 0.0
        %5571 = vmatprep.subr.mxu0 0.0
        %5572 = vmatpush1.msra.mxu0 0.0
        %5573 = vmatprep.subr.mxu0 0.0
        %5574 = vmatpush1.msra.mxu0 0.0
        %5575 = vmatprep.subr.mxu0 0.0
        %5576 = vmatpush1.msra.mxu0 0.0
        %5577 = vmatprep.subr.mxu0 0.0
        %5578 = vmatpush1.msra.mxu0 0.0
        %5579 = vmatprep.subr.mxu0 0.0
        %5580 = vmatpush1.msra.mxu0 0.0
        %5581 = vmatprep.subr.mxu0 0.0
        %5582 = vmatpush1.msra.mxu0 0.0
        %5583 = vmatprep.subr.mxu0 0.0
        %5584 = vmatpush1.msra.mxu0 0.0
        %5585 = vmatprep.subr.mxu0 0.0
        %5586 = vmatpush1.msra.mxu0 0.0
        %5587 = vmatprep.subr.mxu0 0.0
        %5588 = vmatpush1.msra.mxu0 0.0
        %5589 = vmatprep.mubr.f32.mxu0 %v5445
        %5590 = vmatmul.mubr.f32.gmra.mrb[0].mxu0 %v5440
        %v5591 = vpop.f32.mrb[0].mxu0
        %v5592 = vadd.f32 0.0, %v5591
        %v5593 = vpop.f32.mrb[0].mxu0
        %5594 = vmatprep.mubr.f32.mxu0 %v5448
        %5595 = vmatmul.mubr.f32.gmra.mrb[0].mxu0 %v5442
        %v5596 = vpop.f32.mrb[0].mxu0
        %v5597 = vadd.f32 0.0, %v5596
        %v5598 = vpop.f32.mrb[0].mxu0
        %5599 = vdwg.mxu0
        %v5600 = vmax.f32 %v5517, %v5592
        %v5601 = vmax.f32 %v5522, %v5597
        %v5604 = vrot.slane %v5600, 1
        %v5605 = vrot.slane %v5601, 1
        %v5606 = vsel %vm829, %v5604, %v5605
        %v5607 = vsel %vm1713, %v5606, 0
        %5609 = vmatprep.subr.mxu0 0.0
        %5610 = vmatpush1.msra.mxu0 %v661
        %5611 = vmatprep.subr.mxu0 0.0
        %5612 = vmatpush1.msra.mxu0 %v662
        %5613 = vmatprep.subr.mxu0 0.0
        %5614 = vmatpush1.msra.mxu0 %v663
        %5615 = vmatprep.subr.mxu0 0.0
        %5616 = vmatpush1.msra.mxu0 %v664
        %5617 = vmatprep.subr.mxu0 0.0
        %5618 = vmatpush1.msra.mxu0 %v665
        %5619 = vmatprep.subr.mxu0 0.0
        %5620 = vmatpush1.msra.mxu0 %v666
        %5621 = vmatprep.subr.mxu0 0.0
        %5622 = vmatpush1.msra.mxu0 %v667
        %5623 = vmatprep.subr.mxu0 0.0
        %5624 = vmatpush1.msra.mxu0 %v668
        %5625 = vmatprep.subr.mxu0 0.0
        %5626 = vmatpush1.msra.mxu0 %v669
        %5627 = vmatprep.subr.mxu0 0.0
        %5628 = vmatpush1.msra.mxu0 0.0
        %5629 = vmatprep.subr.mxu0 0.0
        %5630 = vmatpush1.msra.mxu0 0.0
        %5631 = vmatprep.subr.mxu0 0.0
        %5632 = vmatpush1.msra.mxu0 0.0
        %5633 = vmatprep.subr.mxu0 0.0
        %5634 = vmatpush1.msra.mxu0 0.0
        %5635 = vmatprep.subr.mxu0 0.0
        %5636 = vmatpush1.msra.mxu0 0.0
        %5637 = vmatprep.subr.mxu0 0.0
        %5638 = vmatpush1.msra.mxu0 0.0
        %5639 = vmatprep.subr.mxu0 0.0
        %5640 = vmatpush1.msra.mxu0 0.0
        %5641 = vmatprep.subr.mxu0 0.0
        %5642 = vmatpush1.msra.mxu0 0.0
        %5643 = vmatprep.subr.mxu0 0.0
        %5644 = vmatpush1.msra.mxu0 0.0
        %5645 = vmatprep.subr.mxu0 0.0
        %5646 = vmatpush1.msra.mxu0 0.0
        %5647 = vmatprep.subr.mxu0 0.0
        %5648 = vmatpush1.msra.mxu0 0.0
        %5649 = vmatprep.subr.mxu0 0.0
        %5650 = vmatpush1.msra.mxu0 0.0
        %5651 = vmatprep.subr.mxu0 0.0
        %5652 = vmatpush1.msra.mxu0 0.0
        %5653 = vmatprep.subr.mxu0 0.0
        %5654 = vmatpush1.msra.mxu0 0.0
        %5655 = vmatprep.subr.mxu0 0.0
        %5656 = vmatpush1.msra.mxu0 0.0
        %5657 = vmatprep.subr.mxu0 0.0
        %5658 = vmatpush1.msra.mxu0 0.0
        %5659 = vmatprep.subr.mxu0 0.0
        %5660 = vmatpush1.msra.mxu0 0.0
        %5661 = vmatprep.subr.mxu0 0.0
        %5662 = vmatpush1.msra.mxu0 0.0
        %5663 = vmatprep.subr.mxu0 0.0
        %5664 = vmatpush1.msra.mxu0 0.0
        %5665 = vmatprep.subr.mxu0 0.0
        %5666 = vmatpush1.msra.mxu0 0.0
        %5667 = vmatprep.subr.mxu0 0.0
        %5668 = vmatpush1.msra.mxu0 0.0
        %5669 = vmatprep.subr.mxu0 0.0
        %5670 = vmatpush1.msra.mxu0 0.0
        %5671 = vmatprep.subr.mxu0 0.0
        %5672 = vmatpush1.msra.mxu0 0.0
        %5673 = vmatprep.mubr.f32.mxu0 0.0
        %5674 = vmatmul.mubr.f32.gmra.mrb[0].mxu0 %v5607
        %v5675 = vpop.f32.mrb[0].mxu0
        %v5676 = vadd.f32 0.0, %v5675
        %v5677 = vpop.f32.mrb[0].mxu0
        %5678 = vdwg.mxu0
        %v5679 = vsel %vm1713, %v5600, 0
        %5681 = vmatprep.subr.mxu0 0.0
        %5682 = vmatpush1.msra.mxu0 %v651
        %5683 = vmatprep.subr.mxu0 0.0
        %5684 = vmatpush1.msra.mxu0 %v652
        %5685 = vmatprep.subr.mxu0 0.0
        %5686 = vmatpush1.msra.mxu0 %v653
        %5687 = vmatprep.subr.mxu0 0.0
        %5688 = vmatpush1.msra.mxu0 %v654
        %5689 = vmatprep.subr.mxu0 0.0
        %5690 = vmatpush1.msra.mxu0 %v655
        %5691 = vmatprep.subr.mxu0 0.0
        %5692 = vmatpush1.msra.mxu0 %v656
        %5693 = vmatprep.subr.mxu0 0.0
        %5694 = vmatpush1.msra.mxu0 %v657
        %5695 = vmatprep.subr.mxu0 0.0
        %5696 = vmatpush1.msra.mxu0 %v658
        %5697 = vmatprep.subr.mxu0 0.0
        %5698 = vmatpush1.msra.mxu0 %v659
        %5699 = vmatprep.subr.mxu0 0.0
        %5700 = vmatpush1.msra.mxu0 0.0
        %5701 = vmatprep.subr.mxu0 0.0
        %5702 = vmatpush1.msra.mxu0 0.0
        %5703 = vmatprep.subr.mxu0 0.0
        %5704 = vmatpush1.msra.mxu0 0.0
        %5705 = vmatprep.subr.mxu0 0.0
        %5706 = vmatpush1.msra.mxu0 0.0
        %5707 = vmatprep.subr.mxu0 0.0
        %5708 = vmatpush1.msra.mxu0 0.0
        %5709 = vmatprep.subr.mxu0 0.0
        %5710 = vmatpush1.msra.mxu0 0.0
        %5711 = vmatprep.subr.mxu0 0.0
        %5712 = vmatpush1.msra.mxu0 0.0
        %5713 = vmatprep.subr.mxu0 0.0
        %5714 = vmatpush1.msra.mxu0 0.0
        %5715 = vmatprep.subr.mxu0 0.0
        %5716 = vmatpush1.msra.mxu0 0.0
        %5717 = vmatprep.subr.mxu0 0.0
        %5718 = vmatpush1.msra.mxu0 0.0
        %5719 = vmatprep.subr.mxu0 0.0
        %5720 = vmatpush1.msra.mxu0 0.0
        %5721 = vmatprep.subr.mxu0 0.0
        %5722 = vmatpush1.msra.mxu0 0.0
        %5723 = vmatprep.subr.mxu0 0.0
        %5724 = vmatpush1.msra.mxu0 0.0
        %5725 = vmatprep.subr.mxu0 0.0
        %5726 = vmatpush1.msra.mxu0 0.0
        %5727 = vmatprep.subr.mxu0 0.0
        %5728 = vmatpush1.msra.mxu0 0.0
        %5729 = vmatprep.subr.mxu0 0.0
        %5730 = vmatpush1.msra.mxu0 0.0
        %5731 = vmatprep.subr.mxu0 0.0
        %5732 = vmatpush1.msra.mxu0 0.0
        %5733 = vmatprep.subr.mxu0 0.0
        %5734 = vmatpush1.msra.mxu0 0.0
        %5735 = vmatprep.subr.mxu0 0.0
        %5736 = vmatpush1.msra.mxu0 0.0
        %5737 = vmatprep.subr.mxu0 0.0
        %5738 = vmatpush1.msra.mxu0 0.0
        %5739 = vmatprep.subr.mxu0 0.0
        %5740 = vmatpush1.msra.mxu0 0.0
        %5741 = vmatprep.subr.mxu0 0.0
        %5742 = vmatpush1.msra.mxu0 0.0
        %5743 = vmatprep.subr.mxu0 0.0
        %5744 = vmatpush1.msra.mxu0 0.0
        %5745 = vmatprep.mubr.f32.mxu0 0.0
        %5746 = vmatmul.mubr.f32.gmra.mrb[0].mxu0 %v5679
        %v5747 = vpop.f32.mrb[0].mxu0
        %v5748 = vadd.f32 %v5676, %v5747
        %v5749 = vpop.f32.mrb[0].mxu0
        %5750 = vdwg.mxu0
        %v5751 = vrot.slane %v5600, 2
        %v5752 = vrot.slane %v5601, 2
        %v5753 = vsel %vm1029, %v5751, %v5752
        %v5754 = vsel %vm1713, %v5753, 0
        %5756 = vmatprep.subr.mxu0 0.0
        %5757 = vmatpush1.msra.mxu0 %v671
        %5758 = vmatprep.subr.mxu0 0.0
        %5759 = vmatpush1.msra.mxu0 %v672
        %5760 = vmatprep.subr.mxu0 0.0
        %5761 = vmatpush1.msra.mxu0 %v673
        %5762 = vmatprep.subr.mxu0 0.0
        %5763 = vmatpush1.msra.mxu0 %v674
        %5764 = vmatprep.subr.mxu0 0.0
        %5765 = vmatpush1.msra.mxu0 %v675
        %5766 = vmatprep.subr.mxu0 0.0
        %5767 = vmatpush1.msra.mxu0 %v676
        %5768 = vmatprep.subr.mxu0 0.0
        %5769 = vmatpush1.msra.mxu0 %v677
        %5770 = vmatprep.subr.mxu0 0.0
        %5771 = vmatpush1.msra.mxu0 %v678
        %5772 = vmatprep.subr.mxu0 0.0
        %5773 = vmatpush1.msra.mxu0 %v679
        %5774 = vmatprep.subr.mxu0 0.0
        %5775 = vmatpush1.msra.mxu0 0.0
        %5776 = vmatprep.subr.mxu0 0.0
        %5777 = vmatpush1.msra.mxu0 0.0
        %5778 = vmatprep.subr.mxu0 0.0
        %5779 = vmatpush1.msra.mxu0 0.0
        %5780 = vmatprep.subr.mxu0 0.0
        %5781 = vmatpush1.msra.mxu0 0.0
        %5782 = vmatprep.subr.mxu0 0.0
        %5783 = vmatpush1.msra.mxu0 0.0
        %5784 = vmatprep.subr.mxu0 0.0
        %5785 = vmatpush1.msra.mxu0 0.0
        %5786 = vmatprep.subr.mxu0 0.0
        %5787 = vmatpush1.msra.mxu0 0.0
        %5788 = vmatprep.subr.mxu0 0.0
        %5789 = vmatpush1.msra.mxu0 0.0
        %5790 = vmatprep.subr.mxu0 0.0
        %5791 = vmatpush1.msra.mxu0 0.0
        %5792 = vmatprep.subr.mxu0 0.0
        %5793 = vmatpush1.msra.mxu0 0.0
        %5794 = vmatprep.subr.mxu0 0.0
        %5795 = vmatpush1.msra.mxu0 0.0
        %5796 = vmatprep.subr.mxu0 0.0
        %5797 = vmatpush1.msra.mxu0 0.0
        %5798 = vmatprep.subr.mxu0 0.0
        %5799 = vmatpush1.msra.mxu0 0.0
        %5800 = vmatprep.subr.mxu0 0.0
        %5801 = vmatpush1.msra.mxu0 0.0
        %5802 = vmatprep.subr.mxu0 0.0
        %5803 = vmatpush1.msra.mxu0 0.0
        %5804 = vmatprep.subr.mxu0 0.0
        %5805 = vmatpush1.msra.mxu0 0.0
        %5806 = vmatprep.subr.mxu0 0.0
        %5807 = vmatpush1.msra.mxu0 0.0
        %5808 = vmatprep.subr.mxu0 0.0
        %5809 = vmatpush1.msra.mxu0 0.0
        %5810 = vmatprep.subr.mxu0 0.0
        %5811 = vmatpush1.msra.mxu0 0.0
        %5812 = vmatprep.subr.mxu0 0.0
        %5813 = vmatpush1.msra.mxu0 0.0
        %5814 = vmatprep.subr.mxu0 0.0
        %5815 = vmatpush1.msra.mxu0 0.0
        %5816 = vmatprep.subr.mxu0 0.0
        %5817 = vmatpush1.msra.mxu0 0.0
        %5818 = vmatprep.subr.mxu0 0.0
        %5819 = vmatpush1.msra.mxu0 0.0
        %5820 = vmatprep.mubr.f32.mxu0 0.0
        %5821 = vmatmul.mubr.f32.gmra.mrb[0].mxu0 %v5754
        %v5822 = vpop.f32.mrb[0].mxu0
        %v5823 = vadd.f32 0.0, %v5822
        %v5824 = vpop.f32.mrb[0].mxu0
        %5825 = vdwg.mxu0
        %v5826 = vadd.f32 %v5748, %v5823
        %v5827 = vrot.slane %v5600, 3
        %v5828 = vrot.slane %v5601, 3
        %v5829 = vsel %vm1138, %v5827, %v5828
        %v5830 = vsel %vm1713, %v5829, 0
        %5832 = vmatprep.subr.mxu0 0.0
        %5833 = vmatpush1.msra.mxu0 %v681
        %5834 = vmatprep.subr.mxu0 0.0
        %5835 = vmatpush1.msra.mxu0 %v682
        %5836 = vmatprep.subr.mxu0 0.0
        %5837 = vmatpush1.msra.mxu0 %v683
        %5838 = vmatprep.subr.mxu0 0.0
        %5839 = vmatpush1.msra.mxu0 %v684
        %5840 = vmatprep.subr.mxu0 0.0
        %5841 = vmatpush1.msra.mxu0 %v685
        %5842 = vmatprep.subr.mxu0 0.0
        %5843 = vmatpush1.msra.mxu0 %v686
        %5844 = vmatprep.subr.mxu0 0.0
        %5845 = vmatpush1.msra.mxu0 %v687
        %5846 = vmatprep.subr.mxu0 0.0
        %5847 = vmatpush1.msra.mxu0 %v688
        %5848 = vmatprep.subr.mxu0 0.0
        %5849 = vmatpush1.msra.mxu0 %v689
        %5850 = vmatprep.subr.mxu0 0.0
        %5851 = vmatpush1.msra.mxu0 0.0
        %5852 = vmatprep.subr.mxu0 0.0
        %5853 = vmatpush1.msra.mxu0 0.0
        %5854 = vmatprep.subr.mxu0 0.0
        %5855 = vmatpush1.msra.mxu0 0.0
        %5856 = vmatprep.subr.mxu0 0.0
        %5857 = vmatpush1.msra.mxu0 0.0
        %5858 = vmatprep.subr.mxu0 0.0
        %5859 = vmatpush1.msra.mxu0 0.0
        %5860 = vmatprep.subr.mxu0 0.0
        %5861 = vmatpush1.msra.mxu0 0.0
        %5862 = vmatprep.subr.mxu0 0.0
        %5863 = vmatpush1.msra.mxu0 0.0
        %5864 = vmatprep.subr.mxu0 0.0
        %5865 = vmatpush1.msra.mxu0 0.0
        %5866 = vmatprep.subr.mxu0 0.0
        %5867 = vmatpush1.msra.mxu0 0.0
        %5868 = vmatprep.subr.mxu0 0.0
        %5869 = vmatpush1.msra.mxu0 0.0
        %5870 = vmatprep.subr.mxu0 0.0
        %5871 = vmatpush1.msra.mxu0 0.0
        %5872 = vmatprep.subr.mxu0 0.0
        %5873 = vmatpush1.msra.mxu0 0.0
        %5874 = vmatprep.subr.mxu0 0.0
        %5875 = vmatpush1.msra.mxu0 0.0
        %5876 = vmatprep.subr.mxu0 0.0
        %5877 = vmatpush1.msra.mxu0 0.0
        %5878 = vmatprep.subr.mxu0 0.0
        %5879 = vmatpush1.msra.mxu0 0.0
        %5880 = vmatprep.subr.mxu0 0.0
        %5881 = vmatpush1.msra.mxu0 0.0
        %5882 = vmatprep.subr.mxu0 0.0
        %5883 = vmatpush1.msra.mxu0 0.0
        %5884 = vmatprep.subr.mxu0 0.0
        %5885 = vmatpush1.msra.mxu0 0.0
        %5886 = vmatprep.subr.mxu0 0.0
        %5887 = vmatpush1.msra.mxu0 0.0
        %5888 = vmatprep.subr.mxu0 0.0
        %5889 = vmatpush1.msra.mxu0 0.0
        %5890 = vmatprep.subr.mxu0 0.0
        %5891 = vmatpush1.msra.mxu0 0.0
        %5892 = vmatprep.subr.mxu0 0.0
        %5893 = vmatpush1.msra.mxu0 0.0
        %5894 = vmatprep.subr.mxu0 0.0
        %5895 = vmatpush1.msra.mxu0 0.0
        %5896 = vmatprep.mubr.f32.mxu0 0.0
        %5897 = vmatmul.mubr.f32.gmra.mrb[0].mxu0 %v5830
        %v5898 = vpop.f32.mrb[0].mxu0
        %v5899 = vadd.f32 0.0, %v5898
        %v5900 = vpop.f32.mrb[0].mxu0
        %5901 = vdwg.mxu0
        %v5902 = vadd.f32 %v5826, %v5899
        %v5903 = vrot.slane %v5600, 4
        %v5904 = vrot.slane %v5601, 4
        %v5905 = vsel %vm844, %v5903, %v5904
        %v5906 = vsel %vm1713, %v5905, 0
        %5908 = vmatprep.subr.mxu0 0.0
        %5909 = vmatpush1.msra.mxu0 %v691
        %5910 = vmatprep.subr.mxu0 0.0
        %5911 = vmatpush1.msra.mxu0 %v692
        %5912 = vmatprep.subr.mxu0 0.0
        %5913 = vmatpush1.msra.mxu0 %v693
        %5914 = vmatprep.subr.mxu0 0.0
        %5915 = vmatpush1.msra.mxu0 %v694
        %5916 = vmatprep.subr.mxu0 0.0
        %5917 = vmatpush1.msra.mxu0 %v695
        %5918 = vmatprep.subr.mxu0 0.0
        %5919 = vmatpush1.msra.mxu0 %v696
        %5920 = vmatprep.subr.mxu0 0.0
        %5921 = vmatpush1.msra.mxu0 %v697
        %5922 = vmatprep.subr.mxu0 0.0
        %5923 = vmatpush1.msra.mxu0 %v698
        %5924 = vmatprep.subr.mxu0 0.0
        %5925 = vmatpush1.msra.mxu0 %v699
        %5926 = vmatprep.subr.mxu0 0.0
        %5927 = vmatpush1.msra.mxu0 0.0
        %5928 = vmatprep.subr.mxu0 0.0
        %5929 = vmatpush1.msra.mxu0 0.0
        %5930 = vmatprep.subr.mxu0 0.0
        %5931 = vmatpush1.msra.mxu0 0.0
        %5932 = vmatprep.subr.mxu0 0.0
        %5933 = vmatpush1.msra.mxu0 0.0
        %5934 = vmatprep.subr.mxu0 0.0
        %5935 = vmatpush1.msra.mxu0 0.0
        %5936 = vmatprep.subr.mxu0 0.0
        %5937 = vmatpush1.msra.mxu0 0.0
        %5938 = vmatprep.subr.mxu0 0.0
        %5939 = vmatpush1.msra.mxu0 0.0
        %5940 = vmatprep.subr.mxu0 0.0
        %5941 = vmatpush1.msra.mxu0 0.0
        %5942 = vmatprep.subr.mxu0 0.0
        %5943 = vmatpush1.msra.mxu0 0.0
        %5944 = vmatprep.subr.mxu0 0.0
        %5945 = vmatpush1.msra.mxu0 0.0
        %5946 = vmatprep.subr.mxu0 0.0
        %5947 = vmatpush1.msra.mxu0 0.0
        %5948 = vmatprep.subr.mxu0 0.0
        %5949 = vmatpush1.msra.mxu0 0.0
        %5950 = vmatprep.subr.mxu0 0.0
        %5951 = vmatpush1.msra.mxu0 0.0
        %5952 = vmatprep.subr.mxu0 0.0
        %5953 = vmatpush1.msra.mxu0 0.0
        %5954 = vmatprep.subr.mxu0 0.0
        %5955 = vmatpush1.msra.mxu0 0.0
        %5956 = vmatprep.subr.mxu0 0.0
        %5957 = vmatpush1.msra.mxu0 0.0
        %5958 = vmatprep.subr.mxu0 0.0
        %5959 = vmatpush1.msra.mxu0 0.0
        %5960 = vmatprep.subr.mxu0 0.0
        %5961 = vmatpush1.msra.mxu0 0.0
        %5962 = vmatprep.subr.mxu0 0.0
        %5963 = vmatpush1.msra.mxu0 0.0
        %5964 = vmatprep.subr.mxu0 0.0
        %5965 = vmatpush1.msra.mxu0 0.0
        %5966 = vmatprep.subr.mxu0 0.0
        %5967 = vmatpush1.msra.mxu0 0.0
        %5968 = vmatprep.subr.mxu0 0.0
        %5969 = vmatpush1.msra.mxu0 0.0
        %5970 = vmatprep.subr.mxu0 0.0
        %5971 = vmatpush1.msra.mxu0 0.0
        %5972 = vmatprep.mubr.f32.mxu0 0.0
        %5973 = vmatmul.mubr.f32.gmra.mrb[0].mxu0 %v5906
        %v5974 = vpop.f32.mrb[0].mxu0
        %v5975 = vadd.f32 0.0, %v5974
        %v5976 = vpop.f32.mrb[0].mxu0
        %5977 = vdwg.mxu0
        %v5978 = vadd.f32 %v5902, %v5975
        %v5979 = vadd.f32 %v5978, %v2090
        %v5980 = vmax.f32 %v5979, 0.0
        %5981 = vmatprep.subr.mxu0 0.0
        %5982 = vmatpush1.msra.mxu0 %v5980
        %5983 = vmatprep.subr.mxu0 0.0
        %5984 = vmatpush1.msra.mxu0 0.0
        %5985 = vmatprep.subr.mxu0 0.0
        %5986 = vmatpush1.msra.mxu0 0.0
        %5987 = vmatprep.subr.mxu0 0.0
        %5988 = vmatpush1.msra.mxu0 0.0
        %5989 = vmatprep.subr.mxu0 0.0
        %5990 = vmatpush1.msra.mxu0 0.0
        %5991 = vmatprep.subr.mxu0 0.0
        %5992 = vmatpush1.msra.mxu0 0.0
        %5993 = vmatprep.subr.mxu0 0.0
        %5994 = vmatpush1.msra.mxu0 0.0
        %5995 = vmatprep.subr.mxu0 0.0
        %5996 = vmatpush1.msra.mxu0 0.0
        %5997 = vmatprep.subr.mxu0 0.0
        %5998 = vmatpush1.msra.mxu0 0.0
        %5999 = vmatprep.subr.mxu0 0.0
        %6000 = vmatpush1.msra.mxu0 0.0
        %6001 = vmatprep.subr.mxu0 0.0
        %6002 = vmatpush1.msra.mxu0 0.0
        %6003 = vmatprep.subr.mxu0 0.0
        %6004 = vmatpush1.msra.mxu0 0.0
        %6005 = vmatprep.subr.mxu0 0.0
        %6006 = vmatpush1.msra.mxu0 0.0
        %6007 = vmatprep.subr.mxu0 0.0
        %6008 = vmatpush1.msra.mxu0 0.0
        %6009 = vmatprep.subr.mxu0 0.0
        %6010 = vmatpush1.msra.mxu0 0.0
        %6011 = vmatprep.subr.mxu0 0.0
        %6012 = vmatpush1.msra.mxu0 0.0
        %6013 = vmatprep.subr.mxu0 0.0
        %6014 = vmatpush1.msra.mxu0 0.0
        %6015 = vmatprep.subr.mxu0 0.0
        %6016 = vmatpush1.msra.mxu0 0.0
        %6017 = vmatprep.subr.mxu0 0.0
        %6018 = vmatpush1.msra.mxu0 0.0
        %6019 = vmatprep.subr.mxu0 0.0
        %6020 = vmatpush1.msra.mxu0 0.0
        %6021 = vmatprep.subr.mxu0 0.0
        %6022 = vmatpush1.msra.mxu0 0.0
        %6023 = vmatprep.subr.mxu0 0.0
        %6024 = vmatpush1.msra.mxu0 0.0
        %6025 = vmatprep.subr.mxu0 0.0
        %6026 = vmatpush1.msra.mxu0 0.0
        %6027 = vmatprep.subr.mxu0 0.0
        %6028 = vmatpush1.msra.mxu0 0.0
        %6029 = vmatprep.subr.mxu0 0.0
        %6030 = vmatpush1.msra.mxu0 0.0
        %6031 = vmatprep.subr.mxu0 0.0
        %6032 = vmatpush1.msra.mxu0 0.0
        %6033 = vmatprep.subr.mxu0 0.0
        %6034 = vmatpush1.msra.mxu0 0.0
        %6035 = vmatprep.subr.mxu0 0.0
        %6036 = vmatpush1.msra.mxu0 0.0
        %6037 = vmatprep.subr.mxu0 0.0
        %6038 = vmatpush1.msra.mxu0 0.0
        %6039 = vmatprep.subr.mxu0 0.0
        %6040 = vmatpush1.msra.mxu0 0.0
        %6041 = vmatprep.subr.mxu0 0.0
        %6042 = vmatpush1.msra.mxu0 0.0
        %6043 = vmatprep.subr.mxu0 0.0
        %6044 = vmatpush1.msra.mxu0 0.0
        %6045 = vmatprep.mubr.f32.mxu0 0.0
        %6046 = vmatmul.mubr.f32.gmra.mrb[0].mxu0 %v2096
        %v6047 = vpop.f32.mrb[0].mxu0
        %v6048 = vadd.f32 0.0, %v6047
        %v6049 = vpop.f32.mrb[0].mxu0
        %6050 = vdwg.mxu0
        %6051 = vmatprep.subr.mxu0 0.0
        %6052 = vmatpush1.msra.mxu0 %v5980
        %6053 = vmatprep.subr.mxu0 0.0
        %6054 = vmatpush1.msra.mxu0 0.0
        %6055 = vmatprep.subr.mxu0 0.0
        %6056 = vmatpush1.msra.mxu0 0.0
        %6057 = vmatprep.subr.mxu0 0.0
        %6058 = vmatpush1.msra.mxu0 0.0
        %6059 = vmatprep.subr.mxu0 0.0
        %6060 = vmatpush1.msra.mxu0 0.0
        %6061 = vmatprep.subr.mxu0 0.0
        %6062 = vmatpush1.msra.mxu0 0.0
        %6063 = vmatprep.subr.mxu0 0.0
        %6064 = vmatpush1.msra.mxu0 0.0
        %6065 = vmatprep.subr.mxu0 0.0
        %6066 = vmatpush1.msra.mxu0 0.0
        %6067 = vmatprep.subr.mxu0 0.0
        %6068 = vmatpush1.msra.mxu0 0.0
        %6069 = vmatprep.subr.mxu0 0.0
        %6070 = vmatpush1.msra.mxu0 0.0
        %6071 = vmatprep.subr.mxu0 0.0
        %6072 = vmatpush1.msra.mxu0 0.0
        %6073 = vmatprep.subr.mxu0 0.0
        %6074 = vmatpush1.msra.mxu0 0.0
        %6075 = vmatprep.subr.mxu0 0.0
        %6076 = vmatpush1.msra.mxu0 0.0
        %6077 = vmatprep.subr.mxu0 0.0
        %6078 = vmatpush1.msra.mxu0 0.0
        %6079 = vmatprep.subr.mxu0 0.0
        %6080 = vmatpush1.msra.mxu0 0.0
        %6081 = vmatprep.subr.mxu0 0.0
        %6082 = vmatpush1.msra.mxu0 0.0
        %6083 = vmatprep.subr.mxu0 0.0
        %6084 = vmatpush1.msra.mxu0 0.0
        %6085 = vmatprep.subr.mxu0 0.0
        %6086 = vmatpush1.msra.mxu0 0.0
        %6087 = vmatprep.subr.mxu0 0.0
        %6088 = vmatpush1.msra.mxu0 0.0
        %6089 = vmatprep.subr.mxu0 0.0
        %6090 = vmatpush1.msra.mxu0 0.0
        %6091 = vmatprep.subr.mxu0 0.0
        %6092 = vmatpush1.msra.mxu0 0.0
        %6093 = vmatprep.subr.mxu0 0.0
        %6094 = vmatpush1.msra.mxu0 0.0
        %6095 = vmatprep.subr.mxu0 0.0
        %6096 = vmatpush1.msra.mxu0 0.0
        %6097 = vmatprep.subr.mxu0 0.0
        %6098 = vmatpush1.msra.mxu0 0.0
        %6099 = vmatprep.subr.mxu0 0.0
        %6100 = vmatpush1.msra.mxu0 0.0
        %6101 = vmatprep.subr.mxu0 0.0
        %6102 = vmatpush1.msra.mxu0 0.0
        %6103 = vmatprep.subr.mxu0 0.0
        %6104 = vmatpush1.msra.mxu0 0.0
        %6105 = vmatprep.subr.mxu0 0.0
        %6106 = vmatpush1.msra.mxu0 0.0
        %6107 = vmatprep.subr.mxu0 0.0
        %6108 = vmatpush1.msra.mxu0 0.0
        %6109 = vmatprep.subr.mxu0 0.0
        %6110 = vmatpush1.msra.mxu0 0.0
        %6111 = vmatprep.subr.mxu0 0.0
        %6112 = vmatpush1.msra.mxu0 0.0
        %6113 = vmatprep.subr.mxu0 0.0
        %6114 = vmatpush1.msra.mxu0 0.0
        %6115 = vmatprep.mubr.f32.mxu0 0.0
        %6116 = vmatmul.mubr.f32.gmra.mrb[0].mxu0 %v2169
        %v6117 = vpop.f32.mrb[0].mxu0
        %v6118 = vadd.f32 0.0, %v6117
        %v6119 = vpop.f32.mrb[0].mxu0
        %6120 = vdwg.mxu0
        %v6121 = vmax.f32 %v6048, %v6118
        %v6123 = vsel %vm2242, %v6121, 0
        %6125 = vmatprep.subr.mxu0 0.0
        %6126 = vmatpush1.msra.mxu0 %v771
        %6127 = vmatprep.subr.mxu0 0.0
        %6128 = vmatpush1.msra.mxu0 %v772
        %6129 = vmatprep.subr.mxu0 0.0
        %6130 = vmatpush1.msra.mxu0 %v773
        %6131 = vmatprep.subr.mxu0 0.0
        %6132 = vmatpush1.msra.mxu0 %v774
        %6133 = vmatprep.subr.mxu0 0.0
        %6134 = vmatpush1.msra.mxu0 %v775
        %6135 = vmatprep.subr.mxu0 0.0
        %6136 = vmatpush1.msra.mxu0 %v776
        %6137 = vmatprep.subr.mxu0 0.0
        %6138 = vmatpush1.msra.mxu0 %v777
        %6139 = vmatprep.subr.mxu0 0.0
        %6140 = vmatpush1.msra.mxu0 %v778
        %6141 = vmatprep.subr.mxu0 0.0
        %6142 = vmatpush1.msra.mxu0 %v779
        %6143 = vmatprep.subr.mxu0 0.0
        %6144 = vmatpush1.msra.mxu0 %v780
        %6145 = vmatprep.subr.mxu0 0.0
        %6146 = vmatpush1.msra.mxu0 %v781
        %6147 = vmatprep.subr.mxu0 0.0
        %6148 = vmatpush1.msra.mxu0 %v782
        %6149 = vmatprep.subr.mxu0 0.0
        %6150 = vmatpush1.msra.mxu0 0.0
        %6151 = vmatprep.subr.mxu0 0.0
        %6152 = vmatpush1.msra.mxu0 0.0
        %6153 = vmatprep.subr.mxu0 0.0
        %6154 = vmatpush1.msra.mxu0 0.0
        %6155 = vmatprep.subr.mxu0 0.0
        %6156 = vmatpush1.msra.mxu0 0.0
        %6157 = vmatprep.subr.mxu0 0.0
        %6158 = vmatpush1.msra.mxu0 0.0
        %6159 = vmatprep.subr.mxu0 0.0
        %6160 = vmatpush1.msra.mxu0 0.0
        %6161 = vmatprep.subr.mxu0 0.0
        %6162 = vmatpush1.msra.mxu0 0.0
        %6163 = vmatprep.subr.mxu0 0.0
        %6164 = vmatpush1.msra.mxu0 0.0
        %6165 = vmatprep.subr.mxu0 0.0
        %6166 = vmatpush1.msra.mxu0 0.0
        %6167 = vmatprep.subr.mxu0 0.0
        %6168 = vmatpush1.msra.mxu0 0.0
        %6169 = vmatprep.subr.mxu0 0.0
        %6170 = vmatpush1.msra.mxu0 0.0
        %6171 = vmatprep.subr.mxu0 0.0
        %6172 = vmatpush1.msra.mxu0 0.0
        %6173 = vmatprep.subr.mxu0 0.0
        %6174 = vmatpush1.msra.mxu0 0.0
        %6175 = vmatprep.subr.mxu0 0.0
        %6176 = vmatpush1.msra.mxu0 0.0
        %6177 = vmatprep.subr.mxu0 0.0
        %6178 = vmatpush1.msra.mxu0 0.0
        %6179 = vmatprep.subr.mxu0 0.0
        %6180 = vmatpush1.msra.mxu0 0.0
        %6181 = vmatprep.subr.mxu0 0.0
        %6182 = vmatpush1.msra.mxu0 0.0
        %6183 = vmatprep.subr.mxu0 0.0
        %6184 = vmatpush1.msra.mxu0 0.0
        %6185 = vmatprep.subr.mxu0 0.0
        %6186 = vmatpush1.msra.mxu0 0.0
        %6187 = vmatprep.subr.mxu0 0.0
        %6188 = vmatpush1.msra.mxu0 0.0
        %6189 = vmatprep.mubr.f32.mxu0 0.0
        %6190 = vmatmul.mubr.f32.gmra.mrb[0].mxu0 %v6123
        %v6191 = vpop.f32.mrb[0].mxu0
        %v6192 = vadd.f32 0.0, %v6191
        %v6193 = vpop.f32.mrb[0].mxu0
        %6194 = vdwg.mxu0
        %6195 = vmatprep.subr.mxu0 0.0
        %6196 = vmatpush1.msra.mxu0 %v783
        %6197 = vmatprep.subr.mxu0 0.0
        %6198 = vmatpush1.msra.mxu0 %v784
        %6199 = vmatprep.subr.mxu0 0.0
        %6200 = vmatpush1.msra.mxu0 %v785
        %6201 = vmatprep.subr.mxu0 0.0
        %6202 = vmatpush1.msra.mxu0 %v786
        %6203 = vmatprep.subr.mxu0 0.0
        %6204 = vmatpush1.msra.mxu0 %v787
        %6205 = vmatprep.subr.mxu0 0.0
        %6206 = vmatpush1.msra.mxu0 %v788
        %6207 = vmatprep.subr.mxu0 0.0
        %6208 = vmatpush1.msra.mxu0 %v789
        %6209 = vmatprep.subr.mxu0 0.0
        %6210 = vmatpush1.msra.mxu0 %v790
        %6211 = vmatprep.subr.mxu0 0.0
        %6212 = vmatpush1.msra.mxu0 %v791
        %6213 = vmatprep.subr.mxu0 0.0
        %6214 = vmatpush1.msra.mxu0 %v792
        %6215 = vmatprep.subr.mxu0 0.0
        %6216 = vmatpush1.msra.mxu0 %v793
        %6217 = vmatprep.subr.mxu0 0.0
        %6218 = vmatpush1.msra.mxu0 %v794
        %6219 = vmatprep.subr.mxu0 0.0
        %6220 = vmatpush1.msra.mxu0 0.0
        %6221 = vmatprep.subr.mxu0 0.0
        %6222 = vmatpush1.msra.mxu0 0.0
        %6223 = vmatprep.subr.mxu0 0.0
        %6224 = vmatpush1.msra.mxu0 0.0
        %6225 = vmatprep.subr.mxu0 0.0
        %6226 = vmatpush1.msra.mxu0 0.0
        %6227 = vmatprep.subr.mxu0 0.0
        %6228 = vmatpush1.msra.mxu0 0.0
        %6229 = vmatprep.subr.mxu0 0.0
        %6230 = vmatpush1.msra.mxu0 0.0
        %6231 = vmatprep.subr.mxu0 0.0
        %6232 = vmatpush1.msra.mxu0 0.0
        %6233 = vmatprep.subr.mxu0 0.0
        %6234 = vmatpush1.msra.mxu0 0.0
        %6235 = vmatprep.subr.mxu0 0.0
        %6236 = vmatpush1.msra.mxu0 0.0
        %6237 = vmatprep.subr.mxu0 0.0
        %6238 = vmatpush1.msra.mxu0 0.0
        %6239 = vmatprep.subr.mxu0 0.0
        %6240 = vmatpush1.msra.mxu0 0.0
        %6241 = vmatprep.subr.mxu0 0.0
        %6242 = vmatpush1.msra.mxu0 0.0
        %6243 = vmatprep.subr.mxu0 0.0
        %6244 = vmatpush1.msra.mxu0 0.0
        %6245 = vmatprep.subr.mxu0 0.0
        %6246 = vmatpush1.msra.mxu0 0.0
        %6247 = vmatprep.subr.mxu0 0.0
        %6248 = vmatpush1.msra.mxu0 0.0
        %6249 = vmatprep.subr.mxu0 0.0
        %6250 = vmatpush1.msra.mxu0 0.0
        %6251 = vmatprep.subr.mxu0 0.0
        %6252 = vmatpush1.msra.mxu0 0.0
        %6253 = vmatprep.subr.mxu0 0.0
        %6254 = vmatpush1.msra.mxu0 0.0
        %6255 = vmatprep.subr.mxu0 0.0
        %6256 = vmatpush1.msra.mxu0 0.0
        %6257 = vmatprep.subr.mxu0 0.0
        %6258 = vmatpush1.msra.mxu0 0.0
        %6259 = vmatprep.mubr.f32.mxu0 0.0
        %6260 = vmatmul.mubr.f32.gmra.mrb[0].mxu0 %v6123
        %v6261 = vpop.f32.mrb[0].mxu0
        %v6262 = vadd.f32 0.0, %v6261
        %v6263 = vpop.f32.mrb[0].mxu0
        %6264 = vdwg.mxu0
        %v6265 = vmax.f32 %v6192, %v6262
        %v6267 = vrot.slane %v6265, 1
        %v6268 = vsel %vm2389, %v6267, 0
        %6270 = vmatprep.subr.mxu0 0.0
        %6271 = vmatpush1.msra.mxu0 %v707
        %6272 = vmatprep.subr.mxu0 0.0
        %6273 = vmatpush1.msra.mxu0 %v708
        %6274 = vmatprep.subr.mxu0 0.0
        %6275 = vmatpush1.msra.mxu0 %v709
        %6276 = vmatprep.subr.mxu0 0.0
        %6277 = vmatpush1.msra.mxu0 %v710
        %6278 = vmatprep.subr.mxu0 0.0
        %6279 = vmatpush1.msra.mxu0 %v711
        %6280 = vmatprep.subr.mxu0 0.0
        %6281 = vmatpush1.msra.mxu0 %v712
        %6282 = vmatprep.subr.mxu0 0.0
        %6283 = vmatpush1.msra.mxu0 0.0
        %6284 = vmatprep.subr.mxu0 0.0
        %6285 = vmatpush1.msra.mxu0 0.0
        %6286 = vmatprep.subr.mxu0 0.0
        %6287 = vmatpush1.msra.mxu0 0.0
        %6288 = vmatprep.subr.mxu0 0.0
        %6289 = vmatpush1.msra.mxu0 0.0
        %6290 = vmatprep.subr.mxu0 0.0
        %6291 = vmatpush1.msra.mxu0 0.0
        %6292 = vmatprep.subr.mxu0 0.0
        %6293 = vmatpush1.msra.mxu0 0.0
        %6294 = vmatprep.subr.mxu0 0.0
        %6295 = vmatpush1.msra.mxu0 0.0
        %6296 = vmatprep.subr.mxu0 0.0
        %6297 = vmatpush1.msra.mxu0 0.0
        %6298 = vmatprep.subr.mxu0 0.0
        %6299 = vmatpush1.msra.mxu0 0.0
        %6300 = vmatprep.subr.mxu0 0.0
        %6301 = vmatpush1.msra.mxu0 0.0
        %6302 = vmatprep.subr.mxu0 0.0
        %6303 = vmatpush1.msra.mxu0 0.0
        %6304 = vmatprep.subr.mxu0 0.0
        %6305 = vmatpush1.msra.mxu0 0.0
        %6306 = vmatprep.subr.mxu0 0.0
        %6307 = vmatpush1.msra.mxu0 0.0
        %6308 = vmatprep.subr.mxu0 0.0
        %6309 = vmatpush1.msra.mxu0 0.0
        %6310 = vmatprep.subr.mxu0 0.0
        %6311 = vmatpush1.msra.mxu0 0.0
        %6312 = vmatprep.subr.mxu0 0.0
        %6313 = vmatpush1.msra.mxu0 0.0
        %6314 = vmatprep.subr.mxu0 0.0
        %6315 = vmatpush1.msra.mxu0 0.0
        %6316 = vmatprep.subr.mxu0 0.0
        %6317 = vmatpush1.msra.mxu0 0.0
        %6318 = vmatprep.subr.mxu0 0.0
        %6319 = vmatpush1.msra.mxu0 0.0
        %6320 = vmatprep.subr.mxu0 0.0
        %6321 = vmatpush1.msra.mxu0 0.0
        %6322 = vmatprep.subr.mxu0 0.0
        %6323 = vmatpush1.msra.mxu0 0.0
        %6324 = vmatprep.subr.mxu0 0.0
        %6325 = vmatpush1.msra.mxu0 0.0
        %6326 = vmatprep.subr.mxu0 0.0
        %6327 = vmatpush1.msra.mxu0 0.0
        %6328 = vmatprep.subr.mxu0 0.0
        %6329 = vmatpush1.msra.mxu0 0.0
        %6330 = vmatprep.subr.mxu0 0.0
        %6331 = vmatpush1.msra.mxu0 0.0
        %6332 = vmatprep.subr.mxu0 0.0
        %6333 = vmatpush1.msra.mxu0 0.0
        %6334 = vmatprep.mubr.f32.mxu0 0.0
        %6335 = vmatmul.mubr.f32.gmra.mrb[0].mxu0 %v6268
        %v6336 = vpop.f32.mrb[0].mxu0
        %v6337 = vadd.f32 0.0, %v6336
        %v6338 = vpop.f32.mrb[0].mxu0
        %6339 = vdwg.mxu0
        %v6340 = vsel %vm2389, %v6265, 0
        %6342 = vmatprep.subr.mxu0 0.0
        %6343 = vmatpush1.msra.mxu0 %v700
        %6344 = vmatprep.subr.mxu0 0.0
        %6345 = vmatpush1.msra.mxu0 %v701
        %6346 = vmatprep.subr.mxu0 0.0
        %6347 = vmatpush1.msra.mxu0 %v702
        %6348 = vmatprep.subr.mxu0 0.0
        %6349 = vmatpush1.msra.mxu0 %v703
        %6350 = vmatprep.subr.mxu0 0.0
        %6351 = vmatpush1.msra.mxu0 %v704
        %6352 = vmatprep.subr.mxu0 0.0
        %6353 = vmatpush1.msra.mxu0 %v705
        %6354 = vmatprep.subr.mxu0 0.0
        %6355 = vmatpush1.msra.mxu0 0.0
        %6356 = vmatprep.subr.mxu0 0.0
        %6357 = vmatpush1.msra.mxu0 0.0
        %6358 = vmatprep.subr.mxu0 0.0
        %6359 = vmatpush1.msra.mxu0 0.0
        %6360 = vmatprep.subr.mxu0 0.0
        %6361 = vmatpush1.msra.mxu0 0.0
        %6362 = vmatprep.subr.mxu0 0.0
        %6363 = vmatpush1.msra.mxu0 0.0
        %6364 = vmatprep.subr.mxu0 0.0
        %6365 = vmatpush1.msra.mxu0 0.0
        %6366 = vmatprep.subr.mxu0 0.0
        %6367 = vmatpush1.msra.mxu0 0.0
        %6368 = vmatprep.subr.mxu0 0.0
        %6369 = vmatpush1.msra.mxu0 0.0
        %6370 = vmatprep.subr.mxu0 0.0
        %6371 = vmatpush1.msra.mxu0 0.0
        %6372 = vmatprep.subr.mxu0 0.0
        %6373 = vmatpush1.msra.mxu0 0.0
        %6374 = vmatprep.subr.mxu0 0.0
        %6375 = vmatpush1.msra.mxu0 0.0
        %6376 = vmatprep.subr.mxu0 0.0
        %6377 = vmatpush1.msra.mxu0 0.0
        %6378 = vmatprep.subr.mxu0 0.0
        %6379 = vmatpush1.msra.mxu0 0.0
        %6380 = vmatprep.subr.mxu0 0.0
        %6381 = vmatpush1.msra.mxu0 0.0
        %6382 = vmatprep.subr.mxu0 0.0
        %6383 = vmatpush1.msra.mxu0 0.0
        %6384 = vmatprep.subr.mxu0 0.0
        %6385 = vmatpush1.msra.mxu0 0.0
        %6386 = vmatprep.subr.mxu0 0.0
        %6387 = vmatpush1.msra.mxu0 0.0
        %6388 = vmatprep.subr.mxu0 0.0
        %6389 = vmatpush1.msra.mxu0 0.0
        %6390 = vmatprep.subr.mxu0 0.0
        %6391 = vmatpush1.msra.mxu0 0.0
        %6392 = vmatprep.subr.mxu0 0.0
        %6393 = vmatpush1.msra.mxu0 0.0
        %6394 = vmatprep.subr.mxu0 0.0
        %6395 = vmatpush1.msra.mxu0 0.0
        %6396 = vmatprep.subr.mxu0 0.0
        %6397 = vmatpush1.msra.mxu0 0.0
        %6398 = vmatprep.subr.mxu0 0.0
        %6399 = vmatpush1.msra.mxu0 0.0
        %6400 = vmatprep.subr.mxu0 0.0
        %6401 = vmatpush1.msra.mxu0 0.0
        %6402 = vmatprep.subr.mxu0 0.0
        %6403 = vmatpush1.msra.mxu0 0.0
        %6404 = vmatprep.subr.mxu0 0.0
        %6405 = vmatpush1.msra.mxu0 0.0
        %6406 = vmatprep.mubr.f32.mxu0 0.0
        %6407 = vmatmul.mubr.f32.gmra.mrb[0].mxu0 %v6340
        %v6408 = vpop.f32.mrb[0].mxu0
        %v6409 = vadd.f32 %v6337, %v6408
        %v6410 = vpop.f32.mrb[0].mxu0
        %6411 = vdwg.mxu0
        %v6412 = vrot.slane %v6265, 2
        %v6413 = vsel %vm2389, %v6412, 0
        %6415 = vmatprep.subr.mxu0 0.0
        %6416 = vmatpush1.msra.mxu0 %v714
        %6417 = vmatprep.subr.mxu0 0.0
        %6418 = vmatpush1.msra.mxu0 %v715
        %6419 = vmatprep.subr.mxu0 0.0
        %6420 = vmatpush1.msra.mxu0 %v716
        %6421 = vmatprep.subr.mxu0 0.0
        %6422 = vmatpush1.msra.mxu0 %v717
        %6423 = vmatprep.subr.mxu0 0.0
        %6424 = vmatpush1.msra.mxu0 %v718
        %6425 = vmatprep.subr.mxu0 0.0
        %6426 = vmatpush1.msra.mxu0 %v719
        %6427 = vmatprep.subr.mxu0 0.0
        %6428 = vmatpush1.msra.mxu0 0.0
        %6429 = vmatprep.subr.mxu0 0.0
        %6430 = vmatpush1.msra.mxu0 0.0
        %6431 = vmatprep.subr.mxu0 0.0
        %6432 = vmatpush1.msra.mxu0 0.0
        %6433 = vmatprep.subr.mxu0 0.0
        %6434 = vmatpush1.msra.mxu0 0.0
        %6435 = vmatprep.subr.mxu0 0.0
        %6436 = vmatpush1.msra.mxu0 0.0
        %6437 = vmatprep.subr.mxu0 0.0
        %6438 = vmatpush1.msra.mxu0 0.0
        %6439 = vmatprep.subr.mxu0 0.0
        %6440 = vmatpush1.msra.mxu0 0.0
        %6441 = vmatprep.subr.mxu0 0.0
        %6442 = vmatpush1.msra.mxu0 0.0
        %6443 = vmatprep.subr.mxu0 0.0
        %6444 = vmatpush1.msra.mxu0 0.0
        %6445 = vmatprep.subr.mxu0 0.0
        %6446 = vmatpush1.msra.mxu0 0.0
        %6447 = vmatprep.subr.mxu0 0.0
        %6448 = vmatpush1.msra.mxu0 0.0
        %6449 = vmatprep.subr.mxu0 0.0
        %6450 = vmatpush1.msra.mxu0 0.0
        %6451 = vmatprep.subr.mxu0 0.0
        %6452 = vmatpush1.msra.mxu0 0.0
        %6453 = vmatprep.subr.mxu0 0.0
        %6454 = vmatpush1.msra.mxu0 0.0
        %6455 = vmatprep.subr.mxu0 0.0
        %6456 = vmatpush1.msra.mxu0 0.0
        %6457 = vmatprep.subr.mxu0 0.0
        %6458 = vmatpush1.msra.mxu0 0.0
        %6459 = vmatprep.subr.mxu0 0.0
        %6460 = vmatpush1.msra.mxu0 0.0
        %6461 = vmatprep.subr.mxu0 0.0
        %6462 = vmatpush1.msra.mxu0 0.0
        %6463 = vmatprep.subr.mxu0 0.0
        %6464 = vmatpush1.msra.mxu0 0.0
        %6465 = vmatprep.subr.mxu0 0.0
        %6466 = vmatpush1.msra.mxu0 0.0
        %6467 = vmatprep.subr.mxu0 0.0
        %6468 = vmatpush1.msra.mxu0 0.0
        %6469 = vmatprep.subr.mxu0 0.0
        %6470 = vmatpush1.msra.mxu0 0.0
        %6471 = vmatprep.subr.mxu0 0.0
        %6472 = vmatpush1.msra.mxu0 0.0
        %6473 = vmatprep.subr.mxu0 0.0
        %6474 = vmatpush1.msra.mxu0 0.0
        %6475 = vmatprep.subr.mxu0 0.0
        %6476 = vmatpush1.msra.mxu0 0.0
        %6477 = vmatprep.subr.mxu0 0.0
        %6478 = vmatpush1.msra.mxu0 0.0
        %6479 = vmatprep.mubr.f32.mxu0 0.0
        %6480 = vmatmul.mubr.f32.gmra.mrb[0].mxu0 %v6413
        %v6481 = vpop.f32.mrb[0].mxu0
        %v6482 = vadd.f32 0.0, %v6481
        %v6483 = vpop.f32.mrb[0].mxu0
        %6484 = vdwg.mxu0
        %v6485 = vadd.f32 %v6409, %v6482
        %v6486 = vrot.slane %v6265, 3
        %v6487 = vsel %vm2389, %v6486, 0
        %6489 = vmatprep.subr.mxu0 0.0
        %6490 = vmatpush1.msra.mxu0 %v721
        %6491 = vmatprep.subr.mxu0 0.0
        %6492 = vmatpush1.msra.mxu0 %v722
        %6493 = vmatprep.subr.mxu0 0.0
        %6494 = vmatpush1.msra.mxu0 %v723
        %6495 = vmatprep.subr.mxu0 0.0
        %6496 = vmatpush1.msra.mxu0 %v724
        %6497 = vmatprep.subr.mxu0 0.0
        %6498 = vmatpush1.msra.mxu0 %v725
        %6499 = vmatprep.subr.mxu0 0.0
        %6500 = vmatpush1.msra.mxu0 %v726
        %6501 = vmatprep.subr.mxu0 0.0
        %6502 = vmatpush1.msra.mxu0 0.0
        %6503 = vmatprep.subr.mxu0 0.0
        %6504 = vmatpush1.msra.mxu0 0.0
        %6505 = vmatprep.subr.mxu0 0.0
        %6506 = vmatpush1.msra.mxu0 0.0
        %6507 = vmatprep.subr.mxu0 0.0
        %6508 = vmatpush1.msra.mxu0 0.0
        %6509 = vmatprep.subr.mxu0 0.0
        %6510 = vmatpush1.msra.mxu0 0.0
        %6511 = vmatprep.subr.mxu0 0.0
        %6512 = vmatpush1.msra.mxu0 0.0
        %6513 = vmatprep.subr.mxu0 0.0
        %6514 = vmatpush1.msra.mxu0 0.0
        %6515 = vmatprep.subr.mxu0 0.0
        %6516 = vmatpush1.msra.mxu0 0.0
        %6517 = vmatprep.subr.mxu0 0.0
        %6518 = vmatpush1.msra.mxu0 0.0
        %6519 = vmatprep.subr.mxu0 0.0
        %6520 = vmatpush1.msra.mxu0 0.0
        %6521 = vmatprep.subr.mxu0 0.0
        %6522 = vmatpush1.msra.mxu0 0.0
        %6523 = vmatprep.subr.mxu0 0.0
        %6524 = vmatpush1.msra.mxu0 0.0
        %6525 = vmatprep.subr.mxu0 0.0
        %6526 = vmatpush1.msra.mxu0 0.0
        %6527 = vmatprep.subr.mxu0 0.0
        %6528 = vmatpush1.msra.mxu0 0.0
        %6529 = vmatprep.subr.mxu0 0.0
        %6530 = vmatpush1.msra.mxu0 0.0
        %6531 = vmatprep.subr.mxu0 0.0
        %6532 = vmatpush1.msra.mxu0 0.0
        %6533 = vmatprep.subr.mxu0 0.0
        %6534 = vmatpush1.msra.mxu0 0.0
        %6535 = vmatprep.subr.mxu0 0.0
        %6536 = vmatpush1.msra.mxu0 0.0
        %6537 = vmatprep.subr.mxu0 0.0
        %6538 = vmatpush1.msra.mxu0 0.0
        %6539 = vmatprep.subr.mxu0 0.0
        %6540 = vmatpush1.msra.mxu0 0.0
        %6541 = vmatprep.subr.mxu0 0.0
        %6542 = vmatpush1.msra.mxu0 0.0
        %6543 = vmatprep.subr.mxu0 0.0
        %6544 = vmatpush1.msra.mxu0 0.0
        %6545 = vmatprep.subr.mxu0 0.0
        %6546 = vmatpush1.msra.mxu0 0.0
        %6547 = vmatprep.subr.mxu0 0.0
        %6548 = vmatpush1.msra.mxu0 0.0
        %6549 = vmatprep.subr.mxu0 0.0
        %6550 = vmatpush1.msra.mxu0 0.0
        %6551 = vmatprep.subr.mxu0 0.0
        %6552 = vmatpush1.msra.mxu0 0.0
        %6553 = vmatprep.mubr.f32.mxu0 0.0
        %6554 = vmatmul.mubr.f32.gmra.mrb[0].mxu0 %v6487
        %v6555 = vpop.f32.mrb[0].mxu0
        %v6556 = vadd.f32 0.0, %v6555
        %v6557 = vpop.f32.mrb[0].mxu0
        %6558 = vdwg.mxu0
        %v6559 = vadd.f32 %v6485, %v6556
        %v6560 = vadd.f32 %v6559, %v795
        %v6561 = vmax.f32 %v6560, 0.0
        %v6563 = vsel %vm2684, %v6561, 0
        %6565 = vmatprep.subr.mxu0 0.0
        %6566 = vmatpush1.msra.mxu0 %v796
        %6567 = vmatprep.subr.mxu0 0.0
        %6568 = vmatpush1.msra.mxu0 %v797
        %6569 = vmatprep.subr.mxu0 0.0
        %6570 = vmatpush1.msra.mxu0 %v798
        %6571 = vmatprep.subr.mxu0 0.0
        %6572 = vmatpush1.msra.mxu0 %v799
        %6573 = vmatprep.subr.mxu0 0.0
        %6574 = vmatpush1.msra.mxu0 %v800
        %6575 = vmatprep.subr.mxu0 0.0
        %6576 = vmatpush1.msra.mxu0 %v801
        %6577 = vmatprep.subr.mxu0 0.0
        %6578 = vmatpush1.msra.mxu0 %v802
        %6579 = vmatprep.subr.mxu0 0.0
        %6580 = vmatpush1.msra.mxu0 %v803
        %6581 = vmatprep.subr.mxu0 0.0
        %6582 = vmatpush1.msra.mxu0 %v804
        %6583 = vmatprep.subr.mxu0 0.0
        %6584 = vmatpush1.msra.mxu0 %v805
        %6585 = vmatprep.subr.mxu0 0.0
        %6586 = vmatpush1.msra.mxu0 %v806
        %6587 = vmatprep.subr.mxu0 0.0
        %6588 = vmatpush1.msra.mxu0 %v807
        %6589 = vmatprep.subr.mxu0 0.0
        %6590 = vmatpush1.msra.mxu0 %v808
        %6591 = vmatprep.subr.mxu0 0.0
        %6592 = vmatpush1.msra.mxu0 %v809
        %6593 = vmatprep.subr.mxu0 0.0
        %6594 = vmatpush1.msra.mxu0 %v810
        %6595 = vmatprep.subr.mxu0 0.0
        %6596 = vmatpush1.msra.mxu0 0.0
        %6597 = vmatprep.subr.mxu0 0.0
        %6598 = vmatpush1.msra.mxu0 0.0
        %6599 = vmatprep.subr.mxu0 0.0
        %6600 = vmatpush1.msra.mxu0 0.0
        %6601 = vmatprep.subr.mxu0 0.0
        %6602 = vmatpush1.msra.mxu0 0.0
        %6603 = vmatprep.subr.mxu0 0.0
        %6604 = vmatpush1.msra.mxu0 0.0
        %6605 = vmatprep.subr.mxu0 0.0
        %6606 = vmatpush1.msra.mxu0 0.0
        %6607 = vmatprep.subr.mxu0 0.0
        %6608 = vmatpush1.msra.mxu0 0.0
        %6609 = vmatprep.subr.mxu0 0.0
        %6610 = vmatpush1.msra.mxu0 0.0
        %6611 = vmatprep.subr.mxu0 0.0
        %6612 = vmatpush1.msra.mxu0 0.0
        %6613 = vmatprep.subr.mxu0 0.0
        %6614 = vmatpush1.msra.mxu0 0.0
        %6615 = vmatprep.subr.mxu0 0.0
        %6616 = vmatpush1.msra.mxu0 0.0
        %6617 = vmatprep.subr.mxu0 0.0
        %6618 = vmatpush1.msra.mxu0 0.0
        %6619 = vmatprep.subr.mxu0 0.0
        %6620 = vmatpush1.msra.mxu0 0.0
        %6621 = vmatprep.subr.mxu0 0.0
        %6622 = vmatpush1.msra.mxu0 0.0
        %6623 = vmatprep.subr.mxu0 0.0
        %6624 = vmatpush1.msra.mxu0 0.0
        %6625 = vmatprep.subr.mxu0 0.0
        %6626 = vmatpush1.msra.mxu0 0.0
        %6627 = vmatprep.subr.mxu0 0.0
        %6628 = vmatpush1.msra.mxu0 0.0
        %6629 = vmatprep.mubr.f32.mxu0 0.0
        %6630 = vmatmul.mubr.f32.gmra.mrb[0].mxu0 %v6563
        %v6631 = vpop.f32.mrb[0].mxu0
        %v6632 = vadd.f32 %v811, %v6631
        %v6633 = vpop.f32.mrb[0].mxu0
        %6634 = vdwg.mxu0
        %v6635 = vmax.f32 %v6632, 0.0
        %v6637 = vsel %vm2759, %v6635, 0
        %6639 = vmatprep.subr.mxu0 0.0
        %6640 = vmatpush1.msra.mxu0 %v812
        %6641 = vmatprep.subr.mxu0 0.0
        %6642 = vmatpush1.msra.mxu0 %v813
        %6643 = vmatprep.subr.mxu0 0.0
        %6644 = vmatpush1.msra.mxu0 %v814
        %6645 = vmatprep.subr.mxu0 0.0
        %6646 = vmatpush1.msra.mxu0 %v815
        %6647 = vmatprep.subr.mxu0 0.0
        %6648 = vmatpush1.msra.mxu0 %v816
        %6649 = vmatprep.subr.mxu0 0.0
        %6650 = vmatpush1.msra.mxu0 %v817
        %6651 = vmatprep.subr.mxu0 0.0
        %6652 = vmatpush1.msra.mxu0 %v818
        %6653 = vmatprep.subr.mxu0 0.0
        %6654 = vmatpush1.msra.mxu0 %v2764
        %6655 = vmatprep.subr.mxu0 0.0
        %6656 = vmatpush1.msra.mxu0 0.0
        %6657 = vmatprep.subr.mxu0 0.0
        %6658 = vmatpush1.msra.mxu0 0.0
        %6659 = vmatprep.subr.mxu0 0.0
        %6660 = vmatpush1.msra.mxu0 0.0
        %6661 = vmatprep.subr.mxu0 0.0
        %6662 = vmatpush1.msra.mxu0 0.0
        %6663 = vmatprep.subr.mxu0 0.0
        %6664 = vmatpush1.msra.mxu0 0.0
        %6665 = vmatprep.subr.mxu0 0.0
        %6666 = vmatpush1.msra.mxu0 0.0
        %6667 = vmatprep.subr.mxu0 0.0
        %6668 = vmatpush1.msra.mxu0 0.0
        %6669 = vmatprep.subr.mxu0 0.0
        %6670 = vmatpush1.msra.mxu0 0.0
        %6671 = vmatprep.subr.mxu0 0.0
        %6672 = vmatpush1.msra.mxu0 0.0
        %6673 = vmatprep.subr.mxu0 0.0
        %6674 = vmatpush1.msra.mxu0 0.0
        %6675 = vmatprep.subr.mxu0 0.0
        %6676 = vmatpush1.msra.mxu0 0.0
        %6677 = vmatprep.subr.mxu0 0.0
        %6678 = vmatpush1.msra.mxu0 0.0
        %6679 = vmatprep.subr.mxu0 0.0
        %6680 = vmatpush1.msra.mxu0 0.0
        %6681 = vmatprep.subr.mxu0 0.0
        %6682 = vmatpush1.msra.mxu0 0.0
        %6683 = vmatprep.subr.mxu0 0.0
        %6684 = vmatpush1.msra.mxu0 0.0
        %6685 = vmatprep.subr.mxu0 0.0
        %6686 = vmatpush1.msra.mxu0 0.0
        %6687 = vmatprep.subr.mxu0 0.0
        %6688 = vmatpush1.msra.mxu0 0.0
        %6689 = vmatprep.subr.mxu0 0.0
        %6690 = vmatpush1.msra.mxu0 0.0
        %6691 = vmatprep.subr.mxu0 0.0
        %6692 = vmatpush1.msra.mxu0 0.0
        %6693 = vmatprep.subr.mxu0 0.0
        %6694 = vmatpush1.msra.mxu0 0.0
        %6695 = vmatprep.subr.mxu0 0.0
        %6696 = vmatpush1.msra.mxu0 0.0
        %6697 = vmatprep.subr.mxu0 0.0
        %6698 = vmatpush1.msra.mxu0 0.0
        %6699 = vmatprep.subr.mxu0 0.0
        %6700 = vmatpush1.msra.mxu0 0.0
        %6701 = vmatprep.subr.mxu0 0.0
        %6702 = vmatpush1.msra.mxu0 0.0
        %6703 = vmatprep.mubr.f32.mxu0 0.0
        %6704 = vmatmul.mubr.f32.gmra.mrb[0].mxu0 %v6637
        %v6705 = vpop.f32.mrb[0].mxu0
        %v6706 = vadd.f32 %v820, %v6705
        %v6707 = vpop.f32.mrb[0].mxu0
        %6708 = vdwg.mxu0
        %s6709 = scalar_lea.vmem %s598, 2 [#allocation2]
        %6710 = vst [vmem:[%s6709] sm:$0x1] %v6706
        %s6711 = scalar_lea.vmem %s604, 96
        %v6712 = vld [vmem:[%s6711] sm:$0xff]
        %v6713 = vld [vmem:[%s6711 + $0x8] sm:$0xff]
        %v6714 = vld [vmem:[%s6711 + $0x10] sm:$0xff]
        %v6715 = vld [vmem:[%s6711 + $0x18] sm:$0xf]
        %v6720 = vrot.slane %v6712, 1
        %v6721 = vrot.slane %v6713, 1
        %v6722 = vsel %vm829, %v6720, %v6721
        %v6723 = vrot.slane %v6714, 1
        %v6724 = vsel %vm829, %v6721, %v6723
        %v6725 = vrot.slane %v6715, 1
        %v6726 = vsel %vm829, %v6723, %v6725
        %v6727 = vsel %vm837, %v6722, 0
        %v6729 = vsel %vm837, %v6724, 0
        %v6731 = vsel %vm837, %v6726, 0
        %6733 = vmatprep.subr.mxu0 %v617
        %6734 = vmatpush1.msra.mxu0 %v616
        %6735 = vmatprep.subr.mxu0 %v619
        %6736 = vmatpush1.msra.mxu0 %v618
        %6737 = vmatprep.subr.mxu0 %v621
        %6738 = vmatpush1.msra.mxu0 %v620
        %6739 = vmatprep.subr.mxu0 %v849
        %6740 = vmatpush1.msra.mxu0 %v846
        %6741 = vmatprep.subr.mxu0 0.0
        %6742 = vmatpush1.msra.mxu0 0.0
        %6743 = vmatprep.subr.mxu0 0.0
        %6744 = vmatpush1.msra.mxu0 0.0
        %6745 = vmatprep.subr.mxu0 0.0
        %6746 = vmatpush1.msra.mxu0 0.0
        %6747 = vmatprep.subr.mxu0 0.0
        %6748 = vmatpush1.msra.mxu0 0.0
        %6749 = vmatprep.subr.mxu0 0.0
        %6750 = vmatpush1.msra.mxu0 0.0
        %6751 = vmatprep.subr.mxu0 0.0
        %6752 = vmatpush1.msra.mxu0 0.0
        %6753 = vmatprep.subr.mxu0 0.0
        %6754 = vmatpush1.msra.mxu0 0.0
        %6755 = vmatprep.subr.mxu0 0.0
        %6756 = vmatpush1.msra.mxu0 0.0
        %6757 = vmatprep.subr.mxu0 0.0
        %6758 = vmatpush1.msra.mxu0 0.0
        %6759 = vmatprep.subr.mxu0 0.0
        %6760 = vmatpush1.msra.mxu0 0.0
        %6761 = vmatprep.subr.mxu0 0.0
        %6762 = vmatpush1.msra.mxu0 0.0
        %6763 = vmatprep.subr.mxu0 0.0
        %6764 = vmatpush1.msra.mxu0 0.0
        %6765 = vmatprep.subr.mxu0 0.0
        %6766 = vmatpush1.msra.mxu0 0.0
        %6767 = vmatprep.subr.mxu0 0.0
        %6768 = vmatpush1.msra.mxu0 0.0
        %6769 = vmatprep.subr.mxu0 0.0
        %6770 = vmatpush1.msra.mxu0 0.0
        %6771 = vmatprep.subr.mxu0 0.0
        %6772 = vmatpush1.msra.mxu0 0.0
        %6773 = vmatprep.subr.mxu0 0.0
        %6774 = vmatpush1.msra.mxu0 0.0
        %6775 = vmatprep.subr.mxu0 0.0
        %6776 = vmatpush1.msra.mxu0 0.0
        %6777 = vmatprep.subr.mxu0 0.0
        %6778 = vmatpush1.msra.mxu0 0.0
        %6779 = vmatprep.subr.mxu0 0.0
        %6780 = vmatpush1.msra.mxu0 0.0
        %6781 = vmatprep.subr.mxu0 0.0
        %6782 = vmatpush1.msra.mxu0 0.0
        %6783 = vmatprep.subr.mxu0 0.0
        %6784 = vmatpush1.msra.mxu0 0.0
        %6785 = vmatprep.subr.mxu0 0.0
        %6786 = vmatpush1.msra.mxu0 0.0
        %6787 = vmatprep.subr.mxu0 0.0
        %6788 = vmatpush1.msra.mxu0 0.0
        %6789 = vmatprep.subr.mxu0 0.0
        %6790 = vmatpush1.msra.mxu0 0.0
        %6791 = vmatprep.subr.mxu0 0.0
        %6792 = vmatpush1.msra.mxu0 0.0
        %6793 = vmatprep.subr.mxu0 0.0
        %6794 = vmatpush1.msra.mxu0 0.0
        %6795 = vmatprep.subr.mxu0 0.0
        %6796 = vmatpush1.msra.mxu0 0.0
        %6797 = vmatprep.mubr.f32.mxu0 0.0
        %6798 = vmatmul.mubr.f32.gmra.mrb[0].mxu0 %v6727
        %v6799 = vpop.f32.mrb[0].mxu0
        %v6800 = vadd.f32 0.0, %v6799
        %v6801 = vpop.f32.mrb[0].mxu0
        %v6802 = vadd.f32 0.0, %v6801
        %6803 = vmatprep.mubr.f32.mxu0 0.0
        %6804 = vmatmul.mubr.f32.gmra.mrb[0].mxu0 %v6729
        %v6805 = vpop.f32.mrb[0].mxu0
        %v6806 = vadd.f32 0.0, %v6805
        %v6807 = vpop.f32.mrb[0].mxu0
        %v6808 = vadd.f32 0.0, %v6807
        %6809 = vmatprep.mubr.f32.mxu0 0.0
        %6810 = vmatmul.mubr.f32.gmra.mrb[0].mxu0 %v6731
        %v6811 = vpop.f32.mrb[0].mxu0
        %v6812 = vadd.f32 0.0, %v6811
        %v6813 = vpop.f32.mrb[0].mxu0
        %v6814 = vadd.f32 0.0, %v6813
        %6815 = vdwg.mxu0
        %v6816 = vsel %vm837, %v6712, 0
        %v6818 = vsel %vm837, %v6713, 0
        %v6820 = vsel %vm837, %v6714, 0
        %6822 = vmatprep.subr.mxu0 %v608
        %6823 = vmatpush1.msra.mxu0 %v607
        %6824 = vmatprep.subr.mxu0 %v610
        %6825 = vmatpush1.msra.mxu0 %v609
        %6826 = vmatprep.subr.mxu0 %v612
        %6827 = vmatpush1.msra.mxu0 %v611
        %6828 = vmatprep.subr.mxu0 %v944
        %6829 = vmatpush1.msra.mxu0 %v941
        %6830 = vmatprep.subr.mxu0 0.0
        %6831 = vmatpush1.msra.mxu0 0.0
        %6832 = vmatprep.subr.mxu0 0.0
        %6833 = vmatpush1.msra.mxu0 0.0
        %6834 = vmatprep.subr.mxu0 0.0
        %6835 = vmatpush1.msra.mxu0 0.0
        %6836 = vmatprep.subr.mxu0 0.0
        %6837 = vmatpush1.msra.mxu0 0.0
        %6838 = vmatprep.subr.mxu0 0.0
        %6839 = vmatpush1.msra.mxu0 0.0
        %6840 = vmatprep.subr.mxu0 0.0
        %6841 = vmatpush1.msra.mxu0 0.0
        %6842 = vmatprep.subr.mxu0 0.0
        %6843 = vmatpush1.msra.mxu0 0.0
        %6844 = vmatprep.subr.mxu0 0.0
        %6845 = vmatpush1.msra.mxu0 0.0
        %6846 = vmatprep.subr.mxu0 0.0
        %6847 = vmatpush1.msra.mxu0 0.0
        %6848 = vmatprep.subr.mxu0 0.0
        %6849 = vmatpush1.msra.mxu0 0.0
        %6850 = vmatprep.subr.mxu0 0.0
        %6851 = vmatpush1.msra.mxu0 0.0
        %6852 = vmatprep.subr.mxu0 0.0
        %6853 = vmatpush1.msra.mxu0 0.0
        %6854 = vmatprep.subr.mxu0 0.0
        %6855 = vmatpush1.msra.mxu0 0.0
        %6856 = vmatprep.subr.mxu0 0.0
        %6857 = vmatpush1.msra.mxu0 0.0
        %6858 = vmatprep.subr.mxu0 0.0
        %6859 = vmatpush1.msra.mxu0 0.0
        %6860 = vmatprep.subr.mxu0 0.0
        %6861 = vmatpush1.msra.mxu0 0.0
        %6862 = vmatprep.subr.mxu0 0.0
        %6863 = vmatpush1.msra.mxu0 0.0
        %6864 = vmatprep.subr.mxu0 0.0
        %6865 = vmatpush1.msra.mxu0 0.0
        %6866 = vmatprep.subr.mxu0 0.0
        %6867 = vmatpush1.msra.mxu0 0.0
        %6868 = vmatprep.subr.mxu0 0.0
        %6869 = vmatpush1.msra.mxu0 0.0
        %6870 = vmatprep.subr.mxu0 0.0
        %6871 = vmatpush1.msra.mxu0 0.0
        %6872 = vmatprep.subr.mxu0 0.0
        %6873 = vmatpush1.msra.mxu0 0.0
        %6874 = vmatprep.subr.mxu0 0.0
        %6875 = vmatpush1.msra.mxu0 0.0
        %6876 = vmatprep.subr.mxu0 0.0
        %6877 = vmatpush1.msra.mxu0 0.0
        %6878 = vmatprep.subr.mxu0 0.0
        %6879 = vmatpush1.msra.mxu0 0.0
        %6880 = vmatprep.subr.mxu0 0.0
        %6881 = vmatpush1.msra.mxu0 0.0
        %6882 = vmatprep.subr.mxu0 0.0
        %6883 = vmatpush1.msra.mxu0 0.0
        %6884 = vmatprep.subr.mxu0 0.0
        %6885 = vmatpush1.msra.mxu0 0.0
        %6886 = vmatprep.mubr.f32.mxu0 0.0
        %6887 = vmatmul.mubr.f32.gmra.mrb[0].mxu0 %v6816
        %v6888 = vpop.f32.mrb[0].mxu0
        %v6889 = vadd.f32 %v6800, %v6888
        %v6890 = vpop.f32.mrb[0].mxu0
        %v6891 = vadd.f32 %v6802, %v6890
        %6892 = vmatprep.mubr.f32.mxu0 0.0
        %6893 = vmatmul.mubr.f32.gmra.mrb[0].mxu0 %v6818
        %v6894 = vpop.f32.mrb[0].mxu0
        %v6895 = vadd.f32 %v6806, %v6894
        %v6896 = vpop.f32.mrb[0].mxu0
        %v6897 = vadd.f32 %v6808, %v6896
        %6898 = vmatprep.mubr.f32.mxu0 0.0
        %6899 = vmatmul.mubr.f32.gmra.mrb[0].mxu0 %v6820
        %v6900 = vpop.f32.mrb[0].mxu0
        %v6901 = vadd.f32 %v6812, %v6900
        %v6902 = vpop.f32.mrb[0].mxu0
        %v6903 = vadd.f32 %v6814, %v6902
        %6904 = vdwg.mxu0
        %v6905 = vrot.slane %v6712, 2
        %v6906 = vrot.slane %v6713, 2
        %v6907 = vsel %vm1029, %v6905, %v6906
        %v6908 = vrot.slane %v6714, 2
        %v6909 = vsel %vm1029, %v6906, %v6908
        %v6910 = vrot.slane %v6715, 2
        %v6911 = vsel %vm1029, %v6908, %v6910
        %v6912 = vsel %vm837, %v6907, 0
        %v6914 = vsel %vm837, %v6909, 0
        %v6916 = vsel %vm837, %v6911, 0
        %6918 = vmatprep.subr.mxu0 %v626
        %6919 = vmatpush1.msra.mxu0 %v625
        %6920 = vmatprep.subr.mxu0 %v628
        %6921 = vmatpush1.msra.mxu0 %v627
        %6922 = vmatprep.subr.mxu0 %v630
        %6923 = vmatpush1.msra.mxu0 %v629
        %6924 = vmatprep.subr.mxu0 %v1047
        %6925 = vmatpush1.msra.mxu0 %v1044
        %6926 = vmatprep.subr.mxu0 0.0
        %6927 = vmatpush1.msra.mxu0 0.0
        %6928 = vmatprep.subr.mxu0 0.0
        %6929 = vmatpush1.msra.mxu0 0.0
        %6930 = vmatprep.subr.mxu0 0.0
        %6931 = vmatpush1.msra.mxu0 0.0
        %6932 = vmatprep.subr.mxu0 0.0
        %6933 = vmatpush1.msra.mxu0 0.0
        %6934 = vmatprep.subr.mxu0 0.0
        %6935 = vmatpush1.msra.mxu0 0.0
        %6936 = vmatprep.subr.mxu0 0.0
        %6937 = vmatpush1.msra.mxu0 0.0
        %6938 = vmatprep.subr.mxu0 0.0
        %6939 = vmatpush1.msra.mxu0 0.0
        %6940 = vmatprep.subr.mxu0 0.0
        %6941 = vmatpush1.msra.mxu0 0.0
        %6942 = vmatprep.subr.mxu0 0.0
        %6943 = vmatpush1.msra.mxu0 0.0
        %6944 = vmatprep.subr.mxu0 0.0
        %6945 = vmatpush1.msra.mxu0 0.0
        %6946 = vmatprep.subr.mxu0 0.0
        %6947 = vmatpush1.msra.mxu0 0.0
        %6948 = vmatprep.subr.mxu0 0.0
        %6949 = vmatpush1.msra.mxu0 0.0
        %6950 = vmatprep.subr.mxu0 0.0
        %6951 = vmatpush1.msra.mxu0 0.0
        %6952 = vmatprep.subr.mxu0 0.0
        %6953 = vmatpush1.msra.mxu0 0.0
        %6954 = vmatprep.subr.mxu0 0.0
        %6955 = vmatpush1.msra.mxu0 0.0
        %6956 = vmatprep.subr.mxu0 0.0
        %6957 = vmatpush1.msra.mxu0 0.0
        %6958 = vmatprep.subr.mxu0 0.0
        %6959 = vmatpush1.msra.mxu0 0.0
        %6960 = vmatprep.subr.mxu0 0.0
        %6961 = vmatpush1.msra.mxu0 0.0
        %6962 = vmatprep.subr.mxu0 0.0
        %6963 = vmatpush1.msra.mxu0 0.0
        %6964 = vmatprep.subr.mxu0 0.0
        %6965 = vmatpush1.msra.mxu0 0.0
        %6966 = vmatprep.subr.mxu0 0.0
        %6967 = vmatpush1.msra.mxu0 0.0
        %6968 = vmatprep.subr.mxu0 0.0
        %6969 = vmatpush1.msra.mxu0 0.0
        %6970 = vmatprep.subr.mxu0 0.0
        %6971 = vmatpush1.msra.mxu0 0.0
        %6972 = vmatprep.subr.mxu0 0.0
        %6973 = vmatpush1.msra.mxu0 0.0
        %6974 = vmatprep.subr.mxu0 0.0
        %6975 = vmatpush1.msra.mxu0 0.0
        %6976 = vmatprep.subr.mxu0 0.0
        %6977 = vmatpush1.msra.mxu0 0.0
        %6978 = vmatprep.subr.mxu0 0.0
        %6979 = vmatpush1.msra.mxu0 0.0
        %6980 = vmatprep.subr.mxu0 0.0
        %6981 = vmatpush1.msra.mxu0 0.0
        %6982 = vmatprep.mubr.f32.mxu0 0.0
        %6983 = vmatmul.mubr.f32.gmra.mrb[0].mxu0 %v6912
        %v6984 = vpop.f32.mrb[0].mxu0
        %v6985 = vadd.f32 0.0, %v6984
        %v6986 = vpop.f32.mrb[0].mxu0
        %v6987 = vadd.f32 0.0, %v6986
        %6988 = vmatprep.mubr.f32.mxu0 0.0
        %6989 = vmatmul.mubr.f32.gmra.mrb[0].mxu0 %v6914
        %v6990 = vpop.f32.mrb[0].mxu0
        %v6991 = vadd.f32 0.0, %v6990
        %v6992 = vpop.f32.mrb[0].mxu0
        %v6993 = vadd.f32 0.0, %v6992
        %6994 = vmatprep.mubr.f32.mxu0 0.0
        %6995 = vmatmul.mubr.f32.gmra.mrb[0].mxu0 %v6916
        %v6996 = vpop.f32.mrb[0].mxu0
        %v6997 = vadd.f32 0.0, %v6996
        %v6998 = vpop.f32.mrb[0].mxu0
        %v6999 = vadd.f32 0.0, %v6998
        %7000 = vdwg.mxu0
        %v7001 = vadd.f32 %v6889, %v6985
        %v7002 = vadd.f32 %v6891, %v6987
        %v7003 = vadd.f32 %v6895, %v6991
        %v7004 = vadd.f32 %v6897, %v6993
        %v7005 = vadd.f32 %v6901, %v6997
        %v7006 = vadd.f32 %v6903, %v6999
        %v7007 = vrot.slane %v6712, 3
        %v7008 = vrot.slane %v6713, 3
        %v7009 = vsel %vm1138, %v7007, %v7008
        %v7010 = vrot.slane %v6714, 3
        %v7011 = vsel %vm1138, %v7008, %v7010
        %v7012 = vrot.slane %v6715, 3
        %v7013 = vsel %vm1138, %v7010, %v7012
        %v7014 = vsel %vm837, %v7009, 0
        %v7016 = vsel %vm837, %v7011, 0
        %v7018 = vsel %vm837, %v7013, 0
        %7020 = vmatprep.subr.mxu0 %v635
        %7021 = vmatpush1.msra.mxu0 %v634
        %7022 = vmatprep.subr.mxu0 %v637
        %7023 = vmatpush1.msra.mxu0 %v636
        %7024 = vmatprep.subr.mxu0 %v639
        %7025 = vmatpush1.msra.mxu0 %v638
        %7026 = vmatprep.subr.mxu0 %v1156
        %7027 = vmatpush1.msra.mxu0 %v1153
        %7028 = vmatprep.subr.mxu0 0.0
        %7029 = vmatpush1.msra.mxu0 0.0
        %7030 = vmatprep.subr.mxu0 0.0
        %7031 = vmatpush1.msra.mxu0 0.0
        %7032 = vmatprep.subr.mxu0 0.0
        %7033 = vmatpush1.msra.mxu0 0.0
        %7034 = vmatprep.subr.mxu0 0.0
        %7035 = vmatpush1.msra.mxu0 0.0
        %7036 = vmatprep.subr.mxu0 0.0
        %7037 = vmatpush1.msra.mxu0 0.0
        %7038 = vmatprep.subr.mxu0 0.0
        %7039 = vmatpush1.msra.mxu0 0.0
        %7040 = vmatprep.subr.mxu0 0.0
        %7041 = vmatpush1.msra.mxu0 0.0
        %7042 = vmatprep.subr.mxu0 0.0
        %7043 = vmatpush1.msra.mxu0 0.0
        %7044 = vmatprep.subr.mxu0 0.0
        %7045 = vmatpush1.msra.mxu0 0.0
        %7046 = vmatprep.subr.mxu0 0.0
        %7047 = vmatpush1.msra.mxu0 0.0
        %7048 = vmatprep.subr.mxu0 0.0
        %7049 = vmatpush1.msra.mxu0 0.0
        %7050 = vmatprep.subr.mxu0 0.0
        %7051 = vmatpush1.msra.mxu0 0.0
        %7052 = vmatprep.subr.mxu0 0.0
        %7053 = vmatpush1.msra.mxu0 0.0
        %7054 = vmatprep.subr.mxu0 0.0
        %7055 = vmatpush1.msra.mxu0 0.0
        %7056 = vmatprep.subr.mxu0 0.0
        %7057 = vmatpush1.msra.mxu0 0.0
        %7058 = vmatprep.subr.mxu0 0.0
        %7059 = vmatpush1.msra.mxu0 0.0
        %7060 = vmatprep.subr.mxu0 0.0
        %7061 = vmatpush1.msra.mxu0 0.0
        %7062 = vmatprep.subr.mxu0 0.0
        %7063 = vmatpush1.msra.mxu0 0.0
        %7064 = vmatprep.subr.mxu0 0.0
        %7065 = vmatpush1.msra.mxu0 0.0
        %7066 = vmatprep.subr.mxu0 0.0
        %7067 = vmatpush1.msra.mxu0 0.0
        %7068 = vmatprep.subr.mxu0 0.0
        %7069 = vmatpush1.msra.mxu0 0.0
        %7070 = vmatprep.subr.mxu0 0.0
        %7071 = vmatpush1.msra.mxu0 0.0
        %7072 = vmatprep.subr.mxu0 0.0
        %7073 = vmatpush1.msra.mxu0 0.0
        %7074 = vmatprep.subr.mxu0 0.0
        %7075 = vmatpush1.msra.mxu0 0.0
        %7076 = vmatprep.subr.mxu0 0.0
        %7077 = vmatpush1.msra.mxu0 0.0
        %7078 = vmatprep.subr.mxu0 0.0
        %7079 = vmatpush1.msra.mxu0 0.0
        %7080 = vmatprep.subr.mxu0 0.0
        %7081 = vmatpush1.msra.mxu0 0.0
        %7082 = vmatprep.subr.mxu0 0.0
        %7083 = vmatpush1.msra.mxu0 0.0
        %7084 = vmatprep.mubr.f32.mxu0 0.0
        %7085 = vmatmul.mubr.f32.gmra.mrb[0].mxu0 %v7014
        %v7086 = vpop.f32.mrb[0].mxu0
        %v7087 = vadd.f32 0.0, %v7086
        %v7088 = vpop.f32.mrb[0].mxu0
        %v7089 = vadd.f32 0.0, %v7088
        %7090 = vmatprep.mubr.f32.mxu0 0.0
        %7091 = vmatmul.mubr.f32.gmra.mrb[0].mxu0 %v7016
        %v7092 = vpop.f32.mrb[0].mxu0
        %v7093 = vadd.f32 0.0, %v7092
        %v7094 = vpop.f32.mrb[0].mxu0
        %v7095 = vadd.f32 0.0, %v7094
        %7096 = vmatprep.mubr.f32.mxu0 0.0
        %7097 = vmatmul.mubr.f32.gmra.mrb[0].mxu0 %v7018
        %v7098 = vpop.f32.mrb[0].mxu0
        %v7099 = vadd.f32 0.0, %v7098
        %v7100 = vpop.f32.mrb[0].mxu0
        %v7101 = vadd.f32 0.0, %v7100
        %7102 = vdwg.mxu0
        %v7103 = vadd.f32 %v7001, %v7087
        %v7104 = vadd.f32 %v7002, %v7089
        %v7105 = vadd.f32 %v7003, %v7093
        %v7106 = vadd.f32 %v7004, %v7095
        %v7107 = vadd.f32 %v7005, %v7099
        %v7108 = vadd.f32 %v7006, %v7101
        %v7109 = vrot.slane %v6712, 4
        %v7110 = vrot.slane %v6713, 4
        %v7111 = vsel %vm844, %v7109, %v7110
        %v7112 = vrot.slane %v6714, 4
        %v7113 = vsel %vm844, %v7110, %v7112
        %v7114 = vrot.slane %v6715, 4
        %v7115 = vsel %vm844, %v7112, %v7114
        %v7116 = vsel %vm837, %v7111, 0
        %v7118 = vsel %vm837, %v7113, 0
        %v7120 = vsel %vm837, %v7115, 0
        %7122 = vmatprep.subr.mxu0 %v644
        %7123 = vmatpush1.msra.mxu0 %v643
        %7124 = vmatprep.subr.mxu0 %v646
        %7125 = vmatpush1.msra.mxu0 %v645
        %7126 = vmatprep.subr.mxu0 %v648
        %7127 = vmatpush1.msra.mxu0 %v647
        %7128 = vmatprep.subr.mxu0 %v1264
        %7129 = vmatpush1.msra.mxu0 %v1261
        %7130 = vmatprep.subr.mxu0 0.0
        %7131 = vmatpush1.msra.mxu0 0.0
        %7132 = vmatprep.subr.mxu0 0.0
        %7133 = vmatpush1.msra.mxu0 0.0
        %7134 = vmatprep.subr.mxu0 0.0
        %7135 = vmatpush1.msra.mxu0 0.0
        %7136 = vmatprep.subr.mxu0 0.0
        %7137 = vmatpush1.msra.mxu0 0.0
        %7138 = vmatprep.subr.mxu0 0.0
        %7139 = vmatpush1.msra.mxu0 0.0
        %7140 = vmatprep.subr.mxu0 0.0
        %7141 = vmatpush1.msra.mxu0 0.0
        %7142 = vmatprep.subr.mxu0 0.0
        %7143 = vmatpush1.msra.mxu0 0.0
        %7144 = vmatprep.subr.mxu0 0.0
        %7145 = vmatpush1.msra.mxu0 0.0
        %7146 = vmatprep.subr.mxu0 0.0
        %7147 = vmatpush1.msra.mxu0 0.0
        %7148 = vmatprep.subr.mxu0 0.0
        %7149 = vmatpush1.msra.mxu0 0.0
        %7150 = vmatprep.subr.mxu0 0.0
        %7151 = vmatpush1.msra.mxu0 0.0
        %7152 = vmatprep.subr.mxu0 0.0
        %7153 = vmatpush1.msra.mxu0 0.0
        %7154 = vmatprep.subr.mxu0 0.0
        %7155 = vmatpush1.msra.mxu0 0.0
        %7156 = vmatprep.subr.mxu0 0.0
        %7157 = vmatpush1.msra.mxu0 0.0
        %7158 = vmatprep.subr.mxu0 0.0
        %7159 = vmatpush1.msra.mxu0 0.0
        %7160 = vmatprep.subr.mxu0 0.0
        %7161 = vmatpush1.msra.mxu0 0.0
        %7162 = vmatprep.subr.mxu0 0.0
        %7163 = vmatpush1.msra.mxu0 0.0
        %7164 = vmatprep.subr.mxu0 0.0
        %7165 = vmatpush1.msra.mxu0 0.0
        %7166 = vmatprep.subr.mxu0 0.0
        %7167 = vmatpush1.msra.mxu0 0.0
        %7168 = vmatprep.subr.mxu0 0.0
        %7169 = vmatpush1.msra.mxu0 0.0
        %7170 = vmatprep.subr.mxu0 0.0
        %7171 = vmatpush1.msra.mxu0 0.0
        %7172 = vmatprep.subr.mxu0 0.0
        %7173 = vmatpush1.msra.mxu0 0.0
        %7174 = vmatprep.subr.mxu0 0.0
        %7175 = vmatpush1.msra.mxu0 0.0
        %7176 = vmatprep.subr.mxu0 0.0
        %7177 = vmatpush1.msra.mxu0 0.0
        %7178 = vmatprep.subr.mxu0 0.0
        %7179 = vmatpush1.msra.mxu0 0.0
        %7180 = vmatprep.subr.mxu0 0.0
        %7181 = vmatpush1.msra.mxu0 0.0
        %7182 = vmatprep.subr.mxu0 0.0
        %7183 = vmatpush1.msra.mxu0 0.0
        %7184 = vmatprep.subr.mxu0 0.0
        %7185 = vmatpush1.msra.mxu0 0.0
        %7186 = vmatprep.mubr.f32.mxu0 0.0
        %7187 = vmatmul.mubr.f32.gmra.mrb[0].mxu0 %v7116
        %v7188 = vpop.f32.mrb[0].mxu0
        %v7189 = vadd.f32 0.0, %v7188
        %v7190 = vpop.f32.mrb[0].mxu0
        %v7191 = vadd.f32 0.0, %v7190
        %7192 = vmatprep.mubr.f32.mxu0 0.0
        %7193 = vmatmul.mubr.f32.gmra.mrb[0].mxu0 %v7118
        %v7194 = vpop.f32.mrb[0].mxu0
        %v7195 = vadd.f32 0.0, %v7194
        %v7196 = vpop.f32.mrb[0].mxu0
        %v7197 = vadd.f32 0.0, %v7196
        %7198 = vmatprep.mubr.f32.mxu0 0.0
        %7199 = vmatmul.mubr.f32.gmra.mrb[0].mxu0 %v7120
        %v7200 = vpop.f32.mrb[0].mxu0
        %v7201 = vadd.f32 0.0, %v7200
        %v7202 = vpop.f32.mrb[0].mxu0
        %v7203 = vadd.f32 0.0, %v7202
        %7204 = vdwg.mxu0
        %v7205 = vadd.f32 %v7103, %v7189
        %v7206 = vadd.f32 %v7104, %v7191
        %v7207 = vadd.f32 %v7105, %v7195
        %v7208 = vadd.f32 %v7106, %v7197
        %v7209 = vadd.f32 %v7107, %v7201
        %v7210 = vadd.f32 %v7108, %v7203
        %v7211 = vadd.f32 %v7205, %v1359
        %v7212 = vadd.f32 %v7206, %v1363
        %v7213 = vadd.f32 %v7207, %v1359
        %v7214 = vadd.f32 %v7208, %v1363
        %v7215 = vadd.f32 %v7209, %v1359
        %v7216 = vadd.f32 %v7210, %v1363
        %v7217 = vmax.f32 %v7211, 0.0
        %v7218 = vmax.f32 %v7212, 0.0
        %v7219 = vmax.f32 %v7213, 0.0
        %v7220 = vmax.f32 %v7214, 0.0
        %v7221 = vmax.f32 %v7215, 0.0
        %v7222 = vmax.f32 %v7216, 0.0
        %7223 = vmatprep.subr.mxu0 %v7218
        %7224 = vmatpush1.msra.mxu0 %v7217
        %7225 = vmatprep.subr.mxu0 %v7220
        %7226 = vmatpush1.msra.mxu0 %v7219
        %7227 = vmatprep.subr.mxu0 %v7222
        %7228 = vmatpush1.msra.mxu0 %v7221
        %7229 = vmatprep.subr.mxu0 0.0
        %7230 = vmatpush1.msra.mxu0 0.0
        %7231 = vmatprep.subr.mxu0 0.0
        %7232 = vmatpush1.msra.mxu0 0.0
        %7233 = vmatprep.subr.mxu0 0.0
        %7234 = vmatpush1.msra.mxu0 0.0
        %7235 = vmatprep.subr.mxu0 0.0
        %7236 = vmatpush1.msra.mxu0 0.0
        %7237 = vmatprep.subr.mxu0 0.0
        %7238 = vmatpush1.msra.mxu0 0.0
        %7239 = vmatprep.subr.mxu0 0.0
        %7240 = vmatpush1.msra.mxu0 0.0
        %7241 = vmatprep.subr.mxu0 0.0
        %7242 = vmatpush1.msra.mxu0 0.0
        %7243 = vmatprep.subr.mxu0 0.0
        %7244 = vmatpush1.msra.mxu0 0.0
        %7245 = vmatprep.subr.mxu0 0.0
        %7246 = vmatpush1.msra.mxu0 0.0
        %7247 = vmatprep.subr.mxu0 0.0
        %7248 = vmatpush1.msra.mxu0 0.0
        %7249 = vmatprep.subr.mxu0 0.0
        %7250 = vmatpush1.msra.mxu0 0.0
        %7251 = vmatprep.subr.mxu0 0.0
        %7252 = vmatpush1.msra.mxu0 0.0
        %7253 = vmatprep.subr.mxu0 0.0
        %7254 = vmatpush1.msra.mxu0 0.0
        %7255 = vmatprep.subr.mxu0 0.0
        %7256 = vmatpush1.msra.mxu0 0.0
        %7257 = vmatprep.subr.mxu0 0.0
        %7258 = vmatpush1.msra.mxu0 0.0
        %7259 = vmatprep.subr.mxu0 0.0
        %7260 = vmatpush1.msra.mxu0 0.0
        %7261 = vmatprep.subr.mxu0 0.0
        %7262 = vmatpush1.msra.mxu0 0.0
        %7263 = vmatprep.subr.mxu0 0.0
        %7264 = vmatpush1.msra.mxu0 0.0
        %7265 = vmatprep.subr.mxu0 0.0
        %7266 = vmatpush1.msra.mxu0 0.0
        %7267 = vmatprep.subr.mxu0 0.0
        %7268 = vmatpush1.msra.mxu0 0.0
        %7269 = vmatprep.subr.mxu0 0.0
        %7270 = vmatpush1.msra.mxu0 0.0
        %7271 = vmatprep.subr.mxu0 0.0
        %7272 = vmatpush1.msra.mxu0 0.0
        %7273 = vmatprep.subr.mxu0 0.0
        %7274 = vmatpush1.msra.mxu0 0.0
        %7275 = vmatprep.subr.mxu0 0.0
        %7276 = vmatpush1.msra.mxu0 0.0
        %7277 = vmatprep.subr.mxu0 0.0
        %7278 = vmatpush1.msra.mxu0 0.0
        %7279 = vmatprep.subr.mxu0 0.0
        %7280 = vmatpush1.msra.mxu0 0.0
        %7281 = vmatprep.subr.mxu0 0.0
        %7282 = vmatpush1.msra.mxu0 0.0
        %7283 = vmatprep.subr.mxu0 0.0
        %7284 = vmatpush1.msra.mxu0 0.0
        %7285 = vmatprep.subr.mxu0 0.0
        %7286 = vmatpush1.msra.mxu0 0.0
        %7287 = vmatprep.mubr.f32.mxu0 0.0
        %7288 = vmatmul.mubr.f32.gmra.mrb[0].mxu0 %v1380
        %v7289 = vpop.f32.mrb[0].mxu0
        %v7290 = vadd.f32 0.0, %v7289
        %v7291 = vpop.f32.mrb[0].mxu0
        %v7292 = vadd.f32 0.0, %v7291
        %7293 = vmatprep.mubr.f32.mxu0 0.0
        %7294 = vmatmul.mubr.f32.gmra.mrb[0].mxu0 %v1383
        %v7295 = vpop.f32.mrb[0].mxu0
        %v7296 = vadd.f32 0.0, %v7295
        %v7297 = vpop.f32.mrb[0].mxu0
        %v7298 = vadd.f32 0.0, %v7297
        %7299 = vdwg.mxu0
        %7300 = vmatprep.subr.mxu0 %v7218
        %7301 = vmatpush1.msra.mxu0 %v7217
        %7302 = vmatprep.subr.mxu0 %v7220
        %7303 = vmatpush1.msra.mxu0 %v7219
        %7304 = vmatprep.subr.mxu0 %v7222
        %7305 = vmatpush1.msra.mxu0 %v7221
        %7306 = vmatprep.subr.mxu0 0.0
        %7307 = vmatpush1.msra.mxu0 0.0
        %7308 = vmatprep.subr.mxu0 0.0
        %7309 = vmatpush1.msra.mxu0 0.0
        %7310 = vmatprep.subr.mxu0 0.0
        %7311 = vmatpush1.msra.mxu0 0.0
        %7312 = vmatprep.subr.mxu0 0.0
        %7313 = vmatpush1.msra.mxu0 0.0
        %7314 = vmatprep.subr.mxu0 0.0
        %7315 = vmatpush1.msra.mxu0 0.0
        %7316 = vmatprep.subr.mxu0 0.0
        %7317 = vmatpush1.msra.mxu0 0.0
        %7318 = vmatprep.subr.mxu0 0.0
        %7319 = vmatpush1.msra.mxu0 0.0
        %7320 = vmatprep.subr.mxu0 0.0
        %7321 = vmatpush1.msra.mxu0 0.0
        %7322 = vmatprep.subr.mxu0 0.0
        %7323 = vmatpush1.msra.mxu0 0.0
        %7324 = vmatprep.subr.mxu0 0.0
        %7325 = vmatpush1.msra.mxu0 0.0
        %7326 = vmatprep.subr.mxu0 0.0
        %7327 = vmatpush1.msra.mxu0 0.0
        %7328 = vmatprep.subr.mxu0 0.0
        %7329 = vmatpush1.msra.mxu0 0.0
        %7330 = vmatprep.subr.mxu0 0.0
        %7331 = vmatpush1.msra.mxu0 0.0
        %7332 = vmatprep.subr.mxu0 0.0
        %7333 = vmatpush1.msra.mxu0 0.0
        %7334 = vmatprep.subr.mxu0 0.0
        %7335 = vmatpush1.msra.mxu0 0.0
        %7336 = vmatprep.subr.mxu0 0.0
        %7337 = vmatpush1.msra.mxu0 0.0
        %7338 = vmatprep.subr.mxu0 0.0
        %7339 = vmatpush1.msra.mxu0 0.0
        %7340 = vmatprep.subr.mxu0 0.0
        %7341 = vmatpush1.msra.mxu0 0.0
        %7342 = vmatprep.subr.mxu0 0.0
        %7343 = vmatpush1.msra.mxu0 0.0
        %7344 = vmatprep.subr.mxu0 0.0
        %7345 = vmatpush1.msra.mxu0 0.0
        %7346 = vmatprep.subr.mxu0 0.0
        %7347 = vmatpush1.msra.mxu0 0.0
        %7348 = vmatprep.subr.mxu0 0.0
        %7349 = vmatpush1.msra.mxu0 0.0
        %7350 = vmatprep.subr.mxu0 0.0
        %7351 = vmatpush1.msra.mxu0 0.0
        %7352 = vmatprep.subr.mxu0 0.0
        %7353 = vmatpush1.msra.mxu0 0.0
        %7354 = vmatprep.subr.mxu0 0.0
        %7355 = vmatpush1.msra.mxu0 0.0
        %7356 = vmatprep.subr.mxu0 0.0
        %7357 = vmatpush1.msra.mxu0 0.0
        %7358 = vmatprep.subr.mxu0 0.0
        %7359 = vmatpush1.msra.mxu0 0.0
        %7360 = vmatprep.subr.mxu0 0.0
        %7361 = vmatpush1.msra.mxu0 0.0
        %7362 = vmatprep.subr.mxu0 0.0
        %7363 = vmatpush1.msra.mxu0 0.0
        %7364 = vmatprep.mubr.f32.mxu0 0.0
        %7365 = vmatmul.mubr.f32.gmra.mrb[0].mxu0 %v1463
        %v7366 = vpop.f32.mrb[0].mxu0
        %v7367 = vadd.f32 0.0, %v7366
        %v7368 = vpop.f32.mrb[0].mxu0
        %v7369 = vadd.f32 0.0, %v7368
        %7370 = vmatprep.mubr.f32.mxu0 0.0
        %7371 = vmatmul.mubr.f32.gmra.mrb[0].mxu0 %v1466
        %v7372 = vpop.f32.mrb[0].mxu0
        %v7373 = vadd.f32 0.0, %v7372
        %v7374 = vpop.f32.mrb[0].mxu0
        %v7375 = vadd.f32 0.0, %v7374
        %7376 = vdwg.mxu0
        %v7377 = vmax.f32 %v7290, %v7367
        %v7378 = vmax.f32 %v7292, %v7369
        %v7379 = vmax.f32 %v7296, %v7373
        %v7380 = vmax.f32 %v7298, %v7375
        %v7382 = vsel %vm1549, %v7378, 0
        %v7385 = vsel %vm1549, %v7380, 0
        %7387 = vmatprep.subr.mxu0 0.0
        %7388 = vmatpush1.msra.mxu0 %v733
        %7389 = vmatprep.subr.mxu0 0.0
        %7390 = vmatpush1.msra.mxu0 %v734
        %7391 = vmatprep.subr.mxu0 0.0
        %7392 = vmatpush1.msra.mxu0 %v735
        %7393 = vmatprep.subr.mxu0 0.0
        %7394 = vmatpush1.msra.mxu0 %v736
        %7395 = vmatprep.subr.mxu0 0.0
        %7396 = vmatpush1.msra.mxu0 %v737
        %7397 = vmatprep.subr.mxu0 0.0
        %7398 = vmatpush1.msra.mxu0 %v738
        %7399 = vmatprep.subr.mxu0 0.0
        %7400 = vmatpush1.msra.mxu0 %v739
        %7401 = vmatprep.subr.mxu0 0.0
        %7402 = vmatpush1.msra.mxu0 %v740
        %7403 = vmatprep.subr.mxu0 0.0
        %7404 = vmatpush1.msra.mxu0 %v741
        %7405 = vmatprep.subr.mxu0 0.0
        %7406 = vmatpush1.msra.mxu0 %v742
        %7407 = vmatprep.subr.mxu0 0.0
        %7408 = vmatpush1.msra.mxu0 %v743
        %7409 = vmatprep.subr.mxu0 0.0
        %7410 = vmatpush1.msra.mxu0 %v744
        %7411 = vmatprep.subr.mxu0 0.0
        %7412 = vmatpush1.msra.mxu0 %v745
        %7413 = vmatprep.subr.mxu0 0.0
        %7414 = vmatpush1.msra.mxu0 %v746
        %7415 = vmatprep.subr.mxu0 0.0
        %7416 = vmatpush1.msra.mxu0 %v747
        %7417 = vmatprep.subr.mxu0 0.0
        %7418 = vmatpush1.msra.mxu0 %v748
        %7419 = vmatprep.subr.mxu0 0.0
        %7420 = vmatpush1.msra.mxu0 %v749
        %7421 = vmatprep.subr.mxu0 0.0
        %7422 = vmatpush1.msra.mxu0 %v750
        %7423 = vmatprep.subr.mxu0 0.0
        %7424 = vmatpush1.msra.mxu0 0.0
        %7425 = vmatprep.subr.mxu0 0.0
        %7426 = vmatpush1.msra.mxu0 0.0
        %7427 = vmatprep.subr.mxu0 0.0
        %7428 = vmatpush1.msra.mxu0 0.0
        %7429 = vmatprep.subr.mxu0 0.0
        %7430 = vmatpush1.msra.mxu0 0.0
        %7431 = vmatprep.subr.mxu0 0.0
        %7432 = vmatpush1.msra.mxu0 0.0
        %7433 = vmatprep.subr.mxu0 0.0
        %7434 = vmatpush1.msra.mxu0 0.0
        %7435 = vmatprep.subr.mxu0 0.0
        %7436 = vmatpush1.msra.mxu0 0.0
        %7437 = vmatprep.subr.mxu0 0.0
        %7438 = vmatpush1.msra.mxu0 0.0
        %7439 = vmatprep.subr.mxu0 0.0
        %7440 = vmatpush1.msra.mxu0 0.0
        %7441 = vmatprep.subr.mxu0 0.0
        %7442 = vmatpush1.msra.mxu0 0.0
        %7443 = vmatprep.subr.mxu0 0.0
        %7444 = vmatpush1.msra.mxu0 0.0
        %7445 = vmatprep.subr.mxu0 0.0
        %7446 = vmatpush1.msra.mxu0 0.0
        %7447 = vmatprep.subr.mxu0 0.0
        %7448 = vmatpush1.msra.mxu0 0.0
        %7449 = vmatprep.subr.mxu0 0.0
        %7450 = vmatpush1.msra.mxu0 0.0
        %7451 = vmatprep.mubr.f32.mxu0 %v7382
        %7452 = vmatmul.mubr.f32.gmra.mrb[0].mxu0 %v7377
        %v7453 = vpop.f32.mrb[0].mxu0
        %v7454 = vadd.f32 0.0, %v7453
        %v7455 = vpop.f32.mrb[0].mxu0
        %7456 = vmatprep.mubr.f32.mxu0 %v7385
        %7457 = vmatmul.mubr.f32.gmra.mrb[0].mxu0 %v7379
        %v7458 = vpop.f32.mrb[0].mxu0
        %v7459 = vadd.f32 0.0, %v7458
        %v7460 = vpop.f32.mrb[0].mxu0
        %7461 = vdwg.mxu0
        %7462 = vmatprep.subr.mxu0 0.0
        %7463 = vmatpush1.msra.mxu0 %v751
        %7464 = vmatprep.subr.mxu0 0.0
        %7465 = vmatpush1.msra.mxu0 %v752
        %7466 = vmatprep.subr.mxu0 0.0
        %7467 = vmatpush1.msra.mxu0 %v753
        %7468 = vmatprep.subr.mxu0 0.0
        %7469 = vmatpush1.msra.mxu0 %v754
        %7470 = vmatprep.subr.mxu0 0.0
        %7471 = vmatpush1.msra.mxu0 %v755
        %7472 = vmatprep.subr.mxu0 0.0
        %7473 = vmatpush1.msra.mxu0 %v756
        %7474 = vmatprep.subr.mxu0 0.0
        %7475 = vmatpush1.msra.mxu0 %v757
        %7476 = vmatprep.subr.mxu0 0.0
        %7477 = vmatpush1.msra.mxu0 %v758
        %7478 = vmatprep.subr.mxu0 0.0
        %7479 = vmatpush1.msra.mxu0 %v759
        %7480 = vmatprep.subr.mxu0 0.0
        %7481 = vmatpush1.msra.mxu0 %v760
        %7482 = vmatprep.subr.mxu0 0.0
        %7483 = vmatpush1.msra.mxu0 %v761
        %7484 = vmatprep.subr.mxu0 0.0
        %7485 = vmatpush1.msra.mxu0 %v762
        %7486 = vmatprep.subr.mxu0 0.0
        %7487 = vmatpush1.msra.mxu0 %v763
        %7488 = vmatprep.subr.mxu0 0.0
        %7489 = vmatpush1.msra.mxu0 %v764
        %7490 = vmatprep.subr.mxu0 0.0
        %7491 = vmatpush1.msra.mxu0 %v765
        %7492 = vmatprep.subr.mxu0 0.0
        %7493 = vmatpush1.msra.mxu0 %v766
        %7494 = vmatprep.subr.mxu0 0.0
        %7495 = vmatpush1.msra.mxu0 %v767
        %7496 = vmatprep.subr.mxu0 0.0
        %7497 = vmatpush1.msra.mxu0 %v768
        %7498 = vmatprep.subr.mxu0 0.0
        %7499 = vmatpush1.msra.mxu0 0.0
        %7500 = vmatprep.subr.mxu0 0.0
        %7501 = vmatpush1.msra.mxu0 0.0
        %7502 = vmatprep.subr.mxu0 0.0
        %7503 = vmatpush1.msra.mxu0 0.0
        %7504 = vmatprep.subr.mxu0 0.0
        %7505 = vmatpush1.msra.mxu0 0.0
        %7506 = vmatprep.subr.mxu0 0.0
        %7507 = vmatpush1.msra.mxu0 0.0
        %7508 = vmatprep.subr.mxu0 0.0
        %7509 = vmatpush1.msra.mxu0 0.0
        %7510 = vmatprep.subr.mxu0 0.0
        %7511 = vmatpush1.msra.mxu0 0.0
        %7512 = vmatprep.subr.mxu0 0.0
        %7513 = vmatpush1.msra.mxu0 0.0
        %7514 = vmatprep.subr.mxu0 0.0
        %7515 = vmatpush1.msra.mxu0 0.0
        %7516 = vmatprep.subr.mxu0 0.0
        %7517 = vmatpush1.msra.mxu0 0.0
        %7518 = vmatprep.subr.mxu0 0.0
        %7519 = vmatpush1.msra.mxu0 0.0
        %7520 = vmatprep.subr.mxu0 0.0
        %7521 = vmatpush1.msra.mxu0 0.0
        %7522 = vmatprep.subr.mxu0 0.0
        %7523 = vmatpush1.msra.mxu0 0.0
        %7524 = vmatprep.subr.mxu0 0.0
        %7525 = vmatpush1.msra.mxu0 0.0
        %7526 = vmatprep.mubr.f32.mxu0 %v7382
        %7527 = vmatmul.mubr.f32.gmra.mrb[0].mxu0 %v7377
        %v7528 = vpop.f32.mrb[0].mxu0
        %v7529 = vadd.f32 0.0, %v7528
        %v7530 = vpop.f32.mrb[0].mxu0
        %7531 = vmatprep.mubr.f32.mxu0 %v7385
        %7532 = vmatmul.mubr.f32.gmra.mrb[0].mxu0 %v7379
        %v7533 = vpop.f32.mrb[0].mxu0
        %v7534 = vadd.f32 0.0, %v7533
        %v7535 = vpop.f32.mrb[0].mxu0
        %7536 = vdwg.mxu0
        %v7537 = vmax.f32 %v7454, %v7529
        %v7538 = vmax.f32 %v7459, %v7534
        %v7541 = vrot.slane %v7537, 1
        %v7542 = vrot.slane %v7538, 1
        %v7543 = vsel %vm829, %v7541, %v7542
        %v7544 = vsel %vm1713, %v7543, 0
        %7546 = vmatprep.subr.mxu0 0.0
        %7547 = vmatpush1.msra.mxu0 %v661
        %7548 = vmatprep.subr.mxu0 0.0
        %7549 = vmatpush1.msra.mxu0 %v662
        %7550 = vmatprep.subr.mxu0 0.0
        %7551 = vmatpush1.msra.mxu0 %v663
        %7552 = vmatprep.subr.mxu0 0.0
        %7553 = vmatpush1.msra.mxu0 %v664
        %7554 = vmatprep.subr.mxu0 0.0
        %7555 = vmatpush1.msra.mxu0 %v665
        %7556 = vmatprep.subr.mxu0 0.0
        %7557 = vmatpush1.msra.mxu0 %v666
        %7558 = vmatprep.subr.mxu0 0.0
        %7559 = vmatpush1.msra.mxu0 %v667
        %7560 = vmatprep.subr.mxu0 0.0
        %7561 = vmatpush1.msra.mxu0 %v668
        %7562 = vmatprep.subr.mxu0 0.0
        %7563 = vmatpush1.msra.mxu0 %v669
        %7564 = vmatprep.subr.mxu0 0.0
        %7565 = vmatpush1.msra.mxu0 0.0
        %7566 = vmatprep.subr.mxu0 0.0
        %7567 = vmatpush1.msra.mxu0 0.0
        %7568 = vmatprep.subr.mxu0 0.0
        %7569 = vmatpush1.msra.mxu0 0.0
        %7570 = vmatprep.subr.mxu0 0.0
        %7571 = vmatpush1.msra.mxu0 0.0
        %7572 = vmatprep.subr.mxu0 0.0
        %7573 = vmatpush1.msra.mxu0 0.0
        %7574 = vmatprep.subr.mxu0 0.0
        %7575 = vmatpush1.msra.mxu0 0.0
        %7576 = vmatprep.subr.mxu0 0.0
        %7577 = vmatpush1.msra.mxu0 0.0
        %7578 = vmatprep.subr.mxu0 0.0
        %7579 = vmatpush1.msra.mxu0 0.0
        %7580 = vmatprep.subr.mxu0 0.0
        %7581 = vmatpush1.msra.mxu0 0.0
        %7582 = vmatprep.subr.mxu0 0.0
        %7583 = vmatpush1.msra.mxu0 0.0
        %7584 = vmatprep.subr.mxu0 0.0
        %7585 = vmatpush1.msra.mxu0 0.0
        %7586 = vmatprep.subr.mxu0 0.0
        %7587 = vmatpush1.msra.mxu0 0.0
        %7588 = vmatprep.subr.mxu0 0.0
        %7589 = vmatpush1.msra.mxu0 0.0
        %7590 = vmatprep.subr.mxu0 0.0
        %7591 = vmatpush1.msra.mxu0 0.0
        %7592 = vmatprep.subr.mxu0 0.0
        %7593 = vmatpush1.msra.mxu0 0.0
        %7594 = vmatprep.subr.mxu0 0.0
        %7595 = vmatpush1.msra.mxu0 0.0
        %7596 = vmatprep.subr.mxu0 0.0
        %7597 = vmatpush1.msra.mxu0 0.0
        %7598 = vmatprep.subr.mxu0 0.0
        %7599 = vmatpush1.msra.mxu0 0.0
        %7600 = vmatprep.subr.mxu0 0.0
        %7601 = vmatpush1.msra.mxu0 0.0
        %7602 = vmatprep.subr.mxu0 0.0
        %7603 = vmatpush1.msra.mxu0 0.0
        %7604 = vmatprep.subr.mxu0 0.0
        %7605 = vmatpush1.msra.mxu0 0.0
        %7606 = vmatprep.subr.mxu0 0.0
        %7607 = vmatpush1.msra.mxu0 0.0
        %7608 = vmatprep.subr.mxu0 0.0
        %7609 = vmatpush1.msra.mxu0 0.0
        %7610 = vmatprep.mubr.f32.mxu0 0.0
        %7611 = vmatmul.mubr.f32.gmra.mrb[0].mxu0 %v7544
        %v7612 = vpop.f32.mrb[0].mxu0
        %v7613 = vadd.f32 0.0, %v7612
        %v7614 = vpop.f32.mrb[0].mxu0
        %7615 = vdwg.mxu0
        %v7616 = vsel %vm1713, %v7537, 0
        %7618 = vmatprep.subr.mxu0 0.0
        %7619 = vmatpush1.msra.mxu0 %v651
        %7620 = vmatprep.subr.mxu0 0.0
        %7621 = vmatpush1.msra.mxu0 %v652
        %7622 = vmatprep.subr.mxu0 0.0
        %7623 = vmatpush1.msra.mxu0 %v653
        %7624 = vmatprep.subr.mxu0 0.0
        %7625 = vmatpush1.msra.mxu0 %v654
        %7626 = vmatprep.subr.mxu0 0.0
        %7627 = vmatpush1.msra.mxu0 %v655
        %7628 = vmatprep.subr.mxu0 0.0
        %7629 = vmatpush1.msra.mxu0 %v656
        %7630 = vmatprep.subr.mxu0 0.0
        %7631 = vmatpush1.msra.mxu0 %v657
        %7632 = vmatprep.subr.mxu0 0.0
        %7633 = vmatpush1.msra.mxu0 %v658
        %7634 = vmatprep.subr.mxu0 0.0
        %7635 = vmatpush1.msra.mxu0 %v659
        %7636 = vmatprep.subr.mxu0 0.0
        %7637 = vmatpush1.msra.mxu0 0.0
        %7638 = vmatprep.subr.mxu0 0.0
        %7639 = vmatpush1.msra.mxu0 0.0
        %7640 = vmatprep.subr.mxu0 0.0
        %7641 = vmatpush1.msra.mxu0 0.0
        %7642 = vmatprep.subr.mxu0 0.0
        %7643 = vmatpush1.msra.mxu0 0.0
        %7644 = vmatprep.subr.mxu0 0.0
        %7645 = vmatpush1.msra.mxu0 0.0
        %7646 = vmatprep.subr.mxu0 0.0
        %7647 = vmatpush1.msra.mxu0 0.0
        %7648 = vmatprep.subr.mxu0 0.0
        %7649 = vmatpush1.msra.mxu0 0.0
        %7650 = vmatprep.subr.mxu0 0.0
        %7651 = vmatpush1.msra.mxu0 0.0
        %7652 = vmatprep.subr.mxu0 0.0
        %7653 = vmatpush1.msra.mxu0 0.0
        %7654 = vmatprep.subr.mxu0 0.0
        %7655 = vmatpush1.msra.mxu0 0.0
        %7656 = vmatprep.subr.mxu0 0.0
        %7657 = vmatpush1.msra.mxu0 0.0
        %7658 = vmatprep.subr.mxu0 0.0
        %7659 = vmatpush1.msra.mxu0 0.0
        %7660 = vmatprep.subr.mxu0 0.0
        %7661 = vmatpush1.msra.mxu0 0.0
        %7662 = vmatprep.subr.mxu0 0.0
        %7663 = vmatpush1.msra.mxu0 0.0
        %7664 = vmatprep.subr.mxu0 0.0
        %7665 = vmatpush1.msra.mxu0 0.0
        %7666 = vmatprep.subr.mxu0 0.0
        %7667 = vmatpush1.msra.mxu0 0.0
        %7668 = vmatprep.subr.mxu0 0.0
        %7669 = vmatpush1.msra.mxu0 0.0
        %7670 = vmatprep.subr.mxu0 0.0
        %7671 = vmatpush1.msra.mxu0 0.0
        %7672 = vmatprep.subr.mxu0 0.0
        %7673 = vmatpush1.msra.mxu0 0.0
        %7674 = vmatprep.subr.mxu0 0.0
        %7675 = vmatpush1.msra.mxu0 0.0
        %7676 = vmatprep.subr.mxu0 0.0
        %7677 = vmatpush1.msra.mxu0 0.0
        %7678 = vmatprep.subr.mxu0 0.0
        %7679 = vmatpush1.msra.mxu0 0.0
        %7680 = vmatprep.subr.mxu0 0.0
        %7681 = vmatpush1.msra.mxu0 0.0
        %7682 = vmatprep.mubr.f32.mxu0 0.0
        %7683 = vmatmul.mubr.f32.gmra.mrb[0].mxu0 %v7616
        %v7684 = vpop.f32.mrb[0].mxu0
        %v7685 = vadd.f32 %v7613, %v7684
        %v7686 = vpop.f32.mrb[0].mxu0
        %7687 = vdwg.mxu0
        %v7688 = vrot.slane %v7537, 2
        %v7689 = vrot.slane %v7538, 2
        %v7690 = vsel %vm1029, %v7688, %v7689
        %v7691 = vsel %vm1713, %v7690, 0
        %7693 = vmatprep.subr.mxu0 0.0
        %7694 = vmatpush1.msra.mxu0 %v671
        %7695 = vmatprep.subr.mxu0 0.0
        %7696 = vmatpush1.msra.mxu0 %v672
        %7697 = vmatprep.subr.mxu0 0.0
        %7698 = vmatpush1.msra.mxu0 %v673
        %7699 = vmatprep.subr.mxu0 0.0
        %7700 = vmatpush1.msra.mxu0 %v674
        %7701 = vmatprep.subr.mxu0 0.0
        %7702 = vmatpush1.msra.mxu0 %v675
        %7703 = vmatprep.subr.mxu0 0.0
        %7704 = vmatpush1.msra.mxu0 %v676
        %7705 = vmatprep.subr.mxu0 0.0
        %7706 = vmatpush1.msra.mxu0 %v677
        %7707 = vmatprep.subr.mxu0 0.0
        %7708 = vmatpush1.msra.mxu0 %v678
        %7709 = vmatprep.subr.mxu0 0.0
        %7710 = vmatpush1.msra.mxu0 %v679
        %7711 = vmatprep.subr.mxu0 0.0
        %7712 = vmatpush1.msra.mxu0 0.0
        %7713 = vmatprep.subr.mxu0 0.0
        %7714 = vmatpush1.msra.mxu0 0.0
        %7715 = vmatprep.subr.mxu0 0.0
        %7716 = vmatpush1.msra.mxu0 0.0
        %7717 = vmatprep.subr.mxu0 0.0
        %7718 = vmatpush1.msra.mxu0 0.0
        %7719 = vmatprep.subr.mxu0 0.0
        %7720 = vmatpush1.msra.mxu0 0.0
        %7721 = vmatprep.subr.mxu0 0.0
        %7722 = vmatpush1.msra.mxu0 0.0
        %7723 = vmatprep.subr.mxu0 0.0
        %7724 = vmatpush1.msra.mxu0 0.0
        %7725 = vmatprep.subr.mxu0 0.0
        %7726 = vmatpush1.msra.mxu0 0.0
        %7727 = vmatprep.subr.mxu0 0.0
        %7728 = vmatpush1.msra.mxu0 0.0
        %7729 = vmatprep.subr.mxu0 0.0
        %7730 = vmatpush1.msra.mxu0 0.0
        %7731 = vmatprep.subr.mxu0 0.0
        %7732 = vmatpush1.msra.mxu0 0.0
        %7733 = vmatprep.subr.mxu0 0.0
        %7734 = vmatpush1.msra.mxu0 0.0
        %7735 = vmatprep.subr.mxu0 0.0
        %7736 = vmatpush1.msra.mxu0 0.0
        %7737 = vmatprep.subr.mxu0 0.0
        %7738 = vmatpush1.msra.mxu0 0.0
        %7739 = vmatprep.subr.mxu0 0.0
        %7740 = vmatpush1.msra.mxu0 0.0
        %7741 = vmatprep.subr.mxu0 0.0
        %7742 = vmatpush1.msra.mxu0 0.0
        %7743 = vmatprep.subr.mxu0 0.0
        %7744 = vmatpush1.msra.mxu0 0.0
        %7745 = vmatprep.subr.mxu0 0.0
        %7746 = vmatpush1.msra.mxu0 0.0
        %7747 = vmatprep.subr.mxu0 0.0
        %7748 = vmatpush1.msra.mxu0 0.0
        %7749 = vmatprep.subr.mxu0 0.0
        %7750 = vmatpush1.msra.mxu0 0.0
        %7751 = vmatprep.subr.mxu0 0.0
        %7752 = vmatpush1.msra.mxu0 0.0
        %7753 = vmatprep.subr.mxu0 0.0
        %7754 = vmatpush1.msra.mxu0 0.0
        %7755 = vmatprep.subr.mxu0 0.0
        %7756 = vmatpush1.msra.mxu0 0.0
        %7757 = vmatprep.mubr.f32.mxu0 0.0
        %7758 = vmatmul.mubr.f32.gmra.mrb[0].mxu0 %v7691
        %v7759 = vpop.f32.mrb[0].mxu0
        %v7760 = vadd.f32 0.0, %v7759
        %v7761 = vpop.f32.mrb[0].mxu0
        %7762 = vdwg.mxu0
        %v7763 = vadd.f32 %v7685, %v7760
        %v7764 = vrot.slane %v7537, 3
        %v7765 = vrot.slane %v7538, 3
        %v7766 = vsel %vm1138, %v7764, %v7765
        %v7767 = vsel %vm1713, %v7766, 0
        %7769 = vmatprep.subr.mxu0 0.0
        %7770 = vmatpush1.msra.mxu0 %v681
        %7771 = vmatprep.subr.mxu0 0.0
        %7772 = vmatpush1.msra.mxu0 %v682
        %7773 = vmatprep.subr.mxu0 0.0
        %7774 = vmatpush1.msra.mxu0 %v683
        %7775 = vmatprep.subr.mxu0 0.0
        %7776 = vmatpush1.msra.mxu0 %v684
        %7777 = vmatprep.subr.mxu0 0.0
        %7778 = vmatpush1.msra.mxu0 %v685
        %7779 = vmatprep.subr.mxu0 0.0
        %7780 = vmatpush1.msra.mxu0 %v686
        %7781 = vmatprep.subr.mxu0 0.0
        %7782 = vmatpush1.msra.mxu0 %v687
        %7783 = vmatprep.subr.mxu0 0.0
        %7784 = vmatpush1.msra.mxu0 %v688
        %7785 = vmatprep.subr.mxu0 0.0
        %7786 = vmatpush1.msra.mxu0 %v689
        %7787 = vmatprep.subr.mxu0 0.0
        %7788 = vmatpush1.msra.mxu0 0.0
        %7789 = vmatprep.subr.mxu0 0.0
        %7790 = vmatpush1.msra.mxu0 0.0
        %7791 = vmatprep.subr.mxu0 0.0
        %7792 = vmatpush1.msra.mxu0 0.0
        %7793 = vmatprep.subr.mxu0 0.0
        %7794 = vmatpush1.msra.mxu0 0.0
        %7795 = vmatprep.subr.mxu0 0.0
        %7796 = vmatpush1.msra.mxu0 0.0
        %7797 = vmatprep.subr.mxu0 0.0
        %7798 = vmatpush1.msra.mxu0 0.0
        %7799 = vmatprep.subr.mxu0 0.0
        %7800 = vmatpush1.msra.mxu0 0.0
        %7801 = vmatprep.subr.mxu0 0.0
        %7802 = vmatpush1.msra.mxu0 0.0
        %7803 = vmatprep.subr.mxu0 0.0
        %7804 = vmatpush1.msra.mxu0 0.0
        %7805 = vmatprep.subr.mxu0 0.0
        %7806 = vmatpush1.msra.mxu0 0.0
        %7807 = vmatprep.subr.mxu0 0.0
        %7808 = vmatpush1.msra.mxu0 0.0
        %7809 = vmatprep.subr.mxu0 0.0
        %7810 = vmatpush1.msra.mxu0 0.0
        %7811 = vmatprep.subr.mxu0 0.0
        %7812 = vmatpush1.msra.mxu0 0.0
        %7813 = vmatprep.subr.mxu0 0.0
        %7814 = vmatpush1.msra.mxu0 0.0
        %7815 = vmatprep.subr.mxu0 0.0
        %7816 = vmatpush1.msra.mxu0 0.0
        %7817 = vmatprep.subr.mxu0 0.0
        %7818 = vmatpush1.msra.mxu0 0.0
        %7819 = vmatprep.subr.mxu0 0.0
        %7820 = vmatpush1.msra.mxu0 0.0
        %7821 = vmatprep.subr.mxu0 0.0
        %7822 = vmatpush1.msra.mxu0 0.0
        %7823 = vmatprep.subr.mxu0 0.0
        %7824 = vmatpush1.msra.mxu0 0.0
        %7825 = vmatprep.subr.mxu0 0.0
        %7826 = vmatpush1.msra.mxu0 0.0
        %7827 = vmatprep.subr.mxu0 0.0
        %7828 = vmatpush1.msra.mxu0 0.0
        %7829 = vmatprep.subr.mxu0 0.0
        %7830 = vmatpush1.msra.mxu0 0.0
        %7831 = vmatprep.subr.mxu0 0.0
        %7832 = vmatpush1.msra.mxu0 0.0
        %7833 = vmatprep.mubr.f32.mxu0 0.0
        %7834 = vmatmul.mubr.f32.gmra.mrb[0].mxu0 %v7767
        %v7835 = vpop.f32.mrb[0].mxu0
        %v7836 = vadd.f32 0.0, %v7835
        %v7837 = vpop.f32.mrb[0].mxu0
        %7838 = vdwg.mxu0
        %v7839 = vadd.f32 %v7763, %v7836
        %v7840 = vrot.slane %v7537, 4
        %v7841 = vrot.slane %v7538, 4
        %v7842 = vsel %vm844, %v7840, %v7841
        %v7843 = vsel %vm1713, %v7842, 0
        %7845 = vmatprep.subr.mxu0 0.0
        %7846 = vmatpush1.msra.mxu0 %v691
        %7847 = vmatprep.subr.mxu0 0.0
        %7848 = vmatpush1.msra.mxu0 %v692
        %7849 = vmatprep.subr.mxu0 0.0
        %7850 = vmatpush1.msra.mxu0 %v693
        %7851 = vmatprep.subr.mxu0 0.0
        %7852 = vmatpush1.msra.mxu0 %v694
        %7853 = vmatprep.subr.mxu0 0.0
        %7854 = vmatpush1.msra.mxu0 %v695
        %7855 = vmatprep.subr.mxu0 0.0
        %7856 = vmatpush1.msra.mxu0 %v696
        %7857 = vmatprep.subr.mxu0 0.0
        %7858 = vmatpush1.msra.mxu0 %v697
        %7859 = vmatprep.subr.mxu0 0.0
        %7860 = vmatpush1.msra.mxu0 %v698
        %7861 = vmatprep.subr.mxu0 0.0
        %7862 = vmatpush1.msra.mxu0 %v699
        %7863 = vmatprep.subr.mxu0 0.0
        %7864 = vmatpush1.msra.mxu0 0.0
        %7865 = vmatprep.subr.mxu0 0.0
        %7866 = vmatpush1.msra.mxu0 0.0
        %7867 = vmatprep.subr.mxu0 0.0
        %7868 = vmatpush1.msra.mxu0 0.0
        %7869 = vmatprep.subr.mxu0 0.0
        %7870 = vmatpush1.msra.mxu0 0.0
        %7871 = vmatprep.subr.mxu0 0.0
        %7872 = vmatpush1.msra.mxu0 0.0
        %7873 = vmatprep.subr.mxu0 0.0
        %7874 = vmatpush1.msra.mxu0 0.0
        %7875 = vmatprep.subr.mxu0 0.0
        %7876 = vmatpush1.msra.mxu0 0.0
        %7877 = vmatprep.subr.mxu0 0.0
        %7878 = vmatpush1.msra.mxu0 0.0
        %7879 = vmatprep.subr.mxu0 0.0
        %7880 = vmatpush1.msra.mxu0 0.0
        %7881 = vmatprep.subr.mxu0 0.0
        %7882 = vmatpush1.msra.mxu0 0.0
        %7883 = vmatprep.subr.mxu0 0.0
        %7884 = vmatpush1.msra.mxu0 0.0
        %7885 = vmatprep.subr.mxu0 0.0
        %7886 = vmatpush1.msra.mxu0 0.0
        %7887 = vmatprep.subr.mxu0 0.0
        %7888 = vmatpush1.msra.mxu0 0.0
        %7889 = vmatprep.subr.mxu0 0.0
        %7890 = vmatpush1.msra.mxu0 0.0
        %7891 = vmatprep.subr.mxu0 0.0
        %7892 = vmatpush1.msra.mxu0 0.0
        %7893 = vmatprep.subr.mxu0 0.0
        %7894 = vmatpush1.msra.mxu0 0.0
        %7895 = vmatprep.subr.mxu0 0.0
        %7896 = vmatpush1.msra.mxu0 0.0
        %7897 = vmatprep.subr.mxu0 0.0
        %7898 = vmatpush1.msra.mxu0 0.0
        %7899 = vmatprep.subr.mxu0 0.0
        %7900 = vmatpush1.msra.mxu0 0.0
        %7901 = vmatprep.subr.mxu0 0.0
        %7902 = vmatpush1.msra.mxu0 0.0
        %7903 = vmatprep.subr.mxu0 0.0
        %7904 = vmatpush1.msra.mxu0 0.0
        %7905 = vmatprep.subr.mxu0 0.0
        %7906 = vmatpush1.msra.mxu0 0.0
        %7907 = vmatprep.subr.mxu0 0.0
        %7908 = vmatpush1.msra.mxu0 0.0
        %7909 = vmatprep.mubr.f32.mxu0 0.0
        %7910 = vmatmul.mubr.f32.gmra.mrb[0].mxu0 %v7843
        %v7911 = vpop.f32.mrb[0].mxu0
        %v7912 = vadd.f32 0.0, %v7911
        %v7913 = vpop.f32.mrb[0].mxu0
        %7914 = vdwg.mxu0
        %v7915 = vadd.f32 %v7839, %v7912
        %v7916 = vadd.f32 %v7915, %v2090
        %v7917 = vmax.f32 %v7916, 0.0
        %7918 = vmatprep.subr.mxu0 0.0
        %7919 = vmatpush1.msra.mxu0 %v7917
        %7920 = vmatprep.subr.mxu0 0.0
        %7921 = vmatpush1.msra.mxu0 0.0
        %7922 = vmatprep.subr.mxu0 0.0
        %7923 = vmatpush1.msra.mxu0 0.0
        %7924 = vmatprep.subr.mxu0 0.0
        %7925 = vmatpush1.msra.mxu0 0.0
        %7926 = vmatprep.subr.mxu0 0.0
        %7927 = vmatpush1.msra.mxu0 0.0
        %7928 = vmatprep.subr.mxu0 0.0
        %7929 = vmatpush1.msra.mxu0 0.0
        %7930 = vmatprep.subr.mxu0 0.0
        %7931 = vmatpush1.msra.mxu0 0.0
        %7932 = vmatprep.subr.mxu0 0.0
        %7933 = vmatpush1.msra.mxu0 0.0
        %7934 = vmatprep.subr.mxu0 0.0
        %7935 = vmatpush1.msra.mxu0 0.0
        %7936 = vmatprep.subr.mxu0 0.0
        %7937 = vmatpush1.msra.mxu0 0.0
        %7938 = vmatprep.subr.mxu0 0.0
        %7939 = vmatpush1.msra.mxu0 0.0
        %7940 = vmatprep.subr.mxu0 0.0
        %7941 = vmatpush1.msra.mxu0 0.0
        %7942 = vmatprep.subr.mxu0 0.0
        %7943 = vmatpush1.msra.mxu0 0.0
        %7944 = vmatprep.subr.mxu0 0.0
        %7945 = vmatpush1.msra.mxu0 0.0
        %7946 = vmatprep.subr.mxu0 0.0
        %7947 = vmatpush1.msra.mxu0 0.0
        %7948 = vmatprep.subr.mxu0 0.0
        %7949 = vmatpush1.msra.mxu0 0.0
        %7950 = vmatprep.subr.mxu0 0.0
        %7951 = vmatpush1.msra.mxu0 0.0
        %7952 = vmatprep.subr.mxu0 0.0
        %7953 = vmatpush1.msra.mxu0 0.0
        %7954 = vmatprep.subr.mxu0 0.0
        %7955 = vmatpush1.msra.mxu0 0.0
        %7956 = vmatprep.subr.mxu0 0.0
        %7957 = vmatpush1.msra.mxu0 0.0
        %7958 = vmatprep.subr.mxu0 0.0
        %7959 = vmatpush1.msra.mxu0 0.0
        %7960 = vmatprep.subr.mxu0 0.0
        %7961 = vmatpush1.msra.mxu0 0.0
        %7962 = vmatprep.subr.mxu0 0.0
        %7963 = vmatpush1.msra.mxu0 0.0
        %7964 = vmatprep.subr.mxu0 0.0
        %7965 = vmatpush1.msra.mxu0 0.0
        %7966 = vmatprep.subr.mxu0 0.0
        %7967 = vmatpush1.msra.mxu0 0.0
        %7968 = vmatprep.subr.mxu0 0.0
        %7969 = vmatpush1.msra.mxu0 0.0
        %7970 = vmatprep.subr.mxu0 0.0
        %7971 = vmatpush1.msra.mxu0 0.0
        %7972 = vmatprep.subr.mxu0 0.0
        %7973 = vmatpush1.msra.mxu0 0.0
        %7974 = vmatprep.subr.mxu0 0.0
        %7975 = vmatpush1.msra.mxu0 0.0
        %7976 = vmatprep.subr.mxu0 0.0
        %7977 = vmatpush1.msra.mxu0 0.0
        %7978 = vmatprep.subr.mxu0 0.0
        %7979 = vmatpush1.msra.mxu0 0.0
        %7980 = vmatprep.subr.mxu0 0.0
        %7981 = vmatpush1.msra.mxu0 0.0
        %7982 = vmatprep.mubr.f32.mxu0 0.0
        %7983 = vmatmul.mubr.f32.gmra.mrb[0].mxu0 %v2096
        %v7984 = vpop.f32.mrb[0].mxu0
        %v7985 = vadd.f32 0.0, %v7984
        %v7986 = vpop.f32.mrb[0].mxu0
        %7987 = vdwg.mxu0
        %7988 = vmatprep.subr.mxu0 0.0
        %7989 = vmatpush1.msra.mxu0 %v7917
        %7990 = vmatprep.subr.mxu0 0.0
        %7991 = vmatpush1.msra.mxu0 0.0
        %7992 = vmatprep.subr.mxu0 0.0
        %7993 = vmatpush1.msra.mxu0 0.0
        %7994 = vmatprep.subr.mxu0 0.0
        %7995 = vmatpush1.msra.mxu0 0.0
        %7996 = vmatprep.subr.mxu0 0.0
        %7997 = vmatpush1.msra.mxu0 0.0
        %7998 = vmatprep.subr.mxu0 0.0
        %7999 = vmatpush1.msra.mxu0 0.0
        %8000 = vmatprep.subr.mxu0 0.0
        %8001 = vmatpush1.msra.mxu0 0.0
        %8002 = vmatprep.subr.mxu0 0.0
        %8003 = vmatpush1.msra.mxu0 0.0
        %8004 = vmatprep.subr.mxu0 0.0
        %8005 = vmatpush1.msra.mxu0 0.0
        %8006 = vmatprep.subr.mxu0 0.0
        %8007 = vmatpush1.msra.mxu0 0.0
        %8008 = vmatprep.subr.mxu0 0.0
        %8009 = vmatpush1.msra.mxu0 0.0
        %8010 = vmatprep.subr.mxu0 0.0
        %8011 = vmatpush1.msra.mxu0 0.0
        %8012 = vmatprep.subr.mxu0 0.0
        %8013 = vmatpush1.msra.mxu0 0.0
        %8014 = vmatprep.subr.mxu0 0.0
        %8015 = vmatpush1.msra.mxu0 0.0
        %8016 = vmatprep.subr.mxu0 0.0
        %8017 = vmatpush1.msra.mxu0 0.0
        %8018 = vmatprep.subr.mxu0 0.0
        %8019 = vmatpush1.msra.mxu0 0.0
        %8020 = vmatprep.subr.mxu0 0.0
        %8021 = vmatpush1.msra.mxu0 0.0
        %8022 = vmatprep.subr.mxu0 0.0
        %8023 = vmatpush1.msra.mxu0 0.0
        %8024 = vmatprep.subr.mxu0 0.0
        %8025 = vmatpush1.msra.mxu0 0.0
        %8026 = vmatprep.subr.mxu0 0.0
        %8027 = vmatpush1.msra.mxu0 0.0
        %8028 = vmatprep.subr.mxu0 0.0
        %8029 = vmatpush1.msra.mxu0 0.0
        %8030 = vmatprep.subr.mxu0 0.0
        %8031 = vmatpush1.msra.mxu0 0.0
        %8032 = vmatprep.subr.mxu0 0.0
        %8033 = vmatpush1.msra.mxu0 0.0
        %8034 = vmatprep.subr.mxu0 0.0
        %8035 = vmatpush1.msra.mxu0 0.0
        %8036 = vmatprep.subr.mxu0 0.0
        %8037 = vmatpush1.msra.mxu0 0.0
        %8038 = vmatprep.subr.mxu0 0.0
        %8039 = vmatpush1.msra.mxu0 0.0
        %8040 = vmatprep.subr.mxu0 0.0
        %8041 = vmatpush1.msra.mxu0 0.0
        %8042 = vmatprep.subr.mxu0 0.0
        %8043 = vmatpush1.msra.mxu0 0.0
        %8044 = vmatprep.subr.mxu0 0.0
        %8045 = vmatpush1.msra.mxu0 0.0
        %8046 = vmatprep.subr.mxu0 0.0
        %8047 = vmatpush1.msra.mxu0 0.0
        %8048 = vmatprep.subr.mxu0 0.0
        %8049 = vmatpush1.msra.mxu0 0.0
        %8050 = vmatprep.subr.mxu0 0.0
        %8051 = vmatpush1.msra.mxu0 0.0
        %8052 = vmatprep.mubr.f32.mxu0 0.0
        %8053 = vmatmul.mubr.f32.gmra.mrb[0].mxu0 %v2169
        %v8054 = vpop.f32.mrb[0].mxu0
        %v8055 = vadd.f32 0.0, %v8054
        %v8056 = vpop.f32.mrb[0].mxu0
        %8057 = vdwg.mxu0
        %v8058 = vmax.f32 %v7985, %v8055
        %v8060 = vsel %vm2242, %v8058, 0
        %8062 = vmatprep.subr.mxu0 0.0
        %8063 = vmatpush1.msra.mxu0 %v771
        %8064 = vmatprep.subr.mxu0 0.0
        %8065 = vmatpush1.msra.mxu0 %v772
        %8066 = vmatprep.subr.mxu0 0.0
        %8067 = vmatpush1.msra.mxu0 %v773
        %8068 = vmatprep.subr.mxu0 0.0
        %8069 = vmatpush1.msra.mxu0 %v774
        %8070 = vmatprep.subr.mxu0 0.0
        %8071 = vmatpush1.msra.mxu0 %v775
        %8072 = vmatprep.subr.mxu0 0.0
        %8073 = vmatpush1.msra.mxu0 %v776
        %8074 = vmatprep.subr.mxu0 0.0
        %8075 = vmatpush1.msra.mxu0 %v777
        %8076 = vmatprep.subr.mxu0 0.0
        %8077 = vmatpush1.msra.mxu0 %v778
        %8078 = vmatprep.subr.mxu0 0.0
        %8079 = vmatpush1.msra.mxu0 %v779
        %8080 = vmatprep.subr.mxu0 0.0
        %8081 = vmatpush1.msra.mxu0 %v780
        %8082 = vmatprep.subr.mxu0 0.0
        %8083 = vmatpush1.msra.mxu0 %v781
        %8084 = vmatprep.subr.mxu0 0.0
        %8085 = vmatpush1.msra.mxu0 %v782
        %8086 = vmatprep.subr.mxu0 0.0
        %8087 = vmatpush1.msra.mxu0 0.0
        %8088 = vmatprep.subr.mxu0 0.0
        %8089 = vmatpush1.msra.mxu0 0.0
        %8090 = vmatprep.subr.mxu0 0.0
        %8091 = vmatpush1.msra.mxu0 0.0
        %8092 = vmatprep.subr.mxu0 0.0
        %8093 = vmatpush1.msra.mxu0 0.0
        %8094 = vmatprep.subr.mxu0 0.0
        %8095 = vmatpush1.msra.mxu0 0.0
        %8096 = vmatprep.subr.mxu0 0.0
        %8097 = vmatpush1.msra.mxu0 0.0
        %8098 = vmatprep.subr.mxu0 0.0
        %8099 = vmatpush1.msra.mxu0 0.0
        %8100 = vmatprep.subr.mxu0 0.0
        %8101 = vmatpush1.msra.mxu0 0.0
        %8102 = vmatprep.subr.mxu0 0.0
        %8103 = vmatpush1.msra.mxu0 0.0
        %8104 = vmatprep.subr.mxu0 0.0
        %8105 = vmatpush1.msra.mxu0 0.0
        %8106 = vmatprep.subr.mxu0 0.0
        %8107 = vmatpush1.msra.mxu0 0.0
        %8108 = vmatprep.subr.mxu0 0.0
        %8109 = vmatpush1.msra.mxu0 0.0
        %8110 = vmatprep.subr.mxu0 0.0
        %8111 = vmatpush1.msra.mxu0 0.0
        %8112 = vmatprep.subr.mxu0 0.0
        %8113 = vmatpush1.msra.mxu0 0.0
        %8114 = vmatprep.subr.mxu0 0.0
        %8115 = vmatpush1.msra.mxu0 0.0
        %8116 = vmatprep.subr.mxu0 0.0
        %8117 = vmatpush1.msra.mxu0 0.0
        %8118 = vmatprep.subr.mxu0 0.0
        %8119 = vmatpush1.msra.mxu0 0.0
        %8120 = vmatprep.subr.mxu0 0.0
        %8121 = vmatpush1.msra.mxu0 0.0
        %8122 = vmatprep.subr.mxu0 0.0
        %8123 = vmatpush1.msra.mxu0 0.0
        %8124 = vmatprep.subr.mxu0 0.0
        %8125 = vmatpush1.msra.mxu0 0.0
        %8126 = vmatprep.mubr.f32.mxu0 0.0
        %8127 = vmatmul.mubr.f32.gmra.mrb[0].mxu0 %v8060
        %v8128 = vpop.f32.mrb[0].mxu0
        %v8129 = vadd.f32 0.0, %v8128
        %v8130 = vpop.f32.mrb[0].mxu0
        %8131 = vdwg.mxu0
        %8132 = vmatprep.subr.mxu0 0.0
        %8133 = vmatpush1.msra.mxu0 %v783
        %8134 = vmatprep.subr.mxu0 0.0
        %8135 = vmatpush1.msra.mxu0 %v784
        %8136 = vmatprep.subr.mxu0 0.0
        %8137 = vmatpush1.msra.mxu0 %v785
        %8138 = vmatprep.subr.mxu0 0.0
        %8139 = vmatpush1.msra.mxu0 %v786
        %8140 = vmatprep.subr.mxu0 0.0
        %8141 = vmatpush1.msra.mxu0 %v787
        %8142 = vmatprep.subr.mxu0 0.0
        %8143 = vmatpush1.msra.mxu0 %v788
        %8144 = vmatprep.subr.mxu0 0.0
        %8145 = vmatpush1.msra.mxu0 %v789
        %8146 = vmatprep.subr.mxu0 0.0
        %8147 = vmatpush1.msra.mxu0 %v790
        %8148 = vmatprep.subr.mxu0 0.0
        %8149 = vmatpush1.msra.mxu0 %v791
        %8150 = vmatprep.subr.mxu0 0.0
        %8151 = vmatpush1.msra.mxu0 %v792
        %8152 = vmatprep.subr.mxu0 0.0
        %8153 = vmatpush1.msra.mxu0 %v793
        %8154 = vmatprep.subr.mxu0 0.0
        %8155 = vmatpush1.msra.mxu0 %v794
        %8156 = vmatprep.subr.mxu0 0.0
        %8157 = vmatpush1.msra.mxu0 0.0
        %8158 = vmatprep.subr.mxu0 0.0
        %8159 = vmatpush1.msra.mxu0 0.0
        %8160 = vmatprep.subr.mxu0 0.0
        %8161 = vmatpush1.msra.mxu0 0.0
        %8162 = vmatprep.subr.mxu0 0.0
        %8163 = vmatpush1.msra.mxu0 0.0
        %8164 = vmatprep.subr.mxu0 0.0
        %8165 = vmatpush1.msra.mxu0 0.0
        %8166 = vmatprep.subr.mxu0 0.0
        %8167 = vmatpush1.msra.mxu0 0.0
        %8168 = vmatprep.subr.mxu0 0.0
        %8169 = vmatpush1.msra.mxu0 0.0
        %8170 = vmatprep.subr.mxu0 0.0
        %8171 = vmatpush1.msra.mxu0 0.0
        %8172 = vmatprep.subr.mxu0 0.0
        %8173 = vmatpush1.msra.mxu0 0.0
        %8174 = vmatprep.subr.mxu0 0.0
        %8175 = vmatpush1.msra.mxu0 0.0
        %8176 = vmatprep.subr.mxu0 0.0
        %8177 = vmatpush1.msra.mxu0 0.0
        %8178 = vmatprep.subr.mxu0 0.0
        %8179 = vmatpush1.msra.mxu0 0.0
        %8180 = vmatprep.subr.mxu0 0.0
        %8181 = vmatpush1.msra.mxu0 0.0
        %8182 = vmatprep.subr.mxu0 0.0
        %8183 = vmatpush1.msra.mxu0 0.0
        %8184 = vmatprep.subr.mxu0 0.0
        %8185 = vmatpush1.msra.mxu0 0.0
        %8186 = vmatprep.subr.mxu0 0.0
        %8187 = vmatpush1.msra.mxu0 0.0
        %8188 = vmatprep.subr.mxu0 0.0
        %8189 = vmatpush1.msra.mxu0 0.0
        %8190 = vmatprep.subr.mxu0 0.0
        %8191 = vmatpush1.msra.mxu0 0.0
        %8192 = vmatprep.subr.mxu0 0.0
        %8193 = vmatpush1.msra.mxu0 0.0
        %8194 = vmatprep.subr.mxu0 0.0
        %8195 = vmatpush1.msra.mxu0 0.0
        %8196 = vmatprep.mubr.f32.mxu0 0.0
        %8197 = vmatmul.mubr.f32.gmra.mrb[0].mxu0 %v8060
        %v8198 = vpop.f32.mrb[0].mxu0
        %v8199 = vadd.f32 0.0, %v8198
        %v8200 = vpop.f32.mrb[0].mxu0
        %8201 = vdwg.mxu0
        %v8202 = vmax.f32 %v8129, %v8199
        %v8204 = vrot.slane %v8202, 1
        %v8205 = vsel %vm2389, %v8204, 0
        %8207 = vmatprep.subr.mxu0 0.0
        %8208 = vmatpush1.msra.mxu0 %v707
        %8209 = vmatprep.subr.mxu0 0.0
        %8210 = vmatpush1.msra.mxu0 %v708
        %8211 = vmatprep.subr.mxu0 0.0
        %8212 = vmatpush1.msra.mxu0 %v709
        %8213 = vmatprep.subr.mxu0 0.0
        %8214 = vmatpush1.msra.mxu0 %v710
        %8215 = vmatprep.subr.mxu0 0.0
        %8216 = vmatpush1.msra.mxu0 %v711
        %8217 = vmatprep.subr.mxu0 0.0
        %8218 = vmatpush1.msra.mxu0 %v712
        %8219 = vmatprep.subr.mxu0 0.0
        %8220 = vmatpush1.msra.mxu0 0.0
        %8221 = vmatprep.subr.mxu0 0.0
        %8222 = vmatpush1.msra.mxu0 0.0
        %8223 = vmatprep.subr.mxu0 0.0
        %8224 = vmatpush1.msra.mxu0 0.0
        %8225 = vmatprep.subr.mxu0 0.0
        %8226 = vmatpush1.msra.mxu0 0.0
        %8227 = vmatprep.subr.mxu0 0.0
        %8228 = vmatpush1.msra.mxu0 0.0
        %8229 = vmatprep.subr.mxu0 0.0
        %8230 = vmatpush1.msra.mxu0 0.0
        %8231 = vmatprep.subr.mxu0 0.0
        %8232 = vmatpush1.msra.mxu0 0.0
        %8233 = vmatprep.subr.mxu0 0.0
        %8234 = vmatpush1.msra.mxu0 0.0
        %8235 = vmatprep.subr.mxu0 0.0
        %8236 = vmatpush1.msra.mxu0 0.0
        %8237 = vmatprep.subr.mxu0 0.0
        %8238 = vmatpush1.msra.mxu0 0.0
        %8239 = vmatprep.subr.mxu0 0.0
        %8240 = vmatpush1.msra.mxu0 0.0
        %8241 = vmatprep.subr.mxu0 0.0
        %8242 = vmatpush1.msra.mxu0 0.0
        %8243 = vmatprep.subr.mxu0 0.0
        %8244 = vmatpush1.msra.mxu0 0.0
        %8245 = vmatprep.subr.mxu0 0.0
        %8246 = vmatpush1.msra.mxu0 0.0
        %8247 = vmatprep.subr.mxu0 0.0
        %8248 = vmatpush1.msra.mxu0 0.0
        %8249 = vmatprep.subr.mxu0 0.0
        %8250 = vmatpush1.msra.mxu0 0.0
        %8251 = vmatprep.subr.mxu0 0.0
        %8252 = vmatpush1.msra.mxu0 0.0
        %8253 = vmatprep.subr.mxu0 0.0
        %8254 = vmatpush1.msra.mxu0 0.0
        %8255 = vmatprep.subr.mxu0 0.0
        %8256 = vmatpush1.msra.mxu0 0.0
        %8257 = vmatprep.subr.mxu0 0.0
        %8258 = vmatpush1.msra.mxu0 0.0
        %8259 = vmatprep.subr.mxu0 0.0
        %8260 = vmatpush1.msra.mxu0 0.0
        %8261 = vmatprep.subr.mxu0 0.0
        %8262 = vmatpush1.msra.mxu0 0.0
        %8263 = vmatprep.subr.mxu0 0.0
        %8264 = vmatpush1.msra.mxu0 0.0
        %8265 = vmatprep.subr.mxu0 0.0
        %8266 = vmatpush1.msra.mxu0 0.0
        %8267 = vmatprep.subr.mxu0 0.0
        %8268 = vmatpush1.msra.mxu0 0.0
        %8269 = vmatprep.subr.mxu0 0.0
        %8270 = vmatpush1.msra.mxu0 0.0
        %8271 = vmatprep.mubr.f32.mxu0 0.0
        %8272 = vmatmul.mubr.f32.gmra.mrb[0].mxu0 %v8205
        %v8273 = vpop.f32.mrb[0].mxu0
        %v8274 = vadd.f32 0.0, %v8273
        %v8275 = vpop.f32.mrb[0].mxu0
        %8276 = vdwg.mxu0
        %v8277 = vsel %vm2389, %v8202, 0
        %8279 = vmatprep.subr.mxu0 0.0
        %8280 = vmatpush1.msra.mxu0 %v700
        %8281 = vmatprep.subr.mxu0 0.0
        %8282 = vmatpush1.msra.mxu0 %v701
        %8283 = vmatprep.subr.mxu0 0.0
        %8284 = vmatpush1.msra.mxu0 %v702
        %8285 = vmatprep.subr.mxu0 0.0
        %8286 = vmatpush1.msra.mxu0 %v703
        %8287 = vmatprep.subr.mxu0 0.0
        %8288 = vmatpush1.msra.mxu0 %v704
        %8289 = vmatprep.subr.mxu0 0.0
        %8290 = vmatpush1.msra.mxu0 %v705
        %8291 = vmatprep.subr.mxu0 0.0
        %8292 = vmatpush1.msra.mxu0 0.0
        %8293 = vmatprep.subr.mxu0 0.0
        %8294 = vmatpush1.msra.mxu0 0.0
        %8295 = vmatprep.subr.mxu0 0.0
        %8296 = vmatpush1.msra.mxu0 0.0
        %8297 = vmatprep.subr.mxu0 0.0
        %8298 = vmatpush1.msra.mxu0 0.0
        %8299 = vmatprep.subr.mxu0 0.0
        %8300 = vmatpush1.msra.mxu0 0.0
        %8301 = vmatprep.subr.mxu0 0.0
        %8302 = vmatpush1.msra.mxu0 0.0
        %8303 = vmatprep.subr.mxu0 0.0
        %8304 = vmatpush1.msra.mxu0 0.0
        %8305 = vmatprep.subr.mxu0 0.0
        %8306 = vmatpush1.msra.mxu0 0.0
        %8307 = vmatprep.subr.mxu0 0.0
        %8308 = vmatpush1.msra.mxu0 0.0
        %8309 = vmatprep.subr.mxu0 0.0
        %8310 = vmatpush1.msra.mxu0 0.0
        %8311 = vmatprep.subr.mxu0 0.0
        %8312 = vmatpush1.msra.mxu0 0.0
        %8313 = vmatprep.subr.mxu0 0.0
        %8314 = vmatpush1.msra.mxu0 0.0
        %8315 = vmatprep.subr.mxu0 0.0
        %8316 = vmatpush1.msra.mxu0 0.0
        %8317 = vmatprep.subr.mxu0 0.0
        %8318 = vmatpush1.msra.mxu0 0.0
        %8319 = vmatprep.subr.mxu0 0.0
        %8320 = vmatpush1.msra.mxu0 0.0
        %8321 = vmatprep.subr.mxu0 0.0
        %8322 = vmatpush1.msra.mxu0 0.0
        %8323 = vmatprep.subr.mxu0 0.0
        %8324 = vmatpush1.msra.mxu0 0.0
        %8325 = vmatprep.subr.mxu0 0.0
        %8326 = vmatpush1.msra.mxu0 0.0
        %8327 = vmatprep.subr.mxu0 0.0
        %8328 = vmatpush1.msra.mxu0 0.0
        %8329 = vmatprep.subr.mxu0 0.0
        %8330 = vmatpush1.msra.mxu0 0.0
        %8331 = vmatprep.subr.mxu0 0.0
        %8332 = vmatpush1.msra.mxu0 0.0
        %8333 = vmatprep.subr.mxu0 0.0
        %8334 = vmatpush1.msra.mxu0 0.0
        %8335 = vmatprep.subr.mxu0 0.0
        %8336 = vmatpush1.msra.mxu0 0.0
        %8337 = vmatprep.subr.mxu0 0.0
        %8338 = vmatpush1.msra.mxu0 0.0
        %8339 = vmatprep.subr.mxu0 0.0
        %8340 = vmatpush1.msra.mxu0 0.0
        %8341 = vmatprep.subr.mxu0 0.0
        %8342 = vmatpush1.msra.mxu0 0.0
        %8343 = vmatprep.mubr.f32.mxu0 0.0
        %8344 = vmatmul.mubr.f32.gmra.mrb[0].mxu0 %v8277
        %v8345 = vpop.f32.mrb[0].mxu0
        %v8346 = vadd.f32 %v8274, %v8345
        %v8347 = vpop.f32.mrb[0].mxu0
        %8348 = vdwg.mxu0
        %v8349 = vrot.slane %v8202, 2
        %v8350 = vsel %vm2389, %v8349, 0
        %8352 = vmatprep.subr.mxu0 0.0
        %8353 = vmatpush1.msra.mxu0 %v714
        %8354 = vmatprep.subr.mxu0 0.0
        %8355 = vmatpush1.msra.mxu0 %v715
        %8356 = vmatprep.subr.mxu0 0.0
        %8357 = vmatpush1.msra.mxu0 %v716
        %8358 = vmatprep.subr.mxu0 0.0
        %8359 = vmatpush1.msra.mxu0 %v717
        %8360 = vmatprep.subr.mxu0 0.0
        %8361 = vmatpush1.msra.mxu0 %v718
        %8362 = vmatprep.subr.mxu0 0.0
        %8363 = vmatpush1.msra.mxu0 %v719
        %8364 = vmatprep.subr.mxu0 0.0
        %8365 = vmatpush1.msra.mxu0 0.0
        %8366 = vmatprep.subr.mxu0 0.0
        %8367 = vmatpush1.msra.mxu0 0.0
        %8368 = vmatprep.subr.mxu0 0.0
        %8369 = vmatpush1.msra.mxu0 0.0
        %8370 = vmatprep.subr.mxu0 0.0
        %8371 = vmatpush1.msra.mxu0 0.0
        %8372 = vmatprep.subr.mxu0 0.0
        %8373 = vmatpush1.msra.mxu0 0.0
        %8374 = vmatprep.subr.mxu0 0.0
        %8375 = vmatpush1.msra.mxu0 0.0
        %8376 = vmatprep.subr.mxu0 0.0
        %8377 = vmatpush1.msra.mxu0 0.0
        %8378 = vmatprep.subr.mxu0 0.0
        %8379 = vmatpush1.msra.mxu0 0.0
        %8380 = vmatprep.subr.mxu0 0.0
        %8381 = vmatpush1.msra.mxu0 0.0
        %8382 = vmatprep.subr.mxu0 0.0
        %8383 = vmatpush1.msra.mxu0 0.0
        %8384 = vmatprep.subr.mxu0 0.0
        %8385 = vmatpush1.msra.mxu0 0.0
        %8386 = vmatprep.subr.mxu0 0.0
        %8387 = vmatpush1.msra.mxu0 0.0
        %8388 = vmatprep.subr.mxu0 0.0
        %8389 = vmatpush1.msra.mxu0 0.0
        %8390 = vmatprep.subr.mxu0 0.0
        %8391 = vmatpush1.msra.mxu0 0.0
        %8392 = vmatprep.subr.mxu0 0.0
        %8393 = vmatpush1.msra.mxu0 0.0
        %8394 = vmatprep.subr.mxu0 0.0
        %8395 = vmatpush1.msra.mxu0 0.0
        %8396 = vmatprep.subr.mxu0 0.0
        %8397 = vmatpush1.msra.mxu0 0.0
        %8398 = vmatprep.subr.mxu0 0.0
        %8399 = vmatpush1.msra.mxu0 0.0
        %8400 = vmatprep.subr.mxu0 0.0
        %8401 = vmatpush1.msra.mxu0 0.0
        %8402 = vmatprep.subr.mxu0 0.0
        %8403 = vmatpush1.msra.mxu0 0.0
        %8404 = vmatprep.subr.mxu0 0.0
        %8405 = vmatpush1.msra.mxu0 0.0
        %8406 = vmatprep.subr.mxu0 0.0
        %8407 = vmatpush1.msra.mxu0 0.0
        %8408 = vmatprep.subr.mxu0 0.0
        %8409 = vmatpush1.msra.mxu0 0.0
        %8410 = vmatprep.subr.mxu0 0.0
        %8411 = vmatpush1.msra.mxu0 0.0
        %8412 = vmatprep.subr.mxu0 0.0
        %8413 = vmatpush1.msra.mxu0 0.0
        %8414 = vmatprep.subr.mxu0 0.0
        %8415 = vmatpush1.msra.mxu0 0.0
        %8416 = vmatprep.mubr.f32.mxu0 0.0
        %8417 = vmatmul.mubr.f32.gmra.mrb[0].mxu0 %v8350
        %v8418 = vpop.f32.mrb[0].mxu0
        %v8419 = vadd.f32 0.0, %v8418
        %v8420 = vpop.f32.mrb[0].mxu0
        %8421 = vdwg.mxu0
        %v8422 = vadd.f32 %v8346, %v8419
        %v8423 = vrot.slane %v8202, 3
        %v8424 = vsel %vm2389, %v8423, 0
        %8426 = vmatprep.subr.mxu0 0.0
        %8427 = vmatpush1.msra.mxu0 %v721
        %8428 = vmatprep.subr.mxu0 0.0
        %8429 = vmatpush1.msra.mxu0 %v722
        %8430 = vmatprep.subr.mxu0 0.0
        %8431 = vmatpush1.msra.mxu0 %v723
        %8432 = vmatprep.subr.mxu0 0.0
        %8433 = vmatpush1.msra.mxu0 %v724
        %8434 = vmatprep.subr.mxu0 0.0
        %8435 = vmatpush1.msra.mxu0 %v725
        %8436 = vmatprep.subr.mxu0 0.0
        %8437 = vmatpush1.msra.mxu0 %v726
        %8438 = vmatprep.subr.mxu0 0.0
        %8439 = vmatpush1.msra.mxu0 0.0
        %8440 = vmatprep.subr.mxu0 0.0
        %8441 = vmatpush1.msra.mxu0 0.0
        %8442 = vmatprep.subr.mxu0 0.0
        %8443 = vmatpush1.msra.mxu0 0.0
        %8444 = vmatprep.subr.mxu0 0.0
        %8445 = vmatpush1.msra.mxu0 0.0
        %8446 = vmatprep.subr.mxu0 0.0
        %8447 = vmatpush1.msra.mxu0 0.0
        %8448 = vmatprep.subr.mxu0 0.0
        %8449 = vmatpush1.msra.mxu0 0.0
        %8450 = vmatprep.subr.mxu0 0.0
        %8451 = vmatpush1.msra.mxu0 0.0
        %8452 = vmatprep.subr.mxu0 0.0
        %8453 = vmatpush1.msra.mxu0 0.0
        %8454 = vmatprep.subr.mxu0 0.0
        %8455 = vmatpush1.msra.mxu0 0.0
        %8456 = vmatprep.subr.mxu0 0.0
        %8457 = vmatpush1.msra.mxu0 0.0
        %8458 = vmatprep.subr.mxu0 0.0
        %8459 = vmatpush1.msra.mxu0 0.0
        %8460 = vmatprep.subr.mxu0 0.0
        %8461 = vmatpush1.msra.mxu0 0.0
        %8462 = vmatprep.subr.mxu0 0.0
        %8463 = vmatpush1.msra.mxu0 0.0
        %8464 = vmatprep.subr.mxu0 0.0
        %8465 = vmatpush1.msra.mxu0 0.0
        %8466 = vmatprep.subr.mxu0 0.0
        %8467 = vmatpush1.msra.mxu0 0.0
        %8468 = vmatprep.subr.mxu0 0.0
        %8469 = vmatpush1.msra.mxu0 0.0
        %8470 = vmatprep.subr.mxu0 0.0
        %8471 = vmatpush1.msra.mxu0 0.0
        %8472 = vmatprep.subr.mxu0 0.0
        %8473 = vmatpush1.msra.mxu0 0.0
        %8474 = vmatprep.subr.mxu0 0.0
        %8475 = vmatpush1.msra.mxu0 0.0
        %8476 = vmatprep.subr.mxu0 0.0
        %8477 = vmatpush1.msra.mxu0 0.0
        %8478 = vmatprep.subr.mxu0 0.0
        %8479 = vmatpush1.msra.mxu0 0.0
        %8480 = vmatprep.subr.mxu0 0.0
        %8481 = vmatpush1.msra.mxu0 0.0
        %8482 = vmatprep.subr.mxu0 0.0
        %8483 = vmatpush1.msra.mxu0 0.0
        %8484 = vmatprep.subr.mxu0 0.0
        %8485 = vmatpush1.msra.mxu0 0.0
        %8486 = vmatprep.subr.mxu0 0.0
        %8487 = vmatpush1.msra.mxu0 0.0
        %8488 = vmatprep.subr.mxu0 0.0
        %8489 = vmatpush1.msra.mxu0 0.0
        %8490 = vmatprep.mubr.f32.mxu0 0.0
        %8491 = vmatmul.mubr.f32.gmra.mrb[0].mxu0 %v8424
        %v8492 = vpop.f32.mrb[0].mxu0
        %v8493 = vadd.f32 0.0, %v8492
        %v8494 = vpop.f32.mrb[0].mxu0
        %8495 = vdwg.mxu0
        %v8496 = vadd.f32 %v8422, %v8493
        %v8497 = vadd.f32 %v8496, %v795
        %v8498 = vmax.f32 %v8497, 0.0
        %v8500 = vsel %vm2684, %v8498, 0
        %8502 = vmatprep.subr.mxu0 0.0
        %8503 = vmatpush1.msra.mxu0 %v796
        %8504 = vmatprep.subr.mxu0 0.0
        %8505 = vmatpush1.msra.mxu0 %v797
        %8506 = vmatprep.subr.mxu0 0.0
        %8507 = vmatpush1.msra.mxu0 %v798
        %8508 = vmatprep.subr.mxu0 0.0
        %8509 = vmatpush1.msra.mxu0 %v799
        %8510 = vmatprep.subr.mxu0 0.0
        %8511 = vmatpush1.msra.mxu0 %v800
        %8512 = vmatprep.subr.mxu0 0.0
        %8513 = vmatpush1.msra.mxu0 %v801
        %8514 = vmatprep.subr.mxu0 0.0
        %8515 = vmatpush1.msra.mxu0 %v802
        %8516 = vmatprep.subr.mxu0 0.0
        %8517 = vmatpush1.msra.mxu0 %v803
        %8518 = vmatprep.subr.mxu0 0.0
        %8519 = vmatpush1.msra.mxu0 %v804
        %8520 = vmatprep.subr.mxu0 0.0
        %8521 = vmatpush1.msra.mxu0 %v805
        %8522 = vmatprep.subr.mxu0 0.0
        %8523 = vmatpush1.msra.mxu0 %v806
        %8524 = vmatprep.subr.mxu0 0.0
        %8525 = vmatpush1.msra.mxu0 %v807
        %8526 = vmatprep.subr.mxu0 0.0
        %8527 = vmatpush1.msra.mxu0 %v808
        %8528 = vmatprep.subr.mxu0 0.0
        %8529 = vmatpush1.msra.mxu0 %v809
        %8530 = vmatprep.subr.mxu0 0.0
        %8531 = vmatpush1.msra.mxu0 %v810
        %8532 = vmatprep.subr.mxu0 0.0
        %8533 = vmatpush1.msra.mxu0 0.0
        %8534 = vmatprep.subr.mxu0 0.0
        %8535 = vmatpush1.msra.mxu0 0.0
        %8536 = vmatprep.subr.mxu0 0.0
        %8537 = vmatpush1.msra.mxu0 0.0
        %8538 = vmatprep.subr.mxu0 0.0
        %8539 = vmatpush1.msra.mxu0 0.0
        %8540 = vmatprep.subr.mxu0 0.0
        %8541 = vmatpush1.msra.mxu0 0.0
        %8542 = vmatprep.subr.mxu0 0.0
        %8543 = vmatpush1.msra.mxu0 0.0
        %8544 = vmatprep.subr.mxu0 0.0
        %8545 = vmatpush1.msra.mxu0 0.0
        %8546 = vmatprep.subr.mxu0 0.0
        %8547 = vmatpush1.msra.mxu0 0.0
        %8548 = vmatprep.subr.mxu0 0.0
        %8549 = vmatpush1.msra.mxu0 0.0
        %8550 = vmatprep.subr.mxu0 0.0
        %8551 = vmatpush1.msra.mxu0 0.0
        %8552 = vmatprep.subr.mxu0 0.0
        %8553 = vmatpush1.msra.mxu0 0.0
        %8554 = vmatprep.subr.mxu0 0.0
        %8555 = vmatpush1.msra.mxu0 0.0
        %8556 = vmatprep.subr.mxu0 0.0
        %8557 = vmatpush1.msra.mxu0 0.0
        %8558 = vmatprep.subr.mxu0 0.0
        %8559 = vmatpush1.msra.mxu0 0.0
        %8560 = vmatprep.subr.mxu0 0.0
        %8561 = vmatpush1.msra.mxu0 0.0
        %8562 = vmatprep.subr.mxu0 0.0
        %8563 = vmatpush1.msra.mxu0 0.0
        %8564 = vmatprep.subr.mxu0 0.0
        %8565 = vmatpush1.msra.mxu0 0.0
        %8566 = vmatprep.mubr.f32.mxu0 0.0
        %8567 = vmatmul.mubr.f32.gmra.mrb[0].mxu0 %v8500
        %v8568 = vpop.f32.mrb[0].mxu0
        %v8569 = vadd.f32 %v811, %v8568
        %v8570 = vpop.f32.mrb[0].mxu0
        %8571 = vdwg.mxu0
        %v8572 = vmax.f32 %v8569, 0.0
        %v8574 = vsel %vm2759, %v8572, 0
        %8576 = vmatprep.subr.mxu0 0.0
        %8577 = vmatpush1.msra.mxu0 %v812
        %8578 = vmatprep.subr.mxu0 0.0
        %8579 = vmatpush1.msra.mxu0 %v813
        %8580 = vmatprep.subr.mxu0 0.0
        %8581 = vmatpush1.msra.mxu0 %v814
        %8582 = vmatprep.subr.mxu0 0.0
        %8583 = vmatpush1.msra.mxu0 %v815
        %8584 = vmatprep.subr.mxu0 0.0
        %8585 = vmatpush1.msra.mxu0 %v816
        %8586 = vmatprep.subr.mxu0 0.0
        %8587 = vmatpush1.msra.mxu0 %v817
        %8588 = vmatprep.subr.mxu0 0.0
        %8589 = vmatpush1.msra.mxu0 %v818
        %8590 = vmatprep.subr.mxu0 0.0
        %8591 = vmatpush1.msra.mxu0 %v2764
        %8592 = vmatprep.subr.mxu0 0.0
        %8593 = vmatpush1.msra.mxu0 0.0
        %8594 = vmatprep.subr.mxu0 0.0
        %8595 = vmatpush1.msra.mxu0 0.0
        %8596 = vmatprep.subr.mxu0 0.0
        %8597 = vmatpush1.msra.mxu0 0.0
        %8598 = vmatprep.subr.mxu0 0.0
        %8599 = vmatpush1.msra.mxu0 0.0
        %8600 = vmatprep.subr.mxu0 0.0
        %8601 = vmatpush1.msra.mxu0 0.0
        %8602 = vmatprep.subr.mxu0 0.0
        %8603 = vmatpush1.msra.mxu0 0.0
        %8604 = vmatprep.subr.mxu0 0.0
        %8605 = vmatpush1.msra.mxu0 0.0
        %8606 = vmatprep.subr.mxu0 0.0
        %8607 = vmatpush1.msra.mxu0 0.0
        %8608 = vmatprep.subr.mxu0 0.0
        %8609 = vmatpush1.msra.mxu0 0.0
        %8610 = vmatprep.subr.mxu0 0.0
        %8611 = vmatpush1.msra.mxu0 0.0
        %8612 = vmatprep.subr.mxu0 0.0
        %8613 = vmatpush1.msra.mxu0 0.0
        %8614 = vmatprep.subr.mxu0 0.0
        %8615 = vmatpush1.msra.mxu0 0.0
        %8616 = vmatprep.subr.mxu0 0.0
        %8617 = vmatpush1.msra.mxu0 0.0
        %8618 = vmatprep.subr.mxu0 0.0
        %8619 = vmatpush1.msra.mxu0 0.0
        %8620 = vmatprep.subr.mxu0 0.0
        %8621 = vmatpush1.msra.mxu0 0.0
        %8622 = vmatprep.subr.mxu0 0.0
        %8623 = vmatpush1.msra.mxu0 0.0
        %8624 = vmatprep.subr.mxu0 0.0
        %8625 = vmatpush1.msra.mxu0 0.0
        %8626 = vmatprep.subr.mxu0 0.0
        %8627 = vmatpush1.msra.mxu0 0.0
        %8628 = vmatprep.subr.mxu0 0.0
        %8629 = vmatpush1.msra.mxu0 0.0
        %8630 = vmatprep.subr.mxu0 0.0
        %8631 = vmatpush1.msra.mxu0 0.0
        %8632 = vmatprep.subr.mxu0 0.0
        %8633 = vmatpush1.msra.mxu0 0.0
        %8634 = vmatprep.subr.mxu0 0.0
        %8635 = vmatpush1.msra.mxu0 0.0
        %8636 = vmatprep.subr.mxu0 0.0
        %8637 = vmatpush1.msra.mxu0 0.0
        %8638 = vmatprep.subr.mxu0 0.0
        %8639 = vmatpush1.msra.mxu0 0.0
        %8640 = vmatprep.mubr.f32.mxu0 0.0
        %8641 = vmatmul.mubr.f32.gmra.mrb[0].mxu0 %v8574
        %v8642 = vpop.f32.mrb[0].mxu0
        %v8643 = vadd.f32 %v820, %v8642
        %v8644 = vpop.f32.mrb[0].mxu0
        %8645 = vdwg.mxu0
        %s8646 = scalar_lea.vmem %s598, 3 [#allocation2]
        %8647 = vst [vmem:[%s8646] sm:$0x1] %v8643
        %s8648 = sand.u32 %s445, 1
        %s8649 = scalar_lea.sflag [#allocation3], %s8648
        %s8650 = sand.u32 %s445, 1
        %s8651 = smul.addr %s8650, 4
        %s8652 = scalar_lea.vmem [#allocation2], %s8651
        // Predicated region
        $region97: #{mnist_classifier_forward.1} parent=95 // pred_check
          %p8653 = pneg %p455
        $region98: #{mnist_classifier_forward.1} parent=95 // pred_check_branch
          %8655 = sbr.rel (%p8653) target = $region100
        $region99: #{mnist_classifier_forward.1} parent=95 // pred_region
          %s8656 = smul.u32 4, %s33
          %s8658 = ssub.s32 64, 64
          %8659 = vsyncadd %s8649, %s8658
          %s8660 = smul.addr %s8656, 16
          %s8661 = scalar_lea.hbm %s19, %s8660
          %s8662 = sshll.u32 %s8652, 4
          %s8663 = int_to_ptr.vmem [resolvable:$true] %s8662
          %8668 = dma.vmem_to_hbm [thread:$0]  %s8663, 64, %s8661, %s8649, 16, 16, 1
        $region100: #{mnist_classifier_forward.1} parent=95 // pred_fallthru
          _
      $region96: #{mnist_classifier_forward.1} parent=5 // pred_fallthru
        _
      %p8669 = scmp.le.s32.totalorder 2, %s28
      // Predicated region
      $region101: #{mnist_classifier_forward.1} parent=5 // pred_check
        %p8670 = pneg %p8669
      $region102: #{mnist_classifier_forward.1} parent=5 // pred_check_branch
        %8672 = sbr.rel (%p8670) target = $region104
      $region103: #{mnist_classifier_forward.1} parent=5 // pred_region
        %s8673 = ssub.s32 %s28, 2
        // Predicated region
        $region105: #{mnist_classifier_forward.1} parent=103 // pred_check
          %p8674 = pneg %p461
        $region106: #{mnist_classifier_forward.1} parent=103 // pred_check_branch
          %8676 = sbr.rel (%p8674) target = $region108
        $region107: #{mnist_classifier_forward.1} parent=103 // pred_region
          %s8677 = sand.u32 %s446, 1
          %s8678 = scalar_lea.sflag [#allocation3], %s8677
          %s8679 = sand.u32 %s446, 1
          %s8680 = smul.addr %s8679, 4
          %s8681 = scalar_lea.vmem [#allocation2], %s8680
          %8682 = dma.done %s8678, 64
        $region108: #{mnist_classifier_forward.1} parent=103 // pred_fallthru
          _
      $region104: #{mnist_classifier_forward.1} parent=5 // pred_fallthru
        _
    $region6: #{mnist_classifier_forward.1} parent=1 // loop_footer
      %s32 = sadd.s32 1, %s28
    $region7: #{mnist_classifier_forward.1} parent=1 // loop_footer_branch
      %27 = sbr.rel target = $region3
    $region8: #{mnist_classifier_forward.1} parent=1 // loop_exit
      _
    %8683 = vsyncpa [#allocation3], 1
    %s8684 = scalar_lea.sflag [#allocation3], 1
    %8685 = vsyncpa %s8684, 1

</llo_original>
